<compile_context>
chip_gen: v5e
topology: v5e:2x2
jax: 0.10.0
libtpu: 0.0.40
codegen_flags: <defaults>
</compile_context>

<pallas_src>
import functools

import jax
import jax.numpy as jnp
from jax import lax
from jax.experimental import pallas as pl
from jax.experimental.pallas import tpu as pltpu

NUM_HEADS = 4
R_PAD = 128            # lane-dense output width; real region_dim columns sliced on host


def _region_embed_kernel(x_ref, wqkv_ref, bqkv_ref, wc_ref, bc_ref, mask_ref, pool_ref,
                         o_ref, *, num_heads):
    """One grid step processes BB regions flattened to M = BB * L rows.

    x_ref    : (M, E)          edge embeddings, rows region-major
    wqkv_ref : (E, 3E)         fused in-proj weight (softmax scale folded into Q cols)
    bqkv_ref : (1, 3E)         fused in-proj bias
    wc_ref   : (H, D, R_PAD)   fused (out_proj o fc) weight, zero-padded, per head
    bc_ref   : (1, R_PAD)      fused bias
    mask_ref : (M, M)          additive block-diagonal mask bias (0 / -1e30)
    pool_ref : (BB, M)         block-diagonal mean-pool matrix (1/L within a region)
    o_ref    : (BB, R_PAD)
    """
    M, E = x_ref.shape
    H = num_heads
    D = E // H

    x = x_ref[...]
    # One lane-dense QKV matmul + one broadcast bias add (replaces 12 N=8 matmuls).
    qkv = jnp.dot(x, wqkv_ref[...], preferred_element_type=jnp.float32) + bqkv_ref[...]
    mask = mask_ref[...]
    pool = pool_ref[...]

    acc = jnp.zeros((pool.shape[0], o_ref.shape[1]), jnp.float32)      # (BB, R_PAD)
    for h in range(H):                                                  # static, H = 4
        q = qkv[:, h * D:(h + 1) * D]                    # scale already folded in
        k = qkv[:, E + h * D:E + (h + 1) * D]
        v = qkv[:, 2 * E + h * D:2 * E + (h + 1) * D]
        # scores = q @ k^T + block-diagonal bias   (one dense (M, M) matmul)
        s = lax.dot_general(q, k, (((1,), (1,)), ((), ())),
                            preferred_element_type=jnp.float32) + mask
        p = jnp.exp(s - jnp.max(s, axis=-1, keepdims=True))
        # deferred normalization: scale the small (M, D) PV result, not the (M, M) p
        recip = pl.reciprocal(jnp.sum(p, axis=-1, keepdims=True), approx=False)
        pv = jnp.dot(p, v, preferred_element_type=jnp.float32) * recip            # (M, D)
        pooled_h = jnp.dot(pool, pv, preferred_element_type=jnp.float32)          # (BB, D)
        # head concat + out_proj + fc folded into one per-head (D, R_PAD) matmul
        acc = acc + jnp.dot(pooled_h, wc_ref[h], preferred_element_type=jnp.float32)

    o_ref[...] = (acc + bc_ref[...]).astype(o_ref.dtype)


def _prepare_weights(params, num_heads):
    """Host-side reshapes / transposes / fusions (free in XLA)."""
    w_in, b_in, w_out, b_out, w_fc, b_fc = params
    E = w_out.shape[0]
    R = w_fc.shape[0]
    H = num_heads
    assert E % H == 0, "edge_embedding_dim must be divisible by num_heads"
    D = E // H

    # Fused QKV weight (E, 3E), columns ordered [q | k | v]; fold 1/sqrt(D) into Q.
    scale = 1.0 / jnp.sqrt(jnp.float32(D))
    col_scale = jnp.concatenate(
        [jnp.full((E,), scale, jnp.float32), jnp.ones((2 * E,), jnp.float32)])
    w_qkv = (w_in.T * col_scale[None, :]).astype(jnp.float32)          # (E, 3E)
    b_qkv = (b_in * col_scale).reshape(1, 3 * E).astype(jnp.float32)   # (1, 3E)

    # Fuse out_proj and fc (mean-pool commutes with both linear maps), split per head.
    w_comb = (w_out.T @ w_fc.T)                                        # (E, R)
    w_comb = jnp.pad(w_comb, ((0, 0), (0, R_PAD - R))).reshape(H, D, R_PAD)
    b_comb = jnp.pad(b_out @ w_fc.T + b_fc, (0, R_PAD - R)).reshape(1, R_PAD)
    return (w_qkv, b_qkv, w_comb.astype(jnp.float32), b_comb.astype(jnp.float32)), R


def _round_up(x, m):
    return ((x + m - 1) // m) * m


def _two_tensorcores():
    try:
        return "v7" in jax.devices()[0].device_kind.lower()
    except Exception:  # pragma: no cover - conservative fallback
        return False


def _pick_block_regions(B, L):
    # Target ~256 MXU rows per grid step (fills v6e/v7x's 256-row MXU, v5e's 128-row
    # MXU is trivially filled and per-step overhead is amortized).  BB must be a
    # multiple of 8 so the (BB, 128) output block obeys the (8, 128) rule.
    bb = max(8, (max(1, 256 // L) // 8) * 8)
    bb = min(bb, max(8, _round_up(B, 8)))      # don't pad tiny batches to huge blocks
    # v7x has 2 TensorCores: prefer grid >= 2 "parallel" steps over a grid of 1.
    if _two_tensorcores() and bb >= 16 and pl.cdiv(B, bb) == 1 and B > bb // 2:
        bb //= 2
    return bb


def region_embedding_forward_batched(xs, params, *, block_regions=None):
    """xs: (B, L, E) float32 -> (B, region_dim) float32."""
    B, L, E = xs.shape
    weights, R = _prepare_weights(params, NUM_HEADS)

    BB = block_regions if block_regions is not None else _pick_block_regions(B, L)
    assert BB % 8 == 0, "block_regions must be a multiple of 8 for the (8,128) rule"
    B_pad = _round_up(B, BB)
    if B_pad != B:
        xs = jnp.pad(xs, ((0, B_pad - B), (0, 0), (0, 0)))   # padded regions sliced off below
    M = BB * L
    # TODO(synk): for very long regions (BB*L in the thousands) the dense (M, M) mask/score
    # path should switch to a per-region grid axis instead of row flattening.

    x2d = xs.reshape(B_pad * L, E)

    # Host-precomputed block-diagonal additive mask bias and mean-pool matrix.
    rid = jnp.arange(M, dtype=jnp.int32) // L
    mask = jnp.where(rid[:, None] == rid[None, :],
                     jnp.float32(0.0), jnp.float32(-1e30))                        # (M, M)
    pool = (jnp.arange(BB, dtype=jnp.int32)[:, None] == rid[None, :]
            ).astype(jnp.float32) / jnp.float32(L)                                # (BB, M)

    consts = weights + (mask, pool)

    def const_spec(a):
        return pl.BlockSpec(a.shape, lambda i, n=a.ndim: (0,) * n)   # VMEM-resident

    out = pl.pallas_call(
        functools.partial(_region_embed_kernel, num_heads=NUM_HEADS),
        out_shape=jax.ShapeDtypeStruct((B_pad, R_PAD), jnp.float32),
        grid=(B_pad // BB,),
        in_specs=[pl.BlockSpec((M, E), lambda i: (i, 0))]
                 + [const_spec(a) for a in consts],
        out_specs=pl.BlockSpec((BB, R_PAD), lambda i: (i, 0)),
        compiler_params=pltpu.CompilerParams(dimension_semantics=("parallel",)),
    )(x2d, *consts)
    return out[:B, :R]


def region_embedding_forward(x, params):
    """x: (L, E) float32 -> (region_dim,), matching RegionEmbedding.forward."""
    return region_embedding_forward_batched(x[None], params)[0]


def init_params(key, edge_dim, region_dim):
    """Deterministic synthetic params matching nn.MultiheadAttention + nn.Linear shapes."""
    ks = jax.random.split(key, 6)
    w_in = 0.05 * jax.random.normal(ks[0], (3 * edge_dim, edge_dim), jnp.float32)
    b_in = 0.05 * jax.random.normal(ks[1], (3 * edge_dim,), jnp.float32)
    w_out = 0.05 * jax.random.normal(ks[2], (edge_dim, edge_dim), jnp.float32)
    b_out = 0.05 * jax.random.normal(ks[3], (edge_dim,), jnp.float32)
    w_fc = 0.05 * jax.random.normal(ks[4], (region_dim, edge_dim), jnp.float32)
    b_fc = 0.05 * jax.random.normal(ks[5], (region_dim,), jnp.float32)
    return (w_in, b_in, w_out, b_out, w_fc, b_fc)


def _reference_forward(x, params):
    """Pure-JAX reference mirroring PyTorch MultiheadAttention semantics."""
    w_in, b_in, w_out, b_out, w_fc, b_fc = params
    L, E = x.shape
    D = E // NUM_HEADS
    qkv = x @ w_in.T + b_in
    q, k, v = qkv[:, :E], qkv[:, E:2 * E], qkv[:, 2 * E:]
    outs = []
    for h in range(NUM_HEADS):
        qh, kh, vh = (t[:, h * D:(h + 1) * D] for t in (q, k, v))
        s = (qh @ kh.T) / jnp.sqrt(jnp.float32(D))
        p = jax.nn.softmax(s, axis=-1)
        outs.append(p @ vh)
    attn = jnp.concatenate(outs, axis=-1) @ w_out.T + b_out
    pooled = jnp.mean(attn, axis=0, keepdims=True)
    return (pooled @ w_fc.T + b_fc)[0]


if __name__ == "__main__":
    edge_embedding_dim = 32     # divisible by num_heads=4
    region_embedding_dim = 16
    seq_len = 8                 # edges per region
    batch = 32                  # regions per call

    key = jax.random.PRNGKey(0)
    k_x, k_p = jax.random.split(key)
    xs = jax.random.normal(k_x, (batch, seq_len, edge_embedding_dim), jnp.float32)
    params = init_params(k_p, edge_embedding_dim, region_embedding_dim)

    # batched path (main throughput path)
    out_b = jax.block_until_ready(region_embedding_forward_batched(xs, params))
    ref_b = jax.vmap(lambda x: _reference_forward(x, params))(xs)
    assert out_b.shape == (batch, region_embedding_dim)
    assert jnp.allclose(out_b, ref_b, rtol=1e-4, atol=1e-4), "batched mismatch vs reference"

    # odd batch exercising the pad-up path (no degradation to BB=1)
    out_o = jax.block_until_ready(region_embedding_forward_batched(xs[:27], params))
    assert jnp.allclose(out_o, ref_b[:27], rtol=1e-4, atol=1e-4), "odd-batch mismatch"

    # single-region path, exactly the PyTorch module's forward signature
    out1 = jax.block_until_ready(region_embedding_forward(xs[0], params))
    assert out1.shape == (region_embedding_dim,)
    assert jnp.allclose(out1, ref_b[0], rtol=1e-4, atol=1e-4), "single mismatch vs reference"

    print("KERNEL_OK")
</pallas_src>

<mosaic_0001>
module attributes {stable_mosaic.version = 11 : i64} {
  func.func @_region_embed_kernel(%arg0: i32, %arg1: memref<256x32xf32, #tpu.memory_space<vmem>>, %arg2: memref<32x96xf32, #tpu.memory_space<vmem>>, %arg3: memref<1x96xf32, #tpu.memory_space<vmem>>, %arg4: memref<4x8x128xf32, #tpu.memory_space<vmem>>, %arg5: memref<1x128xf32, #tpu.memory_space<vmem>>, %arg6: memref<256x256xf32, #tpu.memory_space<vmem>>, %arg7: memref<32x256xf32, #tpu.memory_space<vmem>>, %arg8: memref<32x128xf32, #tpu.memory_space<vmem>>) attributes {dimension_semantics = [#tpu.dimension_semantics<parallel>], iteration_bounds = array<i64: 1>, scalar_prefetch = 0 : i64, scratch_operands = 0 : i64, tpu.core_type = #tpu.core_type<tc>, window_params = [{transform_indices = @transform_0, window_bounds = array<i64: 256, 32>}, {pipeline_mode = #tpu.pipeline_mode<synchronous>, transform_indices = @transform_1, window_bounds = array<i64: 32, 96>}, {pipeline_mode = #tpu.pipeline_mode<synchronous>, transform_indices = @transform_2, window_bounds = array<i64: 1, 96>}, {pipeline_mode = #tpu.pipeline_mode<synchronous>, transform_indices = @transform_3, window_bounds = array<i64: 4, 8, 128>}, {pipeline_mode = #tpu.pipeline_mode<synchronous>, transform_indices = @transform_4, window_bounds = array<i64: 1, 128>}, {pipeline_mode = #tpu.pipeline_mode<synchronous>, transform_indices = @transform_5, window_bounds = array<i64: 256, 256>}, {pipeline_mode = #tpu.pipeline_mode<synchronous>, transform_indices = @transform_6, window_bounds = array<i64: 32, 256>}, {transform_indices = @transform_7, window_bounds = array<i64: 32, 128>}]} {
    %c0 = arith.constant 0 : index
    %c0_0 = arith.constant 0 : index
    %0 = vector.load %arg1[%c0, %c0_0] : memref<256x32xf32, #tpu.memory_space<vmem>>, vector<256x32xf32>
    %c0_1 = arith.constant 0 : index
    %c0_2 = arith.constant 0 : index
    %1 = vector.load %arg2[%c0_1, %c0_2] : memref<32x96xf32, #tpu.memory_space<vmem>>, vector<32x96xf32>
    %cst = arith.constant dense<0.000000e+00> : vector<256x96xf32>
    %2 = tpu.matmul %0, %1, %cst {dimension_numbers = #tpu.dot_dimension_numbers<[1], [0], [0], [1], [0, 0, 1, 1], [], []>} : vector<256x32xf32>, vector<32x96xf32>, vector<256x96xf32> -> vector<256x96xf32>
    %c0_3 = arith.constant 0 : index
    %c0_4 = arith.constant 0 : index
    %3 = vector.load %arg3[%c0_3, %c0_4] : memref<1x96xf32, #tpu.memory_space<vmem>>, vector<1x96xf32>
    %4 = vector.broadcast %3 : vector<1x96xf32> to vector<256x96xf32>
    %5 = arith.addf %2, %4 : vector<256x96xf32>
    %c0_5 = arith.constant 0 : index
    %c0_6 = arith.constant 0 : index
    %6 = vector.load %arg6[%c0_5, %c0_6] : memref<256x256xf32, #tpu.memory_space<vmem>>, vector<256x256xf32>
    %c0_7 = arith.constant 0 : index
    %c0_8 = arith.constant 0 : index
    %7 = vector.load %arg7[%c0_7, %c0_8] : memref<32x256xf32, #tpu.memory_space<vmem>>, vector<32x256xf32>
    %cst_9 = arith.constant 0.000000e+00 : f32
    %8 = vector.broadcast %cst_9 : f32 to vector<32x128xf32>
    %9 = vector.extract_strided_slice %5 {offsets = [0, 0], sizes = [256, 8], strides = [1, 1]} : vector<256x96xf32> to vector<256x8xf32>
    %10 = vector.extract_strided_slice %5 {offsets = [0, 32], sizes = [256, 8], strides = [1, 1]} : vector<256x96xf32> to vector<256x8xf32>
    %11 = vector.extract_strided_slice %5 {offsets = [0, 64], sizes = [256, 8], strides = [1, 1]} : vector<256x96xf32> to vector<256x8xf32>
    %cst_10 = arith.constant dense<0.000000e+00> : vector<256x256xf32>
    %12 = tpu.matmul %9, %10, %cst_10 {dimension_numbers = #tpu.dot_dimension_numbers<[1], [1], [0], [0], [0, 0, 1, 0], [], []>} : vector<256x8xf32>, vector<256x8xf32>, vector<256x256xf32> -> vector<256x256xf32>
    %13 = arith.addf %12, %6 : vector<256x256xf32>
    %cst_11 = arith.constant dense<0xFF800000> : vector<256xf32>
    %14 = vector.multi_reduction <maximumf>, %13, %cst_11 [1] : vector<256x256xf32> to vector<256xf32>
    %15 = vector.shape_cast %14 : vector<256xf32> to vector<256x1xf32>
    %16 = vector.broadcast %15 : vector<256x1xf32> to vector<256x256xf32>
    %17 = arith.subf %13, %16 : vector<256x256xf32>
    %18 = math.exp %17 : vector<256x256xf32>
    %cst_12 = arith.constant dense<0.000000e+00> : vector<256xf32>
    %19 = vector.multi_reduction <add>, %18, %cst_12 [1] : vector<256x256xf32> to vector<256xf32>
    %20 = vector.shape_cast %19 : vector<256xf32> to vector<256x1xf32>
    %21 = tpu.reciprocal %20 : vector<256x1xf32> -> vector<256x1xf32>
    %cst_13 = arith.constant dense<0.000000e+00> : vector<256x8xf32>
    %22 = tpu.matmul %18, %11, %cst_13 {dimension_numbers = #tpu.dot_dimension_numbers<[1], [0], [0], [1], [0, 0, 1, 1], [], []>} : vector<256x256xf32>, vector<256x8xf32>, vector<256x8xf32> -> vector<256x8xf32>
    %23 = vector.broadcast %21 : vector<256x1xf32> to vector<256x8xf32>
    %24 = arith.mulf %22, %23 : vector<256x8xf32>
    %cst_14 = arith.constant dense<0.000000e+00> : vector<32x8xf32>
    %25 = tpu.matmul %7, %24, %cst_14 {dimension_numbers = #tpu.dot_dimension_numbers<[1], [0], [0], [1], [0, 0, 1, 1], [], []>} : vector<32x256xf32>, vector<256x8xf32>, vector<32x8xf32> -> vector<32x8xf32>
    %c0_15 = arith.constant 0 : index
    %c0_16 = arith.constant 0 : index
    %c0_17 = arith.constant 0 : index
    %26 = vector.load %arg4[%c0_15, %c0_16, %c0_17] : memref<4x8x128xf32, #tpu.memory_space<vmem>>, vector<1x8x128xf32>
    %27 = vector.shape_cast %26 : vector<1x8x128xf32> to vector<8x128xf32>
    %cst_18 = arith.constant dense<0.000000e+00> : vector<32x128xf32>
    %28 = tpu.matmul %25, %27, %cst_18 {dimension_numbers = #tpu.dot_dimension_numbers<[1], [0], [0], [1], [0, 0, 1, 1], [], []>} : vector<32x8xf32>, vector<8x128xf32>, vector<32x128xf32> -> vector<32x128xf32>
    %29 = arith.addf %8, %28 : vector<32x128xf32>
    %30 = vector.extract_strided_slice %5 {offsets = [0, 8], sizes = [256, 8], strides = [1, 1]} : vector<256x96xf32> to vector<256x8xf32>
    %31 = vector.extract_strided_slice %5 {offsets = [0, 40], sizes = [256, 8], strides = [1, 1]} : vector<256x96xf32> to vector<256x8xf32>
    %32 = vector.extract_strided_slice %5 {offsets = [0, 72], sizes = [256, 8], strides = [1, 1]} : vector<256x96xf32> to vector<256x8xf32>
    %cst_19 = arith.constant dense<0.000000e+00> : vector<256x256xf32>
    %33 = tpu.matmul %30, %31, %cst_19 {dimension_numbers = #tpu.dot_dimension_numbers<[1], [1], [0], [0], [0, 0, 1, 0], [], []>} : vector<256x8xf32>, vector<256x8xf32>, vector<256x256xf32> -> vector<256x256xf32>
    %34 = arith.addf %33, %6 : vector<256x256xf32>
    %cst_20 = arith.constant dense<0xFF800000> : vector<256xf32>
    %35 = vector.multi_reduction <maximumf>, %34, %cst_20 [1] : vector<256x256xf32> to vector<256xf32>
    %36 = vector.shape_cast %35 : vector<256xf32> to vector<256x1xf32>
    %37 = vector.broadcast %36 : vector<256x1xf32> to vector<256x256xf32>
    %38 = arith.subf %34, %37 : vector<256x256xf32>
    %39 = math.exp %38 : vector<256x256xf32>
    %cst_21 = arith.constant dense<0.000000e+00> : vector<256xf32>
    %40 = vector.multi_reduction <add>, %39, %cst_21 [1] : vector<256x256xf32> to vector<256xf32>
    %41 = vector.shape_cast %40 : vector<256xf32> to vector<256x1xf32>
    %42 = tpu.reciprocal %41 : vector<256x1xf32> -> vector<256x1xf32>
    %cst_22 = arith.constant dense<0.000000e+00> : vector<256x8xf32>
    %43 = tpu.matmul %39, %32, %cst_22 {dimension_numbers = #tpu.dot_dimension_numbers<[1], [0], [0], [1], [0, 0, 1, 1], [], []>} : vector<256x256xf32>, vector<256x8xf32>, vector<256x8xf32> -> vector<256x8xf32>
    %44 = vector.broadcast %42 : vector<256x1xf32> to vector<256x8xf32>
    %45 = arith.mulf %43, %44 : vector<256x8xf32>
    %cst_23 = arith.constant dense<0.000000e+00> : vector<32x8xf32>
    %46 = tpu.matmul %7, %45, %cst_23 {dimension_numbers = #tpu.dot_dimension_numbers<[1], [0], [0], [1], [0, 0, 1, 1], [], []>} : vector<32x256xf32>, vector<256x8xf32>, vector<32x8xf32> -> vector<32x8xf32>
    %c1 = arith.constant 1 : index
    %c0_24 = arith.constant 0 : index
    %c0_25 = arith.constant 0 : index
    %47 = vector.load %arg4[%c1, %c0_24, %c0_25] : memref<4x8x128xf32, #tpu.memory_space<vmem>>, vector<1x8x128xf32>
    %48 = vector.shape_cast %47 : vector<1x8x128xf32> to vector<8x128xf32>
    %cst_26 = arith.constant dense<0.000000e+00> : vector<32x128xf32>
    %49 = tpu.matmul %46, %48, %cst_26 {dimension_numbers = #tpu.dot_dimension_numbers<[1], [0], [0], [1], [0, 0, 1, 1], [], []>} : vector<32x8xf32>, vector<8x128xf32>, vector<32x128xf32> -> vector<32x128xf32>
    %50 = arith.addf %29, %49 : vector<32x128xf32>
    %51 = vector.extract_strided_slice %5 {offsets = [0, 16], sizes = [256, 8], strides = [1, 1]} : vector<256x96xf32> to vector<256x8xf32>
    %52 = vector.extract_strided_slice %5 {offsets = [0, 48], sizes = [256, 8], strides = [1, 1]} : vector<256x96xf32> to vector<256x8xf32>
    %53 = vector.extract_strided_slice %5 {offsets = [0, 80], sizes = [256, 8], strides = [1, 1]} : vector<256x96xf32> to vector<256x8xf32>
    %cst_27 = arith.constant dense<0.000000e+00> : vector<256x256xf32>
    %54 = tpu.matmul %51, %52, %cst_27 {dimension_numbers = #tpu.dot_dimension_numbers<[1], [1], [0], [0], [0, 0, 1, 0], [], []>} : vector<256x8xf32>, vector<256x8xf32>, vector<256x256xf32> -> vector<256x256xf32>
    %55 = arith.addf %54, %6 : vector<256x256xf32>
    %cst_28 = arith.constant dense<0xFF800000> : vector<256xf32>
    %56 = vector.multi_reduction <maximumf>, %55, %cst_28 [1] : vector<256x256xf32> to vector<256xf32>
    %57 = vector.shape_cast %56 : vector<256xf32> to vector<256x1xf32>
    %58 = vector.broadcast %57 : vector<256x1xf32> to vector<256x256xf32>
    %59 = arith.subf %55, %58 : vector<256x256xf32>
    %60 = math.exp %59 : vector<256x256xf32>
    %cst_29 = arith.constant dense<0.000000e+00> : vector<256xf32>
    %61 = vector.multi_reduction <add>, %60, %cst_29 [1] : vector<256x256xf32> to vector<256xf32>
    %62 = vector.shape_cast %61 : vector<256xf32> to vector<256x1xf32>
    %63 = tpu.reciprocal %62 : vector<256x1xf32> -> vector<256x1xf32>
    %cst_30 = arith.constant dense<0.000000e+00> : vector<256x8xf32>
    %64 = tpu.matmul %60, %53, %cst_30 {dimension_numbers = #tpu.dot_dimension_numbers<[1], [0], [0], [1], [0, 0, 1, 1], [], []>} : vector<256x256xf32>, vector<256x8xf32>, vector<256x8xf32> -> vector<256x8xf32>
    %65 = vector.broadcast %63 : vector<256x1xf32> to vector<256x8xf32>
    %66 = arith.mulf %64, %65 : vector<256x8xf32>
    %cst_31 = arith.constant dense<0.000000e+00> : vector<32x8xf32>
    %67 = tpu.matmul %7, %66, %cst_31 {dimension_numbers = #tpu.dot_dimension_numbers<[1], [0], [0], [1], [0, 0, 1, 1], [], []>} : vector<32x256xf32>, vector<256x8xf32>, vector<32x8xf32> -> vector<32x8xf32>
    %c2 = arith.constant 2 : index
    %c0_32 = arith.constant 0 : index
    %c0_33 = arith.constant 0 : index
    %68 = vector.load %arg4[%c2, %c0_32, %c0_33] : memref<4x8x128xf32, #tpu.memory_space<vmem>>, vector<1x8x128xf32>
    %69 = vector.shape_cast %68 : vector<1x8x128xf32> to vector<8x128xf32>
    %cst_34 = arith.constant dense<0.000000e+00> : vector<32x128xf32>
    %70 = tpu.matmul %67, %69, %cst_34 {dimension_numbers = #tpu.dot_dimension_numbers<[1], [0], [0], [1], [0, 0, 1, 1], [], []>} : vector<32x8xf32>, vector<8x128xf32>, vector<32x128xf32> -> vector<32x128xf32>
    %71 = arith.addf %50, %70 : vector<32x128xf32>
    %72 = vector.extract_strided_slice %5 {offsets = [0, 24], sizes = [256, 8], strides = [1, 1]} : vector<256x96xf32> to vector<256x8xf32>
    %73 = vector.extract_strided_slice %5 {offsets = [0, 56], sizes = [256, 8], strides = [1, 1]} : vector<256x96xf32> to vector<256x8xf32>
    %74 = vector.extract_strided_slice %5 {offsets = [0, 88], sizes = [256, 8], strides = [1, 1]} : vector<256x96xf32> to vector<256x8xf32>
    %cst_35 = arith.constant dense<0.000000e+00> : vector<256x256xf32>
    %75 = tpu.matmul %72, %73, %cst_35 {dimension_numbers = #tpu.dot_dimension_numbers<[1], [1], [0], [0], [0, 0, 1, 0], [], []>} : vector<256x8xf32>, vector<256x8xf32>, vector<256x256xf32> -> vector<256x256xf32>
    %76 = arith.addf %75, %6 : vector<256x256xf32>
    %cst_36 = arith.constant dense<0xFF800000> : vector<256xf32>
    %77 = vector.multi_reduction <maximumf>, %76, %cst_36 [1] : vector<256x256xf32> to vector<256xf32>
    %78 = vector.shape_cast %77 : vector<256xf32> to vector<256x1xf32>
    %79 = vector.broadcast %78 : vector<256x1xf32> to vector<256x256xf32>
    %80 = arith.subf %76, %79 : vector<256x256xf32>
    %81 = math.exp %80 : vector<256x256xf32>
    %cst_37 = arith.constant dense<0.000000e+00> : vector<256xf32>
    %82 = vector.multi_reduction <add>, %81, %cst_37 [1] : vector<256x256xf32> to vector<256xf32>
    %83 = vector.shape_cast %82 : vector<256xf32> to vector<256x1xf32>
    %84 = tpu.reciprocal %83 : vector<256x1xf32> -> vector<256x1xf32>
    %cst_38 = arith.constant dense<0.000000e+00> : vector<256x8xf32>
    %85 = tpu.matmul %81, %74, %cst_38 {dimension_numbers = #tpu.dot_dimension_numbers<[1], [0], [0], [1], [0, 0, 1, 1], [], []>} : vector<256x256xf32>, vector<256x8xf32>, vector<256x8xf32> -> vector<256x8xf32>
    %86 = vector.broadcast %84 : vector<256x1xf32> to vector<256x8xf32>
    %87 = arith.mulf %85, %86 : vector<256x8xf32>
    %cst_39 = arith.constant dense<0.000000e+00> : vector<32x8xf32>
    %88 = tpu.matmul %7, %87, %cst_39 {dimension_numbers = #tpu.dot_dimension_numbers<[1], [0], [0], [1], [0, 0, 1, 1], [], []>} : vector<32x256xf32>, vector<256x8xf32>, vector<32x8xf32> -> vector<32x8xf32>
    %c3 = arith.constant 3 : index
    %c0_40 = arith.constant 0 : index
    %c0_41 = arith.constant 0 : index
    %89 = vector.load %arg4[%c3, %c0_40, %c0_41] : memref<4x8x128xf32, #tpu.memory_space<vmem>>, vector<1x8x128xf32>
    %90 = vector.shape_cast %89 : vector<1x8x128xf32> to vector<8x128xf32>
    %cst_42 = arith.constant dense<0.000000e+00> : vector<32x128xf32>
    %91 = tpu.matmul %88, %90, %cst_42 {dimension_numbers = #tpu.dot_dimension_numbers<[1], [0], [0], [1], [0, 0, 1, 1], [], []>} : vector<32x8xf32>, vector<8x128xf32>, vector<32x128xf32> -> vector<32x128xf32>
    %92 = arith.addf %71, %91 : vector<32x128xf32>
    %c0_43 = arith.constant 0 : index
    %c0_44 = arith.constant 0 : index
    %93 = vector.load %arg5[%c0_43, %c0_44] : memref<1x128xf32, #tpu.memory_space<vmem>>, vector<1x128xf32>
    %94 = vector.broadcast %93 : vector<1x128xf32> to vector<32x128xf32>
    %95 = arith.addf %92, %94 : vector<32x128xf32>
    %c0_45 = arith.constant 0 : index
    %c0_46 = arith.constant 0 : index
    %96 = vector.load %arg8[%c0_45, %c0_46] : memref<32x128xf32, #tpu.memory_space<vmem>>, vector<32x128xf32>
    tpu.vector_store %arg8[%c0_45, %c0_46], %95 {strides = array<i32>} : memref<32x128xf32, #tpu.memory_space<vmem>>, vector<32x128xf32>,
    return
  }
  func.func @transform_0(%arg0: i32) -> (i32, i32) {
    %c0_i32 = arith.constant 0 : i32
    %c0_i32_0 = arith.constant 0 : i32
    return %arg0, %c0_i32 : i32, i32
  }
  func.func @transform_1(%arg0: i32) -> (i32, i32) {
    %c0_i32 = arith.constant 0 : i32
    %c0_i32_0 = arith.constant 0 : i32
    %c0_i32_1 = arith.constant 0 : i32
    return %c0_i32, %c0_i32_0 : i32, i32
  }
  func.func @transform_2(%arg0: i32) -> (i32, i32) {
    %c0_i32 = arith.constant 0 : i32
    %c0_i32_0 = arith.constant 0 : i32
    %c0_i32_1 = arith.constant 0 : i32
    return %c0_i32, %c0_i32_0 : i32, i32
  }
  func.func @transform_3(%arg0: i32) -> (i32, i32, i32) {
    %c0_i32 = arith.constant 0 : i32
    %c0_i32_0 = arith.constant 0 : i32
    %c0_i32_1 = arith.constant 0 : i32
    %c0_i32_2 = arith.constant 0 : i32
    return %c0_i32, %c0_i32_0, %c0_i32_1 : i32, i32, i32
  }
  func.func @transform_4(%arg0: i32) -> (i32, i32) {
    %c0_i32 = arith.constant 0 : i32
    %c0_i32_0 = arith.constant 0 : i32
    %c0_i32_1 = arith.constant 0 : i32
    return %c0_i32, %c0_i32_0 : i32, i32
  }
  func.func @transform_5(%arg0: i32) -> (i32, i32) {
    %c0_i32 = arith.constant 0 : i32
    %c0_i32_0 = arith.constant 0 : i32
    %c0_i32_1 = arith.constant 0 : i32
    return %c0_i32, %c0_i32_0 : i32, i32
  }
  func.func @transform_6(%arg0: i32) -> (i32, i32) {
    %c0_i32 = arith.constant 0 : i32
    %c0_i32_0 = arith.constant 0 : i32
    %c0_i32_1 = arith.constant 0 : i32
    return %c0_i32, %c0_i32_0 : i32, i32
  }
  func.func @transform_7(%arg0: i32) -> (i32, i32) {
    %c0_i32 = arith.constant 0 : i32
    %c0_i32_0 = arith.constant 0 : i32
    return %arg0, %c0_i32 : i32, i32
  }
}

</mosaic_0001>

<llo_original>
// kernel: tpu_custom_call.1
$region0: #{tpu_custom_call.1}
  #allocation0 [shape = 'u32[]', space=smem, size = 0x4, offset = 0x4, fixed_abs, tag = 'smem constant byte address 0x4 - core index']
  #allocation1 [shape = 'u32[72,128]{1,0:T(1,128)}', space=vmem, size = 0x9000, scoped, tag = 'internal scratch']
  %s0 = inlined_call_operand.vmem [shape: f32[256,32], index: 0, kind: input, shape index: {}]
  %s1 = inlined_call_operand.vmem [shape: f32[32,96], index: 1, kind: input, shape index: {}]
  %s2 = inlined_call_operand.vmem [shape: f32[1,96], index: 2, kind: input, shape index: {}]
  %s3 = inlined_call_operand.vmem [shape: f32[4,8,128], index: 3, kind: input, shape index: {}]
  %s4 = inlined_call_operand.vmem [shape: f32[1,128], index: 4, kind: input, shape index: {}]
  %s5 = inlined_call_operand.hbm [shape: f32[256,256], index: 5, kind: input, shape index: {}]
  %s6 = inlined_call_operand.vmem [shape: f32[32,256], index: 6, kind: input, shape index: {}]
  %s7 = inlined_call_operand.hbm [shape: f32[32,128], index: 7, kind: output, shape index: {}]
  %s8 = sld [smem:[#allocation0]]
  $region42: #{tpu_custom_call.1} parent=0
    _
  %s10 = ssub.s32 1, %s8
  %s11 = scalar_select 0, %s10, %s8
  $region1: #{tpu_custom_call.1} parent=0
    #allocation2 [shape = 'u8[262144]{0}', space=vmem, size = 0x40000, scoped, tag = 'input window, operand 5, single buffered']
    #allocation3 [shape = 's32[1]{0}', space=sflag, size = 0x4, scoped, tag = 'scoped memory for tpu_custom_call.1']
    #allocation4 [shape = 's32[1]{0}', space=sflag, size = 0x4, scoped, tag = 'scoped memory for tpu_custom_call.1']
    #allocation5 [shape = 'u8[16384]{0}', space=vmem, size = 0x4000, scoped, tag = 'output window, operand 0, single buffered']
    %12 = vsyncpa [#allocation3], 0
    %13 = vsyncpa [#allocation4], 0
    // Predicated region
    $region2: #{tpu_custom_call.1} parent=1 // pred_check
      _
    $region3: #{tpu_custom_call.1} parent=1 // pred_check_branch
      %15 = sbr.rel (0) target = $region5
    $region4: #{tpu_custom_call.1} parent=1 // pred_region
      _
    $region5: #{tpu_custom_call.1} parent=1 // pred_fallthru
      _
    // Predicated region
    $region6: #{tpu_custom_call.1} parent=1 // pred_check
      _
    $region7: #{tpu_custom_call.1} parent=1 // pred_check_branch
      %17 = sbr.rel (0) target = $region9
    $region8: #{tpu_custom_call.1} parent=1 // pred_region
      _
    $region9: #{tpu_custom_call.1} parent=1 // pred_fallthru
      _
    // Predicated region
    $region10: #{tpu_custom_call.1} parent=1 // pred_check
      _
    $region11: #{tpu_custom_call.1} parent=1 // pred_check_branch
      %19 = sbr.rel (0) target = $region13
    $region12: #{tpu_custom_call.1} parent=1 // pred_region
      _
    $region13: #{tpu_custom_call.1} parent=1 // pred_fallthru
      _
    // Predicated region
    $region14: #{tpu_custom_call.1} parent=1 // pred_check
      _
    $region15: #{tpu_custom_call.1} parent=1 // pred_check_branch
      %21 = sbr.rel (0) target = $region17
    $region16: #{tpu_custom_call.1} parent=1 // pred_region
      _
    $region17: #{tpu_custom_call.1} parent=1 // pred_fallthru
      _
    // Predicated region
    $region18: #{tpu_custom_call.1} parent=1 // pred_check
      _
    $region19: #{tpu_custom_call.1} parent=1 // pred_check_branch
      %23 = sbr.rel (0) target = $region21
    $region20: #{tpu_custom_call.1} parent=1 // pred_region
      _
    $region21: #{tpu_custom_call.1} parent=1 // pred_fallthru
      _
    // Predicated region
    $region22: #{tpu_custom_call.1} parent=1 // pred_check
      _
    $region23: #{tpu_custom_call.1} parent=1 // pred_check_branch
      %25 = sbr.rel (0) target = $region25
    $region24: #{tpu_custom_call.1} parent=1 // pred_region
      %27 = vsyncadd [#allocation3], 0
      %s28 = sshll.u32 %s5, 4
      %s29 = int_to_ptr.hbm [resolvable:$true] %s28
      %s30 = sshll.u32 [#allocation2], 4
      %s31 = int_to_ptr.vmem [resolvable:$true] %s30
      %36 = dma.hbm_to_vmem [thread:$0]  %s29, 8192, %s31, [#allocation3], 256, 256, 16
    $region25: #{tpu_custom_call.1} parent=1 // pred_fallthru
      _
    // Predicated region
    $region26: #{tpu_custom_call.1} parent=1 // pred_check
      _
    $region27: #{tpu_custom_call.1} parent=1 // pred_check_branch
      %38 = sbr.rel (0) target = $region29
    $region28: #{tpu_custom_call.1} parent=1 // pred_region
      _
    $region29: #{tpu_custom_call.1} parent=1 // pred_fallthru
      _
    // Predicated region
    $region30: #{tpu_custom_call.1} parent=1 // pred_check
      _
    $region31: #{tpu_custom_call.1} parent=1 // pred_check_branch
      %40 = sbr.rel (0) target = $region33
    $region32: #{tpu_custom_call.1} parent=1 // pred_region
      %42 = dma.done [#allocation3], 8192
    $region33: #{tpu_custom_call.1} parent=1 // pred_fallthru
      _
    %v43 = vld [vmem:[%s0] sm:$0xff]
    %v44 = vld [vmem:[%s0 + $0x8] sm:$0xff]
    %v45 = vld [vmem:[%s0 + $0x10] sm:$0xff]
    %v46 = vld [vmem:[%s0 + $0x18] sm:$0xff]
    %v47 = vld [vmem:[%s0 + $0x20] sm:$0xff]
    %v48 = vld [vmem:[%s0 + $0x28] sm:$0xff]
    %v49 = vld [vmem:[%s0 + $0x30] sm:$0xff]
    %v50 = vld [vmem:[%s0 + $0x38] sm:$0xff]
    %v51 = vld [vmem:[%s0 + $0x40] sm:$0xff]
    %v52 = vld [vmem:[%s0 + $0x48] sm:$0xff]
    %v53 = vld [vmem:[%s0 + $0x50] sm:$0xff]
    %v54 = vld [vmem:[%s0 + $0x58] sm:$0xff]
    %v55 = vld [vmem:[%s0 + $0x60] sm:$0xff]
    %v56 = vld [vmem:[%s0 + $0x68] sm:$0xff]
    %v57 = vld [vmem:[%s0 + $0x70] sm:$0xff]
    %v58 = vld [vmem:[%s0 + $0x78] sm:$0xff]
    %v59 = vld [vmem:[%s0 + $0x80] sm:$0xff]
    %v60 = vld [vmem:[%s0 + $0x88] sm:$0xff]
    %v61 = vld [vmem:[%s0 + $0x90] sm:$0xff]
    %v62 = vld [vmem:[%s0 + $0x98] sm:$0xff]
    %v63 = vld [vmem:[%s0 + $0xa0] sm:$0xff]
    %v64 = vld [vmem:[%s0 + $0xa8] sm:$0xff]
    %v65 = vld [vmem:[%s0 + $0xb0] sm:$0xff]
    %v66 = vld [vmem:[%s0 + $0xb8] sm:$0xff]
    %v67 = vld [vmem:[%s0 + $0xc0] sm:$0xff]
    %v68 = vld [vmem:[%s0 + $0xc8] sm:$0xff]
    %v69 = vld [vmem:[%s0 + $0xd0] sm:$0xff]
    %v70 = vld [vmem:[%s0 + $0xd8] sm:$0xff]
    %v71 = vld [vmem:[%s0 + $0xe0] sm:$0xff]
    %v72 = vld [vmem:[%s0 + $0xe8] sm:$0xff]
    %v73 = vld [vmem:[%s0 + $0xf0] sm:$0xff]
    %v74 = vld [vmem:[%s0 + $0xf8] sm:$0xff]
    %v75 = vld [vmem:[%s1] sm:$0xff]
    %v76 = vld [vmem:[%s1 + $0x8] sm:$0xff]
    %v77 = vld [vmem:[%s1 + $0x10] sm:$0xff]
    %v78 = vld [vmem:[%s1 + $0x18] sm:$0xff]
    %v79 = vld [vmem:[%s2] sm:$0x1]
    %v81 = vperm.slane %v79, 0
    %vm83 = vcmask 261120
    %v85 = vsel %vm83, %v43, 0
    %v88 = vsel %vm83, %v44, 0
    %v91 = vsel %vm83, %v45, 0
    %v94 = vsel %vm83, %v46, 0
    %v97 = vsel %vm83, %v47, 0
    %v100 = vsel %vm83, %v48, 0
    %v103 = vsel %vm83, %v49, 0
    %v106 = vsel %vm83, %v50, 0
    %v109 = vsel %vm83, %v51, 0
    %v112 = vsel %vm83, %v52, 0
    %v115 = vsel %vm83, %v53, 0
    %v118 = vsel %vm83, %v54, 0
    %v121 = vsel %vm83, %v55, 0
    %v124 = vsel %vm83, %v56, 0
    %v127 = vsel %vm83, %v57, 0
    %v130 = vsel %vm83, %v58, 0
    %v133 = vsel %vm83, %v59, 0
    %v136 = vsel %vm83, %v60, 0
    %v139 = vsel %vm83, %v61, 0
    %v142 = vsel %vm83, %v62, 0
    %v145 = vsel %vm83, %v63, 0
    %v148 = vsel %vm83, %v64, 0
    %v151 = vsel %vm83, %v65, 0
    %v154 = vsel %vm83, %v66, 0
    %v157 = vsel %vm83, %v67, 0
    %v160 = vsel %vm83, %v68, 0
    %v163 = vsel %vm83, %v69, 0
    %v166 = vsel %vm83, %v70, 0
    %v169 = vsel %vm83, %v71, 0
    %v172 = vsel %vm83, %v72, 0
    %v175 = vsel %vm83, %v73, 0
    %v178 = vsel %vm83, %v74, 0
    %180 = vmatpush.msra.mxu0 0.0
    %181 = vmatpush.msra.mxu0 0.0
    %182 = vmatpush.msra.mxu0 0.0
    %183 = vmatpush.msra.mxu0 0.0
    %184 = vmatpush.msra.mxu0 0.0
    %185 = vmatpush.msra.mxu0 0.0
    %186 = vmatpush.msra.mxu0 0.0
    %187 = vmatpush.msra.mxu0 0.0
    %188 = vmatpush.msra.mxu0 0.0
    %189 = vmatpush.msra.mxu0 0.0
    %190 = vmatpush.msra.mxu0 0.0
    %191 = vmatpush.msra.mxu0 0.0
    %192 = vmatpush.msra.mxu0 %v78
    %193 = vmatpush.msra.mxu0 %v77
    %194 = vmatpush.msra.mxu0 %v76
    %195 = vmatpush.msra.mxu0 %v75
    %196 = vmatmul.f32.gmra.mxu0 %v85
    %v197 = vpop.f32.mrf.mxu0
    %v198 = vadd.f32 %v81, %v197
    %199 = vmatmul.f32.gmra.mxu0 %v88
    %v200 = vpop.f32.mrf.mxu0
    %v201 = vadd.f32 %v81, %v200
    %202 = vmatmul.f32.gmra.mxu0 %v91
    %v203 = vpop.f32.mrf.mxu0
    %v204 = vadd.f32 %v81, %v203
    %205 = vmatmul.f32.gmra.mxu0 %v94
    %v206 = vpop.f32.mrf.mxu0
    %v207 = vadd.f32 %v81, %v206
    %208 = vmatmul.f32.gmra.mxu0 %v97
    %v209 = vpop.f32.mrf.mxu0
    %v210 = vadd.f32 %v81, %v209
    %211 = vmatmul.f32.gmra.mxu0 %v100
    %v212 = vpop.f32.mrf.mxu0
    %v213 = vadd.f32 %v81, %v212
    %214 = vmatmul.f32.gmra.mxu0 %v103
    %v215 = vpop.f32.mrf.mxu0
    %v216 = vadd.f32 %v81, %v215
    %217 = vmatmul.f32.gmra.mxu0 %v106
    %v218 = vpop.f32.mrf.mxu0
    %v219 = vadd.f32 %v81, %v218
    %220 = vmatmul.f32.gmra.mxu0 %v109
    %v221 = vpop.f32.mrf.mxu0
    %v222 = vadd.f32 %v81, %v221
    %223 = vmatmul.f32.gmra.mxu0 %v112
    %v224 = vpop.f32.mrf.mxu0
    %v225 = vadd.f32 %v81, %v224
    %226 = vmatmul.f32.gmra.mxu0 %v115
    %v227 = vpop.f32.mrf.mxu0
    %v228 = vadd.f32 %v81, %v227
    %229 = vmatmul.f32.gmra.mxu0 %v118
    %v230 = vpop.f32.mrf.mxu0
    %v231 = vadd.f32 %v81, %v230
    %232 = vmatmul.f32.gmra.mxu0 %v121
    %v233 = vpop.f32.mrf.mxu0
    %v234 = vadd.f32 %v81, %v233
    %235 = vmatmul.f32.gmra.mxu0 %v124
    %v236 = vpop.f32.mrf.mxu0
    %v237 = vadd.f32 %v81, %v236
    %238 = vmatmul.f32.gmra.mxu0 %v127
    %v239 = vpop.f32.mrf.mxu0
    %v240 = vadd.f32 %v81, %v239
    %241 = vmatmul.f32.gmra.mxu0 %v130
    %v242 = vpop.f32.mrf.mxu0
    %v243 = vadd.f32 %v81, %v242
    %244 = vmatmul.f32.gmra.mxu0 %v133
    %v245 = vpop.f32.mrf.mxu0
    %v246 = vadd.f32 %v81, %v245
    %247 = vmatmul.f32.gmra.mxu0 %v136
    %v248 = vpop.f32.mrf.mxu0
    %v249 = vadd.f32 %v81, %v248
    %250 = vmatmul.f32.gmra.mxu0 %v139
    %v251 = vpop.f32.mrf.mxu0
    %v252 = vadd.f32 %v81, %v251
    %253 = vmatmul.f32.gmra.mxu0 %v142
    %v254 = vpop.f32.mrf.mxu0
    %v255 = vadd.f32 %v81, %v254
    %256 = vmatmul.f32.gmra.mxu0 %v145
    %v257 = vpop.f32.mrf.mxu0
    %v258 = vadd.f32 %v81, %v257
    %259 = vmatmul.f32.gmra.mxu0 %v148
    %v260 = vpop.f32.mrf.mxu0
    %v261 = vadd.f32 %v81, %v260
    %262 = vmatmul.f32.gmra.mxu0 %v151
    %v263 = vpop.f32.mrf.mxu0
    %v264 = vadd.f32 %v81, %v263
    %265 = vmatmul.f32.gmra.mxu0 %v154
    %v266 = vpop.f32.mrf.mxu0
    %v267 = vadd.f32 %v81, %v266
    %268 = vmatmul.f32.gmra.mxu0 %v157
    %v269 = vpop.f32.mrf.mxu0
    %v270 = vadd.f32 %v81, %v269
    %271 = vmatmul.f32.gmra.mxu0 %v160
    %v272 = vpop.f32.mrf.mxu0
    %v273 = vadd.f32 %v81, %v272
    %274 = vmatmul.f32.gmra.mxu0 %v163
    %v275 = vpop.f32.mrf.mxu0
    %v276 = vadd.f32 %v81, %v275
    %277 = vmatmul.f32.gmra.mxu0 %v166
    %v278 = vpop.f32.mrf.mxu0
    %v279 = vadd.f32 %v81, %v278
    %280 = vmatmul.f32.gmra.mxu0 %v169
    %v281 = vpop.f32.mrf.mxu0
    %v282 = vadd.f32 %v81, %v281
    %283 = vmatmul.f32.gmra.mxu0 %v172
    %v284 = vpop.f32.mrf.mxu0
    %v285 = vadd.f32 %v81, %v284
    %286 = vmatmul.f32.gmra.mxu0 %v175
    %v287 = vpop.f32.mrf.mxu0
    %v288 = vadd.f32 %v81, %v287
    %289 = vmatmul.f32.gmra.mxu0 %v178
    %v290 = vpop.f32.mrf.mxu0
    %v291 = vadd.f32 %v81, %v290
    %292 = vdwg.mxu0
    %v293 = vld [vmem:[#allocation2] sm:$0xff]
    %v294 = vld [vmem:[#allocation2 + $0x8] sm:$0xff]
    %v295 = vld [vmem:[#allocation2 + $0x10] sm:$0xff]
    %v296 = vld [vmem:[#allocation2 + $0x18] sm:$0xff]
    %v297 = vld [vmem:[#allocation2 + $0x20] sm:$0xff]
    %v298 = vld [vmem:[#allocation2 + $0x28] sm:$0xff]
    %v299 = vld [vmem:[#allocation2 + $0x30] sm:$0xff]
    %v300 = vld [vmem:[#allocation2 + $0x38] sm:$0xff]
    %v301 = vld [vmem:[#allocation2 + $0x40] sm:$0xff]
    %v302 = vld [vmem:[#allocation2 + $0x48] sm:$0xff]
    %v303 = vld [vmem:[#allocation2 + $0x50] sm:$0xff]
    %v304 = vld [vmem:[#allocation2 + $0x58] sm:$0xff]
    %v305 = vld [vmem:[#allocation2 + $0x60] sm:$0xff]
    %v306 = vld [vmem:[#allocation2 + $0x68] sm:$0xff]
    %v307 = vld [vmem:[#allocation2 + $0x70] sm:$0xff]
    %v308 = vld [vmem:[#allocation2 + $0x78] sm:$0xff]
    %v309 = vld [vmem:[#allocation2 + $0x80] sm:$0xff]
    %v310 = vld [vmem:[#allocation2 + $0x88] sm:$0xff]
    %v311 = vld [vmem:[#allocation2 + $0x90] sm:$0xff]
    %v312 = vld [vmem:[#allocation2 + $0x98] sm:$0xff]
    %v313 = vld [vmem:[#allocation2 + $0xa0] sm:$0xff]
    %v314 = vld [vmem:[#allocation2 + $0xa8] sm:$0xff]
    %v315 = vld [vmem:[#allocation2 + $0xb0] sm:$0xff]
    %v316 = vld [vmem:[#allocation2 + $0xb8] sm:$0xff]
    %v317 = vld [vmem:[#allocation2 + $0xc0] sm:$0xff]
    %v318 = vld [vmem:[#allocation2 + $0xc8] sm:$0xff]
    %v319 = vld [vmem:[#allocation2 + $0xd0] sm:$0xff]
    %v320 = vld [vmem:[#allocation2 + $0xd8] sm:$0xff]
    %v321 = vld [vmem:[#allocation2 + $0xe0] sm:$0xff]
    %v322 = vld [vmem:[#allocation2 + $0xe8] sm:$0xff]
    %v323 = vld [vmem:[#allocation2 + $0xf0] sm:$0xff]
    %v324 = vld [vmem:[#allocation2 + $0xf8] sm:$0xff]
    %v325 = vld [vmem:[#allocation2 + $0x100] sm:$0xff]
    %v326 = vld [vmem:[#allocation2 + $0x108] sm:$0xff]
    %v327 = vld [vmem:[#allocation2 + $0x110] sm:$0xff]
    %v328 = vld [vmem:[#allocation2 + $0x118] sm:$0xff]
    %v329 = vld [vmem:[#allocation2 + $0x120] sm:$0xff]
    %v330 = vld [vmem:[#allocation2 + $0x128] sm:$0xff]
    %v331 = vld [vmem:[#allocation2 + $0x130] sm:$0xff]
    %v332 = vld [vmem:[#allocation2 + $0x138] sm:$0xff]
    %v333 = vld [vmem:[#allocation2 + $0x140] sm:$0xff]
    %v334 = vld [vmem:[#allocation2 + $0x148] sm:$0xff]
    %v335 = vld [vmem:[#allocation2 + $0x150] sm:$0xff]
    %v336 = vld [vmem:[#allocation2 + $0x158] sm:$0xff]
    %v337 = vld [vmem:[#allocation2 + $0x160] sm:$0xff]
    %v338 = vld [vmem:[#allocation2 + $0x168] sm:$0xff]
    %v339 = vld [vmem:[#allocation2 + $0x170] sm:$0xff]
    %v340 = vld [vmem:[#allocation2 + $0x178] sm:$0xff]
    %v341 = vld [vmem:[#allocation2 + $0x180] sm:$0xff]
    %v342 = vld [vmem:[#allocation2 + $0x188] sm:$0xff]
    %v343 = vld [vmem:[#allocation2 + $0x190] sm:$0xff]
    %v344 = vld [vmem:[#allocation2 + $0x198] sm:$0xff]
    %v345 = vld [vmem:[#allocation2 + $0x1a0] sm:$0xff]
    %v346 = vld [vmem:[#allocation2 + $0x1a8] sm:$0xff]
    %v347 = vld [vmem:[#allocation2 + $0x1b0] sm:$0xff]
    %v348 = vld [vmem:[#allocation2 + $0x1b8] sm:$0xff]
    %v349 = vld [vmem:[#allocation2 + $0x1c0] sm:$0xff]
    %v350 = vld [vmem:[#allocation2 + $0x1c8] sm:$0xff]
    %v351 = vld [vmem:[#allocation2 + $0x1d0] sm:$0xff]
    %v352 = vld [vmem:[#allocation2 + $0x1d8] sm:$0xff]
    %v353 = vld [vmem:[#allocation2 + $0x1e0] sm:$0xff]
    %v354 = vld [vmem:[#allocation2 + $0x1e8] sm:$0xff]
    %v355 = vld [vmem:[#allocation2 + $0x1f0] sm:$0xff]
    %v356 = vld [vmem:[#allocation2 + $0x1f8] sm:$0xff]
    %v357 = vld [vmem:[%s6] sm:$0xff]
    %v358 = vld [vmem:[%s6 + $0x8] sm:$0xff]
    %v359 = vld [vmem:[%s6 + $0x10] sm:$0xff]
    %v360 = vld [vmem:[%s6 + $0x18] sm:$0xff]
    %v361 = vld [vmem:[%s6 + $0x20] sm:$0xff]
    %v362 = vld [vmem:[%s6 + $0x28] sm:$0xff]
    %v363 = vld [vmem:[%s6 + $0x30] sm:$0xff]
    %v364 = vld [vmem:[%s6 + $0x38] sm:$0xff]
    %397 = vrot.lane.b32.xlu0 %v198, 96
    %v398 = vpop.permute.xlu0 %397
    %399 = vrot.lane.b32.xlu0 %v201, 96
    %v400 = vpop.permute.xlu0 %399
    %401 = vrot.lane.b32.xlu0 %v204, 96
    %v402 = vpop.permute.xlu0 %401
    %403 = vrot.lane.b32.xlu0 %v207, 96
    %v404 = vpop.permute.xlu0 %403
    %405 = vrot.lane.b32.xlu0 %v210, 96
    %v406 = vpop.permute.xlu0 %405
    %407 = vrot.lane.b32.xlu0 %v213, 96
    %v408 = vpop.permute.xlu0 %407
    %409 = vrot.lane.b32.xlu0 %v216, 96
    %v410 = vpop.permute.xlu0 %409
    %411 = vrot.lane.b32.xlu0 %v219, 96
    %v412 = vpop.permute.xlu0 %411
    %413 = vrot.lane.b32.xlu0 %v222, 96
    %v414 = vpop.permute.xlu0 %413
    %415 = vrot.lane.b32.xlu0 %v225, 96
    %v416 = vpop.permute.xlu0 %415
    %417 = vrot.lane.b32.xlu0 %v228, 96
    %v418 = vpop.permute.xlu0 %417
    %419 = vrot.lane.b32.xlu0 %v231, 96
    %v420 = vpop.permute.xlu0 %419
    %421 = vrot.lane.b32.xlu0 %v234, 96
    %v422 = vpop.permute.xlu0 %421
    %423 = vrot.lane.b32.xlu0 %v237, 96
    %v424 = vpop.permute.xlu0 %423
    %425 = vrot.lane.b32.xlu0 %v240, 96
    %v426 = vpop.permute.xlu0 %425
    %427 = vrot.lane.b32.xlu0 %v243, 96
    %v428 = vpop.permute.xlu0 %427
    %429 = vrot.lane.b32.xlu0 %v246, 96
    %v430 = vpop.permute.xlu0 %429
    %431 = vrot.lane.b32.xlu0 %v249, 96
    %v432 = vpop.permute.xlu0 %431
    %433 = vrot.lane.b32.xlu0 %v252, 96
    %v434 = vpop.permute.xlu0 %433
    %435 = vrot.lane.b32.xlu0 %v255, 96
    %v436 = vpop.permute.xlu0 %435
    %437 = vrot.lane.b32.xlu0 %v258, 96
    %v438 = vpop.permute.xlu0 %437
    %439 = vrot.lane.b32.xlu0 %v261, 96
    %v440 = vpop.permute.xlu0 %439
    %441 = vrot.lane.b32.xlu0 %v264, 96
    %v442 = vpop.permute.xlu0 %441
    %443 = vrot.lane.b32.xlu0 %v267, 96
    %v444 = vpop.permute.xlu0 %443
    %445 = vrot.lane.b32.xlu0 %v270, 96
    %v446 = vpop.permute.xlu0 %445
    %447 = vrot.lane.b32.xlu0 %v273, 96
    %v448 = vpop.permute.xlu0 %447
    %449 = vrot.lane.b32.xlu0 %v276, 96
    %v450 = vpop.permute.xlu0 %449
    %451 = vrot.lane.b32.xlu0 %v279, 96
    %v452 = vpop.permute.xlu0 %451
    %453 = vrot.lane.b32.xlu0 %v282, 96
    %v454 = vpop.permute.xlu0 %453
    %455 = vrot.lane.b32.xlu0 %v285, 96
    %v456 = vpop.permute.xlu0 %455
    %457 = vrot.lane.b32.xlu0 %v288, 96
    %v458 = vpop.permute.xlu0 %457
    %459 = vrot.lane.b32.xlu0 %v291, 96
    %v460 = vpop.permute.xlu0 %459
    %vm461 = vcmask 64512
    %v462 = vsel %vm461, %v198, 0
    %v464 = vsel %vm461, %v201, 0
    %v466 = vsel %vm461, %v204, 0
    %v468 = vsel %vm461, %v207, 0
    %v470 = vsel %vm461, %v210, 0
    %v472 = vsel %vm461, %v213, 0
    %v474 = vsel %vm461, %v216, 0
    %v476 = vsel %vm461, %v219, 0
    %v478 = vsel %vm461, %v222, 0
    %v480 = vsel %vm461, %v225, 0
    %v482 = vsel %vm461, %v228, 0
    %v484 = vsel %vm461, %v231, 0
    %v486 = vsel %vm461, %v234, 0
    %v488 = vsel %vm461, %v237, 0
    %v490 = vsel %vm461, %v240, 0
    %v492 = vsel %vm461, %v243, 0
    %v494 = vsel %vm461, %v246, 0
    %v496 = vsel %vm461, %v249, 0
    %v498 = vsel %vm461, %v252, 0
    %v500 = vsel %vm461, %v255, 0
    %v502 = vsel %vm461, %v258, 0
    %v504 = vsel %vm461, %v261, 0
    %v506 = vsel %vm461, %v264, 0
    %v508 = vsel %vm461, %v267, 0
    %v510 = vsel %vm461, %v270, 0
    %v512 = vsel %vm461, %v273, 0
    %v514 = vsel %vm461, %v276, 0
    %v516 = vsel %vm461, %v279, 0
    %v518 = vsel %vm461, %v282, 0
    %v520 = vsel %vm461, %v285, 0
    %v522 = vsel %vm461, %v288, 0
    %v524 = vsel %vm461, %v291, 0
    %v526 = vsel %vm461, %v398, 0
    %v528 = vsel %vm461, %v400, 0
    %v530 = vsel %vm461, %v402, 0
    %v532 = vsel %vm461, %v404, 0
    %v534 = vsel %vm461, %v406, 0
    %v536 = vsel %vm461, %v408, 0
    %v538 = vsel %vm461, %v410, 0
    %v540 = vsel %vm461, %v412, 0
    %v542 = vsel %vm461, %v414, 0
    %v544 = vsel %vm461, %v416, 0
    %v546 = vsel %vm461, %v418, 0
    %v548 = vsel %vm461, %v420, 0
    %v550 = vsel %vm461, %v422, 0
    %v552 = vsel %vm461, %v424, 0
    %v554 = vsel %vm461, %v426, 0
    %v556 = vsel %vm461, %v428, 0
    %v558 = vsel %vm461, %v430, 0
    %v560 = vsel %vm461, %v432, 0
    %v562 = vsel %vm461, %v434, 0
    %v564 = vsel %vm461, %v436, 0
    %v566 = vsel %vm461, %v438, 0
    %v568 = vsel %vm461, %v440, 0
    %v570 = vsel %vm461, %v442, 0
    %v572 = vsel %vm461, %v444, 0
    %v574 = vsel %vm461, %v446, 0
    %v576 = vsel %vm461, %v448, 0
    %v578 = vsel %vm461, %v450, 0
    %v580 = vsel %vm461, %v452, 0
    %v582 = vsel %vm461, %v454, 0
    %v584 = vsel %vm461, %v456, 0
    %v586 = vsel %vm461, %v458, 0
    %v588 = vsel %vm461, %v460, 0
    %590 = vmatpush.xpose.msra.mxu0 %v556
    %591 = vmatpush.xpose.msra.mxu0 %v554
    %592 = vmatpush.xpose.msra.mxu0 %v552
    %593 = vmatpush.xpose.msra.mxu0 %v550
    %594 = vmatpush.xpose.msra.mxu0 %v548
    %595 = vmatpush.xpose.msra.mxu0 %v546
    %596 = vmatpush.xpose.msra.mxu0 %v544
    %597 = vmatpush.xpose.msra.mxu0 %v542
    %598 = vmatpush.xpose.msra.mxu0 %v540
    %599 = vmatpush.xpose.msra.mxu0 %v538
    %600 = vmatpush.xpose.msra.mxu0 %v536
    %601 = vmatpush.xpose.msra.mxu0 %v534
    %602 = vmatpush.xpose.msra.mxu0 %v532
    %603 = vmatpush.xpose.msra.mxu0 %v530
    %604 = vmatpush.xpose.msra.mxu0 %v528
    %605 = vmatpush.xpose.msra.mxu0 %v526
    %606 = vmatmul.f32.gmra.mxu0 %v462
    %v607 = vpop.f32.mrf.mxu0
    %v608 = vadd.f32 %v293, %v607
    %609 = vmatmul.f32.gmra.mxu0 %v464
    %v610 = vpop.f32.mrf.mxu0
    %v611 = vadd.f32 %v295, %v610
    %612 = vmatmul.f32.gmra.mxu0 %v466
    %v613 = vpop.f32.mrf.mxu0
    %v614 = vadd.f32 %v297, %v613
    %615 = vmatmul.f32.gmra.mxu0 %v468
    %v616 = vpop.f32.mrf.mxu0
    %v617 = vadd.f32 %v299, %v616
    %618 = vmatmul.f32.gmra.mxu0 %v470
    %v619 = vpop.f32.mrf.mxu0
    %v620 = vadd.f32 %v301, %v619
    %621 = vmatmul.f32.gmra.mxu0 %v472
    %v622 = vpop.f32.mrf.mxu0
    %v623 = vadd.f32 %v303, %v622
    %624 = vmatmul.f32.gmra.mxu0 %v474
    %v625 = vpop.f32.mrf.mxu0
    %v626 = vadd.f32 %v305, %v625
    %627 = vmatmul.f32.gmra.mxu0 %v476
    %v628 = vpop.f32.mrf.mxu0
    %v629 = vadd.f32 %v307, %v628
    %630 = vmatmul.f32.gmra.mxu0 %v478
    %v631 = vpop.f32.mrf.mxu0
    %v632 = vadd.f32 %v309, %v631
    %633 = vmatmul.f32.gmra.mxu0 %v480
    %v634 = vpop.f32.mrf.mxu0
    %v635 = vadd.f32 %v311, %v634
    %636 = vmatmul.f32.gmra.mxu0 %v482
    %v637 = vpop.f32.mrf.mxu0
    %v638 = vadd.f32 %v313, %v637
    %639 = vmatmul.f32.gmra.mxu0 %v484
    %v640 = vpop.f32.mrf.mxu0
    %v641 = vadd.f32 %v315, %v640
    %642 = vmatmul.f32.gmra.mxu0 %v486
    %v643 = vpop.f32.mrf.mxu0
    %v644 = vadd.f32 %v317, %v643
    %645 = vmatmul.f32.gmra.mxu0 %v488
    %v646 = vpop.f32.mrf.mxu0
    %v647 = vadd.f32 %v319, %v646
    %648 = vmatmul.f32.gmra.mxu0 %v490
    %v649 = vpop.f32.mrf.mxu0
    %v650 = vadd.f32 %v321, %v649
    %651 = vmatmul.f32.gmra.mxu0 %v492
    %v652 = vpop.f32.mrf.mxu0
    %v653 = vadd.f32 %v323, %v652
    %654 = vmatmul.f32.gmra.mxu0 %v494
    %v655 = vpop.f32.mrf.mxu0
    %v656 = vadd.f32 %v325, %v655
    %657 = vmatmul.f32.gmra.mxu0 %v496
    %v658 = vpop.f32.mrf.mxu0
    %v659 = vadd.f32 %v327, %v658
    %660 = vmatmul.f32.gmra.mxu0 %v498
    %v661 = vpop.f32.mrf.mxu0
    %v662 = vadd.f32 %v329, %v661
    %663 = vmatmul.f32.gmra.mxu0 %v500
    %v664 = vpop.f32.mrf.mxu0
    %v665 = vadd.f32 %v331, %v664
    %666 = vmatmul.f32.gmra.mxu0 %v502
    %v667 = vpop.f32.mrf.mxu0
    %v668 = vadd.f32 %v333, %v667
    %669 = vmatmul.f32.gmra.mxu0 %v504
    %v670 = vpop.f32.mrf.mxu0
    %v671 = vadd.f32 %v335, %v670
    %672 = vmatmul.f32.gmra.mxu0 %v506
    %v673 = vpop.f32.mrf.mxu0
    %v674 = vadd.f32 %v337, %v673
    %675 = vmatmul.f32.gmra.mxu0 %v508
    %v676 = vpop.f32.mrf.mxu0
    %v677 = vadd.f32 %v339, %v676
    %678 = vmatmul.f32.gmra.mxu0 %v510
    %v679 = vpop.f32.mrf.mxu0
    %v680 = vadd.f32 %v341, %v679
    %681 = vmatmul.f32.gmra.mxu0 %v512
    %v682 = vpop.f32.mrf.mxu0
    %v683 = vadd.f32 %v343, %v682
    %684 = vmatmul.f32.gmra.mxu0 %v514
    %v685 = vpop.f32.mrf.mxu0
    %v686 = vadd.f32 %v345, %v685
    %687 = vmatmul.f32.gmra.mxu0 %v516
    %v688 = vpop.f32.mrf.mxu0
    %v689 = vadd.f32 %v347, %v688
    %690 = vmatmul.f32.gmra.mxu0 %v518
    %v691 = vpop.f32.mrf.mxu0
    %v692 = vadd.f32 %v349, %v691
    %693 = vmatmul.f32.gmra.mxu0 %v520
    %v694 = vpop.f32.mrf.mxu0
    %v695 = vadd.f32 %v351, %v694
    %696 = vmatmul.f32.gmra.mxu0 %v522
    %v697 = vpop.f32.mrf.mxu0
    %v698 = vadd.f32 %v353, %v697
    %699 = vmatmul.f32.gmra.mxu0 %v524
    %v700 = vpop.f32.mrf.mxu0
    %v701 = vadd.f32 %v355, %v700
    %702 = vdwg.mxu0
    %703 = vmatpush.xpose.msra.mxu0 %v588
    %704 = vmatpush.xpose.msra.mxu0 %v586
    %705 = vmatpush.xpose.msra.mxu0 %v584
    %706 = vmatpush.xpose.msra.mxu0 %v582
    %707 = vmatpush.xpose.msra.mxu0 %v580
    %708 = vmatpush.xpose.msra.mxu0 %v578
    %709 = vmatpush.xpose.msra.mxu0 %v576
    %710 = vmatpush.xpose.msra.mxu0 %v574
    %711 = vmatpush.xpose.msra.mxu0 %v572
    %712 = vmatpush.xpose.msra.mxu0 %v570
    %713 = vmatpush.xpose.msra.mxu0 %v568
    %714 = vmatpush.xpose.msra.mxu0 %v566
    %715 = vmatpush.xpose.msra.mxu0 %v564
    %716 = vmatpush.xpose.msra.mxu0 %v562
    %717 = vmatpush.xpose.msra.mxu0 %v560
    %718 = vmatpush.xpose.msra.mxu0 %v558
    %719 = vmatmul.f32.gmra.mxu0 %v462
    %v720 = vpop.f32.mrf.mxu0
    %v721 = vadd.f32 %v294, %v720
    %722 = vmatmul.f32.gmra.mxu0 %v464
    %v723 = vpop.f32.mrf.mxu0
    %v724 = vadd.f32 %v296, %v723
    %725 = vmatmul.f32.gmra.mxu0 %v466
    %v726 = vpop.f32.mrf.mxu0
    %v727 = vadd.f32 %v298, %v726
    %728 = vmatmul.f32.gmra.mxu0 %v468
    %v729 = vpop.f32.mrf.mxu0
    %v730 = vadd.f32 %v300, %v729
    %731 = vmatmul.f32.gmra.mxu0 %v470
    %v732 = vpop.f32.mrf.mxu0
    %v733 = vadd.f32 %v302, %v732
    %734 = vmatmul.f32.gmra.mxu0 %v472
    %v735 = vpop.f32.mrf.mxu0
    %v736 = vadd.f32 %v304, %v735
    %737 = vmatmul.f32.gmra.mxu0 %v474
    %v738 = vpop.f32.mrf.mxu0
    %v739 = vadd.f32 %v306, %v738
    %740 = vmatmul.f32.gmra.mxu0 %v476
    %v741 = vpop.f32.mrf.mxu0
    %v742 = vadd.f32 %v308, %v741
    %743 = vmatmul.f32.gmra.mxu0 %v478
    %v744 = vpop.f32.mrf.mxu0
    %v745 = vadd.f32 %v310, %v744
    %746 = vmatmul.f32.gmra.mxu0 %v480
    %v747 = vpop.f32.mrf.mxu0
    %v748 = vadd.f32 %v312, %v747
    %749 = vmatmul.f32.gmra.mxu0 %v482
    %v750 = vpop.f32.mrf.mxu0
    %v751 = vadd.f32 %v314, %v750
    %752 = vmatmul.f32.gmra.mxu0 %v484
    %v753 = vpop.f32.mrf.mxu0
    %v754 = vadd.f32 %v316, %v753
    %755 = vmatmul.f32.gmra.mxu0 %v486
    %v756 = vpop.f32.mrf.mxu0
    %v757 = vadd.f32 %v318, %v756
    %758 = vmatmul.f32.gmra.mxu0 %v488
    %v759 = vpop.f32.mrf.mxu0
    %v760 = vadd.f32 %v320, %v759
    %761 = vmatmul.f32.gmra.mxu0 %v490
    %v762 = vpop.f32.mrf.mxu0
    %v763 = vadd.f32 %v322, %v762
    %764 = vmatmul.f32.gmra.mxu0 %v492
    %v765 = vpop.f32.mrf.mxu0
    %v766 = vadd.f32 %v324, %v765
    %767 = vmatmul.f32.gmra.mxu0 %v494
    %v768 = vpop.f32.mrf.mxu0
    %v769 = vadd.f32 %v326, %v768
    %770 = vmatmul.f32.gmra.mxu0 %v496
    %v771 = vpop.f32.mrf.mxu0
    %v772 = vadd.f32 %v328, %v771
    %773 = vmatmul.f32.gmra.mxu0 %v498
    %v774 = vpop.f32.mrf.mxu0
    %v775 = vadd.f32 %v330, %v774
    %776 = vmatmul.f32.gmra.mxu0 %v500
    %v777 = vpop.f32.mrf.mxu0
    %v778 = vadd.f32 %v332, %v777
    %779 = vmatmul.f32.gmra.mxu0 %v502
    %v780 = vpop.f32.mrf.mxu0
    %v781 = vadd.f32 %v334, %v780
    %782 = vmatmul.f32.gmra.mxu0 %v504
    %v783 = vpop.f32.mrf.mxu0
    %v784 = vadd.f32 %v336, %v783
    %785 = vmatmul.f32.gmra.mxu0 %v506
    %v786 = vpop.f32.mrf.mxu0
    %v787 = vadd.f32 %v338, %v786
    %788 = vmatmul.f32.gmra.mxu0 %v508
    %v789 = vpop.f32.mrf.mxu0
    %v790 = vadd.f32 %v340, %v789
    %791 = vmatmul.f32.gmra.mxu0 %v510
    %v792 = vpop.f32.mrf.mxu0
    %v793 = vadd.f32 %v342, %v792
    %794 = vmatmul.f32.gmra.mxu0 %v512
    %v795 = vpop.f32.mrf.mxu0
    %v796 = vadd.f32 %v344, %v795
    %797 = vmatmul.f32.gmra.mxu0 %v514
    %v798 = vpop.f32.mrf.mxu0
    %v799 = vadd.f32 %v346, %v798
    %800 = vmatmul.f32.gmra.mxu0 %v516
    %v801 = vpop.f32.mrf.mxu0
    %v802 = vadd.f32 %v348, %v801
    %803 = vmatmul.f32.gmra.mxu0 %v518
    %v804 = vpop.f32.mrf.mxu0
    %v805 = vadd.f32 %v350, %v804
    %806 = vmatmul.f32.gmra.mxu0 %v520
    %v807 = vpop.f32.mrf.mxu0
    %v808 = vadd.f32 %v352, %v807
    %809 = vmatmul.f32.gmra.mxu0 %v522
    %v810 = vpop.f32.mrf.mxu0
    %v811 = vadd.f32 %v354, %v810
    %812 = vmatmul.f32.gmra.mxu0 %v524
    %v813 = vpop.f32.mrf.mxu0
    %v814 = vadd.f32 %v356, %v813
    %815 = vdwg.mxu0
    %v816 = vmax.f32 %v608, %v721
    %817 = vmax.xlane.f32.xlu0 %v816
    %v818 = vpop.xlane.xlu0 %817
    %v819 = vmax.f32 %v611, %v724
    %820 = vmax.xlane.f32.xlu0 %v819
    %v821 = vpop.xlane.xlu0 %820
    %v822 = vmax.f32 %v614, %v727
    %823 = vmax.xlane.f32.xlu0 %v822
    %v824 = vpop.xlane.xlu0 %823
    %v825 = vmax.f32 %v617, %v730
    %826 = vmax.xlane.f32.xlu0 %v825
    %v827 = vpop.xlane.xlu0 %826
    %v828 = vmax.f32 %v620, %v733
    %829 = vmax.xlane.f32.xlu0 %v828
    %v830 = vpop.xlane.xlu0 %829
    %v831 = vmax.f32 %v623, %v736
    %832 = vmax.xlane.f32.xlu0 %v831
    %v833 = vpop.xlane.xlu0 %832
    %v834 = vmax.f32 %v626, %v739
    %835 = vmax.xlane.f32.xlu0 %v834
    %v836 = vpop.xlane.xlu0 %835
    %v837 = vmax.f32 %v629, %v742
    %838 = vmax.xlane.f32.xlu0 %v837
    %v839 = vpop.xlane.xlu0 %838
    %v840 = vmax.f32 %v632, %v745
    %841 = vmax.xlane.f32.xlu0 %v840
    %v842 = vpop.xlane.xlu0 %841
    %v843 = vmax.f32 %v635, %v748
    %844 = vmax.xlane.f32.xlu0 %v843
    %v845 = vpop.xlane.xlu0 %844
    %v846 = vmax.f32 %v638, %v751
    %847 = vmax.xlane.f32.xlu0 %v846
    %v848 = vpop.xlane.xlu0 %847
    %v849 = vmax.f32 %v641, %v754
    %850 = vmax.xlane.f32.xlu0 %v849
    %v851 = vpop.xlane.xlu0 %850
    %v852 = vmax.f32 %v644, %v757
    %853 = vmax.xlane.f32.xlu0 %v852
    %v854 = vpop.xlane.xlu0 %853
    %v855 = vmax.f32 %v647, %v760
    %856 = vmax.xlane.f32.xlu0 %v855
    %v857 = vpop.xlane.xlu0 %856
    %v858 = vmax.f32 %v650, %v763
    %859 = vmax.xlane.f32.xlu0 %v858
    %v860 = vpop.xlane.xlu0 %859
    %v861 = vmax.f32 %v653, %v766
    %862 = vmax.xlane.f32.xlu0 %v861
    %v863 = vpop.xlane.xlu0 %862
    %v864 = vmax.f32 %v656, %v769
    %865 = vmax.xlane.f32.xlu0 %v864
    %v866 = vpop.xlane.xlu0 %865
    %v867 = vmax.f32 %v659, %v772
    %868 = vmax.xlane.f32.xlu0 %v867
    %v869 = vpop.xlane.xlu0 %868
    %v870 = vmax.f32 %v662, %v775
    %871 = vmax.xlane.f32.xlu0 %v870
    %v872 = vpop.xlane.xlu0 %871
    %v873 = vmax.f32 %v665, %v778
    %874 = vmax.xlane.f32.xlu0 %v873
    %v875 = vpop.xlane.xlu0 %874
    %v876 = vmax.f32 %v668, %v781
    %877 = vmax.xlane.f32.xlu0 %v876
    %v878 = vpop.xlane.xlu0 %877
    %v879 = vmax.f32 %v671, %v784
    %880 = vmax.xlane.f32.xlu0 %v879
    %v881 = vpop.xlane.xlu0 %880
    %v882 = vmax.f32 %v674, %v787
    %883 = vmax.xlane.f32.xlu0 %v882
    %v884 = vpop.xlane.xlu0 %883
    %v885 = vmax.f32 %v677, %v790
    %886 = vmax.xlane.f32.xlu0 %v885
    %v887 = vpop.xlane.xlu0 %886
    %v888 = vmax.f32 %v680, %v793
    %889 = vmax.xlane.f32.xlu0 %v888
    %v890 = vpop.xlane.xlu0 %889
    %v891 = vmax.f32 %v683, %v796
    %892 = vmax.xlane.f32.xlu0 %v891
    %v893 = vpop.xlane.xlu0 %892
    %v894 = vmax.f32 %v686, %v799
    %895 = vmax.xlane.f32.xlu0 %v894
    %v896 = vpop.xlane.xlu0 %895
    %v897 = vmax.f32 %v689, %v802
    %898 = vmax.xlane.f32.xlu0 %v897
    %v899 = vpop.xlane.xlu0 %898
    %v900 = vmax.f32 %v692, %v805
    %901 = vmax.xlane.f32.xlu0 %v900
    %v902 = vpop.xlane.xlu0 %901
    %v903 = vmax.f32 %v695, %v808
    %904 = vmax.xlane.f32.xlu0 %v903
    %v905 = vpop.xlane.xlu0 %904
    %v906 = vmax.f32 %v698, %v811
    %907 = vmax.xlane.f32.xlu0 %v906
    %v908 = vpop.xlane.xlu0 %907
    %v909 = vmax.f32 %v701, %v814
    %910 = vmax.xlane.f32.xlu0 %v909
    %v911 = vpop.xlane.xlu0 %910
    %v912 = vsub.f32 %v608, %v818
    %v913 = vsub.f32 %v721, %v818
    %v914 = vsub.f32 %v611, %v821
    %v915 = vsub.f32 %v724, %v821
    %v916 = vsub.f32 %v614, %v824
    %v917 = vsub.f32 %v727, %v824
    %v918 = vsub.f32 %v617, %v827
    %v919 = vsub.f32 %v730, %v827
    %v920 = vsub.f32 %v620, %v830
    %v921 = vsub.f32 %v733, %v830
    %v922 = vsub.f32 %v623, %v833
    %v923 = vsub.f32 %v736, %v833
    %v924 = vsub.f32 %v626, %v836
    %v925 = vsub.f32 %v739, %v836
    %v926 = vsub.f32 %v629, %v839
    %v927 = vsub.f32 %v742, %v839
    %v928 = vsub.f32 %v632, %v842
    %v929 = vsub.f32 %v745, %v842
    %v930 = vsub.f32 %v635, %v845
    %v931 = vsub.f32 %v748, %v845
    %v932 = vsub.f32 %v638, %v848
    %v933 = vsub.f32 %v751, %v848
    %v934 = vsub.f32 %v641, %v851
    %v935 = vsub.f32 %v754, %v851
    %v936 = vsub.f32 %v644, %v854
    %v937 = vsub.f32 %v757, %v854
    %v938 = vsub.f32 %v647, %v857
    %v939 = vsub.f32 %v760, %v857
    %v940 = vsub.f32 %v650, %v860
    %v941 = vsub.f32 %v763, %v860
    %v942 = vsub.f32 %v653, %v863
    %v943 = vsub.f32 %v766, %v863
    %v944 = vsub.f32 %v656, %v866
    %v945 = vsub.f32 %v769, %v866
    %v946 = vsub.f32 %v659, %v869
    %v947 = vsub.f32 %v772, %v869
    %v948 = vsub.f32 %v662, %v872
    %v949 = vsub.f32 %v775, %v872
    %v950 = vsub.f32 %v665, %v875
    %v951 = vsub.f32 %v778, %v875
    %v952 = vsub.f32 %v668, %v878
    %v953 = vsub.f32 %v781, %v878
    %v954 = vsub.f32 %v671, %v881
    %v955 = vsub.f32 %v784, %v881
    %v956 = vsub.f32 %v674, %v884
    %v957 = vsub.f32 %v787, %v884
    %v958 = vsub.f32 %v677, %v887
    %v959 = vsub.f32 %v790, %v887
    %v960 = vsub.f32 %v680, %v890
    %v961 = vsub.f32 %v793, %v890
    %v962 = vsub.f32 %v683, %v893
    %v963 = vsub.f32 %v796, %v893
    %v964 = vsub.f32 %v686, %v896
    %v965 = vsub.f32 %v799, %v896
    %v966 = vsub.f32 %v689, %v899
    %v967 = vsub.f32 %v802, %v899
    %v968 = vsub.f32 %v692, %v902
    %v969 = vsub.f32 %v805, %v902
    %v970 = vsub.f32 %v695, %v905
    %v971 = vsub.f32 %v808, %v905
    %v972 = vsub.f32 %v698, %v908
    %v973 = vsub.f32 %v811, %v908
    %v974 = vsub.f32 %v701, %v911
    %v975 = vsub.f32 %v814, %v911
    %v976 = vmul.f32 %v912, 1.442695
    %v977 = vpow.pop %v976
    %v978 = vmul.f32 %v913, 1.442695
    %v979 = vpow.pop %v978
    %v980 = vmul.f32 %v914, 1.442695
    %v981 = vpow.pop %v980
    %v982 = vmul.f32 %v915, 1.442695
    %v983 = vpow.pop %v982
    %v984 = vmul.f32 %v916, 1.442695
    %v985 = vpow.pop %v984
    %v986 = vmul.f32 %v917, 1.442695
    %v987 = vpow.pop %v986
    %v988 = vmul.f32 %v918, 1.442695
    %v989 = vpow.pop %v988
    %v990 = vmul.f32 %v919, 1.442695
    %v991 = vpow.pop %v990
    %v992 = vmul.f32 %v920, 1.442695
    %v993 = vpow.pop %v992
    %v994 = vmul.f32 %v921, 1.442695
    %v995 = vpow.pop %v994
    %v996 = vmul.f32 %v922, 1.442695
    %v997 = vpow.pop %v996
    %v998 = vmul.f32 %v923, 1.442695
    %v999 = vpow.pop %v998
    %v1000 = vmul.f32 %v924, 1.442695
    %v1001 = vpow.pop %v1000
    %v1002 = vmul.f32 %v925, 1.442695
    %v1003 = vpow.pop %v1002
    %v1004 = vmul.f32 %v926, 1.442695
    %v1005 = vpow.pop %v1004
    %v1006 = vmul.f32 %v927, 1.442695
    %v1007 = vpow.pop %v1006
    %v1008 = vmul.f32 %v928, 1.442695
    %v1009 = vpow.pop %v1008
    %v1010 = vmul.f32 %v929, 1.442695
    %v1011 = vpow.pop %v1010
    %v1012 = vmul.f32 %v930, 1.442695
    %v1013 = vpow.pop %v1012
    %v1014 = vmul.f32 %v931, 1.442695
    %v1015 = vpow.pop %v1014
    %v1016 = vmul.f32 %v932, 1.442695
    %v1017 = vpow.pop %v1016
    %v1018 = vmul.f32 %v933, 1.442695
    %v1019 = vpow.pop %v1018
    %v1020 = vmul.f32 %v934, 1.442695
    %v1021 = vpow.pop %v1020
    %v1022 = vmul.f32 %v935, 1.442695
    %v1023 = vpow.pop %v1022
    %v1024 = vmul.f32 %v936, 1.442695
    %v1025 = vpow.pop %v1024
    %v1026 = vmul.f32 %v937, 1.442695
    %v1027 = vpow.pop %v1026
    %v1028 = vmul.f32 %v938, 1.442695
    %v1029 = vpow.pop %v1028
    %v1030 = vmul.f32 %v939, 1.442695
    %v1031 = vpow.pop %v1030
    %v1032 = vmul.f32 %v940, 1.442695
    %v1033 = vpow.pop %v1032
    %v1034 = vmul.f32 %v941, 1.442695
    %v1035 = vpow.pop %v1034
    %v1036 = vmul.f32 %v942, 1.442695
    %v1037 = vpow.pop %v1036
    %v1038 = vmul.f32 %v943, 1.442695
    %v1039 = vpow.pop %v1038
    %v1040 = vmul.f32 %v944, 1.442695
    %v1041 = vpow.pop %v1040
    %v1042 = vmul.f32 %v945, 1.442695
    %v1043 = vpow.pop %v1042
    %v1044 = vmul.f32 %v946, 1.442695
    %v1045 = vpow.pop %v1044
    %v1046 = vmul.f32 %v947, 1.442695
    %v1047 = vpow.pop %v1046
    %v1048 = vmul.f32 %v948, 1.442695
    %v1049 = vpow.pop %v1048
    %v1050 = vmul.f32 %v949, 1.442695
    %v1051 = vpow.pop %v1050
    %v1052 = vmul.f32 %v950, 1.442695
    %v1053 = vpow.pop %v1052
    %v1054 = vmul.f32 %v951, 1.442695
    %v1055 = vpow.pop %v1054
    %v1056 = vmul.f32 %v952, 1.442695
    %v1057 = vpow.pop %v1056
    %v1058 = vmul.f32 %v953, 1.442695
    %v1059 = vpow.pop %v1058
    %v1060 = vmul.f32 %v954, 1.442695
    %v1061 = vpow.pop %v1060
    %v1062 = vmul.f32 %v955, 1.442695
    %v1063 = vpow.pop %v1062
    %v1064 = vmul.f32 %v956, 1.442695
    %v1065 = vpow.pop %v1064
    %v1066 = vmul.f32 %v957, 1.442695
    %v1067 = vpow.pop %v1066
    %v1068 = vmul.f32 %v958, 1.442695
    %v1069 = vpow.pop %v1068
    %v1070 = vmul.f32 %v959, 1.442695
    %v1071 = vpow.pop %v1070
    %v1072 = vmul.f32 %v960, 1.442695
    %v1073 = vpow.pop %v1072
    %v1074 = vmul.f32 %v961, 1.442695
    %v1075 = vpow.pop %v1074
    %v1076 = vmul.f32 %v962, 1.442695
    %v1077 = vpow.pop %v1076
    %v1078 = vmul.f32 %v963, 1.442695
    %v1079 = vpow.pop %v1078
    %v1080 = vmul.f32 %v964, 1.442695
    %v1081 = vpow.pop %v1080
    %v1082 = vmul.f32 %v965, 1.442695
    %v1083 = vpow.pop %v1082
    %v1084 = vmul.f32 %v966, 1.442695
    %v1085 = vpow.pop %v1084
    %v1086 = vmul.f32 %v967, 1.442695
    %v1087 = vpow.pop %v1086
    %v1088 = vmul.f32 %v968, 1.442695
    %v1089 = vpow.pop %v1088
    %v1090 = vmul.f32 %v969, 1.442695
    %v1091 = vpow.pop %v1090
    %v1092 = vmul.f32 %v970, 1.442695
    %v1093 = vpow.pop %v1092
    %v1094 = vmul.f32 %v971, 1.442695
    %v1095 = vpow.pop %v1094
    %v1096 = vmul.f32 %v972, 1.442695
    %v1097 = vpow.pop %v1096
    %v1098 = vmul.f32 %v973, 1.442695
    %v1099 = vpow.pop %v1098
    %v1100 = vmul.f32 %v974, 1.442695
    %v1101 = vpow.pop %v1100
    %v1102 = vmul.f32 %v975, 1.442695
    %v1103 = vpow.pop %v1102
    %v1104 = vadd.f32 %v977, %v979
    %1105 = vadd.xlane.f32.xlu0 %v1104
    %v1106 = vpop.xlane.xlu0 %1105
    %v1107 = vadd.f32 %v981, %v983
    %1108 = vadd.xlane.f32.xlu0 %v1107
    %v1109 = vpop.xlane.xlu0 %1108
    %v1110 = vadd.f32 %v985, %v987
    %1111 = vadd.xlane.f32.xlu0 %v1110
    %v1112 = vpop.xlane.xlu0 %1111
    %v1113 = vadd.f32 %v989, %v991
    %1114 = vadd.xlane.f32.xlu0 %v1113
    %v1115 = vpop.xlane.xlu0 %1114
    %v1116 = vadd.f32 %v993, %v995
    %1117 = vadd.xlane.f32.xlu0 %v1116
    %v1118 = vpop.xlane.xlu0 %1117
    %v1119 = vadd.f32 %v997, %v999
    %1120 = vadd.xlane.f32.xlu0 %v1119
    %v1121 = vpop.xlane.xlu0 %1120
    %v1122 = vadd.f32 %v1001, %v1003
    %1123 = vadd.xlane.f32.xlu0 %v1122
    %v1124 = vpop.xlane.xlu0 %1123
    %v1125 = vadd.f32 %v1005, %v1007
    %1126 = vadd.xlane.f32.xlu0 %v1125
    %v1127 = vpop.xlane.xlu0 %1126
    %v1128 = vadd.f32 %v1009, %v1011
    %1129 = vadd.xlane.f32.xlu0 %v1128
    %v1130 = vpop.xlane.xlu0 %1129
    %v1131 = vadd.f32 %v1013, %v1015
    %1132 = vadd.xlane.f32.xlu0 %v1131
    %v1133 = vpop.xlane.xlu0 %1132
    %v1134 = vadd.f32 %v1017, %v1019
    %1135 = vadd.xlane.f32.xlu0 %v1134
    %v1136 = vpop.xlane.xlu0 %1135
    %v1137 = vadd.f32 %v1021, %v1023
    %1138 = vadd.xlane.f32.xlu0 %v1137
    %v1139 = vpop.xlane.xlu0 %1138
    %v1140 = vadd.f32 %v1025, %v1027
    %1141 = vadd.xlane.f32.xlu0 %v1140
    %v1142 = vpop.xlane.xlu0 %1141
    %v1143 = vadd.f32 %v1029, %v1031
    %1144 = vadd.xlane.f32.xlu0 %v1143
    %v1145 = vpop.xlane.xlu0 %1144
    %v1146 = vadd.f32 %v1033, %v1035
    %1147 = vadd.xlane.f32.xlu0 %v1146
    %v1148 = vpop.xlane.xlu0 %1147
    %v1149 = vadd.f32 %v1037, %v1039
    %1150 = vadd.xlane.f32.xlu0 %v1149
    %v1151 = vpop.xlane.xlu0 %1150
    %v1152 = vadd.f32 %v1041, %v1043
    %1153 = vadd.xlane.f32.xlu0 %v1152
    %v1154 = vpop.xlane.xlu0 %1153
    %v1155 = vadd.f32 %v1045, %v1047
    %1156 = vadd.xlane.f32.xlu0 %v1155
    %v1157 = vpop.xlane.xlu0 %1156
    %v1158 = vadd.f32 %v1049, %v1051
    %1159 = vadd.xlane.f32.xlu0 %v1158
    %v1160 = vpop.xlane.xlu0 %1159
    %v1161 = vadd.f32 %v1053, %v1055
    %1162 = vadd.xlane.f32.xlu0 %v1161
    %v1163 = vpop.xlane.xlu0 %1162
    %v1164 = vadd.f32 %v1057, %v1059
    %1165 = vadd.xlane.f32.xlu0 %v1164
    %v1166 = vpop.xlane.xlu0 %1165
    %v1167 = vadd.f32 %v1061, %v1063
    %1168 = vadd.xlane.f32.xlu0 %v1167
    %v1169 = vpop.xlane.xlu0 %1168
    %v1170 = vadd.f32 %v1065, %v1067
    %1171 = vadd.xlane.f32.xlu0 %v1170
    %v1172 = vpop.xlane.xlu0 %1171
    %v1173 = vadd.f32 %v1069, %v1071
    %1174 = vadd.xlane.f32.xlu0 %v1173
    %v1175 = vpop.xlane.xlu0 %1174
    %v1176 = vadd.f32 %v1073, %v1075
    %1177 = vadd.xlane.f32.xlu0 %v1176
    %v1178 = vpop.xlane.xlu0 %1177
    %v1179 = vadd.f32 %v1077, %v1079
    %1180 = vadd.xlane.f32.xlu0 %v1179
    %v1181 = vpop.xlane.xlu0 %1180
    %v1182 = vadd.f32 %v1081, %v1083
    %1183 = vadd.xlane.f32.xlu0 %v1182
    %v1184 = vpop.xlane.xlu0 %1183
    %v1185 = vadd.f32 %v1085, %v1087
    %1186 = vadd.xlane.f32.xlu0 %v1185
    %v1187 = vpop.xlane.xlu0 %1186
    %v1188 = vadd.f32 %v1089, %v1091
    %1189 = vadd.xlane.f32.xlu0 %v1188
    %v1190 = vpop.xlane.xlu0 %1189
    %v1191 = vadd.f32 %v1093, %v1095
    %1192 = vadd.xlane.f32.xlu0 %v1191
    %v1193 = vpop.xlane.xlu0 %1192
    %v1194 = vadd.f32 %v1097, %v1099
    %1195 = vadd.xlane.f32.xlu0 %v1194
    %v1196 = vpop.xlane.xlu0 %1195
    %v1197 = vadd.f32 %v1101, %v1103
    %1198 = vadd.xlane.f32.xlu0 %v1197
    %v1199 = vpop.xlane.xlu0 %1198
    %v1200 = vrcp.pop %v1106
    %v1201 = vmul.f32 %v1106, %v1200
    %v1202 = vsub.f32 1.0, %v1201
    %v1203 = vmul.f32 %v1200, %v1202
    %v1204 = vadd.f32 %v1200, %v1203
    %vm1205 = vweird.f32 %v1106
    %vm1206 = vweird.f32 %v1200
    %vm1207 = vmor %vm1205, %vm1206
    %v1208 = vsel %vm1207, %v1200, %v1204
    %v1209 = vand.u32 2147483647, %v1106
    %vm1210 = vcmp.eq.f32.partialorder %v1209, 8.507059e+37
    %v1211 = vand.u32 %v1106, 2147483648
    %v1212 = vor.u32 1.1754944e-38, %v1211
    %v1213 = vsel %vm1210, %v1212, %v1208
    %v1214 = vrcp.pop %v1109
    %v1215 = vmul.f32 %v1109, %v1214
    %v1216 = vsub.f32 1.0, %v1215
    %v1217 = vmul.f32 %v1214, %v1216
    %v1218 = vadd.f32 %v1214, %v1217
    %vm1219 = vweird.f32 %v1109
    %vm1220 = vweird.f32 %v1214
    %vm1221 = vmor %vm1219, %vm1220
    %v1222 = vsel %vm1221, %v1214, %v1218
    %v1223 = vand.u32 2147483647, %v1109
    %vm1224 = vcmp.eq.f32.partialorder %v1223, 8.507059e+37
    %v1225 = vand.u32 %v1109, 2147483648
    %v1226 = vor.u32 1.1754944e-38, %v1225
    %v1227 = vsel %vm1224, %v1226, %v1222
    %v1228 = vrcp.pop %v1112
    %v1229 = vmul.f32 %v1112, %v1228
    %v1230 = vsub.f32 1.0, %v1229
    %v1231 = vmul.f32 %v1228, %v1230
    %v1232 = vadd.f32 %v1228, %v1231
    %vm1233 = vweird.f32 %v1112
    %vm1234 = vweird.f32 %v1228
    %vm1235 = vmor %vm1233, %vm1234
    %v1236 = vsel %vm1235, %v1228, %v1232
    %v1237 = vand.u32 2147483647, %v1112
    %vm1238 = vcmp.eq.f32.partialorder %v1237, 8.507059e+37
    %v1239 = vand.u32 %v1112, 2147483648
    %v1240 = vor.u32 1.1754944e-38, %v1239
    %v1241 = vsel %vm1238, %v1240, %v1236
    %v1242 = vrcp.pop %v1115
    %v1243 = vmul.f32 %v1115, %v1242
    %v1244 = vsub.f32 1.0, %v1243
    %v1245 = vmul.f32 %v1242, %v1244
    %v1246 = vadd.f32 %v1242, %v1245
    %vm1247 = vweird.f32 %v1115
    %vm1248 = vweird.f32 %v1242
    %vm1249 = vmor %vm1247, %vm1248
    %v1250 = vsel %vm1249, %v1242, %v1246
    %v1251 = vand.u32 2147483647, %v1115
    %vm1252 = vcmp.eq.f32.partialorder %v1251, 8.507059e+37
    %v1253 = vand.u32 %v1115, 2147483648
    %v1254 = vor.u32 1.1754944e-38, %v1253
    %v1255 = vsel %vm1252, %v1254, %v1250
    %v1256 = vrcp.pop %v1118
    %v1257 = vmul.f32 %v1118, %v1256
    %v1258 = vsub.f32 1.0, %v1257
    %v1259 = vmul.f32 %v1256, %v1258
    %v1260 = vadd.f32 %v1256, %v1259
    %vm1261 = vweird.f32 %v1118
    %vm1262 = vweird.f32 %v1256
    %vm1263 = vmor %vm1261, %vm1262
    %v1264 = vsel %vm1263, %v1256, %v1260
    %v1265 = vand.u32 2147483647, %v1118
    %vm1266 = vcmp.eq.f32.partialorder %v1265, 8.507059e+37
    %v1267 = vand.u32 %v1118, 2147483648
    %v1268 = vor.u32 1.1754944e-38, %v1267
    %v1269 = vsel %vm1266, %v1268, %v1264
    %v1270 = vrcp.pop %v1121
    %v1271 = vmul.f32 %v1121, %v1270
    %v1272 = vsub.f32 1.0, %v1271
    %v1273 = vmul.f32 %v1270, %v1272
    %v1274 = vadd.f32 %v1270, %v1273
    %vm1275 = vweird.f32 %v1121
    %vm1276 = vweird.f32 %v1270
    %vm1277 = vmor %vm1275, %vm1276
    %v1278 = vsel %vm1277, %v1270, %v1274
    %v1279 = vand.u32 2147483647, %v1121
    %vm1280 = vcmp.eq.f32.partialorder %v1279, 8.507059e+37
    %v1281 = vand.u32 %v1121, 2147483648
    %v1282 = vor.u32 1.1754944e-38, %v1281
    %v1283 = vsel %vm1280, %v1282, %v1278
    %v1284 = vrcp.pop %v1124
    %v1285 = vmul.f32 %v1124, %v1284
    %v1286 = vsub.f32 1.0, %v1285
    %v1287 = vmul.f32 %v1284, %v1286
    %v1288 = vadd.f32 %v1284, %v1287
    %vm1289 = vweird.f32 %v1124
    %vm1290 = vweird.f32 %v1284
    %vm1291 = vmor %vm1289, %vm1290
    %v1292 = vsel %vm1291, %v1284, %v1288
    %v1293 = vand.u32 2147483647, %v1124
    %vm1294 = vcmp.eq.f32.partialorder %v1293, 8.507059e+37
    %v1295 = vand.u32 %v1124, 2147483648
    %v1296 = vor.u32 1.1754944e-38, %v1295
    %v1297 = vsel %vm1294, %v1296, %v1292
    %v1298 = vrcp.pop %v1127
    %v1299 = vmul.f32 %v1127, %v1298
    %v1300 = vsub.f32 1.0, %v1299
    %v1301 = vmul.f32 %v1298, %v1300
    %v1302 = vadd.f32 %v1298, %v1301
    %vm1303 = vweird.f32 %v1127
    %vm1304 = vweird.f32 %v1298
    %vm1305 = vmor %vm1303, %vm1304
    %v1306 = vsel %vm1305, %v1298, %v1302
    %v1307 = vand.u32 2147483647, %v1127
    %vm1308 = vcmp.eq.f32.partialorder %v1307, 8.507059e+37
    %v1309 = vand.u32 %v1127, 2147483648
    %v1310 = vor.u32 1.1754944e-38, %v1309
    %v1311 = vsel %vm1308, %v1310, %v1306
    %v1312 = vrcp.pop %v1130
    %v1313 = vmul.f32 %v1130, %v1312
    %v1314 = vsub.f32 1.0, %v1313
    %v1315 = vmul.f32 %v1312, %v1314
    %v1316 = vadd.f32 %v1312, %v1315
    %vm1317 = vweird.f32 %v1130
    %vm1318 = vweird.f32 %v1312
    %vm1319 = vmor %vm1317, %vm1318
    %v1320 = vsel %vm1319, %v1312, %v1316
    %v1321 = vand.u32 2147483647, %v1130
    %vm1322 = vcmp.eq.f32.partialorder %v1321, 8.507059e+37
    %v1323 = vand.u32 %v1130, 2147483648
    %v1324 = vor.u32 1.1754944e-38, %v1323
    %v1325 = vsel %vm1322, %v1324, %v1320
    %v1326 = vrcp.pop %v1133
    %v1327 = vmul.f32 %v1133, %v1326
    %v1328 = vsub.f32 1.0, %v1327
    %v1329 = vmul.f32 %v1326, %v1328
    %v1330 = vadd.f32 %v1326, %v1329
    %vm1331 = vweird.f32 %v1133
    %vm1332 = vweird.f32 %v1326
    %vm1333 = vmor %vm1331, %vm1332
    %v1334 = vsel %vm1333, %v1326, %v1330
    %v1335 = vand.u32 2147483647, %v1133
    %vm1336 = vcmp.eq.f32.partialorder %v1335, 8.507059e+37
    %v1337 = vand.u32 %v1133, 2147483648
    %v1338 = vor.u32 1.1754944e-38, %v1337
    %v1339 = vsel %vm1336, %v1338, %v1334
    %v1340 = vrcp.pop %v1136
    %v1341 = vmul.f32 %v1136, %v1340
    %v1342 = vsub.f32 1.0, %v1341
    %v1343 = vmul.f32 %v1340, %v1342
    %v1344 = vadd.f32 %v1340, %v1343
    %vm1345 = vweird.f32 %v1136
    %vm1346 = vweird.f32 %v1340
    %vm1347 = vmor %vm1345, %vm1346
    %v1348 = vsel %vm1347, %v1340, %v1344
    %v1349 = vand.u32 2147483647, %v1136
    %vm1350 = vcmp.eq.f32.partialorder %v1349, 8.507059e+37
    %v1351 = vand.u32 %v1136, 2147483648
    %v1352 = vor.u32 1.1754944e-38, %v1351
    %v1353 = vsel %vm1350, %v1352, %v1348
    %v1354 = vrcp.pop %v1139
    %v1355 = vmul.f32 %v1139, %v1354
    %v1356 = vsub.f32 1.0, %v1355
    %v1357 = vmul.f32 %v1354, %v1356
    %v1358 = vadd.f32 %v1354, %v1357
    %vm1359 = vweird.f32 %v1139
    %vm1360 = vweird.f32 %v1354
    %vm1361 = vmor %vm1359, %vm1360
    %v1362 = vsel %vm1361, %v1354, %v1358
    %v1363 = vand.u32 2147483647, %v1139
    %vm1364 = vcmp.eq.f32.partialorder %v1363, 8.507059e+37
    %v1365 = vand.u32 %v1139, 2147483648
    %v1366 = vor.u32 1.1754944e-38, %v1365
    %v1367 = vsel %vm1364, %v1366, %v1362
    %v1368 = vrcp.pop %v1142
    %v1369 = vmul.f32 %v1142, %v1368
    %v1370 = vsub.f32 1.0, %v1369
    %v1371 = vmul.f32 %v1368, %v1370
    %v1372 = vadd.f32 %v1368, %v1371
    %vm1373 = vweird.f32 %v1142
    %vm1374 = vweird.f32 %v1368
    %vm1375 = vmor %vm1373, %vm1374
    %v1376 = vsel %vm1375, %v1368, %v1372
    %v1377 = vand.u32 2147483647, %v1142
    %vm1378 = vcmp.eq.f32.partialorder %v1377, 8.507059e+37
    %v1379 = vand.u32 %v1142, 2147483648
    %v1380 = vor.u32 1.1754944e-38, %v1379
    %v1381 = vsel %vm1378, %v1380, %v1376
    %v1382 = vrcp.pop %v1145
    %v1383 = vmul.f32 %v1145, %v1382
    %v1384 = vsub.f32 1.0, %v1383
    %v1385 = vmul.f32 %v1382, %v1384
    %v1386 = vadd.f32 %v1382, %v1385
    %vm1387 = vweird.f32 %v1145
    %vm1388 = vweird.f32 %v1382
    %vm1389 = vmor %vm1387, %vm1388
    %v1390 = vsel %vm1389, %v1382, %v1386
    %v1391 = vand.u32 2147483647, %v1145
    %vm1392 = vcmp.eq.f32.partialorder %v1391, 8.507059e+37
    %v1393 = vand.u32 %v1145, 2147483648
    %v1394 = vor.u32 1.1754944e-38, %v1393
    %v1395 = vsel %vm1392, %v1394, %v1390
    %v1396 = vrcp.pop %v1148
    %v1397 = vmul.f32 %v1148, %v1396
    %v1398 = vsub.f32 1.0, %v1397
    %v1399 = vmul.f32 %v1396, %v1398
    %v1400 = vadd.f32 %v1396, %v1399
    %vm1401 = vweird.f32 %v1148
    %vm1402 = vweird.f32 %v1396
    %vm1403 = vmor %vm1401, %vm1402
    %v1404 = vsel %vm1403, %v1396, %v1400
    %v1405 = vand.u32 2147483647, %v1148
    %vm1406 = vcmp.eq.f32.partialorder %v1405, 8.507059e+37
    %v1407 = vand.u32 %v1148, 2147483648
    %v1408 = vor.u32 1.1754944e-38, %v1407
    %v1409 = vsel %vm1406, %v1408, %v1404
    %v1410 = vrcp.pop %v1151
    %v1411 = vmul.f32 %v1151, %v1410
    %v1412 = vsub.f32 1.0, %v1411
    %v1413 = vmul.f32 %v1410, %v1412
    %v1414 = vadd.f32 %v1410, %v1413
    %vm1415 = vweird.f32 %v1151
    %vm1416 = vweird.f32 %v1410
    %vm1417 = vmor %vm1415, %vm1416
    %v1418 = vsel %vm1417, %v1410, %v1414
    %v1419 = vand.u32 2147483647, %v1151
    %vm1420 = vcmp.eq.f32.partialorder %v1419, 8.507059e+37
    %v1421 = vand.u32 %v1151, 2147483648
    %v1422 = vor.u32 1.1754944e-38, %v1421
    %v1423 = vsel %vm1420, %v1422, %v1418
    %v1424 = vrcp.pop %v1154
    %v1425 = vmul.f32 %v1154, %v1424
    %v1426 = vsub.f32 1.0, %v1425
    %v1427 = vmul.f32 %v1424, %v1426
    %v1428 = vadd.f32 %v1424, %v1427
    %vm1429 = vweird.f32 %v1154
    %vm1430 = vweird.f32 %v1424
    %vm1431 = vmor %vm1429, %vm1430
    %v1432 = vsel %vm1431, %v1424, %v1428
    %v1433 = vand.u32 2147483647, %v1154
    %vm1434 = vcmp.eq.f32.partialorder %v1433, 8.507059e+37
    %v1435 = vand.u32 %v1154, 2147483648
    %v1436 = vor.u32 1.1754944e-38, %v1435
    %v1437 = vsel %vm1434, %v1436, %v1432
    %v1438 = vrcp.pop %v1157
    %v1439 = vmul.f32 %v1157, %v1438
    %v1440 = vsub.f32 1.0, %v1439
    %v1441 = vmul.f32 %v1438, %v1440
    %v1442 = vadd.f32 %v1438, %v1441
    %vm1443 = vweird.f32 %v1157
    %vm1444 = vweird.f32 %v1438
    %vm1445 = vmor %vm1443, %vm1444
    %v1446 = vsel %vm1445, %v1438, %v1442
    %v1447 = vand.u32 2147483647, %v1157
    %vm1448 = vcmp.eq.f32.partialorder %v1447, 8.507059e+37
    %v1449 = vand.u32 %v1157, 2147483648
    %v1450 = vor.u32 1.1754944e-38, %v1449
    %v1451 = vsel %vm1448, %v1450, %v1446
    %v1452 = vrcp.pop %v1160
    %v1453 = vmul.f32 %v1160, %v1452
    %v1454 = vsub.f32 1.0, %v1453
    %v1455 = vmul.f32 %v1452, %v1454
    %v1456 = vadd.f32 %v1452, %v1455
    %vm1457 = vweird.f32 %v1160
    %vm1458 = vweird.f32 %v1452
    %vm1459 = vmor %vm1457, %vm1458
    %v1460 = vsel %vm1459, %v1452, %v1456
    %v1461 = vand.u32 2147483647, %v1160
    %vm1462 = vcmp.eq.f32.partialorder %v1461, 8.507059e+37
    %v1463 = vand.u32 %v1160, 2147483648
    %v1464 = vor.u32 1.1754944e-38, %v1463
    %v1465 = vsel %vm1462, %v1464, %v1460
    %v1466 = vrcp.pop %v1163
    %v1467 = vmul.f32 %v1163, %v1466
    %v1468 = vsub.f32 1.0, %v1467
    %v1469 = vmul.f32 %v1466, %v1468
    %v1470 = vadd.f32 %v1466, %v1469
    %vm1471 = vweird.f32 %v1163
    %vm1472 = vweird.f32 %v1466
    %vm1473 = vmor %vm1471, %vm1472
    %v1474 = vsel %vm1473, %v1466, %v1470
    %v1475 = vand.u32 2147483647, %v1163
    %vm1476 = vcmp.eq.f32.partialorder %v1475, 8.507059e+37
    %v1477 = vand.u32 %v1163, 2147483648
    %v1478 = vor.u32 1.1754944e-38, %v1477
    %v1479 = vsel %vm1476, %v1478, %v1474
    %v1480 = vrcp.pop %v1166
    %v1481 = vmul.f32 %v1166, %v1480
    %v1482 = vsub.f32 1.0, %v1481
    %v1483 = vmul.f32 %v1480, %v1482
    %v1484 = vadd.f32 %v1480, %v1483
    %vm1485 = vweird.f32 %v1166
    %vm1486 = vweird.f32 %v1480
    %vm1487 = vmor %vm1485, %vm1486
    %v1488 = vsel %vm1487, %v1480, %v1484
    %v1489 = vand.u32 2147483647, %v1166
    %vm1490 = vcmp.eq.f32.partialorder %v1489, 8.507059e+37
    %v1491 = vand.u32 %v1166, 2147483648
    %v1492 = vor.u32 1.1754944e-38, %v1491
    %v1493 = vsel %vm1490, %v1492, %v1488
    %v1494 = vrcp.pop %v1169
    %v1495 = vmul.f32 %v1169, %v1494
    %v1496 = vsub.f32 1.0, %v1495
    %v1497 = vmul.f32 %v1494, %v1496
    %v1498 = vadd.f32 %v1494, %v1497
    %vm1499 = vweird.f32 %v1169
    %vm1500 = vweird.f32 %v1494
    %vm1501 = vmor %vm1499, %vm1500
    %v1502 = vsel %vm1501, %v1494, %v1498
    %v1503 = vand.u32 2147483647, %v1169
    %vm1504 = vcmp.eq.f32.partialorder %v1503, 8.507059e+37
    %v1505 = vand.u32 %v1169, 2147483648
    %v1506 = vor.u32 1.1754944e-38, %v1505
    %v1507 = vsel %vm1504, %v1506, %v1502
    %v1508 = vrcp.pop %v1172
    %v1509 = vmul.f32 %v1172, %v1508
    %v1510 = vsub.f32 1.0, %v1509
    %v1511 = vmul.f32 %v1508, %v1510
    %v1512 = vadd.f32 %v1508, %v1511
    %vm1513 = vweird.f32 %v1172
    %vm1514 = vweird.f32 %v1508
    %vm1515 = vmor %vm1513, %vm1514
    %v1516 = vsel %vm1515, %v1508, %v1512
    %v1517 = vand.u32 2147483647, %v1172
    %vm1518 = vcmp.eq.f32.partialorder %v1517, 8.507059e+37
    %v1519 = vand.u32 %v1172, 2147483648
    %v1520 = vor.u32 1.1754944e-38, %v1519
    %v1521 = vsel %vm1518, %v1520, %v1516
    %v1522 = vrcp.pop %v1175
    %v1523 = vmul.f32 %v1175, %v1522
    %v1524 = vsub.f32 1.0, %v1523
    %v1525 = vmul.f32 %v1522, %v1524
    %v1526 = vadd.f32 %v1522, %v1525
    %vm1527 = vweird.f32 %v1175
    %vm1528 = vweird.f32 %v1522
    %vm1529 = vmor %vm1527, %vm1528
    %v1530 = vsel %vm1529, %v1522, %v1526
    %v1531 = vand.u32 2147483647, %v1175
    %vm1532 = vcmp.eq.f32.partialorder %v1531, 8.507059e+37
    %v1533 = vand.u32 %v1175, 2147483648
    %v1534 = vor.u32 1.1754944e-38, %v1533
    %v1535 = vsel %vm1532, %v1534, %v1530
    %v1536 = vrcp.pop %v1178
    %v1537 = vmul.f32 %v1178, %v1536
    %v1538 = vsub.f32 1.0, %v1537
    %v1539 = vmul.f32 %v1536, %v1538
    %v1540 = vadd.f32 %v1536, %v1539
    %vm1541 = vweird.f32 %v1178
    %vm1542 = vweird.f32 %v1536
    %vm1543 = vmor %vm1541, %vm1542
    %v1544 = vsel %vm1543, %v1536, %v1540
    %v1545 = vand.u32 2147483647, %v1178
    %vm1546 = vcmp.eq.f32.partialorder %v1545, 8.507059e+37
    %v1547 = vand.u32 %v1178, 2147483648
    %v1548 = vor.u32 1.1754944e-38, %v1547
    %v1549 = vsel %vm1546, %v1548, %v1544
    %v1550 = vrcp.pop %v1181
    %v1551 = vmul.f32 %v1181, %v1550
    %v1552 = vsub.f32 1.0, %v1551
    %v1553 = vmul.f32 %v1550, %v1552
    %v1554 = vadd.f32 %v1550, %v1553
    %vm1555 = vweird.f32 %v1181
    %vm1556 = vweird.f32 %v1550
    %vm1557 = vmor %vm1555, %vm1556
    %v1558 = vsel %vm1557, %v1550, %v1554
    %v1559 = vand.u32 2147483647, %v1181
    %vm1560 = vcmp.eq.f32.partialorder %v1559, 8.507059e+37
    %v1561 = vand.u32 %v1181, 2147483648
    %v1562 = vor.u32 1.1754944e-38, %v1561
    %v1563 = vsel %vm1560, %v1562, %v1558
    %v1564 = vrcp.pop %v1184
    %v1565 = vmul.f32 %v1184, %v1564
    %v1566 = vsub.f32 1.0, %v1565
    %v1567 = vmul.f32 %v1564, %v1566
    %v1568 = vadd.f32 %v1564, %v1567
    %vm1569 = vweird.f32 %v1184
    %vm1570 = vweird.f32 %v1564
    %vm1571 = vmor %vm1569, %vm1570
    %v1572 = vsel %vm1571, %v1564, %v1568
    %v1573 = vand.u32 2147483647, %v1184
    %vm1574 = vcmp.eq.f32.partialorder %v1573, 8.507059e+37
    %v1575 = vand.u32 %v1184, 2147483648
    %v1576 = vor.u32 1.1754944e-38, %v1575
    %v1577 = vsel %vm1574, %v1576, %v1572
    %v1578 = vrcp.pop %v1187
    %v1579 = vmul.f32 %v1187, %v1578
    %v1580 = vsub.f32 1.0, %v1579
    %v1581 = vmul.f32 %v1578, %v1580
    %v1582 = vadd.f32 %v1578, %v1581
    %vm1583 = vweird.f32 %v1187
    %vm1584 = vweird.f32 %v1578
    %vm1585 = vmor %vm1583, %vm1584
    %v1586 = vsel %vm1585, %v1578, %v1582
    %v1587 = vand.u32 2147483647, %v1187
    %vm1588 = vcmp.eq.f32.partialorder %v1587, 8.507059e+37
    %v1589 = vand.u32 %v1187, 2147483648
    %v1590 = vor.u32 1.1754944e-38, %v1589
    %v1591 = vsel %vm1588, %v1590, %v1586
    %v1592 = vrcp.pop %v1190
    %v1593 = vmul.f32 %v1190, %v1592
    %v1594 = vsub.f32 1.0, %v1593
    %v1595 = vmul.f32 %v1592, %v1594
    %v1596 = vadd.f32 %v1592, %v1595
    %vm1597 = vweird.f32 %v1190
    %vm1598 = vweird.f32 %v1592
    %vm1599 = vmor %vm1597, %vm1598
    %v1600 = vsel %vm1599, %v1592, %v1596
    %v1601 = vand.u32 2147483647, %v1190
    %vm1602 = vcmp.eq.f32.partialorder %v1601, 8.507059e+37
    %v1603 = vand.u32 %v1190, 2147483648
    %v1604 = vor.u32 1.1754944e-38, %v1603
    %v1605 = vsel %vm1602, %v1604, %v1600
    %v1606 = vrcp.pop %v1193
    %v1607 = vmul.f32 %v1193, %v1606
    %v1608 = vsub.f32 1.0, %v1607
    %v1609 = vmul.f32 %v1606, %v1608
    %v1610 = vadd.f32 %v1606, %v1609
    %vm1611 = vweird.f32 %v1193
    %vm1612 = vweird.f32 %v1606
    %vm1613 = vmor %vm1611, %vm1612
    %v1614 = vsel %vm1613, %v1606, %v1610
    %v1615 = vand.u32 2147483647, %v1193
    %vm1616 = vcmp.eq.f32.partialorder %v1615, 8.507059e+37
    %v1617 = vand.u32 %v1193, 2147483648
    %v1618 = vor.u32 1.1754944e-38, %v1617
    %v1619 = vsel %vm1616, %v1618, %v1614
    %v1620 = vrcp.pop %v1196
    %v1621 = vmul.f32 %v1196, %v1620
    %v1622 = vsub.f32 1.0, %v1621
    %v1623 = vmul.f32 %v1620, %v1622
    %v1624 = vadd.f32 %v1620, %v1623
    %vm1625 = vweird.f32 %v1196
    %vm1626 = vweird.f32 %v1620
    %vm1627 = vmor %vm1625, %vm1626
    %v1628 = vsel %vm1627, %v1620, %v1624
    %v1629 = vand.u32 2147483647, %v1196
    %vm1630 = vcmp.eq.f32.partialorder %v1629, 8.507059e+37
    %v1631 = vand.u32 %v1196, 2147483648
    %v1632 = vor.u32 1.1754944e-38, %v1631
    %v1633 = vsel %vm1630, %v1632, %v1628
    %v1634 = vrcp.pop %v1199
    %v1635 = vmul.f32 %v1199, %v1634
    %v1636 = vsub.f32 1.0, %v1635
    %v1637 = vmul.f32 %v1634, %v1636
    %v1638 = vadd.f32 %v1634, %v1637
    %vm1639 = vweird.f32 %v1199
    %vm1640 = vweird.f32 %v1634
    %vm1641 = vmor %vm1639, %vm1640
    %v1642 = vsel %vm1641, %v1634, %v1638
    %v1643 = vand.u32 2147483647, %v1199
    %vm1644 = vcmp.eq.f32.partialorder %v1643, 8.507059e+37
    %v1645 = vand.u32 %v1199, 2147483648
    %v1646 = vor.u32 1.1754944e-38, %v1645
    %v1647 = vsel %vm1644, %v1646, %v1642
    %1648 = vrot.lane.b32.xlu0 %v198, 64
    %v1649 = vpop.permute.xlu0 %1648
    %1650 = vrot.lane.b32.xlu0 %v201, 64
    %v1651 = vpop.permute.xlu0 %1650
    %1652 = vrot.lane.b32.xlu0 %v204, 64
    %v1653 = vpop.permute.xlu0 %1652
    %1654 = vrot.lane.b32.xlu0 %v207, 64
    %v1655 = vpop.permute.xlu0 %1654
    %1656 = vrot.lane.b32.xlu0 %v210, 64
    %v1657 = vpop.permute.xlu0 %1656
    %1658 = vrot.lane.b32.xlu0 %v213, 64
    %v1659 = vpop.permute.xlu0 %1658
    %1660 = vrot.lane.b32.xlu0 %v216, 64
    %v1661 = vpop.permute.xlu0 %1660
    %1662 = vrot.lane.b32.xlu0 %v219, 64
    %v1663 = vpop.permute.xlu0 %1662
    %1664 = vrot.lane.b32.xlu0 %v222, 64
    %v1665 = vpop.permute.xlu0 %1664
    %1666 = vrot.lane.b32.xlu0 %v225, 64
    %v1667 = vpop.permute.xlu0 %1666
    %1668 = vrot.lane.b32.xlu0 %v228, 64
    %v1669 = vpop.permute.xlu0 %1668
    %1670 = vrot.lane.b32.xlu0 %v231, 64
    %v1671 = vpop.permute.xlu0 %1670
    %1672 = vrot.lane.b32.xlu0 %v234, 64
    %v1673 = vpop.permute.xlu0 %1672
    %1674 = vrot.lane.b32.xlu0 %v237, 64
    %v1675 = vpop.permute.xlu0 %1674
    %1676 = vrot.lane.b32.xlu0 %v240, 64
    %v1677 = vpop.permute.xlu0 %1676
    %1678 = vrot.lane.b32.xlu0 %v243, 64
    %v1679 = vpop.permute.xlu0 %1678
    %1680 = vrot.lane.b32.xlu0 %v246, 64
    %v1681 = vpop.permute.xlu0 %1680
    %1682 = vrot.lane.b32.xlu0 %v249, 64
    %v1683 = vpop.permute.xlu0 %1682
    %1684 = vrot.lane.b32.xlu0 %v252, 64
    %v1685 = vpop.permute.xlu0 %1684
    %1686 = vrot.lane.b32.xlu0 %v255, 64
    %v1687 = vpop.permute.xlu0 %1686
    %1688 = vrot.lane.b32.xlu0 %v258, 64
    %v1689 = vpop.permute.xlu0 %1688
    %1690 = vrot.lane.b32.xlu0 %v261, 64
    %v1691 = vpop.permute.xlu0 %1690
    %1692 = vrot.lane.b32.xlu0 %v264, 64
    %v1693 = vpop.permute.xlu0 %1692
    %1694 = vrot.lane.b32.xlu0 %v267, 64
    %v1695 = vpop.permute.xlu0 %1694
    %1696 = vrot.lane.b32.xlu0 %v270, 64
    %v1697 = vpop.permute.xlu0 %1696
    %1698 = vrot.lane.b32.xlu0 %v273, 64
    %v1699 = vpop.permute.xlu0 %1698
    %1700 = vrot.lane.b32.xlu0 %v276, 64
    %v1701 = vpop.permute.xlu0 %1700
    %1702 = vrot.lane.b32.xlu0 %v279, 64
    %v1703 = vpop.permute.xlu0 %1702
    %1704 = vrot.lane.b32.xlu0 %v282, 64
    %v1705 = vpop.permute.xlu0 %1704
    %1706 = vrot.lane.b32.xlu0 %v285, 64
    %v1707 = vpop.permute.xlu0 %1706
    %1708 = vrot.lane.b32.xlu0 %v288, 64
    %v1709 = vpop.permute.xlu0 %1708
    %1710 = vrot.lane.b32.xlu0 %v291, 64
    %v1711 = vpop.permute.xlu0 %1710
    %1744 = vmatpush.msra.mxu0 %v1679
    %1745 = vmatpush.msra.mxu0 %v1677
    %1746 = vmatpush.msra.mxu0 %v1675
    %1747 = vmatpush.msra.mxu0 %v1673
    %1748 = vmatpush.msra.mxu0 %v1671
    %1749 = vmatpush.msra.mxu0 %v1669
    %1750 = vmatpush.msra.mxu0 %v1667
    %1751 = vmatpush.msra.mxu0 %v1665
    %1752 = vmatpush.msra.mxu0 %v1663
    %1753 = vmatpush.msra.mxu0 %v1661
    %1754 = vmatpush.msra.mxu0 %v1659
    %1755 = vmatpush.msra.mxu0 %v1657
    %1756 = vmatpush.msra.mxu0 %v1655
    %1757 = vmatpush.msra.mxu0 %v1653
    %1758 = vmatpush.msra.mxu0 %v1651
    %1759 = vmatpush.msra.mxu0 %v1649
    %1760 = vmatmul.f32.gmra.mxu0 %v977
    %v1761 = vpop.f32.mrf.mxu0
    %v1762 = vadd.f32 0.0, %v1761
    %1763 = vmatmul.f32.gmra.mxu0 %v981
    %v1764 = vpop.f32.mrf.mxu0
    %v1765 = vadd.f32 0.0, %v1764
    %1766 = vmatmul.f32.gmra.mxu0 %v985
    %v1767 = vpop.f32.mrf.mxu0
    %v1768 = vadd.f32 0.0, %v1767
    %1769 = vmatmul.f32.gmra.mxu0 %v989
    %v1770 = vpop.f32.mrf.mxu0
    %v1771 = vadd.f32 0.0, %v1770
    %1772 = vmatmul.f32.gmra.mxu0 %v993
    %v1773 = vpop.f32.mrf.mxu0
    %v1774 = vadd.f32 0.0, %v1773
    %1775 = vmatmul.f32.gmra.mxu0 %v997
    %v1776 = vpop.f32.mrf.mxu0
    %v1777 = vadd.f32 0.0, %v1776
    %1778 = vmatmul.f32.gmra.mxu0 %v1001
    %v1779 = vpop.f32.mrf.mxu0
    %v1780 = vadd.f32 0.0, %v1779
    %1781 = vmatmul.f32.gmra.mxu0 %v1005
    %v1782 = vpop.f32.mrf.mxu0
    %v1783 = vadd.f32 0.0, %v1782
    %1784 = vmatmul.f32.gmra.mxu0 %v1009
    %v1785 = vpop.f32.mrf.mxu0
    %v1786 = vadd.f32 0.0, %v1785
    %1787 = vmatmul.f32.gmra.mxu0 %v1013
    %v1788 = vpop.f32.mrf.mxu0
    %v1789 = vadd.f32 0.0, %v1788
    %1790 = vmatmul.f32.gmra.mxu0 %v1017
    %v1791 = vpop.f32.mrf.mxu0
    %v1792 = vadd.f32 0.0, %v1791
    %1793 = vmatmul.f32.gmra.mxu0 %v1021
    %v1794 = vpop.f32.mrf.mxu0
    %v1795 = vadd.f32 0.0, %v1794
    %1796 = vmatmul.f32.gmra.mxu0 %v1025
    %v1797 = vpop.f32.mrf.mxu0
    %v1798 = vadd.f32 0.0, %v1797
    %1799 = vmatmul.f32.gmra.mxu0 %v1029
    %v1800 = vpop.f32.mrf.mxu0
    %v1801 = vadd.f32 0.0, %v1800
    %1802 = vmatmul.f32.gmra.mxu0 %v1033
    %v1803 = vpop.f32.mrf.mxu0
    %v1804 = vadd.f32 0.0, %v1803
    %1805 = vmatmul.f32.gmra.mxu0 %v1037
    %v1806 = vpop.f32.mrf.mxu0
    %v1807 = vadd.f32 0.0, %v1806
    %1808 = vmatmul.f32.gmra.mxu0 %v1041
    %v1809 = vpop.f32.mrf.mxu0
    %v1810 = vadd.f32 0.0, %v1809
    %1811 = vmatmul.f32.gmra.mxu0 %v1045
    %v1812 = vpop.f32.mrf.mxu0
    %v1813 = vadd.f32 0.0, %v1812
    %1814 = vmatmul.f32.gmra.mxu0 %v1049
    %v1815 = vpop.f32.mrf.mxu0
    %v1816 = vadd.f32 0.0, %v1815
    %1817 = vmatmul.f32.gmra.mxu0 %v1053
    %v1818 = vpop.f32.mrf.mxu0
    %v1819 = vadd.f32 0.0, %v1818
    %1820 = vmatmul.f32.gmra.mxu0 %v1057
    %v1821 = vpop.f32.mrf.mxu0
    %v1822 = vadd.f32 0.0, %v1821
    %1823 = vmatmul.f32.gmra.mxu0 %v1061
    %v1824 = vpop.f32.mrf.mxu0
    %v1825 = vadd.f32 0.0, %v1824
    %1826 = vmatmul.f32.gmra.mxu0 %v1065
    %v1827 = vpop.f32.mrf.mxu0
    %v1828 = vadd.f32 0.0, %v1827
    %1829 = vmatmul.f32.gmra.mxu0 %v1069
    %v1830 = vpop.f32.mrf.mxu0
    %v1831 = vadd.f32 0.0, %v1830
    %1832 = vmatmul.f32.gmra.mxu0 %v1073
    %v1833 = vpop.f32.mrf.mxu0
    %v1834 = vadd.f32 0.0, %v1833
    %1835 = vmatmul.f32.gmra.mxu0 %v1077
    %v1836 = vpop.f32.mrf.mxu0
    %v1837 = vadd.f32 0.0, %v1836
    %1838 = vmatmul.f32.gmra.mxu0 %v1081
    %v1839 = vpop.f32.mrf.mxu0
    %v1840 = vadd.f32 0.0, %v1839
    %1841 = vmatmul.f32.gmra.mxu0 %v1085
    %v1842 = vpop.f32.mrf.mxu0
    %v1843 = vadd.f32 0.0, %v1842
    %1844 = vmatmul.f32.gmra.mxu0 %v1089
    %v1845 = vpop.f32.mrf.mxu0
    %v1846 = vadd.f32 0.0, %v1845
    %1847 = vmatmul.f32.gmra.mxu0 %v1093
    %v1848 = vpop.f32.mrf.mxu0
    %v1849 = vadd.f32 0.0, %v1848
    %1850 = vmatmul.f32.gmra.mxu0 %v1097
    %v1851 = vpop.f32.mrf.mxu0
    %v1852 = vadd.f32 0.0, %v1851
    %1853 = vmatmul.f32.gmra.mxu0 %v1101
    %v1854 = vpop.f32.mrf.mxu0
    %v1855 = vadd.f32 0.0, %v1854
    %1856 = vdwg.mxu0
    %1857 = vmatpush.msra.mxu0 %v1711
    %1858 = vmatpush.msra.mxu0 %v1709
    %1859 = vmatpush.msra.mxu0 %v1707
    %1860 = vmatpush.msra.mxu0 %v1705
    %1861 = vmatpush.msra.mxu0 %v1703
    %1862 = vmatpush.msra.mxu0 %v1701
    %1863 = vmatpush.msra.mxu0 %v1699
    %1864 = vmatpush.msra.mxu0 %v1697
    %1865 = vmatpush.msra.mxu0 %v1695
    %1866 = vmatpush.msra.mxu0 %v1693
    %1867 = vmatpush.msra.mxu0 %v1691
    %1868 = vmatpush.msra.mxu0 %v1689
    %1869 = vmatpush.msra.mxu0 %v1687
    %1870 = vmatpush.msra.mxu0 %v1685
    %1871 = vmatpush.msra.mxu0 %v1683
    %1872 = vmatpush.msra.mxu0 %v1681
    %1873 = vmatmul.f32.gmra.mxu0 %v979
    %v1874 = vpop.f32.mrf.mxu0
    %v1875 = vadd.f32 %v1762, %v1874
    %1876 = vmatmul.f32.gmra.mxu0 %v983
    %v1877 = vpop.f32.mrf.mxu0
    %v1878 = vadd.f32 %v1765, %v1877
    %1879 = vmatmul.f32.gmra.mxu0 %v987
    %v1880 = vpop.f32.mrf.mxu0
    %v1881 = vadd.f32 %v1768, %v1880
    %1882 = vmatmul.f32.gmra.mxu0 %v991
    %v1883 = vpop.f32.mrf.mxu0
    %v1884 = vadd.f32 %v1771, %v1883
    %1885 = vmatmul.f32.gmra.mxu0 %v995
    %v1886 = vpop.f32.mrf.mxu0
    %v1887 = vadd.f32 %v1774, %v1886
    %1888 = vmatmul.f32.gmra.mxu0 %v999
    %v1889 = vpop.f32.mrf.mxu0
    %v1890 = vadd.f32 %v1777, %v1889
    %1891 = vmatmul.f32.gmra.mxu0 %v1003
    %v1892 = vpop.f32.mrf.mxu0
    %v1893 = vadd.f32 %v1780, %v1892
    %1894 = vmatmul.f32.gmra.mxu0 %v1007
    %v1895 = vpop.f32.mrf.mxu0
    %v1896 = vadd.f32 %v1783, %v1895
    %1897 = vmatmul.f32.gmra.mxu0 %v1011
    %v1898 = vpop.f32.mrf.mxu0
    %v1899 = vadd.f32 %v1786, %v1898
    %1900 = vmatmul.f32.gmra.mxu0 %v1015
    %v1901 = vpop.f32.mrf.mxu0
    %v1902 = vadd.f32 %v1789, %v1901
    %1903 = vmatmul.f32.gmra.mxu0 %v1019
    %v1904 = vpop.f32.mrf.mxu0
    %v1905 = vadd.f32 %v1792, %v1904
    %1906 = vmatmul.f32.gmra.mxu0 %v1023
    %v1907 = vpop.f32.mrf.mxu0
    %v1908 = vadd.f32 %v1795, %v1907
    %1909 = vmatmul.f32.gmra.mxu0 %v1027
    %v1910 = vpop.f32.mrf.mxu0
    %v1911 = vadd.f32 %v1798, %v1910
    %1912 = vmatmul.f32.gmra.mxu0 %v1031
    %v1913 = vpop.f32.mrf.mxu0
    %v1914 = vadd.f32 %v1801, %v1913
    %1915 = vmatmul.f32.gmra.mxu0 %v1035
    %v1916 = vpop.f32.mrf.mxu0
    %v1917 = vadd.f32 %v1804, %v1916
    %1918 = vmatmul.f32.gmra.mxu0 %v1039
    %v1919 = vpop.f32.mrf.mxu0
    %v1920 = vadd.f32 %v1807, %v1919
    %1921 = vmatmul.f32.gmra.mxu0 %v1043
    %v1922 = vpop.f32.mrf.mxu0
    %v1923 = vadd.f32 %v1810, %v1922
    %1924 = vmatmul.f32.gmra.mxu0 %v1047
    %v1925 = vpop.f32.mrf.mxu0
    %v1926 = vadd.f32 %v1813, %v1925
    %1927 = vmatmul.f32.gmra.mxu0 %v1051
    %v1928 = vpop.f32.mrf.mxu0
    %v1929 = vadd.f32 %v1816, %v1928
    %1930 = vmatmul.f32.gmra.mxu0 %v1055
    %v1931 = vpop.f32.mrf.mxu0
    %v1932 = vadd.f32 %v1819, %v1931
    %1933 = vmatmul.f32.gmra.mxu0 %v1059
    %v1934 = vpop.f32.mrf.mxu0
    %v1935 = vadd.f32 %v1822, %v1934
    %1936 = vmatmul.f32.gmra.mxu0 %v1063
    %v1937 = vpop.f32.mrf.mxu0
    %v1938 = vadd.f32 %v1825, %v1937
    %1939 = vmatmul.f32.gmra.mxu0 %v1067
    %v1940 = vpop.f32.mrf.mxu0
    %v1941 = vadd.f32 %v1828, %v1940
    %1942 = vmatmul.f32.gmra.mxu0 %v1071
    %v1943 = vpop.f32.mrf.mxu0
    %v1944 = vadd.f32 %v1831, %v1943
    %1945 = vmatmul.f32.gmra.mxu0 %v1075
    %v1946 = vpop.f32.mrf.mxu0
    %v1947 = vadd.f32 %v1834, %v1946
    %1948 = vmatmul.f32.gmra.mxu0 %v1079
    %v1949 = vpop.f32.mrf.mxu0
    %v1950 = vadd.f32 %v1837, %v1949
    %1951 = vmatmul.f32.gmra.mxu0 %v1083
    %v1952 = vpop.f32.mrf.mxu0
    %v1953 = vadd.f32 %v1840, %v1952
    %1954 = vmatmul.f32.gmra.mxu0 %v1087
    %v1955 = vpop.f32.mrf.mxu0
    %v1956 = vadd.f32 %v1843, %v1955
    %1957 = vmatmul.f32.gmra.mxu0 %v1091
    %v1958 = vpop.f32.mrf.mxu0
    %v1959 = vadd.f32 %v1846, %v1958
    %1960 = vmatmul.f32.gmra.mxu0 %v1095
    %v1961 = vpop.f32.mrf.mxu0
    %v1962 = vadd.f32 %v1849, %v1961
    %1963 = vmatmul.f32.gmra.mxu0 %v1099
    %v1964 = vpop.f32.mrf.mxu0
    %v1965 = vadd.f32 %v1852, %v1964
    %1966 = vmatmul.f32.gmra.mxu0 %v1103
    %v1967 = vpop.f32.mrf.mxu0
    %v1968 = vadd.f32 %v1855, %v1967
    %1969 = vdwg.mxu0
    %v1970 = vmul.f32 %v1875, %v1213
    %v1971 = vmul.f32 %v1878, %v1227
    %v1972 = vmul.f32 %v1881, %v1241
    %v1973 = vmul.f32 %v1884, %v1255
    %v1974 = vmul.f32 %v1887, %v1269
    %v1975 = vmul.f32 %v1890, %v1283
    %v1976 = vmul.f32 %v1893, %v1297
    %v1977 = vmul.f32 %v1896, %v1311
    %v1978 = vmul.f32 %v1899, %v1325
    %v1979 = vmul.f32 %v1902, %v1339
    %v1980 = vmul.f32 %v1905, %v1353
    %v1981 = vmul.f32 %v1908, %v1367
    %v1982 = vmul.f32 %v1911, %v1381
    %v1983 = vmul.f32 %v1914, %v1395
    %v1984 = vmul.f32 %v1917, %v1409
    %v1985 = vmul.f32 %v1920, %v1423
    %v1986 = vmul.f32 %v1923, %v1437
    %v1987 = vmul.f32 %v1926, %v1451
    %v1988 = vmul.f32 %v1929, %v1465
    %v1989 = vmul.f32 %v1932, %v1479
    %v1990 = vmul.f32 %v1935, %v1493
    %v1991 = vmul.f32 %v1938, %v1507
    %v1992 = vmul.f32 %v1941, %v1521
    %v1993 = vmul.f32 %v1944, %v1535
    %v1994 = vmul.f32 %v1947, %v1549
    %v1995 = vmul.f32 %v1950, %v1563
    %v1996 = vmul.f32 %v1953, %v1577
    %v1997 = vmul.f32 %v1956, %v1591
    %v1998 = vmul.f32 %v1959, %v1605
    %v1999 = vmul.f32 %v1962, %v1619
    %v2000 = vmul.f32 %v1965, %v1633
    %v2001 = vmul.f32 %v1968, %v1647
    %2002 = vmatpush.msra.mxu0 %v1985
    %2003 = vmatpush.msra.mxu0 %v1984
    %2004 = vmatpush.msra.mxu0 %v1983
    %2005 = vmatpush.msra.mxu0 %v1982
    %2006 = vmatpush.msra.mxu0 %v1981
    %2007 = vmatpush.msra.mxu0 %v1980
    %2008 = vmatpush.msra.mxu0 %v1979
    %2009 = vmatpush.msra.mxu0 %v1978
    %2010 = vmatpush.msra.mxu0 %v1977
    %2011 = vmatpush.msra.mxu0 %v1976
    %2012 = vmatpush.msra.mxu0 %v1975
    %2013 = vmatpush.msra.mxu0 %v1974
    %2014 = vmatpush.msra.mxu0 %v1973
    %2015 = vmatpush.msra.mxu0 %v1972
    %2016 = vmatpush.msra.mxu0 %v1971
    %2017 = vmatpush.msra.mxu0 %v1970
    %2018 = vmatmul.f32.gmra.mxu0 %v357
    %v2019 = vpop.f32.mrf.mxu0
    %v2020 = vadd.f32 0.0, %v2019
    %2021 = vmatmul.f32.gmra.mxu0 %v359
    %v2022 = vpop.f32.mrf.mxu0
    %v2023 = vadd.f32 0.0, %v2022
    %2024 = vmatmul.f32.gmra.mxu0 %v361
    %v2025 = vpop.f32.mrf.mxu0
    %v2026 = vadd.f32 0.0, %v2025
    %2027 = vmatmul.f32.gmra.mxu0 %v363
    %v2028 = vpop.f32.mrf.mxu0
    %v2029 = vadd.f32 0.0, %v2028
    %2030 = vdwg.mxu0
    %2031 = vmatpush.msra.mxu0 %v2001
    %2032 = vmatpush.msra.mxu0 %v2000
    %2033 = vmatpush.msra.mxu0 %v1999
    %2034 = vmatpush.msra.mxu0 %v1998
    %2035 = vmatpush.msra.mxu0 %v1997
    %2036 = vmatpush.msra.mxu0 %v1996
    %2037 = vmatpush.msra.mxu0 %v1995
    %2038 = vmatpush.msra.mxu0 %v1994
    %2039 = vmatpush.msra.mxu0 %v1993
    %2040 = vmatpush.msra.mxu0 %v1992
    %2041 = vmatpush.msra.mxu0 %v1991
    %2042 = vmatpush.msra.mxu0 %v1990
    %2043 = vmatpush.msra.mxu0 %v1989
    %2044 = vmatpush.msra.mxu0 %v1988
    %2045 = vmatpush.msra.mxu0 %v1987
    %2046 = vmatpush.msra.mxu0 %v1986
    %2047 = vmatmul.f32.gmra.mxu0 %v358
    %v2048 = vpop.f32.mrf.mxu0
    %v2049 = vadd.f32 %v2020, %v2048
    %2050 = vmatmul.f32.gmra.mxu0 %v360
    %v2051 = vpop.f32.mrf.mxu0
    %v2052 = vadd.f32 %v2023, %v2051
    %2053 = vmatmul.f32.gmra.mxu0 %v362
    %v2054 = vpop.f32.mrf.mxu0
    %v2055 = vadd.f32 %v2026, %v2054
    %2056 = vmatmul.f32.gmra.mxu0 %v364
    %v2057 = vpop.f32.mrf.mxu0
    %v2058 = vadd.f32 %v2029, %v2057
    %2059 = vdwg.mxu0
    %v2060 = vld [vmem:[%s3] sm:$0xff]
    %2061 = vrot.lane.b32.xlu0 %v198, 120
    %v2062 = vpop.permute.xlu0 %2061
    %2063 = vrot.lane.b32.xlu0 %v201, 120
    %v2064 = vpop.permute.xlu0 %2063
    %2065 = vrot.lane.b32.xlu0 %v204, 120
    %v2066 = vpop.permute.xlu0 %2065
    %2067 = vrot.lane.b32.xlu0 %v207, 120
    %v2068 = vpop.permute.xlu0 %2067
    %2069 = vrot.lane.b32.xlu0 %v210, 120
    %v2070 = vpop.permute.xlu0 %2069
    %2071 = vrot.lane.b32.xlu0 %v213, 120
    %v2072 = vpop.permute.xlu0 %2071
    %2073 = vrot.lane.b32.xlu0 %v216, 120
    %v2074 = vpop.permute.xlu0 %2073
    %2075 = vrot.lane.b32.xlu0 %v219, 120
    %v2076 = vpop.permute.xlu0 %2075
    %2077 = vrot.lane.b32.xlu0 %v222, 120
    %v2078 = vpop.permute.xlu0 %2077
    %2079 = vrot.lane.b32.xlu0 %v225, 120
    %v2080 = vpop.permute.xlu0 %2079
    %2081 = vrot.lane.b32.xlu0 %v228, 120
    %v2082 = vpop.permute.xlu0 %2081
    %2083 = vrot.lane.b32.xlu0 %v231, 120
    %v2084 = vpop.permute.xlu0 %2083
    %2085 = vrot.lane.b32.xlu0 %v234, 120
    %v2086 = vpop.permute.xlu0 %2085
    %2087 = vrot.lane.b32.xlu0 %v237, 120
    %v2088 = vpop.permute.xlu0 %2087
    %2089 = vrot.lane.b32.xlu0 %v240, 120
    %v2090 = vpop.permute.xlu0 %2089
    %2091 = vrot.lane.b32.xlu0 %v243, 120
    %v2092 = vpop.permute.xlu0 %2091
    %2093 = vrot.lane.b32.xlu0 %v246, 120
    %v2094 = vpop.permute.xlu0 %2093
    %2095 = vrot.lane.b32.xlu0 %v249, 120
    %v2096 = vpop.permute.xlu0 %2095
    %2097 = vrot.lane.b32.xlu0 %v252, 120
    %v2098 = vpop.permute.xlu0 %2097
    %2099 = vrot.lane.b32.xlu0 %v255, 120
    %v2100 = vpop.permute.xlu0 %2099
    %2101 = vrot.lane.b32.xlu0 %v258, 120
    %v2102 = vpop.permute.xlu0 %2101
    %2103 = vrot.lane.b32.xlu0 %v261, 120
    %v2104 = vpop.permute.xlu0 %2103
    %2105 = vrot.lane.b32.xlu0 %v264, 120
    %v2106 = vpop.permute.xlu0 %2105
    %2107 = vrot.lane.b32.xlu0 %v267, 120
    %v2108 = vpop.permute.xlu0 %2107
    %2109 = vrot.lane.b32.xlu0 %v270, 120
    %v2110 = vpop.permute.xlu0 %2109
    %2111 = vrot.lane.b32.xlu0 %v273, 120
    %v2112 = vpop.permute.xlu0 %2111
    %2113 = vrot.lane.b32.xlu0 %v276, 120
    %v2114 = vpop.permute.xlu0 %2113
    %2115 = vrot.lane.b32.xlu0 %v279, 120
    %v2116 = vpop.permute.xlu0 %2115
    %2117 = vrot.lane.b32.xlu0 %v282, 120
    %v2118 = vpop.permute.xlu0 %2117
    %2119 = vrot.lane.b32.xlu0 %v285, 120
    %v2120 = vpop.permute.xlu0 %2119
    %2121 = vrot.lane.b32.xlu0 %v288, 120
    %v2122 = vpop.permute.xlu0 %2121
    %2123 = vrot.lane.b32.xlu0 %v291, 120
    %v2124 = vpop.permute.xlu0 %2123
    %2125 = vrot.lane.b32.xlu0 %v198, 88
    %v2126 = vpop.permute.xlu0 %2125
    %2127 = vrot.lane.b32.xlu0 %v201, 88
    %v2128 = vpop.permute.xlu0 %2127
    %2129 = vrot.lane.b32.xlu0 %v204, 88
    %v2130 = vpop.permute.xlu0 %2129
    %2131 = vrot.lane.b32.xlu0 %v207, 88
    %v2132 = vpop.permute.xlu0 %2131
    %2133 = vrot.lane.b32.xlu0 %v210, 88
    %v2134 = vpop.permute.xlu0 %2133
    %2135 = vrot.lane.b32.xlu0 %v213, 88
    %v2136 = vpop.permute.xlu0 %2135
    %2137 = vrot.lane.b32.xlu0 %v216, 88
    %v2138 = vpop.permute.xlu0 %2137
    %2139 = vrot.lane.b32.xlu0 %v219, 88
    %v2140 = vpop.permute.xlu0 %2139
    %2141 = vrot.lane.b32.xlu0 %v222, 88
    %v2142 = vpop.permute.xlu0 %2141
    %2143 = vrot.lane.b32.xlu0 %v225, 88
    %v2144 = vpop.permute.xlu0 %2143
    %2145 = vrot.lane.b32.xlu0 %v228, 88
    %v2146 = vpop.permute.xlu0 %2145
    %2147 = vrot.lane.b32.xlu0 %v231, 88
    %v2148 = vpop.permute.xlu0 %2147
    %2149 = vrot.lane.b32.xlu0 %v234, 88
    %v2150 = vpop.permute.xlu0 %2149
    %2151 = vrot.lane.b32.xlu0 %v237, 88
    %v2152 = vpop.permute.xlu0 %2151
    %2153 = vrot.lane.b32.xlu0 %v240, 88
    %v2154 = vpop.permute.xlu0 %2153
    %2155 = vrot.lane.b32.xlu0 %v243, 88
    %v2156 = vpop.permute.xlu0 %2155
    %2157 = vrot.lane.b32.xlu0 %v246, 88
    %v2158 = vpop.permute.xlu0 %2157
    %2159 = vrot.lane.b32.xlu0 %v249, 88
    %v2160 = vpop.permute.xlu0 %2159
    %2161 = vrot.lane.b32.xlu0 %v252, 88
    %v2162 = vpop.permute.xlu0 %2161
    %2163 = vrot.lane.b32.xlu0 %v255, 88
    %v2164 = vpop.permute.xlu0 %2163
    %2165 = vrot.lane.b32.xlu0 %v258, 88
    %v2166 = vpop.permute.xlu0 %2165
    %2167 = vrot.lane.b32.xlu0 %v261, 88
    %v2168 = vpop.permute.xlu0 %2167
    %2169 = vrot.lane.b32.xlu0 %v264, 88
    %v2170 = vpop.permute.xlu0 %2169
    %2171 = vrot.lane.b32.xlu0 %v267, 88
    %v2172 = vpop.permute.xlu0 %2171
    %2173 = vrot.lane.b32.xlu0 %v270, 88
    %v2174 = vpop.permute.xlu0 %2173
    %2175 = vrot.lane.b32.xlu0 %v273, 88
    %v2176 = vpop.permute.xlu0 %2175
    %2177 = vrot.lane.b32.xlu0 %v276, 88
    %v2178 = vpop.permute.xlu0 %2177
    %2179 = vrot.lane.b32.xlu0 %v279, 88
    %v2180 = vpop.permute.xlu0 %2179
    %2181 = vrot.lane.b32.xlu0 %v282, 88
    %v2182 = vpop.permute.xlu0 %2181
    %2183 = vrot.lane.b32.xlu0 %v285, 88
    %v2184 = vpop.permute.xlu0 %2183
    %2185 = vrot.lane.b32.xlu0 %v288, 88
    %v2186 = vpop.permute.xlu0 %2185
    %2187 = vrot.lane.b32.xlu0 %v291, 88
    %v2188 = vpop.permute.xlu0 %2187
    %v2189 = vsel %vm461, %v2062, 0
    %v2191 = vsel %vm461, %v2064, 0
    %v2193 = vsel %vm461, %v2066, 0
    %v2195 = vsel %vm461, %v2068, 0
    %v2197 = vsel %vm461, %v2070, 0
    %v2199 = vsel %vm461, %v2072, 0
    %v2201 = vsel %vm461, %v2074, 0
    %v2203 = vsel %vm461, %v2076, 0
    %v2205 = vsel %vm461, %v2078, 0
    %v2207 = vsel %vm461, %v2080, 0
    %v2209 = vsel %vm461, %v2082, 0
    %v2211 = vsel %vm461, %v2084, 0
    %v2213 = vsel %vm461, %v2086, 0
    %v2215 = vsel %vm461, %v2088, 0
    %v2217 = vsel %vm461, %v2090, 0
    %v2219 = vsel %vm461, %v2092, 0
    %v2221 = vsel %vm461, %v2094, 0
    %v2223 = vsel %vm461, %v2096, 0
    %v2225 = vsel %vm461, %v2098, 0
    %v2227 = vsel %vm461, %v2100, 0
    %v2229 = vsel %vm461, %v2102, 0
    %v2231 = vsel %vm461, %v2104, 0
    %v2233 = vsel %vm461, %v2106, 0
    %v2235 = vsel %vm461, %v2108, 0
    %v2237 = vsel %vm461, %v2110, 0
    %v2239 = vsel %vm461, %v2112, 0
    %v2241 = vsel %vm461, %v2114, 0
    %v2243 = vsel %vm461, %v2116, 0
    %v2245 = vsel %vm461, %v2118, 0
    %v2247 = vsel %vm461, %v2120, 0
    %v2249 = vsel %vm461, %v2122, 0
    %v2251 = vsel %vm461, %v2124, 0
    %v2253 = vsel %vm461, %v2126, 0
    %v2255 = vsel %vm461, %v2128, 0
    %v2257 = vsel %vm461, %v2130, 0
    %v2259 = vsel %vm461, %v2132, 0
    %v2261 = vsel %vm461, %v2134, 0
    %v2263 = vsel %vm461, %v2136, 0
    %v2265 = vsel %vm461, %v2138, 0
    %v2267 = vsel %vm461, %v2140, 0
    %v2269 = vsel %vm461, %v2142, 0
    %v2271 = vsel %vm461, %v2144, 0
    %v2273 = vsel %vm461, %v2146, 0
    %v2275 = vsel %vm461, %v2148, 0
    %v2277 = vsel %vm461, %v2150, 0
    %v2279 = vsel %vm461, %v2152, 0
    %v2281 = vsel %vm461, %v2154, 0
    %v2283 = vsel %vm461, %v2156, 0
    %v2285 = vsel %vm461, %v2158, 0
    %v2287 = vsel %vm461, %v2160, 0
    %v2289 = vsel %vm461, %v2162, 0
    %v2291 = vsel %vm461, %v2164, 0
    %v2293 = vsel %vm461, %v2166, 0
    %v2295 = vsel %vm461, %v2168, 0
    %v2297 = vsel %vm461, %v2170, 0
    %v2299 = vsel %vm461, %v2172, 0
    %v2301 = vsel %vm461, %v2174, 0
    %v2303 = vsel %vm461, %v2176, 0
    %v2305 = vsel %vm461, %v2178, 0
    %v2307 = vsel %vm461, %v2180, 0
    %v2309 = vsel %vm461, %v2182, 0
    %v2311 = vsel %vm461, %v2184, 0
    %v2313 = vsel %vm461, %v2186, 0
    %v2315 = vsel %vm461, %v2188, 0
    %2317 = vmatpush.xpose.msra.mxu0 %v2283
    %2318 = vmatpush.xpose.msra.mxu0 %v2281
    %2319 = vmatpush.xpose.msra.mxu0 %v2279
    %2320 = vmatpush.xpose.msra.mxu0 %v2277
    %2321 = vmatpush.xpose.msra.mxu0 %v2275
    %2322 = vmatpush.xpose.msra.mxu0 %v2273
    %2323 = vmatpush.xpose.msra.mxu0 %v2271
    %2324 = vmatpush.xpose.msra.mxu0 %v2269
    %2325 = vmatpush.xpose.msra.mxu0 %v2267
    %2326 = vmatpush.xpose.msra.mxu0 %v2265
    %2327 = vmatpush.xpose.msra.mxu0 %v2263
    %2328 = vmatpush.xpose.msra.mxu0 %v2261
    %2329 = vmatpush.xpose.msra.mxu0 %v2259
    %2330 = vmatpush.xpose.msra.mxu0 %v2257
    %2331 = vmatpush.xpose.msra.mxu0 %v2255
    %2332 = vmatpush.xpose.msra.mxu0 %v2253
    %2333 = vmatmul.f32.gmra.mxu0 %v2189
    %v2334 = vpop.f32.mrf.mxu0
    %v2335 = vadd.f32 %v293, %v2334
    %2336 = vmatmul.f32.gmra.mxu0 %v2191
    %v2337 = vpop.f32.mrf.mxu0
    %v2338 = vadd.f32 %v295, %v2337
    %2339 = vmatmul.f32.gmra.mxu0 %v2193
    %v2340 = vpop.f32.mrf.mxu0
    %v2341 = vadd.f32 %v297, %v2340
    %2342 = vmatmul.f32.gmra.mxu0 %v2195
    %v2343 = vpop.f32.mrf.mxu0
    %v2344 = vadd.f32 %v299, %v2343
    %2345 = vmatmul.f32.gmra.mxu0 %v2197
    %v2346 = vpop.f32.mrf.mxu0
    %v2347 = vadd.f32 %v301, %v2346
    %2348 = vmatmul.f32.gmra.mxu0 %v2199
    %v2349 = vpop.f32.mrf.mxu0
    %v2350 = vadd.f32 %v303, %v2349
    %2351 = vmatmul.f32.gmra.mxu0 %v2201
    %v2352 = vpop.f32.mrf.mxu0
    %v2353 = vadd.f32 %v305, %v2352
    %2354 = vmatmul.f32.gmra.mxu0 %v2203
    %v2355 = vpop.f32.mrf.mxu0
    %v2356 = vadd.f32 %v307, %v2355
    %2357 = vmatmul.f32.gmra.mxu0 %v2205
    %v2358 = vpop.f32.mrf.mxu0
    %v2359 = vadd.f32 %v309, %v2358
    %2360 = vmatmul.f32.gmra.mxu0 %v2207
    %v2361 = vpop.f32.mrf.mxu0
    %v2362 = vadd.f32 %v311, %v2361
    %2363 = vmatmul.f32.gmra.mxu0 %v2209
    %v2364 = vpop.f32.mrf.mxu0
    %v2365 = vadd.f32 %v313, %v2364
    %2366 = vmatmul.f32.gmra.mxu0 %v2211
    %v2367 = vpop.f32.mrf.mxu0
    %v2368 = vadd.f32 %v315, %v2367
    %2369 = vmatmul.f32.gmra.mxu0 %v2213
    %v2370 = vpop.f32.mrf.mxu0
    %v2371 = vadd.f32 %v317, %v2370
    %2372 = vmatmul.f32.gmra.mxu0 %v2215
    %v2373 = vpop.f32.mrf.mxu0
    %v2374 = vadd.f32 %v319, %v2373
    %2375 = vmatmul.f32.gmra.mxu0 %v2217
    %v2376 = vpop.f32.mrf.mxu0
    %v2377 = vadd.f32 %v321, %v2376
    %2378 = vmatmul.f32.gmra.mxu0 %v2219
    %v2379 = vpop.f32.mrf.mxu0
    %v2380 = vadd.f32 %v323, %v2379
    %2381 = vmatmul.f32.gmra.mxu0 %v2221
    %v2382 = vpop.f32.mrf.mxu0
    %v2383 = vadd.f32 %v325, %v2382
    %2384 = vmatmul.f32.gmra.mxu0 %v2223
    %v2385 = vpop.f32.mrf.mxu0
    %v2386 = vadd.f32 %v327, %v2385
    %2387 = vmatmul.f32.gmra.mxu0 %v2225
    %v2388 = vpop.f32.mrf.mxu0
    %v2389 = vadd.f32 %v329, %v2388
    %2390 = vmatmul.f32.gmra.mxu0 %v2227
    %v2391 = vpop.f32.mrf.mxu0
    %v2392 = vadd.f32 %v331, %v2391
    %2393 = vmatmul.f32.gmra.mxu0 %v2229
    %v2394 = vpop.f32.mrf.mxu0
    %v2395 = vadd.f32 %v333, %v2394
    %2396 = vmatmul.f32.gmra.mxu0 %v2231
    %v2397 = vpop.f32.mrf.mxu0
    %v2398 = vadd.f32 %v335, %v2397
    %2399 = vmatmul.f32.gmra.mxu0 %v2233
    %v2400 = vpop.f32.mrf.mxu0
    %v2401 = vadd.f32 %v337, %v2400
    %2402 = vmatmul.f32.gmra.mxu0 %v2235
    %v2403 = vpop.f32.mrf.mxu0
    %v2404 = vadd.f32 %v339, %v2403
    %2405 = vmatmul.f32.gmra.mxu0 %v2237
    %v2406 = vpop.f32.mrf.mxu0
    %v2407 = vadd.f32 %v341, %v2406
    %2408 = vmatmul.f32.gmra.mxu0 %v2239
    %v2409 = vpop.f32.mrf.mxu0
    %v2410 = vadd.f32 %v343, %v2409
    %2411 = vmatmul.f32.gmra.mxu0 %v2241
    %v2412 = vpop.f32.mrf.mxu0
    %v2413 = vadd.f32 %v345, %v2412
    %2414 = vmatmul.f32.gmra.mxu0 %v2243
    %v2415 = vpop.f32.mrf.mxu0
    %v2416 = vadd.f32 %v347, %v2415
    %2417 = vmatmul.f32.gmra.mxu0 %v2245
    %v2418 = vpop.f32.mrf.mxu0
    %v2419 = vadd.f32 %v349, %v2418
    %2420 = vmatmul.f32.gmra.mxu0 %v2247
    %v2421 = vpop.f32.mrf.mxu0
    %v2422 = vadd.f32 %v351, %v2421
    %2423 = vmatmul.f32.gmra.mxu0 %v2249
    %v2424 = vpop.f32.mrf.mxu0
    %v2425 = vadd.f32 %v353, %v2424
    %2426 = vmatmul.f32.gmra.mxu0 %v2251
    %v2427 = vpop.f32.mrf.mxu0
    %v2428 = vadd.f32 %v355, %v2427
    %2429 = vdwg.mxu0
    %2430 = vmatpush.xpose.msra.mxu0 %v2315
    %2431 = vmatpush.xpose.msra.mxu0 %v2313
    %2432 = vmatpush.xpose.msra.mxu0 %v2311
    %2433 = vmatpush.xpose.msra.mxu0 %v2309
    %2434 = vmatpush.xpose.msra.mxu0 %v2307
    %2435 = vmatpush.xpose.msra.mxu0 %v2305
    %2436 = vmatpush.xpose.msra.mxu0 %v2303
    %2437 = vmatpush.xpose.msra.mxu0 %v2301
    %2438 = vmatpush.xpose.msra.mxu0 %v2299
    %2439 = vmatpush.xpose.msra.mxu0 %v2297
    %2440 = vmatpush.xpose.msra.mxu0 %v2295
    %2441 = vmatpush.xpose.msra.mxu0 %v2293
    %2442 = vmatpush.xpose.msra.mxu0 %v2291
    %2443 = vmatpush.xpose.msra.mxu0 %v2289
    %2444 = vmatpush.xpose.msra.mxu0 %v2287
    %2445 = vmatpush.xpose.msra.mxu0 %v2285
    %2446 = vmatmul.f32.gmra.mxu0 %v2189
    %v2447 = vpop.f32.mrf.mxu0
    %v2448 = vadd.f32 %v294, %v2447
    %2449 = vmatmul.f32.gmra.mxu0 %v2191
    %v2450 = vpop.f32.mrf.mxu0
    %v2451 = vadd.f32 %v296, %v2450
    %2452 = vmatmul.f32.gmra.mxu0 %v2193
    %v2453 = vpop.f32.mrf.mxu0
    %v2454 = vadd.f32 %v298, %v2453
    %2455 = vmatmul.f32.gmra.mxu0 %v2195
    %v2456 = vpop.f32.mrf.mxu0
    %v2457 = vadd.f32 %v300, %v2456
    %2458 = vmatmul.f32.gmra.mxu0 %v2197
    %v2459 = vpop.f32.mrf.mxu0
    %v2460 = vadd.f32 %v302, %v2459
    %2461 = vmatmul.f32.gmra.mxu0 %v2199
    %v2462 = vpop.f32.mrf.mxu0
    %v2463 = vadd.f32 %v304, %v2462
    %2464 = vmatmul.f32.gmra.mxu0 %v2201
    %v2465 = vpop.f32.mrf.mxu0
    %v2466 = vadd.f32 %v306, %v2465
    %2467 = vmatmul.f32.gmra.mxu0 %v2203
    %v2468 = vpop.f32.mrf.mxu0
    %v2469 = vadd.f32 %v308, %v2468
    %2470 = vmatmul.f32.gmra.mxu0 %v2205
    %v2471 = vpop.f32.mrf.mxu0
    %v2472 = vadd.f32 %v310, %v2471
    %2473 = vmatmul.f32.gmra.mxu0 %v2207
    %v2474 = vpop.f32.mrf.mxu0
    %v2475 = vadd.f32 %v312, %v2474
    %2476 = vmatmul.f32.gmra.mxu0 %v2209
    %v2477 = vpop.f32.mrf.mxu0
    %v2478 = vadd.f32 %v314, %v2477
    %2479 = vmatmul.f32.gmra.mxu0 %v2211
    %v2480 = vpop.f32.mrf.mxu0
    %v2481 = vadd.f32 %v316, %v2480
    %2482 = vmatmul.f32.gmra.mxu0 %v2213
    %v2483 = vpop.f32.mrf.mxu0
    %v2484 = vadd.f32 %v318, %v2483
    %2485 = vmatmul.f32.gmra.mxu0 %v2215
    %v2486 = vpop.f32.mrf.mxu0
    %v2487 = vadd.f32 %v320, %v2486
    %2488 = vmatmul.f32.gmra.mxu0 %v2217
    %v2489 = vpop.f32.mrf.mxu0
    %v2490 = vadd.f32 %v322, %v2489
    %2491 = vmatmul.f32.gmra.mxu0 %v2219
    %v2492 = vpop.f32.mrf.mxu0
    %v2493 = vadd.f32 %v324, %v2492
    %2494 = vmatmul.f32.gmra.mxu0 %v2221
    %v2495 = vpop.f32.mrf.mxu0
    %v2496 = vadd.f32 %v326, %v2495
    %2497 = vmatmul.f32.gmra.mxu0 %v2223
    %v2498 = vpop.f32.mrf.mxu0
    %v2499 = vadd.f32 %v328, %v2498
    %2500 = vmatmul.f32.gmra.mxu0 %v2225
    %v2501 = vpop.f32.mrf.mxu0
    %v2502 = vadd.f32 %v330, %v2501
    %2503 = vmatmul.f32.gmra.mxu0 %v2227
    %v2504 = vpop.f32.mrf.mxu0
    %v2505 = vadd.f32 %v332, %v2504
    %2506 = vmatmul.f32.gmra.mxu0 %v2229
    %v2507 = vpop.f32.mrf.mxu0
    %v2508 = vadd.f32 %v334, %v2507
    %2509 = vmatmul.f32.gmra.mxu0 %v2231
    %v2510 = vpop.f32.mrf.mxu0
    %v2511 = vadd.f32 %v336, %v2510
    %2512 = vmatmul.f32.gmra.mxu0 %v2233
    %v2513 = vpop.f32.mrf.mxu0
    %v2514 = vadd.f32 %v338, %v2513
    %2515 = vmatmul.f32.gmra.mxu0 %v2235
    %v2516 = vpop.f32.mrf.mxu0
    %v2517 = vadd.f32 %v340, %v2516
    %2518 = vmatmul.f32.gmra.mxu0 %v2237
    %v2519 = vpop.f32.mrf.mxu0
    %v2520 = vadd.f32 %v342, %v2519
    %2521 = vmatmul.f32.gmra.mxu0 %v2239
    %v2522 = vpop.f32.mrf.mxu0
    %v2523 = vadd.f32 %v344, %v2522
    %2524 = vmatmul.f32.gmra.mxu0 %v2241
    %v2525 = vpop.f32.mrf.mxu0
    %v2526 = vadd.f32 %v346, %v2525
    %2527 = vmatmul.f32.gmra.mxu0 %v2243
    %v2528 = vpop.f32.mrf.mxu0
    %v2529 = vadd.f32 %v348, %v2528
    %2530 = vmatmul.f32.gmra.mxu0 %v2245
    %v2531 = vpop.f32.mrf.mxu0
    %v2532 = vadd.f32 %v350, %v2531
    %2533 = vmatmul.f32.gmra.mxu0 %v2247
    %v2534 = vpop.f32.mrf.mxu0
    %v2535 = vadd.f32 %v352, %v2534
    %2536 = vmatmul.f32.gmra.mxu0 %v2249
    %v2537 = vpop.f32.mrf.mxu0
    %v2538 = vadd.f32 %v354, %v2537
    %2539 = vmatmul.f32.gmra.mxu0 %v2251
    %v2540 = vpop.f32.mrf.mxu0
    %v2541 = vadd.f32 %v356, %v2540
    %2542 = vdwg.mxu0
    %v2543 = vmax.f32 %v2335, %v2448
    %2544 = vmax.xlane.f32.xlu0 %v2543
    %v2545 = vpop.xlane.xlu0 %2544
    %v2546 = vmax.f32 %v2338, %v2451
    %2547 = vmax.xlane.f32.xlu0 %v2546
    %v2548 = vpop.xlane.xlu0 %2547
    %v2549 = vmax.f32 %v2341, %v2454
    %2550 = vmax.xlane.f32.xlu0 %v2549
    %v2551 = vpop.xlane.xlu0 %2550
    %v2552 = vmax.f32 %v2344, %v2457
    %2553 = vmax.xlane.f32.xlu0 %v2552
    %v2554 = vpop.xlane.xlu0 %2553
    %v2555 = vmax.f32 %v2347, %v2460
    %2556 = vmax.xlane.f32.xlu0 %v2555
    %v2557 = vpop.xlane.xlu0 %2556
    %v2558 = vmax.f32 %v2350, %v2463
    %2559 = vmax.xlane.f32.xlu0 %v2558
    %v2560 = vpop.xlane.xlu0 %2559
    %v2561 = vmax.f32 %v2353, %v2466
    %2562 = vmax.xlane.f32.xlu0 %v2561
    %v2563 = vpop.xlane.xlu0 %2562
    %v2564 = vmax.f32 %v2356, %v2469
    %2565 = vmax.xlane.f32.xlu0 %v2564
    %v2566 = vpop.xlane.xlu0 %2565
    %v2567 = vmax.f32 %v2359, %v2472
    %2568 = vmax.xlane.f32.xlu0 %v2567
    %v2569 = vpop.xlane.xlu0 %2568
    %v2570 = vmax.f32 %v2362, %v2475
    %2571 = vmax.xlane.f32.xlu0 %v2570
    %v2572 = vpop.xlane.xlu0 %2571
    %v2573 = vmax.f32 %v2365, %v2478
    %2574 = vmax.xlane.f32.xlu0 %v2573
    %v2575 = vpop.xlane.xlu0 %2574
    %v2576 = vmax.f32 %v2368, %v2481
    %2577 = vmax.xlane.f32.xlu0 %v2576
    %v2578 = vpop.xlane.xlu0 %2577
    %v2579 = vmax.f32 %v2371, %v2484
    %2580 = vmax.xlane.f32.xlu0 %v2579
    %v2581 = vpop.xlane.xlu0 %2580
    %v2582 = vmax.f32 %v2374, %v2487
    %2583 = vmax.xlane.f32.xlu0 %v2582
    %v2584 = vpop.xlane.xlu0 %2583
    %v2585 = vmax.f32 %v2377, %v2490
    %2586 = vmax.xlane.f32.xlu0 %v2585
    %v2587 = vpop.xlane.xlu0 %2586
    %v2588 = vmax.f32 %v2380, %v2493
    %2589 = vmax.xlane.f32.xlu0 %v2588
    %v2590 = vpop.xlane.xlu0 %2589
    %v2591 = vmax.f32 %v2383, %v2496
    %2592 = vmax.xlane.f32.xlu0 %v2591
    %v2593 = vpop.xlane.xlu0 %2592
    %v2594 = vmax.f32 %v2386, %v2499
    %2595 = vmax.xlane.f32.xlu0 %v2594
    %v2596 = vpop.xlane.xlu0 %2595
    %v2597 = vmax.f32 %v2389, %v2502
    %2598 = vmax.xlane.f32.xlu0 %v2597
    %v2599 = vpop.xlane.xlu0 %2598
    %v2600 = vmax.f32 %v2392, %v2505
    %2601 = vmax.xlane.f32.xlu0 %v2600
    %v2602 = vpop.xlane.xlu0 %2601
    %v2603 = vmax.f32 %v2395, %v2508
    %2604 = vmax.xlane.f32.xlu0 %v2603
    %v2605 = vpop.xlane.xlu0 %2604
    %v2606 = vmax.f32 %v2398, %v2511
    %2607 = vmax.xlane.f32.xlu0 %v2606
    %v2608 = vpop.xlane.xlu0 %2607
    %v2609 = vmax.f32 %v2401, %v2514
    %2610 = vmax.xlane.f32.xlu0 %v2609
    %v2611 = vpop.xlane.xlu0 %2610
    %v2612 = vmax.f32 %v2404, %v2517
    %2613 = vmax.xlane.f32.xlu0 %v2612
    %v2614 = vpop.xlane.xlu0 %2613
    %v2615 = vmax.f32 %v2407, %v2520
    %2616 = vmax.xlane.f32.xlu0 %v2615
    %v2617 = vpop.xlane.xlu0 %2616
    %v2618 = vmax.f32 %v2410, %v2523
    %2619 = vmax.xlane.f32.xlu0 %v2618
    %v2620 = vpop.xlane.xlu0 %2619
    %v2621 = vmax.f32 %v2413, %v2526
    %2622 = vmax.xlane.f32.xlu0 %v2621
    %v2623 = vpop.xlane.xlu0 %2622
    %v2624 = vmax.f32 %v2416, %v2529
    %2625 = vmax.xlane.f32.xlu0 %v2624
    %v2626 = vpop.xlane.xlu0 %2625
    %v2627 = vmax.f32 %v2419, %v2532
    %2628 = vmax.xlane.f32.xlu0 %v2627
    %v2629 = vpop.xlane.xlu0 %2628
    %v2630 = vmax.f32 %v2422, %v2535
    %2631 = vmax.xlane.f32.xlu0 %v2630
    %v2632 = vpop.xlane.xlu0 %2631
    %v2633 = vmax.f32 %v2425, %v2538
    %2634 = vmax.xlane.f32.xlu0 %v2633
    %v2635 = vpop.xlane.xlu0 %2634
    %v2636 = vmax.f32 %v2428, %v2541
    %2637 = vmax.xlane.f32.xlu0 %v2636
    %v2638 = vpop.xlane.xlu0 %2637
    %v2639 = vsub.f32 %v2335, %v2545
    %v2640 = vsub.f32 %v2448, %v2545
    %v2641 = vsub.f32 %v2338, %v2548
    %v2642 = vsub.f32 %v2451, %v2548
    %v2643 = vsub.f32 %v2341, %v2551
    %v2644 = vsub.f32 %v2454, %v2551
    %v2645 = vsub.f32 %v2344, %v2554
    %v2646 = vsub.f32 %v2457, %v2554
    %v2647 = vsub.f32 %v2347, %v2557
    %v2648 = vsub.f32 %v2460, %v2557
    %v2649 = vsub.f32 %v2350, %v2560
    %v2650 = vsub.f32 %v2463, %v2560
    %v2651 = vsub.f32 %v2353, %v2563
    %v2652 = vsub.f32 %v2466, %v2563
    %v2653 = vsub.f32 %v2356, %v2566
    %v2654 = vsub.f32 %v2469, %v2566
    %v2655 = vsub.f32 %v2359, %v2569
    %v2656 = vsub.f32 %v2472, %v2569
    %v2657 = vsub.f32 %v2362, %v2572
    %v2658 = vsub.f32 %v2475, %v2572
    %v2659 = vsub.f32 %v2365, %v2575
    %v2660 = vsub.f32 %v2478, %v2575
    %v2661 = vsub.f32 %v2368, %v2578
    %v2662 = vsub.f32 %v2481, %v2578
    %v2663 = vsub.f32 %v2371, %v2581
    %v2664 = vsub.f32 %v2484, %v2581
    %v2665 = vsub.f32 %v2374, %v2584
    %v2666 = vsub.f32 %v2487, %v2584
    %v2667 = vsub.f32 %v2377, %v2587
    %v2668 = vsub.f32 %v2490, %v2587
    %v2669 = vsub.f32 %v2380, %v2590
    %v2670 = vsub.f32 %v2493, %v2590
    %v2671 = vsub.f32 %v2383, %v2593
    %v2672 = vsub.f32 %v2496, %v2593
    %v2673 = vsub.f32 %v2386, %v2596
    %v2674 = vsub.f32 %v2499, %v2596
    %v2675 = vsub.f32 %v2389, %v2599
    %v2676 = vsub.f32 %v2502, %v2599
    %v2677 = vsub.f32 %v2392, %v2602
    %v2678 = vsub.f32 %v2505, %v2602
    %v2679 = vsub.f32 %v2395, %v2605
    %v2680 = vsub.f32 %v2508, %v2605
    %v2681 = vsub.f32 %v2398, %v2608
    %v2682 = vsub.f32 %v2511, %v2608
    %v2683 = vsub.f32 %v2401, %v2611
    %v2684 = vsub.f32 %v2514, %v2611
    %v2685 = vsub.f32 %v2404, %v2614
    %v2686 = vsub.f32 %v2517, %v2614
    %v2687 = vsub.f32 %v2407, %v2617
    %v2688 = vsub.f32 %v2520, %v2617
    %v2689 = vsub.f32 %v2410, %v2620
    %v2690 = vsub.f32 %v2523, %v2620
    %v2691 = vsub.f32 %v2413, %v2623
    %v2692 = vsub.f32 %v2526, %v2623
    %v2693 = vsub.f32 %v2416, %v2626
    %v2694 = vsub.f32 %v2529, %v2626
    %v2695 = vsub.f32 %v2419, %v2629
    %v2696 = vsub.f32 %v2532, %v2629
    %v2697 = vsub.f32 %v2422, %v2632
    %v2698 = vsub.f32 %v2535, %v2632
    %v2699 = vsub.f32 %v2425, %v2635
    %v2700 = vsub.f32 %v2538, %v2635
    %v2701 = vsub.f32 %v2428, %v2638
    %v2702 = vsub.f32 %v2541, %v2638
    %v2703 = vmul.f32 %v2639, 1.442695
    %v2704 = vpow.pop %v2703
    %v2705 = vmul.f32 %v2640, 1.442695
    %v2706 = vpow.pop %v2705
    %v2707 = vmul.f32 %v2641, 1.442695
    %v2708 = vpow.pop %v2707
    %v2709 = vmul.f32 %v2642, 1.442695
    %v2710 = vpow.pop %v2709
    %v2711 = vmul.f32 %v2643, 1.442695
    %v2712 = vpow.pop %v2711
    %v2713 = vmul.f32 %v2644, 1.442695
    %v2714 = vpow.pop %v2713
    %v2715 = vmul.f32 %v2645, 1.442695
    %v2716 = vpow.pop %v2715
    %v2717 = vmul.f32 %v2646, 1.442695
    %v2718 = vpow.pop %v2717
    %v2719 = vmul.f32 %v2647, 1.442695
    %v2720 = vpow.pop %v2719
    %v2721 = vmul.f32 %v2648, 1.442695
    %v2722 = vpow.pop %v2721
    %v2723 = vmul.f32 %v2649, 1.442695
    %v2724 = vpow.pop %v2723
    %v2725 = vmul.f32 %v2650, 1.442695
    %v2726 = vpow.pop %v2725
    %v2727 = vmul.f32 %v2651, 1.442695
    %v2728 = vpow.pop %v2727
    %v2729 = vmul.f32 %v2652, 1.442695
    %v2730 = vpow.pop %v2729
    %v2731 = vmul.f32 %v2653, 1.442695
    %v2732 = vpow.pop %v2731
    %v2733 = vmul.f32 %v2654, 1.442695
    %v2734 = vpow.pop %v2733
    %v2735 = vmul.f32 %v2655, 1.442695
    %v2736 = vpow.pop %v2735
    %v2737 = vmul.f32 %v2656, 1.442695
    %v2738 = vpow.pop %v2737
    %v2739 = vmul.f32 %v2657, 1.442695
    %v2740 = vpow.pop %v2739
    %v2741 = vmul.f32 %v2658, 1.442695
    %v2742 = vpow.pop %v2741
    %v2743 = vmul.f32 %v2659, 1.442695
    %v2744 = vpow.pop %v2743
    %v2745 = vmul.f32 %v2660, 1.442695
    %v2746 = vpow.pop %v2745
    %v2747 = vmul.f32 %v2661, 1.442695
    %v2748 = vpow.pop %v2747
    %v2749 = vmul.f32 %v2662, 1.442695
    %v2750 = vpow.pop %v2749
    %v2751 = vmul.f32 %v2663, 1.442695
    %v2752 = vpow.pop %v2751
    %v2753 = vmul.f32 %v2664, 1.442695
    %v2754 = vpow.pop %v2753
    %v2755 = vmul.f32 %v2665, 1.442695
    %v2756 = vpow.pop %v2755
    %v2757 = vmul.f32 %v2666, 1.442695
    %v2758 = vpow.pop %v2757
    %v2759 = vmul.f32 %v2667, 1.442695
    %v2760 = vpow.pop %v2759
    %v2761 = vmul.f32 %v2668, 1.442695
    %v2762 = vpow.pop %v2761
    %v2763 = vmul.f32 %v2669, 1.442695
    %v2764 = vpow.pop %v2763
    %v2765 = vmul.f32 %v2670, 1.442695
    %v2766 = vpow.pop %v2765
    %v2767 = vmul.f32 %v2671, 1.442695
    %v2768 = vpow.pop %v2767
    %v2769 = vmul.f32 %v2672, 1.442695
    %v2770 = vpow.pop %v2769
    %v2771 = vmul.f32 %v2673, 1.442695
    %v2772 = vpow.pop %v2771
    %v2773 = vmul.f32 %v2674, 1.442695
    %v2774 = vpow.pop %v2773
    %v2775 = vmul.f32 %v2675, 1.442695
    %v2776 = vpow.pop %v2775
    %v2777 = vmul.f32 %v2676, 1.442695
    %v2778 = vpow.pop %v2777
    %v2779 = vmul.f32 %v2677, 1.442695
    %v2780 = vpow.pop %v2779
    %v2781 = vmul.f32 %v2678, 1.442695
    %v2782 = vpow.pop %v2781
    %v2783 = vmul.f32 %v2679, 1.442695
    %v2784 = vpow.pop %v2783
    %v2785 = vmul.f32 %v2680, 1.442695
    %v2786 = vpow.pop %v2785
    %v2787 = vmul.f32 %v2681, 1.442695
    %v2788 = vpow.pop %v2787
    %v2789 = vmul.f32 %v2682, 1.442695
    %v2790 = vpow.pop %v2789
    %v2791 = vmul.f32 %v2683, 1.442695
    %v2792 = vpow.pop %v2791
    %v2793 = vmul.f32 %v2684, 1.442695
    %v2794 = vpow.pop %v2793
    %v2795 = vmul.f32 %v2685, 1.442695
    %v2796 = vpow.pop %v2795
    %v2797 = vmul.f32 %v2686, 1.442695
    %v2798 = vpow.pop %v2797
    %v2799 = vmul.f32 %v2687, 1.442695
    %v2800 = vpow.pop %v2799
    %v2801 = vmul.f32 %v2688, 1.442695
    %v2802 = vpow.pop %v2801
    %v2803 = vmul.f32 %v2689, 1.442695
    %v2804 = vpow.pop %v2803
    %v2805 = vmul.f32 %v2690, 1.442695
    %v2806 = vpow.pop %v2805
    %v2807 = vmul.f32 %v2691, 1.442695
    %v2808 = vpow.pop %v2807
    %v2809 = vmul.f32 %v2692, 1.442695
    %v2810 = vpow.pop %v2809
    %v2811 = vmul.f32 %v2693, 1.442695
    %v2812 = vpow.pop %v2811
    %v2813 = vmul.f32 %v2694, 1.442695
    %v2814 = vpow.pop %v2813
    %v2815 = vmul.f32 %v2695, 1.442695
    %v2816 = vpow.pop %v2815
    %v2817 = vmul.f32 %v2696, 1.442695
    %v2818 = vpow.pop %v2817
    %v2819 = vmul.f32 %v2697, 1.442695
    %v2820 = vpow.pop %v2819
    %v2821 = vmul.f32 %v2698, 1.442695
    %v2822 = vpow.pop %v2821
    %v2823 = vmul.f32 %v2699, 1.442695
    %v2824 = vpow.pop %v2823
    %v2825 = vmul.f32 %v2700, 1.442695
    %v2826 = vpow.pop %v2825
    %v2827 = vmul.f32 %v2701, 1.442695
    %v2828 = vpow.pop %v2827
    %v2829 = vmul.f32 %v2702, 1.442695
    %v2830 = vpow.pop %v2829
    %v2831 = vadd.f32 %v2704, %v2706
    %2832 = vadd.xlane.f32.xlu0 %v2831
    %v2833 = vpop.xlane.xlu0 %2832
    %v2834 = vadd.f32 %v2708, %v2710
    %2835 = vadd.xlane.f32.xlu0 %v2834
    %v2836 = vpop.xlane.xlu0 %2835
    %v2837 = vadd.f32 %v2712, %v2714
    %2838 = vadd.xlane.f32.xlu0 %v2837
    %v2839 = vpop.xlane.xlu0 %2838
    %v2840 = vadd.f32 %v2716, %v2718
    %2841 = vadd.xlane.f32.xlu0 %v2840
    %v2842 = vpop.xlane.xlu0 %2841
    %v2843 = vadd.f32 %v2720, %v2722
    %2844 = vadd.xlane.f32.xlu0 %v2843
    %v2845 = vpop.xlane.xlu0 %2844
    %v2846 = vadd.f32 %v2724, %v2726
    %2847 = vadd.xlane.f32.xlu0 %v2846
    %v2848 = vpop.xlane.xlu0 %2847
    %v2849 = vadd.f32 %v2728, %v2730
    %2850 = vadd.xlane.f32.xlu0 %v2849
    %v2851 = vpop.xlane.xlu0 %2850
    %v2852 = vadd.f32 %v2732, %v2734
    %2853 = vadd.xlane.f32.xlu0 %v2852
    %v2854 = vpop.xlane.xlu0 %2853
    %v2855 = vadd.f32 %v2736, %v2738
    %2856 = vadd.xlane.f32.xlu0 %v2855
    %v2857 = vpop.xlane.xlu0 %2856
    %v2858 = vadd.f32 %v2740, %v2742
    %2859 = vadd.xlane.f32.xlu0 %v2858
    %v2860 = vpop.xlane.xlu0 %2859
    %v2861 = vadd.f32 %v2744, %v2746
    %2862 = vadd.xlane.f32.xlu0 %v2861
    %v2863 = vpop.xlane.xlu0 %2862
    %v2864 = vadd.f32 %v2748, %v2750
    %2865 = vadd.xlane.f32.xlu0 %v2864
    %v2866 = vpop.xlane.xlu0 %2865
    %v2867 = vadd.f32 %v2752, %v2754
    %2868 = vadd.xlane.f32.xlu0 %v2867
    %v2869 = vpop.xlane.xlu0 %2868
    %v2870 = vadd.f32 %v2756, %v2758
    %2871 = vadd.xlane.f32.xlu0 %v2870
    %v2872 = vpop.xlane.xlu0 %2871
    %v2873 = vadd.f32 %v2760, %v2762
    %2874 = vadd.xlane.f32.xlu0 %v2873
    %v2875 = vpop.xlane.xlu0 %2874
    %v2876 = vadd.f32 %v2764, %v2766
    %2877 = vadd.xlane.f32.xlu0 %v2876
    %v2878 = vpop.xlane.xlu0 %2877
    %v2879 = vadd.f32 %v2768, %v2770
    %2880 = vadd.xlane.f32.xlu0 %v2879
    %v2881 = vpop.xlane.xlu0 %2880
    %v2882 = vadd.f32 %v2772, %v2774
    %2883 = vadd.xlane.f32.xlu0 %v2882
    %v2884 = vpop.xlane.xlu0 %2883
    %v2885 = vadd.f32 %v2776, %v2778
    %2886 = vadd.xlane.f32.xlu0 %v2885
    %v2887 = vpop.xlane.xlu0 %2886
    %v2888 = vadd.f32 %v2780, %v2782
    %2889 = vadd.xlane.f32.xlu0 %v2888
    %v2890 = vpop.xlane.xlu0 %2889
    %v2891 = vadd.f32 %v2784, %v2786
    %2892 = vadd.xlane.f32.xlu0 %v2891
    %v2893 = vpop.xlane.xlu0 %2892
    %v2894 = vadd.f32 %v2788, %v2790
    %2895 = vadd.xlane.f32.xlu0 %v2894
    %v2896 = vpop.xlane.xlu0 %2895
    %v2897 = vadd.f32 %v2792, %v2794
    %2898 = vadd.xlane.f32.xlu0 %v2897
    %v2899 = vpop.xlane.xlu0 %2898
    %v2900 = vadd.f32 %v2796, %v2798
    %2901 = vadd.xlane.f32.xlu0 %v2900
    %v2902 = vpop.xlane.xlu0 %2901
    %v2903 = vadd.f32 %v2800, %v2802
    %2904 = vadd.xlane.f32.xlu0 %v2903
    %v2905 = vpop.xlane.xlu0 %2904
    %v2906 = vadd.f32 %v2804, %v2806
    %2907 = vadd.xlane.f32.xlu0 %v2906
    %v2908 = vpop.xlane.xlu0 %2907
    %v2909 = vadd.f32 %v2808, %v2810
    %2910 = vadd.xlane.f32.xlu0 %v2909
    %v2911 = vpop.xlane.xlu0 %2910
    %v2912 = vadd.f32 %v2812, %v2814
    %2913 = vadd.xlane.f32.xlu0 %v2912
    %v2914 = vpop.xlane.xlu0 %2913
    %v2915 = vadd.f32 %v2816, %v2818
    %2916 = vadd.xlane.f32.xlu0 %v2915
    %v2917 = vpop.xlane.xlu0 %2916
    %v2918 = vadd.f32 %v2820, %v2822
    %2919 = vadd.xlane.f32.xlu0 %v2918
    %v2920 = vpop.xlane.xlu0 %2919
    %v2921 = vadd.f32 %v2824, %v2826
    %2922 = vadd.xlane.f32.xlu0 %v2921
    %v2923 = vpop.xlane.xlu0 %2922
    %v2924 = vadd.f32 %v2828, %v2830
    %2925 = vadd.xlane.f32.xlu0 %v2924
    %v2926 = vpop.xlane.xlu0 %2925
    %v2927 = vrcp.pop %v2833
    %v2928 = vmul.f32 %v2833, %v2927
    %v2929 = vsub.f32 1.0, %v2928
    %v2930 = vmul.f32 %v2927, %v2929
    %v2931 = vadd.f32 %v2927, %v2930
    %vm2932 = vweird.f32 %v2833
    %vm2933 = vweird.f32 %v2927
    %vm2934 = vmor %vm2932, %vm2933
    %v2935 = vsel %vm2934, %v2927, %v2931
    %v2936 = vand.u32 2147483647, %v2833
    %vm2937 = vcmp.eq.f32.partialorder %v2936, 8.507059e+37
    %v2938 = vand.u32 %v2833, 2147483648
    %v2939 = vor.u32 1.1754944e-38, %v2938
    %v2940 = vsel %vm2937, %v2939, %v2935
    %v2941 = vrcp.pop %v2836
    %v2942 = vmul.f32 %v2836, %v2941
    %v2943 = vsub.f32 1.0, %v2942
    %v2944 = vmul.f32 %v2941, %v2943
    %v2945 = vadd.f32 %v2941, %v2944
    %vm2946 = vweird.f32 %v2836
    %vm2947 = vweird.f32 %v2941
    %vm2948 = vmor %vm2946, %vm2947
    %v2949 = vsel %vm2948, %v2941, %v2945
    %v2950 = vand.u32 2147483647, %v2836
    %vm2951 = vcmp.eq.f32.partialorder %v2950, 8.507059e+37
    %v2952 = vand.u32 %v2836, 2147483648
    %v2953 = vor.u32 1.1754944e-38, %v2952
    %v2954 = vsel %vm2951, %v2953, %v2949
    %v2955 = vrcp.pop %v2839
    %v2956 = vmul.f32 %v2839, %v2955
    %v2957 = vsub.f32 1.0, %v2956
    %v2958 = vmul.f32 %v2955, %v2957
    %v2959 = vadd.f32 %v2955, %v2958
    %vm2960 = vweird.f32 %v2839
    %vm2961 = vweird.f32 %v2955
    %vm2962 = vmor %vm2960, %vm2961
    %v2963 = vsel %vm2962, %v2955, %v2959
    %v2964 = vand.u32 2147483647, %v2839
    %vm2965 = vcmp.eq.f32.partialorder %v2964, 8.507059e+37
    %v2966 = vand.u32 %v2839, 2147483648
    %v2967 = vor.u32 1.1754944e-38, %v2966
    %v2968 = vsel %vm2965, %v2967, %v2963
    %v2969 = vrcp.pop %v2842
    %v2970 = vmul.f32 %v2842, %v2969
    %v2971 = vsub.f32 1.0, %v2970
    %v2972 = vmul.f32 %v2969, %v2971
    %v2973 = vadd.f32 %v2969, %v2972
    %vm2974 = vweird.f32 %v2842
    %vm2975 = vweird.f32 %v2969
    %vm2976 = vmor %vm2974, %vm2975
    %v2977 = vsel %vm2976, %v2969, %v2973
    %v2978 = vand.u32 2147483647, %v2842
    %vm2979 = vcmp.eq.f32.partialorder %v2978, 8.507059e+37
    %v2980 = vand.u32 %v2842, 2147483648
    %v2981 = vor.u32 1.1754944e-38, %v2980
    %v2982 = vsel %vm2979, %v2981, %v2977
    %v2983 = vrcp.pop %v2845
    %v2984 = vmul.f32 %v2845, %v2983
    %v2985 = vsub.f32 1.0, %v2984
    %v2986 = vmul.f32 %v2983, %v2985
    %v2987 = vadd.f32 %v2983, %v2986
    %vm2988 = vweird.f32 %v2845
    %vm2989 = vweird.f32 %v2983
    %vm2990 = vmor %vm2988, %vm2989
    %v2991 = vsel %vm2990, %v2983, %v2987
    %v2992 = vand.u32 2147483647, %v2845
    %vm2993 = vcmp.eq.f32.partialorder %v2992, 8.507059e+37
    %v2994 = vand.u32 %v2845, 2147483648
    %v2995 = vor.u32 1.1754944e-38, %v2994
    %v2996 = vsel %vm2993, %v2995, %v2991
    %v2997 = vrcp.pop %v2848
    %v2998 = vmul.f32 %v2848, %v2997
    %v2999 = vsub.f32 1.0, %v2998
    %v3000 = vmul.f32 %v2997, %v2999
    %v3001 = vadd.f32 %v2997, %v3000
    %vm3002 = vweird.f32 %v2848
    %vm3003 = vweird.f32 %v2997
    %vm3004 = vmor %vm3002, %vm3003
    %v3005 = vsel %vm3004, %v2997, %v3001
    %v3006 = vand.u32 2147483647, %v2848
    %vm3007 = vcmp.eq.f32.partialorder %v3006, 8.507059e+37
    %v3008 = vand.u32 %v2848, 2147483648
    %v3009 = vor.u32 1.1754944e-38, %v3008
    %v3010 = vsel %vm3007, %v3009, %v3005
    %v3011 = vrcp.pop %v2851
    %v3012 = vmul.f32 %v2851, %v3011
    %v3013 = vsub.f32 1.0, %v3012
    %v3014 = vmul.f32 %v3011, %v3013
    %v3015 = vadd.f32 %v3011, %v3014
    %vm3016 = vweird.f32 %v2851
    %vm3017 = vweird.f32 %v3011
    %vm3018 = vmor %vm3016, %vm3017
    %v3019 = vsel %vm3018, %v3011, %v3015
    %v3020 = vand.u32 2147483647, %v2851
    %vm3021 = vcmp.eq.f32.partialorder %v3020, 8.507059e+37
    %v3022 = vand.u32 %v2851, 2147483648
    %v3023 = vor.u32 1.1754944e-38, %v3022
    %v3024 = vsel %vm3021, %v3023, %v3019
    %v3025 = vrcp.pop %v2854
    %v3026 = vmul.f32 %v2854, %v3025
    %v3027 = vsub.f32 1.0, %v3026
    %v3028 = vmul.f32 %v3025, %v3027
    %v3029 = vadd.f32 %v3025, %v3028
    %vm3030 = vweird.f32 %v2854
    %vm3031 = vweird.f32 %v3025
    %vm3032 = vmor %vm3030, %vm3031
    %v3033 = vsel %vm3032, %v3025, %v3029
    %v3034 = vand.u32 2147483647, %v2854
    %vm3035 = vcmp.eq.f32.partialorder %v3034, 8.507059e+37
    %v3036 = vand.u32 %v2854, 2147483648
    %v3037 = vor.u32 1.1754944e-38, %v3036
    %v3038 = vsel %vm3035, %v3037, %v3033
    %v3039 = vrcp.pop %v2857
    %v3040 = vmul.f32 %v2857, %v3039
    %v3041 = vsub.f32 1.0, %v3040
    %v3042 = vmul.f32 %v3039, %v3041
    %v3043 = vadd.f32 %v3039, %v3042
    %vm3044 = vweird.f32 %v2857
    %vm3045 = vweird.f32 %v3039
    %vm3046 = vmor %vm3044, %vm3045
    %v3047 = vsel %vm3046, %v3039, %v3043
    %v3048 = vand.u32 2147483647, %v2857
    %vm3049 = vcmp.eq.f32.partialorder %v3048, 8.507059e+37
    %v3050 = vand.u32 %v2857, 2147483648
    %v3051 = vor.u32 1.1754944e-38, %v3050
    %v3052 = vsel %vm3049, %v3051, %v3047
    %v3053 = vrcp.pop %v2860
    %v3054 = vmul.f32 %v2860, %v3053
    %v3055 = vsub.f32 1.0, %v3054
    %v3056 = vmul.f32 %v3053, %v3055
    %v3057 = vadd.f32 %v3053, %v3056
    %vm3058 = vweird.f32 %v2860
    %vm3059 = vweird.f32 %v3053
    %vm3060 = vmor %vm3058, %vm3059
    %v3061 = vsel %vm3060, %v3053, %v3057
    %v3062 = vand.u32 2147483647, %v2860
    %vm3063 = vcmp.eq.f32.partialorder %v3062, 8.507059e+37
    %v3064 = vand.u32 %v2860, 2147483648
    %v3065 = vor.u32 1.1754944e-38, %v3064
    %v3066 = vsel %vm3063, %v3065, %v3061
    %v3067 = vrcp.pop %v2863
    %v3068 = vmul.f32 %v2863, %v3067
    %v3069 = vsub.f32 1.0, %v3068
    %v3070 = vmul.f32 %v3067, %v3069
    %v3071 = vadd.f32 %v3067, %v3070
    %vm3072 = vweird.f32 %v2863
    %vm3073 = vweird.f32 %v3067
    %vm3074 = vmor %vm3072, %vm3073
    %v3075 = vsel %vm3074, %v3067, %v3071
    %v3076 = vand.u32 2147483647, %v2863
    %vm3077 = vcmp.eq.f32.partialorder %v3076, 8.507059e+37
    %v3078 = vand.u32 %v2863, 2147483648
    %v3079 = vor.u32 1.1754944e-38, %v3078
    %v3080 = vsel %vm3077, %v3079, %v3075
    %v3081 = vrcp.pop %v2866
    %v3082 = vmul.f32 %v2866, %v3081
    %v3083 = vsub.f32 1.0, %v3082
    %v3084 = vmul.f32 %v3081, %v3083
    %v3085 = vadd.f32 %v3081, %v3084
    %vm3086 = vweird.f32 %v2866
    %vm3087 = vweird.f32 %v3081
    %vm3088 = vmor %vm3086, %vm3087
    %v3089 = vsel %vm3088, %v3081, %v3085
    %v3090 = vand.u32 2147483647, %v2866
    %vm3091 = vcmp.eq.f32.partialorder %v3090, 8.507059e+37
    %v3092 = vand.u32 %v2866, 2147483648
    %v3093 = vor.u32 1.1754944e-38, %v3092
    %v3094 = vsel %vm3091, %v3093, %v3089
    %v3095 = vrcp.pop %v2869
    %v3096 = vmul.f32 %v2869, %v3095
    %v3097 = vsub.f32 1.0, %v3096
    %v3098 = vmul.f32 %v3095, %v3097
    %v3099 = vadd.f32 %v3095, %v3098
    %vm3100 = vweird.f32 %v2869
    %vm3101 = vweird.f32 %v3095
    %vm3102 = vmor %vm3100, %vm3101
    %v3103 = vsel %vm3102, %v3095, %v3099
    %v3104 = vand.u32 2147483647, %v2869
    %vm3105 = vcmp.eq.f32.partialorder %v3104, 8.507059e+37
    %v3106 = vand.u32 %v2869, 2147483648
    %v3107 = vor.u32 1.1754944e-38, %v3106
    %v3108 = vsel %vm3105, %v3107, %v3103
    %v3109 = vrcp.pop %v2872
    %v3110 = vmul.f32 %v2872, %v3109
    %v3111 = vsub.f32 1.0, %v3110
    %v3112 = vmul.f32 %v3109, %v3111
    %v3113 = vadd.f32 %v3109, %v3112
    %vm3114 = vweird.f32 %v2872
    %vm3115 = vweird.f32 %v3109
    %vm3116 = vmor %vm3114, %vm3115
    %v3117 = vsel %vm3116, %v3109, %v3113
    %v3118 = vand.u32 2147483647, %v2872
    %vm3119 = vcmp.eq.f32.partialorder %v3118, 8.507059e+37
    %v3120 = vand.u32 %v2872, 2147483648
    %v3121 = vor.u32 1.1754944e-38, %v3120
    %v3122 = vsel %vm3119, %v3121, %v3117
    %v3123 = vrcp.pop %v2875
    %v3124 = vmul.f32 %v2875, %v3123
    %v3125 = vsub.f32 1.0, %v3124
    %v3126 = vmul.f32 %v3123, %v3125
    %v3127 = vadd.f32 %v3123, %v3126
    %vm3128 = vweird.f32 %v2875
    %vm3129 = vweird.f32 %v3123
    %vm3130 = vmor %vm3128, %vm3129
    %v3131 = vsel %vm3130, %v3123, %v3127
    %v3132 = vand.u32 2147483647, %v2875
    %vm3133 = vcmp.eq.f32.partialorder %v3132, 8.507059e+37
    %v3134 = vand.u32 %v2875, 2147483648
    %v3135 = vor.u32 1.1754944e-38, %v3134
    %v3136 = vsel %vm3133, %v3135, %v3131
    %v3137 = vrcp.pop %v2878
    %v3138 = vmul.f32 %v2878, %v3137
    %v3139 = vsub.f32 1.0, %v3138
    %v3140 = vmul.f32 %v3137, %v3139
    %v3141 = vadd.f32 %v3137, %v3140
    %vm3142 = vweird.f32 %v2878
    %vm3143 = vweird.f32 %v3137
    %vm3144 = vmor %vm3142, %vm3143
    %v3145 = vsel %vm3144, %v3137, %v3141
    %v3146 = vand.u32 2147483647, %v2878
    %vm3147 = vcmp.eq.f32.partialorder %v3146, 8.507059e+37
    %v3148 = vand.u32 %v2878, 2147483648
    %v3149 = vor.u32 1.1754944e-38, %v3148
    %v3150 = vsel %vm3147, %v3149, %v3145
    %v3151 = vrcp.pop %v2881
    %v3152 = vmul.f32 %v2881, %v3151
    %v3153 = vsub.f32 1.0, %v3152
    %v3154 = vmul.f32 %v3151, %v3153
    %v3155 = vadd.f32 %v3151, %v3154
    %vm3156 = vweird.f32 %v2881
    %vm3157 = vweird.f32 %v3151
    %vm3158 = vmor %vm3156, %vm3157
    %v3159 = vsel %vm3158, %v3151, %v3155
    %v3160 = vand.u32 2147483647, %v2881
    %vm3161 = vcmp.eq.f32.partialorder %v3160, 8.507059e+37
    %v3162 = vand.u32 %v2881, 2147483648
    %v3163 = vor.u32 1.1754944e-38, %v3162
    %v3164 = vsel %vm3161, %v3163, %v3159
    %v3165 = vrcp.pop %v2884
    %v3166 = vmul.f32 %v2884, %v3165
    %v3167 = vsub.f32 1.0, %v3166
    %v3168 = vmul.f32 %v3165, %v3167
    %v3169 = vadd.f32 %v3165, %v3168
    %vm3170 = vweird.f32 %v2884
    %vm3171 = vweird.f32 %v3165
    %vm3172 = vmor %vm3170, %vm3171
    %v3173 = vsel %vm3172, %v3165, %v3169
    %v3174 = vand.u32 2147483647, %v2884
    %vm3175 = vcmp.eq.f32.partialorder %v3174, 8.507059e+37
    %v3176 = vand.u32 %v2884, 2147483648
    %v3177 = vor.u32 1.1754944e-38, %v3176
    %v3178 = vsel %vm3175, %v3177, %v3173
    %v3179 = vrcp.pop %v2887
    %v3180 = vmul.f32 %v2887, %v3179
    %v3181 = vsub.f32 1.0, %v3180
    %v3182 = vmul.f32 %v3179, %v3181
    %v3183 = vadd.f32 %v3179, %v3182
    %vm3184 = vweird.f32 %v2887
    %vm3185 = vweird.f32 %v3179
    %vm3186 = vmor %vm3184, %vm3185
    %v3187 = vsel %vm3186, %v3179, %v3183
    %v3188 = vand.u32 2147483647, %v2887
    %vm3189 = vcmp.eq.f32.partialorder %v3188, 8.507059e+37
    %v3190 = vand.u32 %v2887, 2147483648
    %v3191 = vor.u32 1.1754944e-38, %v3190
    %v3192 = vsel %vm3189, %v3191, %v3187
    %v3193 = vrcp.pop %v2890
    %v3194 = vmul.f32 %v2890, %v3193
    %v3195 = vsub.f32 1.0, %v3194
    %v3196 = vmul.f32 %v3193, %v3195
    %v3197 = vadd.f32 %v3193, %v3196
    %vm3198 = vweird.f32 %v2890
    %vm3199 = vweird.f32 %v3193
    %vm3200 = vmor %vm3198, %vm3199
    %v3201 = vsel %vm3200, %v3193, %v3197
    %v3202 = vand.u32 2147483647, %v2890
    %vm3203 = vcmp.eq.f32.partialorder %v3202, 8.507059e+37
    %v3204 = vand.u32 %v2890, 2147483648
    %v3205 = vor.u32 1.1754944e-38, %v3204
    %v3206 = vsel %vm3203, %v3205, %v3201
    %v3207 = vrcp.pop %v2893
    %v3208 = vmul.f32 %v2893, %v3207
    %v3209 = vsub.f32 1.0, %v3208
    %v3210 = vmul.f32 %v3207, %v3209
    %v3211 = vadd.f32 %v3207, %v3210
    %vm3212 = vweird.f32 %v2893
    %vm3213 = vweird.f32 %v3207
    %vm3214 = vmor %vm3212, %vm3213
    %v3215 = vsel %vm3214, %v3207, %v3211
    %v3216 = vand.u32 2147483647, %v2893
    %vm3217 = vcmp.eq.f32.partialorder %v3216, 8.507059e+37
    %v3218 = vand.u32 %v2893, 2147483648
    %v3219 = vor.u32 1.1754944e-38, %v3218
    %v3220 = vsel %vm3217, %v3219, %v3215
    %v3221 = vrcp.pop %v2896
    %v3222 = vmul.f32 %v2896, %v3221
    %v3223 = vsub.f32 1.0, %v3222
    %v3224 = vmul.f32 %v3221, %v3223
    %v3225 = vadd.f32 %v3221, %v3224
    %vm3226 = vweird.f32 %v2896
    %vm3227 = vweird.f32 %v3221
    %vm3228 = vmor %vm3226, %vm3227
    %v3229 = vsel %vm3228, %v3221, %v3225
    %v3230 = vand.u32 2147483647, %v2896
    %vm3231 = vcmp.eq.f32.partialorder %v3230, 8.507059e+37
    %v3232 = vand.u32 %v2896, 2147483648
    %v3233 = vor.u32 1.1754944e-38, %v3232
    %v3234 = vsel %vm3231, %v3233, %v3229
    %v3235 = vrcp.pop %v2899
    %v3236 = vmul.f32 %v2899, %v3235
    %v3237 = vsub.f32 1.0, %v3236
    %v3238 = vmul.f32 %v3235, %v3237
    %v3239 = vadd.f32 %v3235, %v3238
    %vm3240 = vweird.f32 %v2899
    %vm3241 = vweird.f32 %v3235
    %vm3242 = vmor %vm3240, %vm3241
    %v3243 = vsel %vm3242, %v3235, %v3239
    %v3244 = vand.u32 2147483647, %v2899
    %vm3245 = vcmp.eq.f32.partialorder %v3244, 8.507059e+37
    %v3246 = vand.u32 %v2899, 2147483648
    %v3247 = vor.u32 1.1754944e-38, %v3246
    %v3248 = vsel %vm3245, %v3247, %v3243
    %v3249 = vrcp.pop %v2902
    %v3250 = vmul.f32 %v2902, %v3249
    %v3251 = vsub.f32 1.0, %v3250
    %v3252 = vmul.f32 %v3249, %v3251
    %v3253 = vadd.f32 %v3249, %v3252
    %vm3254 = vweird.f32 %v2902
    %vm3255 = vweird.f32 %v3249
    %vm3256 = vmor %vm3254, %vm3255
    %v3257 = vsel %vm3256, %v3249, %v3253
    %v3258 = vand.u32 2147483647, %v2902
    %vm3259 = vcmp.eq.f32.partialorder %v3258, 8.507059e+37
    %v3260 = vand.u32 %v2902, 2147483648
    %v3261 = vor.u32 1.1754944e-38, %v3260
    %v3262 = vsel %vm3259, %v3261, %v3257
    %v3263 = vrcp.pop %v2905
    %v3264 = vmul.f32 %v2905, %v3263
    %v3265 = vsub.f32 1.0, %v3264
    %v3266 = vmul.f32 %v3263, %v3265
    %v3267 = vadd.f32 %v3263, %v3266
    %vm3268 = vweird.f32 %v2905
    %vm3269 = vweird.f32 %v3263
    %vm3270 = vmor %vm3268, %vm3269
    %v3271 = vsel %vm3270, %v3263, %v3267
    %v3272 = vand.u32 2147483647, %v2905
    %vm3273 = vcmp.eq.f32.partialorder %v3272, 8.507059e+37
    %v3274 = vand.u32 %v2905, 2147483648
    %v3275 = vor.u32 1.1754944e-38, %v3274
    %v3276 = vsel %vm3273, %v3275, %v3271
    %v3277 = vrcp.pop %v2908
    %v3278 = vmul.f32 %v2908, %v3277
    %v3279 = vsub.f32 1.0, %v3278
    %v3280 = vmul.f32 %v3277, %v3279
    %v3281 = vadd.f32 %v3277, %v3280
    %vm3282 = vweird.f32 %v2908
    %vm3283 = vweird.f32 %v3277
    %vm3284 = vmor %vm3282, %vm3283
    %v3285 = vsel %vm3284, %v3277, %v3281
    %v3286 = vand.u32 2147483647, %v2908
    %vm3287 = vcmp.eq.f32.partialorder %v3286, 8.507059e+37
    %v3288 = vand.u32 %v2908, 2147483648
    %v3289 = vor.u32 1.1754944e-38, %v3288
    %v3290 = vsel %vm3287, %v3289, %v3285
    %v3291 = vrcp.pop %v2911
    %v3292 = vmul.f32 %v2911, %v3291
    %v3293 = vsub.f32 1.0, %v3292
    %v3294 = vmul.f32 %v3291, %v3293
    %v3295 = vadd.f32 %v3291, %v3294
    %vm3296 = vweird.f32 %v2911
    %vm3297 = vweird.f32 %v3291
    %vm3298 = vmor %vm3296, %vm3297
    %v3299 = vsel %vm3298, %v3291, %v3295
    %v3300 = vand.u32 2147483647, %v2911
    %vm3301 = vcmp.eq.f32.partialorder %v3300, 8.507059e+37
    %v3302 = vand.u32 %v2911, 2147483648
    %v3303 = vor.u32 1.1754944e-38, %v3302
    %v3304 = vsel %vm3301, %v3303, %v3299
    %v3305 = vrcp.pop %v2914
    %v3306 = vmul.f32 %v2914, %v3305
    %v3307 = vsub.f32 1.0, %v3306
    %v3308 = vmul.f32 %v3305, %v3307
    %v3309 = vadd.f32 %v3305, %v3308
    %vm3310 = vweird.f32 %v2914
    %vm3311 = vweird.f32 %v3305
    %vm3312 = vmor %vm3310, %vm3311
    %v3313 = vsel %vm3312, %v3305, %v3309
    %v3314 = vand.u32 2147483647, %v2914
    %vm3315 = vcmp.eq.f32.partialorder %v3314, 8.507059e+37
    %v3316 = vand.u32 %v2914, 2147483648
    %v3317 = vor.u32 1.1754944e-38, %v3316
    %v3318 = vsel %vm3315, %v3317, %v3313
    %v3319 = vrcp.pop %v2917
    %v3320 = vmul.f32 %v2917, %v3319
    %v3321 = vsub.f32 1.0, %v3320
    %v3322 = vmul.f32 %v3319, %v3321
    %v3323 = vadd.f32 %v3319, %v3322
    %vm3324 = vweird.f32 %v2917
    %vm3325 = vweird.f32 %v3319
    %vm3326 = vmor %vm3324, %vm3325
    %v3327 = vsel %vm3326, %v3319, %v3323
    %v3328 = vand.u32 2147483647, %v2917
    %vm3329 = vcmp.eq.f32.partialorder %v3328, 8.507059e+37
    %v3330 = vand.u32 %v2917, 2147483648
    %v3331 = vor.u32 1.1754944e-38, %v3330
    %v3332 = vsel %vm3329, %v3331, %v3327
    %v3333 = vrcp.pop %v2920
    %v3334 = vmul.f32 %v2920, %v3333
    %v3335 = vsub.f32 1.0, %v3334
    %v3336 = vmul.f32 %v3333, %v3335
    %v3337 = vadd.f32 %v3333, %v3336
    %vm3338 = vweird.f32 %v2920
    %vm3339 = vweird.f32 %v3333
    %vm3340 = vmor %vm3338, %vm3339
    %v3341 = vsel %vm3340, %v3333, %v3337
    %v3342 = vand.u32 2147483647, %v2920
    %vm3343 = vcmp.eq.f32.partialorder %v3342, 8.507059e+37
    %v3344 = vand.u32 %v2920, 2147483648
    %v3345 = vor.u32 1.1754944e-38, %v3344
    %v3346 = vsel %vm3343, %v3345, %v3341
    %v3347 = vrcp.pop %v2923
    %v3348 = vmul.f32 %v2923, %v3347
    %v3349 = vsub.f32 1.0, %v3348
    %v3350 = vmul.f32 %v3347, %v3349
    %v3351 = vadd.f32 %v3347, %v3350
    %vm3352 = vweird.f32 %v2923
    %vm3353 = vweird.f32 %v3347
    %vm3354 = vmor %vm3352, %vm3353
    %v3355 = vsel %vm3354, %v3347, %v3351
    %v3356 = vand.u32 2147483647, %v2923
    %vm3357 = vcmp.eq.f32.partialorder %v3356, 8.507059e+37
    %v3358 = vand.u32 %v2923, 2147483648
    %v3359 = vor.u32 1.1754944e-38, %v3358
    %v3360 = vsel %vm3357, %v3359, %v3355
    %v3361 = vrcp.pop %v2926
    %v3362 = vmul.f32 %v2926, %v3361
    %v3363 = vsub.f32 1.0, %v3362
    %v3364 = vmul.f32 %v3361, %v3363
    %v3365 = vadd.f32 %v3361, %v3364
    %vm3366 = vweird.f32 %v2926
    %vm3367 = vweird.f32 %v3361
    %vm3368 = vmor %vm3366, %vm3367
    %v3369 = vsel %vm3368, %v3361, %v3365
    %v3370 = vand.u32 2147483647, %v2926
    %vm3371 = vcmp.eq.f32.partialorder %v3370, 8.507059e+37
    %v3372 = vand.u32 %v2926, 2147483648
    %v3373 = vor.u32 1.1754944e-38, %v3372
    %v3374 = vsel %vm3371, %v3373, %v3369
    %3375 = vrot.lane.b32.xlu0 %v198, 56
    %v3376 = vpop.permute.xlu0 %3375
    %3377 = vrot.lane.b32.xlu0 %v201, 56
    %v3378 = vpop.permute.xlu0 %3377
    %3379 = vrot.lane.b32.xlu0 %v204, 56
    %v3380 = vpop.permute.xlu0 %3379
    %3381 = vrot.lane.b32.xlu0 %v207, 56
    %v3382 = vpop.permute.xlu0 %3381
    %3383 = vrot.lane.b32.xlu0 %v210, 56
    %v3384 = vpop.permute.xlu0 %3383
    %3385 = vrot.lane.b32.xlu0 %v213, 56
    %v3386 = vpop.permute.xlu0 %3385
    %3387 = vrot.lane.b32.xlu0 %v216, 56
    %v3388 = vpop.permute.xlu0 %3387
    %3389 = vrot.lane.b32.xlu0 %v219, 56
    %v3390 = vpop.permute.xlu0 %3389
    %3391 = vrot.lane.b32.xlu0 %v222, 56
    %v3392 = vpop.permute.xlu0 %3391
    %3393 = vrot.lane.b32.xlu0 %v225, 56
    %v3394 = vpop.permute.xlu0 %3393
    %3395 = vrot.lane.b32.xlu0 %v228, 56
    %v3396 = vpop.permute.xlu0 %3395
    %3397 = vrot.lane.b32.xlu0 %v231, 56
    %v3398 = vpop.permute.xlu0 %3397
    %3399 = vrot.lane.b32.xlu0 %v234, 56
    %v3400 = vpop.permute.xlu0 %3399
    %3401 = vrot.lane.b32.xlu0 %v237, 56
    %v3402 = vpop.permute.xlu0 %3401
    %3403 = vrot.lane.b32.xlu0 %v240, 56
    %v3404 = vpop.permute.xlu0 %3403
    %3405 = vrot.lane.b32.xlu0 %v243, 56
    %v3406 = vpop.permute.xlu0 %3405
    %3407 = vrot.lane.b32.xlu0 %v246, 56
    %v3408 = vpop.permute.xlu0 %3407
    %3409 = vrot.lane.b32.xlu0 %v249, 56
    %v3410 = vpop.permute.xlu0 %3409
    %3411 = vrot.lane.b32.xlu0 %v252, 56
    %v3412 = vpop.permute.xlu0 %3411
    %3413 = vrot.lane.b32.xlu0 %v255, 56
    %v3414 = vpop.permute.xlu0 %3413
    %3415 = vrot.lane.b32.xlu0 %v258, 56
    %v3416 = vpop.permute.xlu0 %3415
    %3417 = vrot.lane.b32.xlu0 %v261, 56
    %v3418 = vpop.permute.xlu0 %3417
    %3419 = vrot.lane.b32.xlu0 %v264, 56
    %v3420 = vpop.permute.xlu0 %3419
    %3421 = vrot.lane.b32.xlu0 %v267, 56
    %v3422 = vpop.permute.xlu0 %3421
    %3423 = vrot.lane.b32.xlu0 %v270, 56
    %v3424 = vpop.permute.xlu0 %3423
    %3425 = vrot.lane.b32.xlu0 %v273, 56
    %v3426 = vpop.permute.xlu0 %3425
    %3427 = vrot.lane.b32.xlu0 %v276, 56
    %v3428 = vpop.permute.xlu0 %3427
    %3429 = vrot.lane.b32.xlu0 %v279, 56
    %v3430 = vpop.permute.xlu0 %3429
    %3431 = vrot.lane.b32.xlu0 %v282, 56
    %v3432 = vpop.permute.xlu0 %3431
    %3433 = vrot.lane.b32.xlu0 %v285, 56
    %v3434 = vpop.permute.xlu0 %3433
    %3435 = vrot.lane.b32.xlu0 %v288, 56
    %v3436 = vpop.permute.xlu0 %3435
    %3437 = vrot.lane.b32.xlu0 %v291, 56
    %v3438 = vpop.permute.xlu0 %3437
    %3471 = vmatpush.msra.mxu0 %v3406
    %3472 = vmatpush.msra.mxu0 %v3404
    %3473 = vmatpush.msra.mxu0 %v3402
    %3474 = vmatpush.msra.mxu0 %v3400
    %3475 = vmatpush.msra.mxu0 %v3398
    %3476 = vmatpush.msra.mxu0 %v3396
    %3477 = vmatpush.msra.mxu0 %v3394
    %3478 = vmatpush.msra.mxu0 %v3392
    %3479 = vmatpush.msra.mxu0 %v3390
    %3480 = vmatpush.msra.mxu0 %v3388
    %3481 = vmatpush.msra.mxu0 %v3386
    %3482 = vmatpush.msra.mxu0 %v3384
    %3483 = vmatpush.msra.mxu0 %v3382
    %3484 = vmatpush.msra.mxu0 %v3380
    %3485 = vmatpush.msra.mxu0 %v3378
    %3486 = vmatpush.msra.mxu0 %v3376
    %3487 = vmatmul.f32.gmra.mxu0 %v2704
    %v3488 = vpop.f32.mrf.mxu0
    %v3489 = vadd.f32 0.0, %v3488
    %3490 = vmatmul.f32.gmra.mxu0 %v2708
    %v3491 = vpop.f32.mrf.mxu0
    %v3492 = vadd.f32 0.0, %v3491
    %3493 = vmatmul.f32.gmra.mxu0 %v2712
    %v3494 = vpop.f32.mrf.mxu0
    %v3495 = vadd.f32 0.0, %v3494
    %3496 = vmatmul.f32.gmra.mxu0 %v2716
    %v3497 = vpop.f32.mrf.mxu0
    %v3498 = vadd.f32 0.0, %v3497
    %3499 = vmatmul.f32.gmra.mxu0 %v2720
    %v3500 = vpop.f32.mrf.mxu0
    %v3501 = vadd.f32 0.0, %v3500
    %3502 = vmatmul.f32.gmra.mxu0 %v2724
    %v3503 = vpop.f32.mrf.mxu0
    %v3504 = vadd.f32 0.0, %v3503
    %3505 = vmatmul.f32.gmra.mxu0 %v2728
    %v3506 = vpop.f32.mrf.mxu0
    %v3507 = vadd.f32 0.0, %v3506
    %3508 = vmatmul.f32.gmra.mxu0 %v2732
    %v3509 = vpop.f32.mrf.mxu0
    %v3510 = vadd.f32 0.0, %v3509
    %3511 = vmatmul.f32.gmra.mxu0 %v2736
    %v3512 = vpop.f32.mrf.mxu0
    %v3513 = vadd.f32 0.0, %v3512
    %3514 = vmatmul.f32.gmra.mxu0 %v2740
    %v3515 = vpop.f32.mrf.mxu0
    %v3516 = vadd.f32 0.0, %v3515
    %3517 = vmatmul.f32.gmra.mxu0 %v2744
    %v3518 = vpop.f32.mrf.mxu0
    %v3519 = vadd.f32 0.0, %v3518
    %3520 = vmatmul.f32.gmra.mxu0 %v2748
    %v3521 = vpop.f32.mrf.mxu0
    %v3522 = vadd.f32 0.0, %v3521
    %3523 = vmatmul.f32.gmra.mxu0 %v2752
    %v3524 = vpop.f32.mrf.mxu0
    %v3525 = vadd.f32 0.0, %v3524
    %3526 = vmatmul.f32.gmra.mxu0 %v2756
    %v3527 = vpop.f32.mrf.mxu0
    %v3528 = vadd.f32 0.0, %v3527
    %3529 = vmatmul.f32.gmra.mxu0 %v2760
    %v3530 = vpop.f32.mrf.mxu0
    %v3531 = vadd.f32 0.0, %v3530
    %3532 = vmatmul.f32.gmra.mxu0 %v2764
    %v3533 = vpop.f32.mrf.mxu0
    %v3534 = vadd.f32 0.0, %v3533
    %3535 = vmatmul.f32.gmra.mxu0 %v2768
    %v3536 = vpop.f32.mrf.mxu0
    %v3537 = vadd.f32 0.0, %v3536
    %3538 = vmatmul.f32.gmra.mxu0 %v2772
    %v3539 = vpop.f32.mrf.mxu0
    %v3540 = vadd.f32 0.0, %v3539
    %3541 = vmatmul.f32.gmra.mxu0 %v2776
    %v3542 = vpop.f32.mrf.mxu0
    %v3543 = vadd.f32 0.0, %v3542
    %3544 = vmatmul.f32.gmra.mxu0 %v2780
    %v3545 = vpop.f32.mrf.mxu0
    %v3546 = vadd.f32 0.0, %v3545
    %3547 = vmatmul.f32.gmra.mxu0 %v2784
    %v3548 = vpop.f32.mrf.mxu0
    %v3549 = vadd.f32 0.0, %v3548
    %3550 = vmatmul.f32.gmra.mxu0 %v2788
    %v3551 = vpop.f32.mrf.mxu0
    %v3552 = vadd.f32 0.0, %v3551
    %3553 = vmatmul.f32.gmra.mxu0 %v2792
    %v3554 = vpop.f32.mrf.mxu0
    %v3555 = vadd.f32 0.0, %v3554
    %3556 = vmatmul.f32.gmra.mxu0 %v2796
    %v3557 = vpop.f32.mrf.mxu0
    %v3558 = vadd.f32 0.0, %v3557
    %3559 = vmatmul.f32.gmra.mxu0 %v2800
    %v3560 = vpop.f32.mrf.mxu0
    %v3561 = vadd.f32 0.0, %v3560
    %3562 = vmatmul.f32.gmra.mxu0 %v2804
    %v3563 = vpop.f32.mrf.mxu0
    %v3564 = vadd.f32 0.0, %v3563
    %3565 = vmatmul.f32.gmra.mxu0 %v2808
    %v3566 = vpop.f32.mrf.mxu0
    %v3567 = vadd.f32 0.0, %v3566
    %3568 = vmatmul.f32.gmra.mxu0 %v2812
    %v3569 = vpop.f32.mrf.mxu0
    %v3570 = vadd.f32 0.0, %v3569
    %3571 = vmatmul.f32.gmra.mxu0 %v2816
    %v3572 = vpop.f32.mrf.mxu0
    %v3573 = vadd.f32 0.0, %v3572
    %3574 = vmatmul.f32.gmra.mxu0 %v2820
    %v3575 = vpop.f32.mrf.mxu0
    %v3576 = vadd.f32 0.0, %v3575
    %3577 = vmatmul.f32.gmra.mxu0 %v2824
    %v3578 = vpop.f32.mrf.mxu0
    %v3579 = vadd.f32 0.0, %v3578
    %3580 = vmatmul.f32.gmra.mxu0 %v2828
    %v3581 = vpop.f32.mrf.mxu0
    %v3582 = vadd.f32 0.0, %v3581
    %3583 = vdwg.mxu0
    %3584 = vmatpush.msra.mxu0 %v3438
    %3585 = vmatpush.msra.mxu0 %v3436
    %3586 = vmatpush.msra.mxu0 %v3434
    %3587 = vmatpush.msra.mxu0 %v3432
    %3588 = vmatpush.msra.mxu0 %v3430
    %3589 = vmatpush.msra.mxu0 %v3428
    %3590 = vmatpush.msra.mxu0 %v3426
    %3591 = vmatpush.msra.mxu0 %v3424
    %3592 = vmatpush.msra.mxu0 %v3422
    %3593 = vmatpush.msra.mxu0 %v3420
    %3594 = vmatpush.msra.mxu0 %v3418
    %3595 = vmatpush.msra.mxu0 %v3416
    %3596 = vmatpush.msra.mxu0 %v3414
    %3597 = vmatpush.msra.mxu0 %v3412
    %3598 = vmatpush.msra.mxu0 %v3410
    %3599 = vmatpush.msra.mxu0 %v3408
    %3600 = vmatmul.f32.gmra.mxu0 %v2706
    %v3601 = vpop.f32.mrf.mxu0
    %v3602 = vadd.f32 %v3489, %v3601
    %3603 = vmatmul.f32.gmra.mxu0 %v2710
    %v3604 = vpop.f32.mrf.mxu0
    %v3605 = vadd.f32 %v3492, %v3604
    %3606 = vmatmul.f32.gmra.mxu0 %v2714
    %v3607 = vpop.f32.mrf.mxu0
    %v3608 = vadd.f32 %v3495, %v3607
    %3609 = vmatmul.f32.gmra.mxu0 %v2718
    %v3610 = vpop.f32.mrf.mxu0
    %v3611 = vadd.f32 %v3498, %v3610
    %3612 = vmatmul.f32.gmra.mxu0 %v2722
    %v3613 = vpop.f32.mrf.mxu0
    %v3614 = vadd.f32 %v3501, %v3613
    %3615 = vmatmul.f32.gmra.mxu0 %v2726
    %v3616 = vpop.f32.mrf.mxu0
    %v3617 = vadd.f32 %v3504, %v3616
    %3618 = vmatmul.f32.gmra.mxu0 %v2730
    %v3619 = vpop.f32.mrf.mxu0
    %v3620 = vadd.f32 %v3507, %v3619
    %3621 = vmatmul.f32.gmra.mxu0 %v2734
    %v3622 = vpop.f32.mrf.mxu0
    %v3623 = vadd.f32 %v3510, %v3622
    %3624 = vmatmul.f32.gmra.mxu0 %v2738
    %v3625 = vpop.f32.mrf.mxu0
    %v3626 = vadd.f32 %v3513, %v3625
    %3627 = vmatmul.f32.gmra.mxu0 %v2742
    %v3628 = vpop.f32.mrf.mxu0
    %v3629 = vadd.f32 %v3516, %v3628
    %3630 = vmatmul.f32.gmra.mxu0 %v2746
    %v3631 = vpop.f32.mrf.mxu0
    %v3632 = vadd.f32 %v3519, %v3631
    %3633 = vmatmul.f32.gmra.mxu0 %v2750
    %v3634 = vpop.f32.mrf.mxu0
    %v3635 = vadd.f32 %v3522, %v3634
    %3636 = vmatmul.f32.gmra.mxu0 %v2754
    %v3637 = vpop.f32.mrf.mxu0
    %v3638 = vadd.f32 %v3525, %v3637
    %3639 = vmatmul.f32.gmra.mxu0 %v2758
    %v3640 = vpop.f32.mrf.mxu0
    %v3641 = vadd.f32 %v3528, %v3640
    %3642 = vmatmul.f32.gmra.mxu0 %v2762
    %v3643 = vpop.f32.mrf.mxu0
    %v3644 = vadd.f32 %v3531, %v3643
    %3645 = vmatmul.f32.gmra.mxu0 %v2766
    %v3646 = vpop.f32.mrf.mxu0
    %v3647 = vadd.f32 %v3534, %v3646
    %3648 = vmatmul.f32.gmra.mxu0 %v2770
    %v3649 = vpop.f32.mrf.mxu0
    %v3650 = vadd.f32 %v3537, %v3649
    %3651 = vmatmul.f32.gmra.mxu0 %v2774
    %v3652 = vpop.f32.mrf.mxu0
    %v3653 = vadd.f32 %v3540, %v3652
    %3654 = vmatmul.f32.gmra.mxu0 %v2778
    %v3655 = vpop.f32.mrf.mxu0
    %v3656 = vadd.f32 %v3543, %v3655
    %3657 = vmatmul.f32.gmra.mxu0 %v2782
    %v3658 = vpop.f32.mrf.mxu0
    %v3659 = vadd.f32 %v3546, %v3658
    %3660 = vmatmul.f32.gmra.mxu0 %v2786
    %v3661 = vpop.f32.mrf.mxu0
    %v3662 = vadd.f32 %v3549, %v3661
    %3663 = vmatmul.f32.gmra.mxu0 %v2790
    %v3664 = vpop.f32.mrf.mxu0
    %v3665 = vadd.f32 %v3552, %v3664
    %3666 = vmatmul.f32.gmra.mxu0 %v2794
    %v3667 = vpop.f32.mrf.mxu0
    %v3668 = vadd.f32 %v3555, %v3667
    %3669 = vmatmul.f32.gmra.mxu0 %v2798
    %v3670 = vpop.f32.mrf.mxu0
    %v3671 = vadd.f32 %v3558, %v3670
    %3672 = vmatmul.f32.gmra.mxu0 %v2802
    %v3673 = vpop.f32.mrf.mxu0
    %v3674 = vadd.f32 %v3561, %v3673
    %3675 = vmatmul.f32.gmra.mxu0 %v2806
    %v3676 = vpop.f32.mrf.mxu0
    %v3677 = vadd.f32 %v3564, %v3676
    %3678 = vmatmul.f32.gmra.mxu0 %v2810
    %v3679 = vpop.f32.mrf.mxu0
    %v3680 = vadd.f32 %v3567, %v3679
    %3681 = vmatmul.f32.gmra.mxu0 %v2814
    %v3682 = vpop.f32.mrf.mxu0
    %v3683 = vadd.f32 %v3570, %v3682
    %3684 = vmatmul.f32.gmra.mxu0 %v2818
    %v3685 = vpop.f32.mrf.mxu0
    %v3686 = vadd.f32 %v3573, %v3685
    %3687 = vmatmul.f32.gmra.mxu0 %v2822
    %v3688 = vpop.f32.mrf.mxu0
    %v3689 = vadd.f32 %v3576, %v3688
    %3690 = vmatmul.f32.gmra.mxu0 %v2826
    %v3691 = vpop.f32.mrf.mxu0
    %v3692 = vadd.f32 %v3579, %v3691
    %3693 = vmatmul.f32.gmra.mxu0 %v2830
    %v3694 = vpop.f32.mrf.mxu0
    %v3695 = vadd.f32 %v3582, %v3694
    %3696 = vdwg.mxu0
    %v3697 = vmul.f32 %v3602, %v2940
    %v3698 = vmul.f32 %v3605, %v2954
    %v3699 = vmul.f32 %v3608, %v2968
    %v3700 = vmul.f32 %v3611, %v2982
    %v3701 = vmul.f32 %v3614, %v2996
    %v3702 = vmul.f32 %v3617, %v3010
    %v3703 = vmul.f32 %v3620, %v3024
    %v3704 = vmul.f32 %v3623, %v3038
    %v3705 = vmul.f32 %v3626, %v3052
    %v3706 = vmul.f32 %v3629, %v3066
    %v3707 = vmul.f32 %v3632, %v3080
    %v3708 = vmul.f32 %v3635, %v3094
    %v3709 = vmul.f32 %v3638, %v3108
    %v3710 = vmul.f32 %v3641, %v3122
    %v3711 = vmul.f32 %v3644, %v3136
    %v3712 = vmul.f32 %v3647, %v3150
    %v3713 = vmul.f32 %v3650, %v3164
    %v3714 = vmul.f32 %v3653, %v3178
    %v3715 = vmul.f32 %v3656, %v3192
    %v3716 = vmul.f32 %v3659, %v3206
    %v3717 = vmul.f32 %v3662, %v3220
    %v3718 = vmul.f32 %v3665, %v3234
    %v3719 = vmul.f32 %v3668, %v3248
    %v3720 = vmul.f32 %v3671, %v3262
    %v3721 = vmul.f32 %v3674, %v3276
    %v3722 = vmul.f32 %v3677, %v3290
    %v3723 = vmul.f32 %v3680, %v3304
    %v3724 = vmul.f32 %v3683, %v3318
    %v3725 = vmul.f32 %v3686, %v3332
    %v3726 = vmul.f32 %v3689, %v3346
    %v3727 = vmul.f32 %v3692, %v3360
    %v3728 = vmul.f32 %v3695, %v3374
    %3729 = vmatpush.msra.mxu0 %v3712
    %3730 = vmatpush.msra.mxu0 %v3711
    %3731 = vmatpush.msra.mxu0 %v3710
    %3732 = vmatpush.msra.mxu0 %v3709
    %3733 = vmatpush.msra.mxu0 %v3708
    %3734 = vmatpush.msra.mxu0 %v3707
    %3735 = vmatpush.msra.mxu0 %v3706
    %3736 = vmatpush.msra.mxu0 %v3705
    %3737 = vmatpush.msra.mxu0 %v3704
    %3738 = vmatpush.msra.mxu0 %v3703
    %3739 = vmatpush.msra.mxu0 %v3702
    %3740 = vmatpush.msra.mxu0 %v3701
    %3741 = vmatpush.msra.mxu0 %v3700
    %3742 = vmatpush.msra.mxu0 %v3699
    %3743 = vmatpush.msra.mxu0 %v3698
    %3744 = vmatpush.msra.mxu0 %v3697
    %3745 = vmatmul.f32.gmra.mxu0 %v357
    %v3746 = vpop.f32.mrf.mxu0
    %v3747 = vadd.f32 0.0, %v3746
    %3748 = vmatmul.f32.gmra.mxu0 %v359
    %v3749 = vpop.f32.mrf.mxu0
    %v3750 = vadd.f32 0.0, %v3749
    %3751 = vmatmul.f32.gmra.mxu0 %v361
    %v3752 = vpop.f32.mrf.mxu0
    %v3753 = vadd.f32 0.0, %v3752
    %3754 = vmatmul.f32.gmra.mxu0 %v363
    %v3755 = vpop.f32.mrf.mxu0
    %v3756 = vadd.f32 0.0, %v3755
    %3757 = vdwg.mxu0
    %3758 = vmatpush.msra.mxu0 %v3728
    %3759 = vmatpush.msra.mxu0 %v3727
    %3760 = vmatpush.msra.mxu0 %v3726
    %3761 = vmatpush.msra.mxu0 %v3725
    %3762 = vmatpush.msra.mxu0 %v3724
    %3763 = vmatpush.msra.mxu0 %v3723
    %3764 = vmatpush.msra.mxu0 %v3722
    %3765 = vmatpush.msra.mxu0 %v3721
    %3766 = vmatpush.msra.mxu0 %v3720
    %3767 = vmatpush.msra.mxu0 %v3719
    %3768 = vmatpush.msra.mxu0 %v3718
    %3769 = vmatpush.msra.mxu0 %v3717
    %3770 = vmatpush.msra.mxu0 %v3716
    %3771 = vmatpush.msra.mxu0 %v3715
    %3772 = vmatpush.msra.mxu0 %v3714
    %3773 = vmatpush.msra.mxu0 %v3713
    %3774 = vmatmul.f32.gmra.mxu0 %v358
    %v3775 = vpop.f32.mrf.mxu0
    %v3776 = vadd.f32 %v3747, %v3775
    %3777 = vmatmul.f32.gmra.mxu0 %v360
    %v3778 = vpop.f32.mrf.mxu0
    %v3779 = vadd.f32 %v3750, %v3778
    %3780 = vmatmul.f32.gmra.mxu0 %v362
    %v3781 = vpop.f32.mrf.mxu0
    %v3782 = vadd.f32 %v3753, %v3781
    %3783 = vmatmul.f32.gmra.mxu0 %v364
    %v3784 = vpop.f32.mrf.mxu0
    %v3785 = vadd.f32 %v3756, %v3784
    %3786 = vdwg.mxu0
    %s3787 = scalar_lea.vmem %s3, 8
    %v3788 = vld [vmem:[%s3787] sm:$0xff]
    %v3790 = vsel %vm461, %v3776, 0
    %v3793 = vsel %vm461, %v3779, 0
    %v3796 = vsel %vm461, %v3782, 0
    %v3799 = vsel %vm461, %v3785, 0
    %3801 = vmatpush.msra.mxu0 0.0
    %3802 = vmatpush.msra.mxu0 0.0
    %3803 = vmatpush.msra.mxu0 0.0
    %3804 = vmatpush.msra.mxu0 0.0
    %3805 = vmatpush.msra.mxu0 0.0
    %3806 = vmatpush.msra.mxu0 0.0
    %3807 = vmatpush.msra.mxu0 0.0
    %3808 = vmatpush.msra.mxu0 0.0
    %3809 = vmatpush.msra.mxu0 0.0
    %3810 = vmatpush.msra.mxu0 0.0
    %3811 = vmatpush.msra.mxu0 0.0
    %3812 = vmatpush.msra.mxu0 0.0
    %3813 = vmatpush.msra.mxu0 0.0
    %3814 = vmatpush.msra.mxu0 0.0
    %3815 = vmatpush.msra.mxu0 0.0
    %3816 = vmatpush.msra.mxu0 %v3788
    %3817 = vmatmul.f32.gmra.mxu0 %v3790
    %v3818 = vpop.f32.mrf.mxu0
    %v3819 = vadd.f32 0.0, %v3818
    %3820 = vmatmul.f32.gmra.mxu0 %v3793
    %v3821 = vpop.f32.mrf.mxu0
    %v3822 = vadd.f32 0.0, %v3821
    %3823 = vmatmul.f32.gmra.mxu0 %v3796
    %v3824 = vpop.f32.mrf.mxu0
    %v3825 = vadd.f32 0.0, %v3824
    %3826 = vmatmul.f32.gmra.mxu0 %v3799
    %v3827 = vpop.f32.mrf.mxu0
    %v3828 = vadd.f32 0.0, %v3827
    %3829 = vdwg.mxu0
    %v3831 = vsel %vm461, %v2049, 0
    %v3834 = vsel %vm461, %v2052, 0
    %v3837 = vsel %vm461, %v2055, 0
    %v3840 = vsel %vm461, %v2058, 0
    %3842 = vmatpush.msra.mxu0 0.0
    %3843 = vmatpush.msra.mxu0 0.0
    %3844 = vmatpush.msra.mxu0 0.0
    %3845 = vmatpush.msra.mxu0 0.0
    %3846 = vmatpush.msra.mxu0 0.0
    %3847 = vmatpush.msra.mxu0 0.0
    %3848 = vmatpush.msra.mxu0 0.0
    %3849 = vmatpush.msra.mxu0 0.0
    %3850 = vmatpush.msra.mxu0 0.0
    %3851 = vmatpush.msra.mxu0 0.0
    %3852 = vmatpush.msra.mxu0 0.0
    %3853 = vmatpush.msra.mxu0 0.0
    %3854 = vmatpush.msra.mxu0 0.0
    %3855 = vmatpush.msra.mxu0 0.0
    %3856 = vmatpush.msra.mxu0 0.0
    %3857 = vmatpush.msra.mxu0 %v2060
    %3858 = vmatmul.f32.gmra.mxu0 %v3831
    %v3859 = vpop.f32.mrf.mxu0
    %v3860 = vadd.f32 %v3819, %v3859
    %3861 = vmatmul.f32.gmra.mxu0 %v3834
    %v3862 = vpop.f32.mrf.mxu0
    %v3863 = vadd.f32 %v3822, %v3862
    %3864 = vmatmul.f32.gmra.mxu0 %v3837
    %v3865 = vpop.f32.mrf.mxu0
    %v3866 = vadd.f32 %v3825, %v3865
    %3867 = vmatmul.f32.gmra.mxu0 %v3840
    %v3868 = vpop.f32.mrf.mxu0
    %v3869 = vadd.f32 %v3828, %v3868
    %3870 = vdwg.mxu0
    %3871 = vrot.lane.b32.xlu0 %v198, 112
    %v3872 = vpop.permute.xlu0 %3871
    %3873 = vrot.lane.b32.xlu0 %v201, 112
    %v3874 = vpop.permute.xlu0 %3873
    %3875 = vrot.lane.b32.xlu0 %v204, 112
    %v3876 = vpop.permute.xlu0 %3875
    %3877 = vrot.lane.b32.xlu0 %v207, 112
    %v3878 = vpop.permute.xlu0 %3877
    %3879 = vrot.lane.b32.xlu0 %v210, 112
    %v3880 = vpop.permute.xlu0 %3879
    %3881 = vrot.lane.b32.xlu0 %v213, 112
    %v3882 = vpop.permute.xlu0 %3881
    %3883 = vrot.lane.b32.xlu0 %v216, 112
    %v3884 = vpop.permute.xlu0 %3883
    %3885 = vrot.lane.b32.xlu0 %v219, 112
    %v3886 = vpop.permute.xlu0 %3885
    %3887 = vrot.lane.b32.xlu0 %v222, 112
    %v3888 = vpop.permute.xlu0 %3887
    %3889 = vrot.lane.b32.xlu0 %v225, 112
    %v3890 = vpop.permute.xlu0 %3889
    %3891 = vrot.lane.b32.xlu0 %v228, 112
    %v3892 = vpop.permute.xlu0 %3891
    %3893 = vrot.lane.b32.xlu0 %v231, 112
    %v3894 = vpop.permute.xlu0 %3893
    %3895 = vrot.lane.b32.xlu0 %v234, 112
    %v3896 = vpop.permute.xlu0 %3895
    %3897 = vrot.lane.b32.xlu0 %v237, 112
    %v3898 = vpop.permute.xlu0 %3897
    %3899 = vrot.lane.b32.xlu0 %v240, 112
    %v3900 = vpop.permute.xlu0 %3899
    %3901 = vrot.lane.b32.xlu0 %v243, 112
    %v3902 = vpop.permute.xlu0 %3901
    %3903 = vrot.lane.b32.xlu0 %v246, 112
    %v3904 = vpop.permute.xlu0 %3903
    %3905 = vrot.lane.b32.xlu0 %v249, 112
    %v3906 = vpop.permute.xlu0 %3905
    %3907 = vrot.lane.b32.xlu0 %v252, 112
    %v3908 = vpop.permute.xlu0 %3907
    %3909 = vrot.lane.b32.xlu0 %v255, 112
    %v3910 = vpop.permute.xlu0 %3909
    %3911 = vrot.lane.b32.xlu0 %v258, 112
    %v3912 = vpop.permute.xlu0 %3911
    %3913 = vrot.lane.b32.xlu0 %v261, 112
    %v3914 = vpop.permute.xlu0 %3913
    %3915 = vrot.lane.b32.xlu0 %v264, 112
    %v3916 = vpop.permute.xlu0 %3915
    %3917 = vrot.lane.b32.xlu0 %v267, 112
    %v3918 = vpop.permute.xlu0 %3917
    %3919 = vrot.lane.b32.xlu0 %v270, 112
    %v3920 = vpop.permute.xlu0 %3919
    %3921 = vrot.lane.b32.xlu0 %v273, 112
    %v3922 = vpop.permute.xlu0 %3921
    %3923 = vrot.lane.b32.xlu0 %v276, 112
    %v3924 = vpop.permute.xlu0 %3923
    %3925 = vrot.lane.b32.xlu0 %v279, 112
    %v3926 = vpop.permute.xlu0 %3925
    %3927 = vrot.lane.b32.xlu0 %v282, 112
    %v3928 = vpop.permute.xlu0 %3927
    %3929 = vrot.lane.b32.xlu0 %v285, 112
    %v3930 = vpop.permute.xlu0 %3929
    %3931 = vrot.lane.b32.xlu0 %v288, 112
    %v3932 = vpop.permute.xlu0 %3931
    %3933 = vrot.lane.b32.xlu0 %v291, 112
    %v3934 = vpop.permute.xlu0 %3933
    %3935 = vrot.lane.b32.xlu0 %v198, 80
    %v3936 = vpop.permute.xlu0 %3935
    %3937 = vrot.lane.b32.xlu0 %v201, 80
    %v3938 = vpop.permute.xlu0 %3937
    %3939 = vrot.lane.b32.xlu0 %v204, 80
    %v3940 = vpop.permute.xlu0 %3939
    %3941 = vrot.lane.b32.xlu0 %v207, 80
    %v3942 = vpop.permute.xlu0 %3941
    %3943 = vrot.lane.b32.xlu0 %v210, 80
    %v3944 = vpop.permute.xlu0 %3943
    %3945 = vrot.lane.b32.xlu0 %v213, 80
    %v3946 = vpop.permute.xlu0 %3945
    %3947 = vrot.lane.b32.xlu0 %v216, 80
    %v3948 = vpop.permute.xlu0 %3947
    %3949 = vrot.lane.b32.xlu0 %v219, 80
    %v3950 = vpop.permute.xlu0 %3949
    %3951 = vrot.lane.b32.xlu0 %v222, 80
    %v3952 = vpop.permute.xlu0 %3951
    %3953 = vrot.lane.b32.xlu0 %v225, 80
    %v3954 = vpop.permute.xlu0 %3953
    %3955 = vrot.lane.b32.xlu0 %v228, 80
    %v3956 = vpop.permute.xlu0 %3955
    %3957 = vrot.lane.b32.xlu0 %v231, 80
    %v3958 = vpop.permute.xlu0 %3957
    %3959 = vrot.lane.b32.xlu0 %v234, 80
    %v3960 = vpop.permute.xlu0 %3959
    %3961 = vrot.lane.b32.xlu0 %v237, 80
    %v3962 = vpop.permute.xlu0 %3961
    %3963 = vrot.lane.b32.xlu0 %v240, 80
    %v3964 = vpop.permute.xlu0 %3963
    %3965 = vrot.lane.b32.xlu0 %v243, 80
    %v3966 = vpop.permute.xlu0 %3965
    %3967 = vrot.lane.b32.xlu0 %v246, 80
    %v3968 = vpop.permute.xlu0 %3967
    %3969 = vrot.lane.b32.xlu0 %v249, 80
    %v3970 = vpop.permute.xlu0 %3969
    %3971 = vrot.lane.b32.xlu0 %v252, 80
    %v3972 = vpop.permute.xlu0 %3971
    %3973 = vrot.lane.b32.xlu0 %v255, 80
    %v3974 = vpop.permute.xlu0 %3973
    %3975 = vrot.lane.b32.xlu0 %v258, 80
    %v3976 = vpop.permute.xlu0 %3975
    %3977 = vrot.lane.b32.xlu0 %v261, 80
    %v3978 = vpop.permute.xlu0 %3977
    %3979 = vrot.lane.b32.xlu0 %v264, 80
    %v3980 = vpop.permute.xlu0 %3979
    %3981 = vrot.lane.b32.xlu0 %v267, 80
    %v3982 = vpop.permute.xlu0 %3981
    %3983 = vrot.lane.b32.xlu0 %v270, 80
    %v3984 = vpop.permute.xlu0 %3983
    %3985 = vrot.lane.b32.xlu0 %v273, 80
    %v3986 = vpop.permute.xlu0 %3985
    %3987 = vrot.lane.b32.xlu0 %v276, 80
    %v3988 = vpop.permute.xlu0 %3987
    %3989 = vrot.lane.b32.xlu0 %v279, 80
    %v3990 = vpop.permute.xlu0 %3989
    %3991 = vrot.lane.b32.xlu0 %v282, 80
    %v3992 = vpop.permute.xlu0 %3991
    %3993 = vrot.lane.b32.xlu0 %v285, 80
    %v3994 = vpop.permute.xlu0 %3993
    %3995 = vrot.lane.b32.xlu0 %v288, 80
    %v3996 = vpop.permute.xlu0 %3995
    %3997 = vrot.lane.b32.xlu0 %v291, 80
    %v3998 = vpop.permute.xlu0 %3997
    %v3999 = vsel %vm461, %v3872, 0
    %v4001 = vsel %vm461, %v3874, 0
    %v4003 = vsel %vm461, %v3876, 0
    %v4005 = vsel %vm461, %v3878, 0
    %v4007 = vsel %vm461, %v3880, 0
    %v4009 = vsel %vm461, %v3882, 0
    %v4011 = vsel %vm461, %v3884, 0
    %v4013 = vsel %vm461, %v3886, 0
    %v4015 = vsel %vm461, %v3888, 0
    %v4017 = vsel %vm461, %v3890, 0
    %v4019 = vsel %vm461, %v3892, 0
    %v4021 = vsel %vm461, %v3894, 0
    %v4023 = vsel %vm461, %v3896, 0
    %v4025 = vsel %vm461, %v3898, 0
    %v4027 = vsel %vm461, %v3900, 0
    %v4029 = vsel %vm461, %v3902, 0
    %v4031 = vsel %vm461, %v3904, 0
    %v4033 = vsel %vm461, %v3906, 0
    %v4035 = vsel %vm461, %v3908, 0
    %v4037 = vsel %vm461, %v3910, 0
    %v4039 = vsel %vm461, %v3912, 0
    %v4041 = vsel %vm461, %v3914, 0
    %v4043 = vsel %vm461, %v3916, 0
    %v4045 = vsel %vm461, %v3918, 0
    %v4047 = vsel %vm461, %v3920, 0
    %v4049 = vsel %vm461, %v3922, 0
    %v4051 = vsel %vm461, %v3924, 0
    %v4053 = vsel %vm461, %v3926, 0
    %v4055 = vsel %vm461, %v3928, 0
    %v4057 = vsel %vm461, %v3930, 0
    %v4059 = vsel %vm461, %v3932, 0
    %v4061 = vsel %vm461, %v3934, 0
    %v4063 = vsel %vm461, %v3936, 0
    %v4065 = vsel %vm461, %v3938, 0
    %v4067 = vsel %vm461, %v3940, 0
    %v4069 = vsel %vm461, %v3942, 0
    %v4071 = vsel %vm461, %v3944, 0
    %v4073 = vsel %vm461, %v3946, 0
    %v4075 = vsel %vm461, %v3948, 0
    %v4077 = vsel %vm461, %v3950, 0
    %v4079 = vsel %vm461, %v3952, 0
    %v4081 = vsel %vm461, %v3954, 0
    %v4083 = vsel %vm461, %v3956, 0
    %v4085 = vsel %vm461, %v3958, 0
    %v4087 = vsel %vm461, %v3960, 0
    %v4089 = vsel %vm461, %v3962, 0
    %v4091 = vsel %vm461, %v3964, 0
    %v4093 = vsel %vm461, %v3966, 0
    %v4095 = vsel %vm461, %v3968, 0
    %v4097 = vsel %vm461, %v3970, 0
    %v4099 = vsel %vm461, %v3972, 0
    %v4101 = vsel %vm461, %v3974, 0
    %v4103 = vsel %vm461, %v3976, 0
    %v4105 = vsel %vm461, %v3978, 0
    %v4107 = vsel %vm461, %v3980, 0
    %v4109 = vsel %vm461, %v3982, 0
    %v4111 = vsel %vm461, %v3984, 0
    %v4113 = vsel %vm461, %v3986, 0
    %v4115 = vsel %vm461, %v3988, 0
    %v4117 = vsel %vm461, %v3990, 0
    %v4119 = vsel %vm461, %v3992, 0
    %v4121 = vsel %vm461, %v3994, 0
    %v4123 = vsel %vm461, %v3996, 0
    %v4125 = vsel %vm461, %v3998, 0
    %4127 = vmatpush.xpose.msra.mxu0 %v4093
    %4128 = vmatpush.xpose.msra.mxu0 %v4091
    %4129 = vmatpush.xpose.msra.mxu0 %v4089
    %4130 = vmatpush.xpose.msra.mxu0 %v4087
    %4131 = vmatpush.xpose.msra.mxu0 %v4085
    %4132 = vmatpush.xpose.msra.mxu0 %v4083
    %4133 = vmatpush.xpose.msra.mxu0 %v4081
    %4134 = vmatpush.xpose.msra.mxu0 %v4079
    %4135 = vmatpush.xpose.msra.mxu0 %v4077
    %4136 = vmatpush.xpose.msra.mxu0 %v4075
    %4137 = vmatpush.xpose.msra.mxu0 %v4073
    %4138 = vmatpush.xpose.msra.mxu0 %v4071
    %4139 = vmatpush.xpose.msra.mxu0 %v4069
    %4140 = vmatpush.xpose.msra.mxu0 %v4067
    %4141 = vmatpush.xpose.msra.mxu0 %v4065
    %4142 = vmatpush.xpose.msra.mxu0 %v4063
    %4143 = vmatmul.f32.gmra.mxu0 %v3999
    %v4144 = vpop.f32.mrf.mxu0
    %v4145 = vadd.f32 %v293, %v4144
    %4146 = vmatmul.f32.gmra.mxu0 %v4001
    %v4147 = vpop.f32.mrf.mxu0
    %v4148 = vadd.f32 %v295, %v4147
    %4149 = vmatmul.f32.gmra.mxu0 %v4003
    %v4150 = vpop.f32.mrf.mxu0
    %v4151 = vadd.f32 %v297, %v4150
    %4152 = vmatmul.f32.gmra.mxu0 %v4005
    %v4153 = vpop.f32.mrf.mxu0
    %v4154 = vadd.f32 %v299, %v4153
    %4155 = vmatmul.f32.gmra.mxu0 %v4007
    %v4156 = vpop.f32.mrf.mxu0
    %v4157 = vadd.f32 %v301, %v4156
    %4158 = vmatmul.f32.gmra.mxu0 %v4009
    %v4159 = vpop.f32.mrf.mxu0
    %v4160 = vadd.f32 %v303, %v4159
    %4161 = vmatmul.f32.gmra.mxu0 %v4011
    %v4162 = vpop.f32.mrf.mxu0
    %v4163 = vadd.f32 %v305, %v4162
    %4164 = vmatmul.f32.gmra.mxu0 %v4013
    %v4165 = vpop.f32.mrf.mxu0
    %v4166 = vadd.f32 %v307, %v4165
    %4167 = vmatmul.f32.gmra.mxu0 %v4015
    %v4168 = vpop.f32.mrf.mxu0
    %v4169 = vadd.f32 %v309, %v4168
    %4170 = vmatmul.f32.gmra.mxu0 %v4017
    %v4171 = vpop.f32.mrf.mxu0
    %v4172 = vadd.f32 %v311, %v4171
    %4173 = vmatmul.f32.gmra.mxu0 %v4019
    %v4174 = vpop.f32.mrf.mxu0
    %v4175 = vadd.f32 %v313, %v4174
    %4176 = vmatmul.f32.gmra.mxu0 %v4021
    %v4177 = vpop.f32.mrf.mxu0
    %v4178 = vadd.f32 %v315, %v4177
    %4179 = vmatmul.f32.gmra.mxu0 %v4023
    %v4180 = vpop.f32.mrf.mxu0
    %v4181 = vadd.f32 %v317, %v4180
    %4182 = vmatmul.f32.gmra.mxu0 %v4025
    %v4183 = vpop.f32.mrf.mxu0
    %v4184 = vadd.f32 %v319, %v4183
    %4185 = vmatmul.f32.gmra.mxu0 %v4027
    %v4186 = vpop.f32.mrf.mxu0
    %v4187 = vadd.f32 %v321, %v4186
    %4188 = vmatmul.f32.gmra.mxu0 %v4029
    %v4189 = vpop.f32.mrf.mxu0
    %v4190 = vadd.f32 %v323, %v4189
    %4191 = vmatmul.f32.gmra.mxu0 %v4031
    %v4192 = vpop.f32.mrf.mxu0
    %v4193 = vadd.f32 %v325, %v4192
    %4194 = vmatmul.f32.gmra.mxu0 %v4033
    %v4195 = vpop.f32.mrf.mxu0
    %v4196 = vadd.f32 %v327, %v4195
    %4197 = vmatmul.f32.gmra.mxu0 %v4035
    %v4198 = vpop.f32.mrf.mxu0
    %v4199 = vadd.f32 %v329, %v4198
    %4200 = vmatmul.f32.gmra.mxu0 %v4037
    %v4201 = vpop.f32.mrf.mxu0
    %v4202 = vadd.f32 %v331, %v4201
    %4203 = vmatmul.f32.gmra.mxu0 %v4039
    %v4204 = vpop.f32.mrf.mxu0
    %v4205 = vadd.f32 %v333, %v4204
    %4206 = vmatmul.f32.gmra.mxu0 %v4041
    %v4207 = vpop.f32.mrf.mxu0
    %v4208 = vadd.f32 %v335, %v4207
    %4209 = vmatmul.f32.gmra.mxu0 %v4043
    %v4210 = vpop.f32.mrf.mxu0
    %v4211 = vadd.f32 %v337, %v4210
    %4212 = vmatmul.f32.gmra.mxu0 %v4045
    %v4213 = vpop.f32.mrf.mxu0
    %v4214 = vadd.f32 %v339, %v4213
    %4215 = vmatmul.f32.gmra.mxu0 %v4047
    %v4216 = vpop.f32.mrf.mxu0
    %v4217 = vadd.f32 %v341, %v4216
    %4218 = vmatmul.f32.gmra.mxu0 %v4049
    %v4219 = vpop.f32.mrf.mxu0
    %v4220 = vadd.f32 %v343, %v4219
    %4221 = vmatmul.f32.gmra.mxu0 %v4051
    %v4222 = vpop.f32.mrf.mxu0
    %v4223 = vadd.f32 %v345, %v4222
    %4224 = vmatmul.f32.gmra.mxu0 %v4053
    %v4225 = vpop.f32.mrf.mxu0
    %v4226 = vadd.f32 %v347, %v4225
    %4227 = vmatmul.f32.gmra.mxu0 %v4055
    %v4228 = vpop.f32.mrf.mxu0
    %v4229 = vadd.f32 %v349, %v4228
    %4230 = vmatmul.f32.gmra.mxu0 %v4057
    %v4231 = vpop.f32.mrf.mxu0
    %v4232 = vadd.f32 %v351, %v4231
    %4233 = vmatmul.f32.gmra.mxu0 %v4059
    %v4234 = vpop.f32.mrf.mxu0
    %v4235 = vadd.f32 %v353, %v4234
    %4236 = vmatmul.f32.gmra.mxu0 %v4061
    %v4237 = vpop.f32.mrf.mxu0
    %v4238 = vadd.f32 %v355, %v4237
    %4239 = vdwg.mxu0
    %4240 = vmatpush.xpose.msra.mxu0 %v4125
    %4241 = vmatpush.xpose.msra.mxu0 %v4123
    %4242 = vmatpush.xpose.msra.mxu0 %v4121
    %4243 = vmatpush.xpose.msra.mxu0 %v4119
    %4244 = vmatpush.xpose.msra.mxu0 %v4117
    %4245 = vmatpush.xpose.msra.mxu0 %v4115
    %4246 = vmatpush.xpose.msra.mxu0 %v4113
    %4247 = vmatpush.xpose.msra.mxu0 %v4111
    %4248 = vmatpush.xpose.msra.mxu0 %v4109
    %4249 = vmatpush.xpose.msra.mxu0 %v4107
    %4250 = vmatpush.xpose.msra.mxu0 %v4105
    %4251 = vmatpush.xpose.msra.mxu0 %v4103
    %4252 = vmatpush.xpose.msra.mxu0 %v4101
    %4253 = vmatpush.xpose.msra.mxu0 %v4099
    %4254 = vmatpush.xpose.msra.mxu0 %v4097
    %4255 = vmatpush.xpose.msra.mxu0 %v4095
    %4256 = vmatmul.f32.gmra.mxu0 %v3999
    %v4257 = vpop.f32.mrf.mxu0
    %v4258 = vadd.f32 %v294, %v4257
    %4259 = vmatmul.f32.gmra.mxu0 %v4001
    %v4260 = vpop.f32.mrf.mxu0
    %v4261 = vadd.f32 %v296, %v4260
    %4262 = vmatmul.f32.gmra.mxu0 %v4003
    %v4263 = vpop.f32.mrf.mxu0
    %v4264 = vadd.f32 %v298, %v4263
    %4265 = vmatmul.f32.gmra.mxu0 %v4005
    %v4266 = vpop.f32.mrf.mxu0
    %v4267 = vadd.f32 %v300, %v4266
    %4268 = vmatmul.f32.gmra.mxu0 %v4007
    %v4269 = vpop.f32.mrf.mxu0
    %v4270 = vadd.f32 %v302, %v4269
    %4271 = vmatmul.f32.gmra.mxu0 %v4009
    %v4272 = vpop.f32.mrf.mxu0
    %v4273 = vadd.f32 %v304, %v4272
    %4274 = vmatmul.f32.gmra.mxu0 %v4011
    %v4275 = vpop.f32.mrf.mxu0
    %v4276 = vadd.f32 %v306, %v4275
    %4277 = vmatmul.f32.gmra.mxu0 %v4013
    %v4278 = vpop.f32.mrf.mxu0
    %v4279 = vadd.f32 %v308, %v4278
    %4280 = vmatmul.f32.gmra.mxu0 %v4015
    %v4281 = vpop.f32.mrf.mxu0
    %v4282 = vadd.f32 %v310, %v4281
    %4283 = vmatmul.f32.gmra.mxu0 %v4017
    %v4284 = vpop.f32.mrf.mxu0
    %v4285 = vadd.f32 %v312, %v4284
    %4286 = vmatmul.f32.gmra.mxu0 %v4019
    %v4287 = vpop.f32.mrf.mxu0
    %v4288 = vadd.f32 %v314, %v4287
    %4289 = vmatmul.f32.gmra.mxu0 %v4021
    %v4290 = vpop.f32.mrf.mxu0
    %v4291 = vadd.f32 %v316, %v4290
    %4292 = vmatmul.f32.gmra.mxu0 %v4023
    %v4293 = vpop.f32.mrf.mxu0
    %v4294 = vadd.f32 %v318, %v4293
    %4295 = vmatmul.f32.gmra.mxu0 %v4025
    %v4296 = vpop.f32.mrf.mxu0
    %v4297 = vadd.f32 %v320, %v4296
    %4298 = vmatmul.f32.gmra.mxu0 %v4027
    %v4299 = vpop.f32.mrf.mxu0
    %v4300 = vadd.f32 %v322, %v4299
    %4301 = vmatmul.f32.gmra.mxu0 %v4029
    %v4302 = vpop.f32.mrf.mxu0
    %v4303 = vadd.f32 %v324, %v4302
    %4304 = vmatmul.f32.gmra.mxu0 %v4031
    %v4305 = vpop.f32.mrf.mxu0
    %v4306 = vadd.f32 %v326, %v4305
    %4307 = vmatmul.f32.gmra.mxu0 %v4033
    %v4308 = vpop.f32.mrf.mxu0
    %v4309 = vadd.f32 %v328, %v4308
    %4310 = vmatmul.f32.gmra.mxu0 %v4035
    %v4311 = vpop.f32.mrf.mxu0
    %v4312 = vadd.f32 %v330, %v4311
    %4313 = vmatmul.f32.gmra.mxu0 %v4037
    %v4314 = vpop.f32.mrf.mxu0
    %v4315 = vadd.f32 %v332, %v4314
    %4316 = vmatmul.f32.gmra.mxu0 %v4039
    %v4317 = vpop.f32.mrf.mxu0
    %v4318 = vadd.f32 %v334, %v4317
    %4319 = vmatmul.f32.gmra.mxu0 %v4041
    %v4320 = vpop.f32.mrf.mxu0
    %v4321 = vadd.f32 %v336, %v4320
    %4322 = vmatmul.f32.gmra.mxu0 %v4043
    %v4323 = vpop.f32.mrf.mxu0
    %v4324 = vadd.f32 %v338, %v4323
    %4325 = vmatmul.f32.gmra.mxu0 %v4045
    %v4326 = vpop.f32.mrf.mxu0
    %v4327 = vadd.f32 %v340, %v4326
    %4328 = vmatmul.f32.gmra.mxu0 %v4047
    %v4329 = vpop.f32.mrf.mxu0
    %v4330 = vadd.f32 %v342, %v4329
    %4331 = vmatmul.f32.gmra.mxu0 %v4049
    %v4332 = vpop.f32.mrf.mxu0
    %v4333 = vadd.f32 %v344, %v4332
    %4334 = vmatmul.f32.gmra.mxu0 %v4051
    %v4335 = vpop.f32.mrf.mxu0
    %v4336 = vadd.f32 %v346, %v4335
    %4337 = vmatmul.f32.gmra.mxu0 %v4053
    %v4338 = vpop.f32.mrf.mxu0
    %v4339 = vadd.f32 %v348, %v4338
    %4340 = vmatmul.f32.gmra.mxu0 %v4055
    %v4341 = vpop.f32.mrf.mxu0
    %v4342 = vadd.f32 %v350, %v4341
    %4343 = vmatmul.f32.gmra.mxu0 %v4057
    %v4344 = vpop.f32.mrf.mxu0
    %v4345 = vadd.f32 %v352, %v4344
    %4346 = vmatmul.f32.gmra.mxu0 %v4059
    %v4347 = vpop.f32.mrf.mxu0
    %v4348 = vadd.f32 %v354, %v4347
    %4349 = vmatmul.f32.gmra.mxu0 %v4061
    %v4350 = vpop.f32.mrf.mxu0
    %v4351 = vadd.f32 %v356, %v4350
    %4352 = vdwg.mxu0
    %v4353 = vmax.f32 %v4145, %v4258
    %4354 = vmax.xlane.f32.xlu0 %v4353
    %v4355 = vpop.xlane.xlu0 %4354
    %v4356 = vmax.f32 %v4148, %v4261
    %4357 = vmax.xlane.f32.xlu0 %v4356
    %v4358 = vpop.xlane.xlu0 %4357
    %v4359 = vmax.f32 %v4151, %v4264
    %4360 = vmax.xlane.f32.xlu0 %v4359
    %v4361 = vpop.xlane.xlu0 %4360
    %v4362 = vmax.f32 %v4154, %v4267
    %4363 = vmax.xlane.f32.xlu0 %v4362
    %v4364 = vpop.xlane.xlu0 %4363
    %v4365 = vmax.f32 %v4157, %v4270
    %4366 = vmax.xlane.f32.xlu0 %v4365
    %v4367 = vpop.xlane.xlu0 %4366
    %v4368 = vmax.f32 %v4160, %v4273
    %4369 = vmax.xlane.f32.xlu0 %v4368
    %v4370 = vpop.xlane.xlu0 %4369
    %v4371 = vmax.f32 %v4163, %v4276
    %4372 = vmax.xlane.f32.xlu0 %v4371
    %v4373 = vpop.xlane.xlu0 %4372
    %v4374 = vmax.f32 %v4166, %v4279
    %4375 = vmax.xlane.f32.xlu0 %v4374
    %v4376 = vpop.xlane.xlu0 %4375
    %v4377 = vmax.f32 %v4169, %v4282
    %4378 = vmax.xlane.f32.xlu0 %v4377
    %v4379 = vpop.xlane.xlu0 %4378
    %v4380 = vmax.f32 %v4172, %v4285
    %4381 = vmax.xlane.f32.xlu0 %v4380
    %v4382 = vpop.xlane.xlu0 %4381
    %v4383 = vmax.f32 %v4175, %v4288
    %4384 = vmax.xlane.f32.xlu0 %v4383
    %v4385 = vpop.xlane.xlu0 %4384
    %v4386 = vmax.f32 %v4178, %v4291
    %4387 = vmax.xlane.f32.xlu0 %v4386
    %v4388 = vpop.xlane.xlu0 %4387
    %v4389 = vmax.f32 %v4181, %v4294
    %4390 = vmax.xlane.f32.xlu0 %v4389
    %v4391 = vpop.xlane.xlu0 %4390
    %v4392 = vmax.f32 %v4184, %v4297
    %4393 = vmax.xlane.f32.xlu0 %v4392
    %v4394 = vpop.xlane.xlu0 %4393
    %v4395 = vmax.f32 %v4187, %v4300
    %4396 = vmax.xlane.f32.xlu0 %v4395
    %v4397 = vpop.xlane.xlu0 %4396
    %v4398 = vmax.f32 %v4190, %v4303
    %4399 = vmax.xlane.f32.xlu0 %v4398
    %v4400 = vpop.xlane.xlu0 %4399
    %v4401 = vmax.f32 %v4193, %v4306
    %4402 = vmax.xlane.f32.xlu0 %v4401
    %v4403 = vpop.xlane.xlu0 %4402
    %v4404 = vmax.f32 %v4196, %v4309
    %4405 = vmax.xlane.f32.xlu0 %v4404
    %v4406 = vpop.xlane.xlu0 %4405
    %v4407 = vmax.f32 %v4199, %v4312
    %4408 = vmax.xlane.f32.xlu0 %v4407
    %v4409 = vpop.xlane.xlu0 %4408
    %v4410 = vmax.f32 %v4202, %v4315
    %4411 = vmax.xlane.f32.xlu0 %v4410
    %v4412 = vpop.xlane.xlu0 %4411
    %v4413 = vmax.f32 %v4205, %v4318
    %4414 = vmax.xlane.f32.xlu0 %v4413
    %v4415 = vpop.xlane.xlu0 %4414
    %v4416 = vmax.f32 %v4208, %v4321
    %4417 = vmax.xlane.f32.xlu0 %v4416
    %v4418 = vpop.xlane.xlu0 %4417
    %v4419 = vmax.f32 %v4211, %v4324
    %4420 = vmax.xlane.f32.xlu0 %v4419
    %v4421 = vpop.xlane.xlu0 %4420
    %v4422 = vmax.f32 %v4214, %v4327
    %4423 = vmax.xlane.f32.xlu0 %v4422
    %v4424 = vpop.xlane.xlu0 %4423
    %v4425 = vmax.f32 %v4217, %v4330
    %4426 = vmax.xlane.f32.xlu0 %v4425
    %v4427 = vpop.xlane.xlu0 %4426
    %v4428 = vmax.f32 %v4220, %v4333
    %4429 = vmax.xlane.f32.xlu0 %v4428
    %v4430 = vpop.xlane.xlu0 %4429
    %v4431 = vmax.f32 %v4223, %v4336
    %4432 = vmax.xlane.f32.xlu0 %v4431
    %v4433 = vpop.xlane.xlu0 %4432
    %v4434 = vmax.f32 %v4226, %v4339
    %4435 = vmax.xlane.f32.xlu0 %v4434
    %v4436 = vpop.xlane.xlu0 %4435
    %v4437 = vmax.f32 %v4229, %v4342
    %4438 = vmax.xlane.f32.xlu0 %v4437
    %v4439 = vpop.xlane.xlu0 %4438
    %v4440 = vmax.f32 %v4232, %v4345
    %4441 = vmax.xlane.f32.xlu0 %v4440
    %v4442 = vpop.xlane.xlu0 %4441
    %v4443 = vmax.f32 %v4235, %v4348
    %4444 = vmax.xlane.f32.xlu0 %v4443
    %v4445 = vpop.xlane.xlu0 %4444
    %v4446 = vmax.f32 %v4238, %v4351
    %4447 = vmax.xlane.f32.xlu0 %v4446
    %v4448 = vpop.xlane.xlu0 %4447
    %v4449 = vsub.f32 %v4145, %v4355
    %v4450 = vsub.f32 %v4258, %v4355
    %v4451 = vsub.f32 %v4148, %v4358
    %v4452 = vsub.f32 %v4261, %v4358
    %v4453 = vsub.f32 %v4151, %v4361
    %v4454 = vsub.f32 %v4264, %v4361
    %v4455 = vsub.f32 %v4154, %v4364
    %v4456 = vsub.f32 %v4267, %v4364
    %v4457 = vsub.f32 %v4157, %v4367
    %v4458 = vsub.f32 %v4270, %v4367
    %v4459 = vsub.f32 %v4160, %v4370
    %v4460 = vsub.f32 %v4273, %v4370
    %v4461 = vsub.f32 %v4163, %v4373
    %v4462 = vsub.f32 %v4276, %v4373
    %v4463 = vsub.f32 %v4166, %v4376
    %v4464 = vsub.f32 %v4279, %v4376
    %v4465 = vsub.f32 %v4169, %v4379
    %v4466 = vsub.f32 %v4282, %v4379
    %v4467 = vsub.f32 %v4172, %v4382
    %v4468 = vsub.f32 %v4285, %v4382
    %v4469 = vsub.f32 %v4175, %v4385
    %v4470 = vsub.f32 %v4288, %v4385
    %v4471 = vsub.f32 %v4178, %v4388
    %v4472 = vsub.f32 %v4291, %v4388
    %v4473 = vsub.f32 %v4181, %v4391
    %v4474 = vsub.f32 %v4294, %v4391
    %v4475 = vsub.f32 %v4184, %v4394
    %v4476 = vsub.f32 %v4297, %v4394
    %v4477 = vsub.f32 %v4187, %v4397
    %v4478 = vsub.f32 %v4300, %v4397
    %v4479 = vsub.f32 %v4190, %v4400
    %v4480 = vsub.f32 %v4303, %v4400
    %v4481 = vsub.f32 %v4193, %v4403
    %v4482 = vsub.f32 %v4306, %v4403
    %v4483 = vsub.f32 %v4196, %v4406
    %v4484 = vsub.f32 %v4309, %v4406
    %v4485 = vsub.f32 %v4199, %v4409
    %v4486 = vsub.f32 %v4312, %v4409
    %v4487 = vsub.f32 %v4202, %v4412
    %v4488 = vsub.f32 %v4315, %v4412
    %v4489 = vsub.f32 %v4205, %v4415
    %v4490 = vsub.f32 %v4318, %v4415
    %v4491 = vsub.f32 %v4208, %v4418
    %v4492 = vsub.f32 %v4321, %v4418
    %v4493 = vsub.f32 %v4211, %v4421
    %v4494 = vsub.f32 %v4324, %v4421
    %v4495 = vsub.f32 %v4214, %v4424
    %v4496 = vsub.f32 %v4327, %v4424
    %v4497 = vsub.f32 %v4217, %v4427
    %v4498 = vsub.f32 %v4330, %v4427
    %v4499 = vsub.f32 %v4220, %v4430
    %v4500 = vsub.f32 %v4333, %v4430
    %v4501 = vsub.f32 %v4223, %v4433
    %v4502 = vsub.f32 %v4336, %v4433
    %v4503 = vsub.f32 %v4226, %v4436
    %v4504 = vsub.f32 %v4339, %v4436
    %v4505 = vsub.f32 %v4229, %v4439
    %v4506 = vsub.f32 %v4342, %v4439
    %v4507 = vsub.f32 %v4232, %v4442
    %v4508 = vsub.f32 %v4345, %v4442
    %v4509 = vsub.f32 %v4235, %v4445
    %v4510 = vsub.f32 %v4348, %v4445
    %v4511 = vsub.f32 %v4238, %v4448
    %v4512 = vsub.f32 %v4351, %v4448
    %v4513 = vmul.f32 %v4449, 1.442695
    %v4514 = vpow.pop %v4513
    %v4515 = vmul.f32 %v4450, 1.442695
    %v4516 = vpow.pop %v4515
    %v4517 = vmul.f32 %v4451, 1.442695
    %v4518 = vpow.pop %v4517
    %v4519 = vmul.f32 %v4452, 1.442695
    %v4520 = vpow.pop %v4519
    %v4521 = vmul.f32 %v4453, 1.442695
    %v4522 = vpow.pop %v4521
    %v4523 = vmul.f32 %v4454, 1.442695
    %v4524 = vpow.pop %v4523
    %v4525 = vmul.f32 %v4455, 1.442695
    %v4526 = vpow.pop %v4525
    %v4527 = vmul.f32 %v4456, 1.442695
    %v4528 = vpow.pop %v4527
    %v4529 = vmul.f32 %v4457, 1.442695
    %v4530 = vpow.pop %v4529
    %v4531 = vmul.f32 %v4458, 1.442695
    %v4532 = vpow.pop %v4531
    %v4533 = vmul.f32 %v4459, 1.442695
    %v4534 = vpow.pop %v4533
    %v4535 = vmul.f32 %v4460, 1.442695
    %v4536 = vpow.pop %v4535
    %v4537 = vmul.f32 %v4461, 1.442695
    %v4538 = vpow.pop %v4537
    %v4539 = vmul.f32 %v4462, 1.442695
    %v4540 = vpow.pop %v4539
    %v4541 = vmul.f32 %v4463, 1.442695
    %v4542 = vpow.pop %v4541
    %v4543 = vmul.f32 %v4464, 1.442695
    %v4544 = vpow.pop %v4543
    %v4545 = vmul.f32 %v4465, 1.442695
    %v4546 = vpow.pop %v4545
    %v4547 = vmul.f32 %v4466, 1.442695
    %v4548 = vpow.pop %v4547
    %v4549 = vmul.f32 %v4467, 1.442695
    %v4550 = vpow.pop %v4549
    %v4551 = vmul.f32 %v4468, 1.442695
    %v4552 = vpow.pop %v4551
    %v4553 = vmul.f32 %v4469, 1.442695
    %v4554 = vpow.pop %v4553
    %v4555 = vmul.f32 %v4470, 1.442695
    %v4556 = vpow.pop %v4555
    %v4557 = vmul.f32 %v4471, 1.442695
    %v4558 = vpow.pop %v4557
    %v4559 = vmul.f32 %v4472, 1.442695
    %v4560 = vpow.pop %v4559
    %v4561 = vmul.f32 %v4473, 1.442695
    %v4562 = vpow.pop %v4561
    %v4563 = vmul.f32 %v4474, 1.442695
    %v4564 = vpow.pop %v4563
    %v4565 = vmul.f32 %v4475, 1.442695
    %v4566 = vpow.pop %v4565
    %v4567 = vmul.f32 %v4476, 1.442695
    %v4568 = vpow.pop %v4567
    %v4569 = vmul.f32 %v4477, 1.442695
    %v4570 = vpow.pop %v4569
    %v4571 = vmul.f32 %v4478, 1.442695
    %v4572 = vpow.pop %v4571
    %v4573 = vmul.f32 %v4479, 1.442695
    %v4574 = vpow.pop %v4573
    %v4575 = vmul.f32 %v4480, 1.442695
    %v4576 = vpow.pop %v4575
    %v4577 = vmul.f32 %v4481, 1.442695
    %v4578 = vpow.pop %v4577
    %v4579 = vmul.f32 %v4482, 1.442695
    %v4580 = vpow.pop %v4579
    %v4581 = vmul.f32 %v4483, 1.442695
    %v4582 = vpow.pop %v4581
    %v4583 = vmul.f32 %v4484, 1.442695
    %v4584 = vpow.pop %v4583
    %v4585 = vmul.f32 %v4485, 1.442695
    %v4586 = vpow.pop %v4585
    %v4587 = vmul.f32 %v4486, 1.442695
    %v4588 = vpow.pop %v4587
    %v4589 = vmul.f32 %v4487, 1.442695
    %v4590 = vpow.pop %v4589
    %v4591 = vmul.f32 %v4488, 1.442695
    %v4592 = vpow.pop %v4591
    %v4593 = vmul.f32 %v4489, 1.442695
    %v4594 = vpow.pop %v4593
    %v4595 = vmul.f32 %v4490, 1.442695
    %v4596 = vpow.pop %v4595
    %v4597 = vmul.f32 %v4491, 1.442695
    %v4598 = vpow.pop %v4597
    %v4599 = vmul.f32 %v4492, 1.442695
    %v4600 = vpow.pop %v4599
    %v4601 = vmul.f32 %v4493, 1.442695
    %v4602 = vpow.pop %v4601
    %v4603 = vmul.f32 %v4494, 1.442695
    %v4604 = vpow.pop %v4603
    %v4605 = vmul.f32 %v4495, 1.442695
    %v4606 = vpow.pop %v4605
    %v4607 = vmul.f32 %v4496, 1.442695
    %v4608 = vpow.pop %v4607
    %v4609 = vmul.f32 %v4497, 1.442695
    %v4610 = vpow.pop %v4609
    %v4611 = vmul.f32 %v4498, 1.442695
    %v4612 = vpow.pop %v4611
    %v4613 = vmul.f32 %v4499, 1.442695
    %v4614 = vpow.pop %v4613
    %v4615 = vmul.f32 %v4500, 1.442695
    %v4616 = vpow.pop %v4615
    %v4617 = vmul.f32 %v4501, 1.442695
    %v4618 = vpow.pop %v4617
    %v4619 = vmul.f32 %v4502, 1.442695
    %v4620 = vpow.pop %v4619
    %v4621 = vmul.f32 %v4503, 1.442695
    %v4622 = vpow.pop %v4621
    %v4623 = vmul.f32 %v4504, 1.442695
    %v4624 = vpow.pop %v4623
    %v4625 = vmul.f32 %v4505, 1.442695
    %v4626 = vpow.pop %v4625
    %v4627 = vmul.f32 %v4506, 1.442695
    %v4628 = vpow.pop %v4627
    %v4629 = vmul.f32 %v4507, 1.442695
    %v4630 = vpow.pop %v4629
    %v4631 = vmul.f32 %v4508, 1.442695
    %v4632 = vpow.pop %v4631
    %v4633 = vmul.f32 %v4509, 1.442695
    %v4634 = vpow.pop %v4633
    %v4635 = vmul.f32 %v4510, 1.442695
    %v4636 = vpow.pop %v4635
    %v4637 = vmul.f32 %v4511, 1.442695
    %v4638 = vpow.pop %v4637
    %v4639 = vmul.f32 %v4512, 1.442695
    %v4640 = vpow.pop %v4639
    %v4641 = vadd.f32 %v4514, %v4516
    %4642 = vadd.xlane.f32.xlu0 %v4641
    %v4643 = vpop.xlane.xlu0 %4642
    %v4644 = vadd.f32 %v4518, %v4520
    %4645 = vadd.xlane.f32.xlu0 %v4644
    %v4646 = vpop.xlane.xlu0 %4645
    %v4647 = vadd.f32 %v4522, %v4524
    %4648 = vadd.xlane.f32.xlu0 %v4647
    %v4649 = vpop.xlane.xlu0 %4648
    %v4650 = vadd.f32 %v4526, %v4528
    %4651 = vadd.xlane.f32.xlu0 %v4650
    %v4652 = vpop.xlane.xlu0 %4651
    %v4653 = vadd.f32 %v4530, %v4532
    %4654 = vadd.xlane.f32.xlu0 %v4653
    %v4655 = vpop.xlane.xlu0 %4654
    %v4656 = vadd.f32 %v4534, %v4536
    %4657 = vadd.xlane.f32.xlu0 %v4656
    %v4658 = vpop.xlane.xlu0 %4657
    %v4659 = vadd.f32 %v4538, %v4540
    %4660 = vadd.xlane.f32.xlu0 %v4659
    %v4661 = vpop.xlane.xlu0 %4660
    %v4662 = vadd.f32 %v4542, %v4544
    %4663 = vadd.xlane.f32.xlu0 %v4662
    %v4664 = vpop.xlane.xlu0 %4663
    %v4665 = vadd.f32 %v4546, %v4548
    %4666 = vadd.xlane.f32.xlu0 %v4665
    %v4667 = vpop.xlane.xlu0 %4666
    %v4668 = vadd.f32 %v4550, %v4552
    %4669 = vadd.xlane.f32.xlu0 %v4668
    %v4670 = vpop.xlane.xlu0 %4669
    %v4671 = vadd.f32 %v4554, %v4556
    %4672 = vadd.xlane.f32.xlu0 %v4671
    %v4673 = vpop.xlane.xlu0 %4672
    %v4674 = vadd.f32 %v4558, %v4560
    %4675 = vadd.xlane.f32.xlu0 %v4674
    %v4676 = vpop.xlane.xlu0 %4675
    %v4677 = vadd.f32 %v4562, %v4564
    %4678 = vadd.xlane.f32.xlu0 %v4677
    %v4679 = vpop.xlane.xlu0 %4678
    %v4680 = vadd.f32 %v4566, %v4568
    %4681 = vadd.xlane.f32.xlu0 %v4680
    %v4682 = vpop.xlane.xlu0 %4681
    %v4683 = vadd.f32 %v4570, %v4572
    %4684 = vadd.xlane.f32.xlu0 %v4683
    %v4685 = vpop.xlane.xlu0 %4684
    %v4686 = vadd.f32 %v4574, %v4576
    %4687 = vadd.xlane.f32.xlu0 %v4686
    %v4688 = vpop.xlane.xlu0 %4687
    %v4689 = vadd.f32 %v4578, %v4580
    %4690 = vadd.xlane.f32.xlu0 %v4689
    %v4691 = vpop.xlane.xlu0 %4690
    %v4692 = vadd.f32 %v4582, %v4584
    %4693 = vadd.xlane.f32.xlu0 %v4692
    %v4694 = vpop.xlane.xlu0 %4693
    %v4695 = vadd.f32 %v4586, %v4588
    %4696 = vadd.xlane.f32.xlu0 %v4695
    %v4697 = vpop.xlane.xlu0 %4696
    %v4698 = vadd.f32 %v4590, %v4592
    %4699 = vadd.xlane.f32.xlu0 %v4698
    %v4700 = vpop.xlane.xlu0 %4699
    %v4701 = vadd.f32 %v4594, %v4596
    %4702 = vadd.xlane.f32.xlu0 %v4701
    %v4703 = vpop.xlane.xlu0 %4702
    %v4704 = vadd.f32 %v4598, %v4600
    %4705 = vadd.xlane.f32.xlu0 %v4704
    %v4706 = vpop.xlane.xlu0 %4705
    %v4707 = vadd.f32 %v4602, %v4604
    %4708 = vadd.xlane.f32.xlu0 %v4707
    %v4709 = vpop.xlane.xlu0 %4708
    %v4710 = vadd.f32 %v4606, %v4608
    %4711 = vadd.xlane.f32.xlu0 %v4710
    %v4712 = vpop.xlane.xlu0 %4711
    %v4713 = vadd.f32 %v4610, %v4612
    %4714 = vadd.xlane.f32.xlu0 %v4713
    %v4715 = vpop.xlane.xlu0 %4714
    %v4716 = vadd.f32 %v4614, %v4616
    %4717 = vadd.xlane.f32.xlu0 %v4716
    %v4718 = vpop.xlane.xlu0 %4717
    %v4719 = vadd.f32 %v4618, %v4620
    %4720 = vadd.xlane.f32.xlu0 %v4719
    %v4721 = vpop.xlane.xlu0 %4720
    %v4722 = vadd.f32 %v4622, %v4624
    %4723 = vadd.xlane.f32.xlu0 %v4722
    %v4724 = vpop.xlane.xlu0 %4723
    %v4725 = vadd.f32 %v4626, %v4628
    %4726 = vadd.xlane.f32.xlu0 %v4725
    %v4727 = vpop.xlane.xlu0 %4726
    %v4728 = vadd.f32 %v4630, %v4632
    %4729 = vadd.xlane.f32.xlu0 %v4728
    %v4730 = vpop.xlane.xlu0 %4729
    %v4731 = vadd.f32 %v4634, %v4636
    %4732 = vadd.xlane.f32.xlu0 %v4731
    %v4733 = vpop.xlane.xlu0 %4732
    %v4734 = vadd.f32 %v4638, %v4640
    %4735 = vadd.xlane.f32.xlu0 %v4734
    %v4736 = vpop.xlane.xlu0 %4735
    %v4737 = vrcp.pop %v4643
    %v4738 = vmul.f32 %v4643, %v4737
    %v4739 = vsub.f32 1.0, %v4738
    %v4740 = vmul.f32 %v4737, %v4739
    %v4741 = vadd.f32 %v4737, %v4740
    %vm4742 = vweird.f32 %v4643
    %vm4743 = vweird.f32 %v4737
    %vm4744 = vmor %vm4742, %vm4743
    %v4745 = vsel %vm4744, %v4737, %v4741
    %v4746 = vand.u32 2147483647, %v4643
    %vm4747 = vcmp.eq.f32.partialorder %v4746, 8.507059e+37
    %v4748 = vand.u32 %v4643, 2147483648
    %v4749 = vor.u32 1.1754944e-38, %v4748
    %v4750 = vsel %vm4747, %v4749, %v4745
    %v4751 = vrcp.pop %v4646
    %v4752 = vmul.f32 %v4646, %v4751
    %v4753 = vsub.f32 1.0, %v4752
    %v4754 = vmul.f32 %v4751, %v4753
    %v4755 = vadd.f32 %v4751, %v4754
    %vm4756 = vweird.f32 %v4646
    %vm4757 = vweird.f32 %v4751
    %vm4758 = vmor %vm4756, %vm4757
    %v4759 = vsel %vm4758, %v4751, %v4755
    %v4760 = vand.u32 2147483647, %v4646
    %vm4761 = vcmp.eq.f32.partialorder %v4760, 8.507059e+37
    %v4762 = vand.u32 %v4646, 2147483648
    %v4763 = vor.u32 1.1754944e-38, %v4762
    %v4764 = vsel %vm4761, %v4763, %v4759
    %v4765 = vrcp.pop %v4649
    %v4766 = vmul.f32 %v4649, %v4765
    %v4767 = vsub.f32 1.0, %v4766
    %v4768 = vmul.f32 %v4765, %v4767
    %v4769 = vadd.f32 %v4765, %v4768
    %vm4770 = vweird.f32 %v4649
    %vm4771 = vweird.f32 %v4765
    %vm4772 = vmor %vm4770, %vm4771
    %v4773 = vsel %vm4772, %v4765, %v4769
    %v4774 = vand.u32 2147483647, %v4649
    %vm4775 = vcmp.eq.f32.partialorder %v4774, 8.507059e+37
    %v4776 = vand.u32 %v4649, 2147483648
    %v4777 = vor.u32 1.1754944e-38, %v4776
    %v4778 = vsel %vm4775, %v4777, %v4773
    %v4779 = vrcp.pop %v4652
    %v4780 = vmul.f32 %v4652, %v4779
    %v4781 = vsub.f32 1.0, %v4780
    %v4782 = vmul.f32 %v4779, %v4781
    %v4783 = vadd.f32 %v4779, %v4782
    %vm4784 = vweird.f32 %v4652
    %vm4785 = vweird.f32 %v4779
    %vm4786 = vmor %vm4784, %vm4785
    %v4787 = vsel %vm4786, %v4779, %v4783
    %v4788 = vand.u32 2147483647, %v4652
    %vm4789 = vcmp.eq.f32.partialorder %v4788, 8.507059e+37
    %v4790 = vand.u32 %v4652, 2147483648
    %v4791 = vor.u32 1.1754944e-38, %v4790
    %v4792 = vsel %vm4789, %v4791, %v4787
    %v4793 = vrcp.pop %v4655
    %v4794 = vmul.f32 %v4655, %v4793
    %v4795 = vsub.f32 1.0, %v4794
    %v4796 = vmul.f32 %v4793, %v4795
    %v4797 = vadd.f32 %v4793, %v4796
    %vm4798 = vweird.f32 %v4655
    %vm4799 = vweird.f32 %v4793
    %vm4800 = vmor %vm4798, %vm4799
    %v4801 = vsel %vm4800, %v4793, %v4797
    %v4802 = vand.u32 2147483647, %v4655
    %vm4803 = vcmp.eq.f32.partialorder %v4802, 8.507059e+37
    %v4804 = vand.u32 %v4655, 2147483648
    %v4805 = vor.u32 1.1754944e-38, %v4804
    %v4806 = vsel %vm4803, %v4805, %v4801
    %v4807 = vrcp.pop %v4658
    %v4808 = vmul.f32 %v4658, %v4807
    %v4809 = vsub.f32 1.0, %v4808
    %v4810 = vmul.f32 %v4807, %v4809
    %v4811 = vadd.f32 %v4807, %v4810
    %vm4812 = vweird.f32 %v4658
    %vm4813 = vweird.f32 %v4807
    %vm4814 = vmor %vm4812, %vm4813
    %v4815 = vsel %vm4814, %v4807, %v4811
    %v4816 = vand.u32 2147483647, %v4658
    %vm4817 = vcmp.eq.f32.partialorder %v4816, 8.507059e+37
    %v4818 = vand.u32 %v4658, 2147483648
    %v4819 = vor.u32 1.1754944e-38, %v4818
    %v4820 = vsel %vm4817, %v4819, %v4815
    %v4821 = vrcp.pop %v4661
    %v4822 = vmul.f32 %v4661, %v4821
    %v4823 = vsub.f32 1.0, %v4822
    %v4824 = vmul.f32 %v4821, %v4823
    %v4825 = vadd.f32 %v4821, %v4824
    %vm4826 = vweird.f32 %v4661
    %vm4827 = vweird.f32 %v4821
    %vm4828 = vmor %vm4826, %vm4827
    %v4829 = vsel %vm4828, %v4821, %v4825
    %v4830 = vand.u32 2147483647, %v4661
    %vm4831 = vcmp.eq.f32.partialorder %v4830, 8.507059e+37
    %v4832 = vand.u32 %v4661, 2147483648
    %v4833 = vor.u32 1.1754944e-38, %v4832
    %v4834 = vsel %vm4831, %v4833, %v4829
    %v4835 = vrcp.pop %v4664
    %v4836 = vmul.f32 %v4664, %v4835
    %v4837 = vsub.f32 1.0, %v4836
    %v4838 = vmul.f32 %v4835, %v4837
    %v4839 = vadd.f32 %v4835, %v4838
    %vm4840 = vweird.f32 %v4664
    %vm4841 = vweird.f32 %v4835
    %vm4842 = vmor %vm4840, %vm4841
    %v4843 = vsel %vm4842, %v4835, %v4839
    %v4844 = vand.u32 2147483647, %v4664
    %vm4845 = vcmp.eq.f32.partialorder %v4844, 8.507059e+37
    %v4846 = vand.u32 %v4664, 2147483648
    %v4847 = vor.u32 1.1754944e-38, %v4846
    %v4848 = vsel %vm4845, %v4847, %v4843
    %v4849 = vrcp.pop %v4667
    %v4850 = vmul.f32 %v4667, %v4849
    %v4851 = vsub.f32 1.0, %v4850
    %v4852 = vmul.f32 %v4849, %v4851
    %v4853 = vadd.f32 %v4849, %v4852
    %vm4854 = vweird.f32 %v4667
    %vm4855 = vweird.f32 %v4849
    %vm4856 = vmor %vm4854, %vm4855
    %v4857 = vsel %vm4856, %v4849, %v4853
    %v4858 = vand.u32 2147483647, %v4667
    %vm4859 = vcmp.eq.f32.partialorder %v4858, 8.507059e+37
    %v4860 = vand.u32 %v4667, 2147483648
    %v4861 = vor.u32 1.1754944e-38, %v4860
    %v4862 = vsel %vm4859, %v4861, %v4857
    %v4863 = vrcp.pop %v4670
    %v4864 = vmul.f32 %v4670, %v4863
    %v4865 = vsub.f32 1.0, %v4864
    %v4866 = vmul.f32 %v4863, %v4865
    %v4867 = vadd.f32 %v4863, %v4866
    %vm4868 = vweird.f32 %v4670
    %vm4869 = vweird.f32 %v4863
    %vm4870 = vmor %vm4868, %vm4869
    %v4871 = vsel %vm4870, %v4863, %v4867
    %v4872 = vand.u32 2147483647, %v4670
    %vm4873 = vcmp.eq.f32.partialorder %v4872, 8.507059e+37
    %v4874 = vand.u32 %v4670, 2147483648
    %v4875 = vor.u32 1.1754944e-38, %v4874
    %v4876 = vsel %vm4873, %v4875, %v4871
    %v4877 = vrcp.pop %v4673
    %v4878 = vmul.f32 %v4673, %v4877
    %v4879 = vsub.f32 1.0, %v4878
    %v4880 = vmul.f32 %v4877, %v4879
    %v4881 = vadd.f32 %v4877, %v4880
    %vm4882 = vweird.f32 %v4673
    %vm4883 = vweird.f32 %v4877
    %vm4884 = vmor %vm4882, %vm4883
    %v4885 = vsel %vm4884, %v4877, %v4881
    %v4886 = vand.u32 2147483647, %v4673
    %vm4887 = vcmp.eq.f32.partialorder %v4886, 8.507059e+37
    %v4888 = vand.u32 %v4673, 2147483648
    %v4889 = vor.u32 1.1754944e-38, %v4888
    %v4890 = vsel %vm4887, %v4889, %v4885
    %v4891 = vrcp.pop %v4676
    %v4892 = vmul.f32 %v4676, %v4891
    %v4893 = vsub.f32 1.0, %v4892
    %v4894 = vmul.f32 %v4891, %v4893
    %v4895 = vadd.f32 %v4891, %v4894
    %vm4896 = vweird.f32 %v4676
    %vm4897 = vweird.f32 %v4891
    %vm4898 = vmor %vm4896, %vm4897
    %v4899 = vsel %vm4898, %v4891, %v4895
    %v4900 = vand.u32 2147483647, %v4676
    %vm4901 = vcmp.eq.f32.partialorder %v4900, 8.507059e+37
    %v4902 = vand.u32 %v4676, 2147483648
    %v4903 = vor.u32 1.1754944e-38, %v4902
    %v4904 = vsel %vm4901, %v4903, %v4899
    %v4905 = vrcp.pop %v4679
    %v4906 = vmul.f32 %v4679, %v4905
    %v4907 = vsub.f32 1.0, %v4906
    %v4908 = vmul.f32 %v4905, %v4907
    %v4909 = vadd.f32 %v4905, %v4908
    %vm4910 = vweird.f32 %v4679
    %vm4911 = vweird.f32 %v4905
    %vm4912 = vmor %vm4910, %vm4911
    %v4913 = vsel %vm4912, %v4905, %v4909
    %v4914 = vand.u32 2147483647, %v4679
    %vm4915 = vcmp.eq.f32.partialorder %v4914, 8.507059e+37
    %v4916 = vand.u32 %v4679, 2147483648
    %v4917 = vor.u32 1.1754944e-38, %v4916
    %v4918 = vsel %vm4915, %v4917, %v4913
    %v4919 = vrcp.pop %v4682
    %v4920 = vmul.f32 %v4682, %v4919
    %v4921 = vsub.f32 1.0, %v4920
    %v4922 = vmul.f32 %v4919, %v4921
    %v4923 = vadd.f32 %v4919, %v4922
    %vm4924 = vweird.f32 %v4682
    %vm4925 = vweird.f32 %v4919
    %vm4926 = vmor %vm4924, %vm4925
    %v4927 = vsel %vm4926, %v4919, %v4923
    %v4928 = vand.u32 2147483647, %v4682
    %vm4929 = vcmp.eq.f32.partialorder %v4928, 8.507059e+37
    %v4930 = vand.u32 %v4682, 2147483648
    %v4931 = vor.u32 1.1754944e-38, %v4930
    %v4932 = vsel %vm4929, %v4931, %v4927
    %v4933 = vrcp.pop %v4685
    %v4934 = vmul.f32 %v4685, %v4933
    %v4935 = vsub.f32 1.0, %v4934
    %v4936 = vmul.f32 %v4933, %v4935
    %v4937 = vadd.f32 %v4933, %v4936
    %vm4938 = vweird.f32 %v4685
    %vm4939 = vweird.f32 %v4933
    %vm4940 = vmor %vm4938, %vm4939
    %v4941 = vsel %vm4940, %v4933, %v4937
    %v4942 = vand.u32 2147483647, %v4685
    %vm4943 = vcmp.eq.f32.partialorder %v4942, 8.507059e+37
    %v4944 = vand.u32 %v4685, 2147483648
    %v4945 = vor.u32 1.1754944e-38, %v4944
    %v4946 = vsel %vm4943, %v4945, %v4941
    %v4947 = vrcp.pop %v4688
    %v4948 = vmul.f32 %v4688, %v4947
    %v4949 = vsub.f32 1.0, %v4948
    %v4950 = vmul.f32 %v4947, %v4949
    %v4951 = vadd.f32 %v4947, %v4950
    %vm4952 = vweird.f32 %v4688
    %vm4953 = vweird.f32 %v4947
    %vm4954 = vmor %vm4952, %vm4953
    %v4955 = vsel %vm4954, %v4947, %v4951
    %v4956 = vand.u32 2147483647, %v4688
    %vm4957 = vcmp.eq.f32.partialorder %v4956, 8.507059e+37
    %v4958 = vand.u32 %v4688, 2147483648
    %v4959 = vor.u32 1.1754944e-38, %v4958
    %v4960 = vsel %vm4957, %v4959, %v4955
    %v4961 = vrcp.pop %v4691
    %v4962 = vmul.f32 %v4691, %v4961
    %v4963 = vsub.f32 1.0, %v4962
    %v4964 = vmul.f32 %v4961, %v4963
    %v4965 = vadd.f32 %v4961, %v4964
    %vm4966 = vweird.f32 %v4691
    %vm4967 = vweird.f32 %v4961
    %vm4968 = vmor %vm4966, %vm4967
    %v4969 = vsel %vm4968, %v4961, %v4965
    %v4970 = vand.u32 2147483647, %v4691
    %vm4971 = vcmp.eq.f32.partialorder %v4970, 8.507059e+37
    %v4972 = vand.u32 %v4691, 2147483648
    %v4973 = vor.u32 1.1754944e-38, %v4972
    %v4974 = vsel %vm4971, %v4973, %v4969
    %v4975 = vrcp.pop %v4694
    %v4976 = vmul.f32 %v4694, %v4975
    %v4977 = vsub.f32 1.0, %v4976
    %v4978 = vmul.f32 %v4975, %v4977
    %v4979 = vadd.f32 %v4975, %v4978
    %vm4980 = vweird.f32 %v4694
    %vm4981 = vweird.f32 %v4975
    %vm4982 = vmor %vm4980, %vm4981
    %v4983 = vsel %vm4982, %v4975, %v4979
    %v4984 = vand.u32 2147483647, %v4694
    %vm4985 = vcmp.eq.f32.partialorder %v4984, 8.507059e+37
    %v4986 = vand.u32 %v4694, 2147483648
    %v4987 = vor.u32 1.1754944e-38, %v4986
    %v4988 = vsel %vm4985, %v4987, %v4983
    %v4989 = vrcp.pop %v4697
    %v4990 = vmul.f32 %v4697, %v4989
    %v4991 = vsub.f32 1.0, %v4990
    %v4992 = vmul.f32 %v4989, %v4991
    %v4993 = vadd.f32 %v4989, %v4992
    %vm4994 = vweird.f32 %v4697
    %vm4995 = vweird.f32 %v4989
    %vm4996 = vmor %vm4994, %vm4995
    %v4997 = vsel %vm4996, %v4989, %v4993
    %v4998 = vand.u32 2147483647, %v4697
    %vm4999 = vcmp.eq.f32.partialorder %v4998, 8.507059e+37
    %v5000 = vand.u32 %v4697, 2147483648
    %v5001 = vor.u32 1.1754944e-38, %v5000
    %v5002 = vsel %vm4999, %v5001, %v4997
    %v5003 = vrcp.pop %v4700
    %v5004 = vmul.f32 %v4700, %v5003
    %v5005 = vsub.f32 1.0, %v5004
    %v5006 = vmul.f32 %v5003, %v5005
    %v5007 = vadd.f32 %v5003, %v5006
    %vm5008 = vweird.f32 %v4700
    %vm5009 = vweird.f32 %v5003
    %vm5010 = vmor %vm5008, %vm5009
    %v5011 = vsel %vm5010, %v5003, %v5007
    %v5012 = vand.u32 2147483647, %v4700
    %vm5013 = vcmp.eq.f32.partialorder %v5012, 8.507059e+37
    %v5014 = vand.u32 %v4700, 2147483648
    %v5015 = vor.u32 1.1754944e-38, %v5014
    %v5016 = vsel %vm5013, %v5015, %v5011
    %v5017 = vrcp.pop %v4703
    %v5018 = vmul.f32 %v4703, %v5017
    %v5019 = vsub.f32 1.0, %v5018
    %v5020 = vmul.f32 %v5017, %v5019
    %v5021 = vadd.f32 %v5017, %v5020
    %vm5022 = vweird.f32 %v4703
    %vm5023 = vweird.f32 %v5017
    %vm5024 = vmor %vm5022, %vm5023
    %v5025 = vsel %vm5024, %v5017, %v5021
    %v5026 = vand.u32 2147483647, %v4703
    %vm5027 = vcmp.eq.f32.partialorder %v5026, 8.507059e+37
    %v5028 = vand.u32 %v4703, 2147483648
    %v5029 = vor.u32 1.1754944e-38, %v5028
    %v5030 = vsel %vm5027, %v5029, %v5025
    %v5031 = vrcp.pop %v4706
    %v5032 = vmul.f32 %v4706, %v5031
    %v5033 = vsub.f32 1.0, %v5032
    %v5034 = vmul.f32 %v5031, %v5033
    %v5035 = vadd.f32 %v5031, %v5034
    %vm5036 = vweird.f32 %v4706
    %vm5037 = vweird.f32 %v5031
    %vm5038 = vmor %vm5036, %vm5037
    %v5039 = vsel %vm5038, %v5031, %v5035
    %v5040 = vand.u32 2147483647, %v4706
    %vm5041 = vcmp.eq.f32.partialorder %v5040, 8.507059e+37
    %v5042 = vand.u32 %v4706, 2147483648
    %v5043 = vor.u32 1.1754944e-38, %v5042
    %v5044 = vsel %vm5041, %v5043, %v5039
    %v5045 = vrcp.pop %v4709
    %v5046 = vmul.f32 %v4709, %v5045
    %v5047 = vsub.f32 1.0, %v5046
    %v5048 = vmul.f32 %v5045, %v5047
    %v5049 = vadd.f32 %v5045, %v5048
    %vm5050 = vweird.f32 %v4709
    %vm5051 = vweird.f32 %v5045
    %vm5052 = vmor %vm5050, %vm5051
    %v5053 = vsel %vm5052, %v5045, %v5049
    %v5054 = vand.u32 2147483647, %v4709
    %vm5055 = vcmp.eq.f32.partialorder %v5054, 8.507059e+37
    %v5056 = vand.u32 %v4709, 2147483648
    %v5057 = vor.u32 1.1754944e-38, %v5056
    %v5058 = vsel %vm5055, %v5057, %v5053
    %v5059 = vrcp.pop %v4712
    %v5060 = vmul.f32 %v4712, %v5059
    %v5061 = vsub.f32 1.0, %v5060
    %v5062 = vmul.f32 %v5059, %v5061
    %v5063 = vadd.f32 %v5059, %v5062
    %vm5064 = vweird.f32 %v4712
    %vm5065 = vweird.f32 %v5059
    %vm5066 = vmor %vm5064, %vm5065
    %v5067 = vsel %vm5066, %v5059, %v5063
    %v5068 = vand.u32 2147483647, %v4712
    %vm5069 = vcmp.eq.f32.partialorder %v5068, 8.507059e+37
    %v5070 = vand.u32 %v4712, 2147483648
    %v5071 = vor.u32 1.1754944e-38, %v5070
    %v5072 = vsel %vm5069, %v5071, %v5067
    %v5073 = vrcp.pop %v4715
    %v5074 = vmul.f32 %v4715, %v5073
    %v5075 = vsub.f32 1.0, %v5074
    %v5076 = vmul.f32 %v5073, %v5075
    %v5077 = vadd.f32 %v5073, %v5076
    %vm5078 = vweird.f32 %v4715
    %vm5079 = vweird.f32 %v5073
    %vm5080 = vmor %vm5078, %vm5079
    %v5081 = vsel %vm5080, %v5073, %v5077
    %v5082 = vand.u32 2147483647, %v4715
    %vm5083 = vcmp.eq.f32.partialorder %v5082, 8.507059e+37
    %v5084 = vand.u32 %v4715, 2147483648
    %v5085 = vor.u32 1.1754944e-38, %v5084
    %v5086 = vsel %vm5083, %v5085, %v5081
    %v5087 = vrcp.pop %v4718
    %v5088 = vmul.f32 %v4718, %v5087
    %v5089 = vsub.f32 1.0, %v5088
    %v5090 = vmul.f32 %v5087, %v5089
    %v5091 = vadd.f32 %v5087, %v5090
    %vm5092 = vweird.f32 %v4718
    %vm5093 = vweird.f32 %v5087
    %vm5094 = vmor %vm5092, %vm5093
    %v5095 = vsel %vm5094, %v5087, %v5091
    %v5096 = vand.u32 2147483647, %v4718
    %vm5097 = vcmp.eq.f32.partialorder %v5096, 8.507059e+37
    %v5098 = vand.u32 %v4718, 2147483648
    %v5099 = vor.u32 1.1754944e-38, %v5098
    %v5100 = vsel %vm5097, %v5099, %v5095
    %v5101 = vrcp.pop %v4721
    %v5102 = vmul.f32 %v4721, %v5101
    %v5103 = vsub.f32 1.0, %v5102
    %v5104 = vmul.f32 %v5101, %v5103
    %v5105 = vadd.f32 %v5101, %v5104
    %vm5106 = vweird.f32 %v4721
    %vm5107 = vweird.f32 %v5101
    %vm5108 = vmor %vm5106, %vm5107
    %v5109 = vsel %vm5108, %v5101, %v5105
    %v5110 = vand.u32 2147483647, %v4721
    %vm5111 = vcmp.eq.f32.partialorder %v5110, 8.507059e+37
    %v5112 = vand.u32 %v4721, 2147483648
    %v5113 = vor.u32 1.1754944e-38, %v5112
    %v5114 = vsel %vm5111, %v5113, %v5109
    %v5115 = vrcp.pop %v4724
    %v5116 = vmul.f32 %v4724, %v5115
    %v5117 = vsub.f32 1.0, %v5116
    %v5118 = vmul.f32 %v5115, %v5117
    %v5119 = vadd.f32 %v5115, %v5118
    %vm5120 = vweird.f32 %v4724
    %vm5121 = vweird.f32 %v5115
    %vm5122 = vmor %vm5120, %vm5121
    %v5123 = vsel %vm5122, %v5115, %v5119
    %v5124 = vand.u32 2147483647, %v4724
    %vm5125 = vcmp.eq.f32.partialorder %v5124, 8.507059e+37
    %v5126 = vand.u32 %v4724, 2147483648
    %v5127 = vor.u32 1.1754944e-38, %v5126
    %v5128 = vsel %vm5125, %v5127, %v5123
    %v5129 = vrcp.pop %v4727
    %v5130 = vmul.f32 %v4727, %v5129
    %v5131 = vsub.f32 1.0, %v5130
    %v5132 = vmul.f32 %v5129, %v5131
    %v5133 = vadd.f32 %v5129, %v5132
    %vm5134 = vweird.f32 %v4727
    %vm5135 = vweird.f32 %v5129
    %vm5136 = vmor %vm5134, %vm5135
    %v5137 = vsel %vm5136, %v5129, %v5133
    %v5138 = vand.u32 2147483647, %v4727
    %vm5139 = vcmp.eq.f32.partialorder %v5138, 8.507059e+37
    %v5140 = vand.u32 %v4727, 2147483648
    %v5141 = vor.u32 1.1754944e-38, %v5140
    %v5142 = vsel %vm5139, %v5141, %v5137
    %v5143 = vrcp.pop %v4730
    %v5144 = vmul.f32 %v4730, %v5143
    %v5145 = vsub.f32 1.0, %v5144
    %v5146 = vmul.f32 %v5143, %v5145
    %v5147 = vadd.f32 %v5143, %v5146
    %vm5148 = vweird.f32 %v4730
    %vm5149 = vweird.f32 %v5143
    %vm5150 = vmor %vm5148, %vm5149
    %v5151 = vsel %vm5150, %v5143, %v5147
    %v5152 = vand.u32 2147483647, %v4730
    %vm5153 = vcmp.eq.f32.partialorder %v5152, 8.507059e+37
    %v5154 = vand.u32 %v4730, 2147483648
    %v5155 = vor.u32 1.1754944e-38, %v5154
    %v5156 = vsel %vm5153, %v5155, %v5151
    %v5157 = vrcp.pop %v4733
    %v5158 = vmul.f32 %v4733, %v5157
    %v5159 = vsub.f32 1.0, %v5158
    %v5160 = vmul.f32 %v5157, %v5159
    %v5161 = vadd.f32 %v5157, %v5160
    %vm5162 = vweird.f32 %v4733
    %vm5163 = vweird.f32 %v5157
    %vm5164 = vmor %vm5162, %vm5163
    %v5165 = vsel %vm5164, %v5157, %v5161
    %v5166 = vand.u32 2147483647, %v4733
    %vm5167 = vcmp.eq.f32.partialorder %v5166, 8.507059e+37
    %v5168 = vand.u32 %v4733, 2147483648
    %v5169 = vor.u32 1.1754944e-38, %v5168
    %v5170 = vsel %vm5167, %v5169, %v5165
    %v5171 = vrcp.pop %v4736
    %v5172 = vmul.f32 %v4736, %v5171
    %v5173 = vsub.f32 1.0, %v5172
    %v5174 = vmul.f32 %v5171, %v5173
    %v5175 = vadd.f32 %v5171, %v5174
    %vm5176 = vweird.f32 %v4736
    %vm5177 = vweird.f32 %v5171
    %vm5178 = vmor %vm5176, %vm5177
    %v5179 = vsel %vm5178, %v5171, %v5175
    %v5180 = vand.u32 2147483647, %v4736
    %vm5181 = vcmp.eq.f32.partialorder %v5180, 8.507059e+37
    %v5182 = vand.u32 %v4736, 2147483648
    %v5183 = vor.u32 1.1754944e-38, %v5182
    %v5184 = vsel %vm5181, %v5183, %v5179
    %5185 = vrot.lane.b32.xlu0 %v198, 48
    %v5186 = vpop.permute.xlu0 %5185
    %5187 = vrot.lane.b32.xlu0 %v201, 48
    %v5188 = vpop.permute.xlu0 %5187
    %5189 = vrot.lane.b32.xlu0 %v204, 48
    %v5190 = vpop.permute.xlu0 %5189
    %5191 = vrot.lane.b32.xlu0 %v207, 48
    %v5192 = vpop.permute.xlu0 %5191
    %5193 = vrot.lane.b32.xlu0 %v210, 48
    %v5194 = vpop.permute.xlu0 %5193
    %5195 = vrot.lane.b32.xlu0 %v213, 48
    %v5196 = vpop.permute.xlu0 %5195
    %5197 = vrot.lane.b32.xlu0 %v216, 48
    %v5198 = vpop.permute.xlu0 %5197
    %5199 = vrot.lane.b32.xlu0 %v219, 48
    %v5200 = vpop.permute.xlu0 %5199
    %5201 = vrot.lane.b32.xlu0 %v222, 48
    %v5202 = vpop.permute.xlu0 %5201
    %5203 = vrot.lane.b32.xlu0 %v225, 48
    %v5204 = vpop.permute.xlu0 %5203
    %5205 = vrot.lane.b32.xlu0 %v228, 48
    %v5206 = vpop.permute.xlu0 %5205
    %5207 = vrot.lane.b32.xlu0 %v231, 48
    %v5208 = vpop.permute.xlu0 %5207
    %5209 = vrot.lane.b32.xlu0 %v234, 48
    %v5210 = vpop.permute.xlu0 %5209
    %5211 = vrot.lane.b32.xlu0 %v237, 48
    %v5212 = vpop.permute.xlu0 %5211
    %5213 = vrot.lane.b32.xlu0 %v240, 48
    %v5214 = vpop.permute.xlu0 %5213
    %5215 = vrot.lane.b32.xlu0 %v243, 48
    %v5216 = vpop.permute.xlu0 %5215
    %5217 = vrot.lane.b32.xlu0 %v246, 48
    %v5218 = vpop.permute.xlu0 %5217
    %5219 = vrot.lane.b32.xlu0 %v249, 48
    %v5220 = vpop.permute.xlu0 %5219
    %5221 = vrot.lane.b32.xlu0 %v252, 48
    %v5222 = vpop.permute.xlu0 %5221
    %5223 = vrot.lane.b32.xlu0 %v255, 48
    %v5224 = vpop.permute.xlu0 %5223
    %5225 = vrot.lane.b32.xlu0 %v258, 48
    %v5226 = vpop.permute.xlu0 %5225
    %5227 = vrot.lane.b32.xlu0 %v261, 48
    %v5228 = vpop.permute.xlu0 %5227
    %5229 = vrot.lane.b32.xlu0 %v264, 48
    %v5230 = vpop.permute.xlu0 %5229
    %5231 = vrot.lane.b32.xlu0 %v267, 48
    %v5232 = vpop.permute.xlu0 %5231
    %5233 = vrot.lane.b32.xlu0 %v270, 48
    %v5234 = vpop.permute.xlu0 %5233
    %5235 = vrot.lane.b32.xlu0 %v273, 48
    %v5236 = vpop.permute.xlu0 %5235
    %5237 = vrot.lane.b32.xlu0 %v276, 48
    %v5238 = vpop.permute.xlu0 %5237
    %5239 = vrot.lane.b32.xlu0 %v279, 48
    %v5240 = vpop.permute.xlu0 %5239
    %5241 = vrot.lane.b32.xlu0 %v282, 48
    %v5242 = vpop.permute.xlu0 %5241
    %5243 = vrot.lane.b32.xlu0 %v285, 48
    %v5244 = vpop.permute.xlu0 %5243
    %5245 = vrot.lane.b32.xlu0 %v288, 48
    %v5246 = vpop.permute.xlu0 %5245
    %5247 = vrot.lane.b32.xlu0 %v291, 48
    %v5248 = vpop.permute.xlu0 %5247
    %5281 = vmatpush.msra.mxu0 %v5216
    %5282 = vmatpush.msra.mxu0 %v5214
    %5283 = vmatpush.msra.mxu0 %v5212
    %5284 = vmatpush.msra.mxu0 %v5210
    %5285 = vmatpush.msra.mxu0 %v5208
    %5286 = vmatpush.msra.mxu0 %v5206
    %5287 = vmatpush.msra.mxu0 %v5204
    %5288 = vmatpush.msra.mxu0 %v5202
    %5289 = vmatpush.msra.mxu0 %v5200
    %5290 = vmatpush.msra.mxu0 %v5198
    %5291 = vmatpush.msra.mxu0 %v5196
    %5292 = vmatpush.msra.mxu0 %v5194
    %5293 = vmatpush.msra.mxu0 %v5192
    %5294 = vmatpush.msra.mxu0 %v5190
    %5295 = vmatpush.msra.mxu0 %v5188
    %5296 = vmatpush.msra.mxu0 %v5186
    %5297 = vmatmul.f32.gmra.mxu0 %v4514
    %v5298 = vpop.f32.mrf.mxu0
    %v5299 = vadd.f32 0.0, %v5298
    %5300 = vmatmul.f32.gmra.mxu0 %v4518
    %v5301 = vpop.f32.mrf.mxu0
    %v5302 = vadd.f32 0.0, %v5301
    %5303 = vmatmul.f32.gmra.mxu0 %v4522
    %v5304 = vpop.f32.mrf.mxu0
    %v5305 = vadd.f32 0.0, %v5304
    %5306 = vmatmul.f32.gmra.mxu0 %v4526
    %v5307 = vpop.f32.mrf.mxu0
    %v5308 = vadd.f32 0.0, %v5307
    %5309 = vmatmul.f32.gmra.mxu0 %v4530
    %v5310 = vpop.f32.mrf.mxu0
    %v5311 = vadd.f32 0.0, %v5310
    %5312 = vmatmul.f32.gmra.mxu0 %v4534
    %v5313 = vpop.f32.mrf.mxu0
    %v5314 = vadd.f32 0.0, %v5313
    %5315 = vmatmul.f32.gmra.mxu0 %v4538
    %v5316 = vpop.f32.mrf.mxu0
    %v5317 = vadd.f32 0.0, %v5316
    %5318 = vmatmul.f32.gmra.mxu0 %v4542
    %v5319 = vpop.f32.mrf.mxu0
    %v5320 = vadd.f32 0.0, %v5319
    %5321 = vmatmul.f32.gmra.mxu0 %v4546
    %v5322 = vpop.f32.mrf.mxu0
    %v5323 = vadd.f32 0.0, %v5322
    %5324 = vmatmul.f32.gmra.mxu0 %v4550
    %v5325 = vpop.f32.mrf.mxu0
    %v5326 = vadd.f32 0.0, %v5325
    %5327 = vmatmul.f32.gmra.mxu0 %v4554
    %v5328 = vpop.f32.mrf.mxu0
    %v5329 = vadd.f32 0.0, %v5328
    %5330 = vmatmul.f32.gmra.mxu0 %v4558
    %v5331 = vpop.f32.mrf.mxu0
    %v5332 = vadd.f32 0.0, %v5331
    %5333 = vmatmul.f32.gmra.mxu0 %v4562
    %v5334 = vpop.f32.mrf.mxu0
    %v5335 = vadd.f32 0.0, %v5334
    %5336 = vmatmul.f32.gmra.mxu0 %v4566
    %v5337 = vpop.f32.mrf.mxu0
    %v5338 = vadd.f32 0.0, %v5337
    %5339 = vmatmul.f32.gmra.mxu0 %v4570
    %v5340 = vpop.f32.mrf.mxu0
    %v5341 = vadd.f32 0.0, %v5340
    %5342 = vmatmul.f32.gmra.mxu0 %v4574
    %v5343 = vpop.f32.mrf.mxu0
    %v5344 = vadd.f32 0.0, %v5343
    %5345 = vmatmul.f32.gmra.mxu0 %v4578
    %v5346 = vpop.f32.mrf.mxu0
    %v5347 = vadd.f32 0.0, %v5346
    %5348 = vmatmul.f32.gmra.mxu0 %v4582
    %v5349 = vpop.f32.mrf.mxu0
    %v5350 = vadd.f32 0.0, %v5349
    %5351 = vmatmul.f32.gmra.mxu0 %v4586
    %v5352 = vpop.f32.mrf.mxu0
    %v5353 = vadd.f32 0.0, %v5352
    %5354 = vmatmul.f32.gmra.mxu0 %v4590
    %v5355 = vpop.f32.mrf.mxu0
    %v5356 = vadd.f32 0.0, %v5355
    %5357 = vmatmul.f32.gmra.mxu0 %v4594
    %v5358 = vpop.f32.mrf.mxu0
    %v5359 = vadd.f32 0.0, %v5358
    %5360 = vmatmul.f32.gmra.mxu0 %v4598
    %v5361 = vpop.f32.mrf.mxu0
    %v5362 = vadd.f32 0.0, %v5361
    %5363 = vmatmul.f32.gmra.mxu0 %v4602
    %v5364 = vpop.f32.mrf.mxu0
    %v5365 = vadd.f32 0.0, %v5364
    %5366 = vmatmul.f32.gmra.mxu0 %v4606
    %v5367 = vpop.f32.mrf.mxu0
    %v5368 = vadd.f32 0.0, %v5367
    %5369 = vmatmul.f32.gmra.mxu0 %v4610
    %v5370 = vpop.f32.mrf.mxu0
    %v5371 = vadd.f32 0.0, %v5370
    %5372 = vmatmul.f32.gmra.mxu0 %v4614
    %v5373 = vpop.f32.mrf.mxu0
    %v5374 = vadd.f32 0.0, %v5373
    %5375 = vmatmul.f32.gmra.mxu0 %v4618
    %v5376 = vpop.f32.mrf.mxu0
    %v5377 = vadd.f32 0.0, %v5376
    %5378 = vmatmul.f32.gmra.mxu0 %v4622
    %v5379 = vpop.f32.mrf.mxu0
    %v5380 = vadd.f32 0.0, %v5379
    %5381 = vmatmul.f32.gmra.mxu0 %v4626
    %v5382 = vpop.f32.mrf.mxu0
    %v5383 = vadd.f32 0.0, %v5382
    %5384 = vmatmul.f32.gmra.mxu0 %v4630
    %v5385 = vpop.f32.mrf.mxu0
    %v5386 = vadd.f32 0.0, %v5385
    %5387 = vmatmul.f32.gmra.mxu0 %v4634
    %v5388 = vpop.f32.mrf.mxu0
    %v5389 = vadd.f32 0.0, %v5388
    %5390 = vmatmul.f32.gmra.mxu0 %v4638
    %v5391 = vpop.f32.mrf.mxu0
    %v5392 = vadd.f32 0.0, %v5391
    %5393 = vdwg.mxu0
    %5394 = vmatpush.msra.mxu0 %v5248
    %5395 = vmatpush.msra.mxu0 %v5246
    %5396 = vmatpush.msra.mxu0 %v5244
    %5397 = vmatpush.msra.mxu0 %v5242
    %5398 = vmatpush.msra.mxu0 %v5240
    %5399 = vmatpush.msra.mxu0 %v5238
    %5400 = vmatpush.msra.mxu0 %v5236
    %5401 = vmatpush.msra.mxu0 %v5234
    %5402 = vmatpush.msra.mxu0 %v5232
    %5403 = vmatpush.msra.mxu0 %v5230
    %5404 = vmatpush.msra.mxu0 %v5228
    %5405 = vmatpush.msra.mxu0 %v5226
    %5406 = vmatpush.msra.mxu0 %v5224
    %5407 = vmatpush.msra.mxu0 %v5222
    %5408 = vmatpush.msra.mxu0 %v5220
    %5409 = vmatpush.msra.mxu0 %v5218
    %5410 = vmatmul.f32.gmra.mxu0 %v4516
    %v5411 = vpop.f32.mrf.mxu0
    %v5412 = vadd.f32 %v5299, %v5411
    %5413 = vmatmul.f32.gmra.mxu0 %v4520
    %v5414 = vpop.f32.mrf.mxu0
    %v5415 = vadd.f32 %v5302, %v5414
    %5416 = vmatmul.f32.gmra.mxu0 %v4524
    %v5417 = vpop.f32.mrf.mxu0
    %v5418 = vadd.f32 %v5305, %v5417
    %5419 = vmatmul.f32.gmra.mxu0 %v4528
    %v5420 = vpop.f32.mrf.mxu0
    %v5421 = vadd.f32 %v5308, %v5420
    %5422 = vmatmul.f32.gmra.mxu0 %v4532
    %v5423 = vpop.f32.mrf.mxu0
    %v5424 = vadd.f32 %v5311, %v5423
    %5425 = vmatmul.f32.gmra.mxu0 %v4536
    %v5426 = vpop.f32.mrf.mxu0
    %v5427 = vadd.f32 %v5314, %v5426
    %5428 = vmatmul.f32.gmra.mxu0 %v4540
    %v5429 = vpop.f32.mrf.mxu0
    %v5430 = vadd.f32 %v5317, %v5429
    %5431 = vmatmul.f32.gmra.mxu0 %v4544
    %v5432 = vpop.f32.mrf.mxu0
    %v5433 = vadd.f32 %v5320, %v5432
    %5434 = vmatmul.f32.gmra.mxu0 %v4548
    %v5435 = vpop.f32.mrf.mxu0
    %v5436 = vadd.f32 %v5323, %v5435
    %5437 = vmatmul.f32.gmra.mxu0 %v4552
    %v5438 = vpop.f32.mrf.mxu0
    %v5439 = vadd.f32 %v5326, %v5438
    %5440 = vmatmul.f32.gmra.mxu0 %v4556
    %v5441 = vpop.f32.mrf.mxu0
    %v5442 = vadd.f32 %v5329, %v5441
    %5443 = vmatmul.f32.gmra.mxu0 %v4560
    %v5444 = vpop.f32.mrf.mxu0
    %v5445 = vadd.f32 %v5332, %v5444
    %5446 = vmatmul.f32.gmra.mxu0 %v4564
    %v5447 = vpop.f32.mrf.mxu0
    %v5448 = vadd.f32 %v5335, %v5447
    %5449 = vmatmul.f32.gmra.mxu0 %v4568
    %v5450 = vpop.f32.mrf.mxu0
    %v5451 = vadd.f32 %v5338, %v5450
    %5452 = vmatmul.f32.gmra.mxu0 %v4572
    %v5453 = vpop.f32.mrf.mxu0
    %v5454 = vadd.f32 %v5341, %v5453
    %5455 = vmatmul.f32.gmra.mxu0 %v4576
    %v5456 = vpop.f32.mrf.mxu0
    %v5457 = vadd.f32 %v5344, %v5456
    %5458 = vmatmul.f32.gmra.mxu0 %v4580
    %v5459 = vpop.f32.mrf.mxu0
    %v5460 = vadd.f32 %v5347, %v5459
    %5461 = vmatmul.f32.gmra.mxu0 %v4584
    %v5462 = vpop.f32.mrf.mxu0
    %v5463 = vadd.f32 %v5350, %v5462
    %5464 = vmatmul.f32.gmra.mxu0 %v4588
    %v5465 = vpop.f32.mrf.mxu0
    %v5466 = vadd.f32 %v5353, %v5465
    %5467 = vmatmul.f32.gmra.mxu0 %v4592
    %v5468 = vpop.f32.mrf.mxu0
    %v5469 = vadd.f32 %v5356, %v5468
    %5470 = vmatmul.f32.gmra.mxu0 %v4596
    %v5471 = vpop.f32.mrf.mxu0
    %v5472 = vadd.f32 %v5359, %v5471
    %5473 = vmatmul.f32.gmra.mxu0 %v4600
    %v5474 = vpop.f32.mrf.mxu0
    %v5475 = vadd.f32 %v5362, %v5474
    %5476 = vmatmul.f32.gmra.mxu0 %v4604
    %v5477 = vpop.f32.mrf.mxu0
    %v5478 = vadd.f32 %v5365, %v5477
    %5479 = vmatmul.f32.gmra.mxu0 %v4608
    %v5480 = vpop.f32.mrf.mxu0
    %v5481 = vadd.f32 %v5368, %v5480
    %5482 = vmatmul.f32.gmra.mxu0 %v4612
    %v5483 = vpop.f32.mrf.mxu0
    %v5484 = vadd.f32 %v5371, %v5483
    %5485 = vmatmul.f32.gmra.mxu0 %v4616
    %v5486 = vpop.f32.mrf.mxu0
    %v5487 = vadd.f32 %v5374, %v5486
    %5488 = vmatmul.f32.gmra.mxu0 %v4620
    %v5489 = vpop.f32.mrf.mxu0
    %v5490 = vadd.f32 %v5377, %v5489
    %5491 = vmatmul.f32.gmra.mxu0 %v4624
    %v5492 = vpop.f32.mrf.mxu0
    %v5493 = vadd.f32 %v5380, %v5492
    %5494 = vmatmul.f32.gmra.mxu0 %v4628
    %v5495 = vpop.f32.mrf.mxu0
    %v5496 = vadd.f32 %v5383, %v5495
    %5497 = vmatmul.f32.gmra.mxu0 %v4632
    %v5498 = vpop.f32.mrf.mxu0
    %v5499 = vadd.f32 %v5386, %v5498
    %5500 = vmatmul.f32.gmra.mxu0 %v4636
    %v5501 = vpop.f32.mrf.mxu0
    %v5502 = vadd.f32 %v5389, %v5501
    %5503 = vmatmul.f32.gmra.mxu0 %v4640
    %v5504 = vpop.f32.mrf.mxu0
    %v5505 = vadd.f32 %v5392, %v5504
    %5506 = vdwg.mxu0
    %v5507 = vmul.f32 %v5412, %v4750
    %v5508 = vmul.f32 %v5415, %v4764
    %v5509 = vmul.f32 %v5418, %v4778
    %v5510 = vmul.f32 %v5421, %v4792
    %v5511 = vmul.f32 %v5424, %v4806
    %v5512 = vmul.f32 %v5427, %v4820
    %v5513 = vmul.f32 %v5430, %v4834
    %v5514 = vmul.f32 %v5433, %v4848
    %v5515 = vmul.f32 %v5436, %v4862
    %v5516 = vmul.f32 %v5439, %v4876
    %v5517 = vmul.f32 %v5442, %v4890
    %v5518 = vmul.f32 %v5445, %v4904
    %v5519 = vmul.f32 %v5448, %v4918
    %v5520 = vmul.f32 %v5451, %v4932
    %v5521 = vmul.f32 %v5454, %v4946
    %v5522 = vmul.f32 %v5457, %v4960
    %v5523 = vmul.f32 %v5460, %v4974
    %v5524 = vmul.f32 %v5463, %v4988
    %v5525 = vmul.f32 %v5466, %v5002
    %v5526 = vmul.f32 %v5469, %v5016
    %v5527 = vmul.f32 %v5472, %v5030
    %v5528 = vmul.f32 %v5475, %v5044
    %v5529 = vmul.f32 %v5478, %v5058
    %v5530 = vmul.f32 %v5481, %v5072
    %v5531 = vmul.f32 %v5484, %v5086
    %v5532 = vmul.f32 %v5487, %v5100
    %v5533 = vmul.f32 %v5490, %v5114
    %v5534 = vmul.f32 %v5493, %v5128
    %v5535 = vmul.f32 %v5496, %v5142
    %v5536 = vmul.f32 %v5499, %v5156
    %v5537 = vmul.f32 %v5502, %v5170
    %v5538 = vmul.f32 %v5505, %v5184
    %5539 = vmatpush.msra.mxu0 %v5522
    %5540 = vmatpush.msra.mxu0 %v5521
    %5541 = vmatpush.msra.mxu0 %v5520
    %5542 = vmatpush.msra.mxu0 %v5519
    %5543 = vmatpush.msra.mxu0 %v5518
    %5544 = vmatpush.msra.mxu0 %v5517
    %5545 = vmatpush.msra.mxu0 %v5516
    %5546 = vmatpush.msra.mxu0 %v5515
    %5547 = vmatpush.msra.mxu0 %v5514
    %5548 = vmatpush.msra.mxu0 %v5513
    %5549 = vmatpush.msra.mxu0 %v5512
    %5550 = vmatpush.msra.mxu0 %v5511
    %5551 = vmatpush.msra.mxu0 %v5510
    %5552 = vmatpush.msra.mxu0 %v5509
    %5553 = vmatpush.msra.mxu0 %v5508
    %5554 = vmatpush.msra.mxu0 %v5507
    %5555 = vmatmul.f32.gmra.mxu0 %v357
    %v5556 = vpop.f32.mrf.mxu0
    %v5557 = vadd.f32 0.0, %v5556
    %5558 = vmatmul.f32.gmra.mxu0 %v359
    %v5559 = vpop.f32.mrf.mxu0
    %v5560 = vadd.f32 0.0, %v5559
    %5561 = vmatmul.f32.gmra.mxu0 %v361
    %v5562 = vpop.f32.mrf.mxu0
    %v5563 = vadd.f32 0.0, %v5562
    %5564 = vmatmul.f32.gmra.mxu0 %v363
    %v5565 = vpop.f32.mrf.mxu0
    %v5566 = vadd.f32 0.0, %v5565
    %5567 = vdwg.mxu0
    %5568 = vmatpush.msra.mxu0 %v5538
    %5569 = vmatpush.msra.mxu0 %v5537
    %5570 = vmatpush.msra.mxu0 %v5536
    %5571 = vmatpush.msra.mxu0 %v5535
    %5572 = vmatpush.msra.mxu0 %v5534
    %5573 = vmatpush.msra.mxu0 %v5533
    %5574 = vmatpush.msra.mxu0 %v5532
    %5575 = vmatpush.msra.mxu0 %v5531
    %5576 = vmatpush.msra.mxu0 %v5530
    %5577 = vmatpush.msra.mxu0 %v5529
    %5578 = vmatpush.msra.mxu0 %v5528
    %5579 = vmatpush.msra.mxu0 %v5527
    %5580 = vmatpush.msra.mxu0 %v5526
    %5581 = vmatpush.msra.mxu0 %v5525
    %5582 = vmatpush.msra.mxu0 %v5524
    %5583 = vmatpush.msra.mxu0 %v5523
    %5584 = vmatmul.f32.gmra.mxu0 %v358
    %v5585 = vpop.f32.mrf.mxu0
    %v5586 = vadd.f32 %v5557, %v5585
    %5587 = vmatmul.f32.gmra.mxu0 %v360
    %v5588 = vpop.f32.mrf.mxu0
    %v5589 = vadd.f32 %v5560, %v5588
    %5590 = vmatmul.f32.gmra.mxu0 %v362
    %v5591 = vpop.f32.mrf.mxu0
    %v5592 = vadd.f32 %v5563, %v5591
    %5593 = vmatmul.f32.gmra.mxu0 %v364
    %v5594 = vpop.f32.mrf.mxu0
    %v5595 = vadd.f32 %v5566, %v5594
    %5596 = vdwg.mxu0
    %s5597 = scalar_lea.vmem %s3, 16
    %v5598 = vld [vmem:[%s5597] sm:$0xff]
    %v5600 = vsel %vm461, %v5586, 0
    %v5603 = vsel %vm461, %v5589, 0
    %v5606 = vsel %vm461, %v5592, 0
    %v5609 = vsel %vm461, %v5595, 0
    %5611 = vmatpush.msra.mxu0 0.0
    %5612 = vmatpush.msra.mxu0 0.0
    %5613 = vmatpush.msra.mxu0 0.0
    %5614 = vmatpush.msra.mxu0 0.0
    %5615 = vmatpush.msra.mxu0 0.0
    %5616 = vmatpush.msra.mxu0 0.0
    %5617 = vmatpush.msra.mxu0 0.0
    %5618 = vmatpush.msra.mxu0 0.0
    %5619 = vmatpush.msra.mxu0 0.0
    %5620 = vmatpush.msra.mxu0 0.0
    %5621 = vmatpush.msra.mxu0 0.0
    %5622 = vmatpush.msra.mxu0 0.0
    %5623 = vmatpush.msra.mxu0 0.0
    %5624 = vmatpush.msra.mxu0 0.0
    %5625 = vmatpush.msra.mxu0 0.0
    %5626 = vmatpush.msra.mxu0 %v5598
    %5627 = vmatmul.f32.gmra.mxu0 %v5600
    %v5628 = vpop.f32.mrf.mxu0
    %v5629 = vadd.f32 0.0, %v5628
    %5630 = vmatmul.f32.gmra.mxu0 %v5603
    %v5631 = vpop.f32.mrf.mxu0
    %v5632 = vadd.f32 0.0, %v5631
    %5633 = vmatmul.f32.gmra.mxu0 %v5606
    %v5634 = vpop.f32.mrf.mxu0
    %v5635 = vadd.f32 0.0, %v5634
    %5636 = vmatmul.f32.gmra.mxu0 %v5609
    %v5637 = vpop.f32.mrf.mxu0
    %v5638 = vadd.f32 0.0, %v5637
    %5639 = vdwg.mxu0
    %v5640 = vadd.f32 %v3860, %v5629
    %v5641 = vadd.f32 %v3863, %v5632
    %v5642 = vadd.f32 %v3866, %v5635
    %v5643 = vadd.f32 %v3869, %v5638
    %5644 = vrot.lane.b32.xlu0 %v198, 104
    %v5645 = vpop.permute.xlu0 %5644
    %5646 = vrot.lane.b32.xlu0 %v201, 104
    %v5647 = vpop.permute.xlu0 %5646
    %5648 = vrot.lane.b32.xlu0 %v204, 104
    %v5649 = vpop.permute.xlu0 %5648
    %5650 = vrot.lane.b32.xlu0 %v207, 104
    %v5651 = vpop.permute.xlu0 %5650
    %5652 = vrot.lane.b32.xlu0 %v210, 104
    %v5653 = vpop.permute.xlu0 %5652
    %5654 = vrot.lane.b32.xlu0 %v213, 104
    %v5655 = vpop.permute.xlu0 %5654
    %5656 = vrot.lane.b32.xlu0 %v216, 104
    %v5657 = vpop.permute.xlu0 %5656
    %5658 = vrot.lane.b32.xlu0 %v219, 104
    %v5659 = vpop.permute.xlu0 %5658
    %5660 = vrot.lane.b32.xlu0 %v222, 104
    %v5661 = vpop.permute.xlu0 %5660
    %5662 = vrot.lane.b32.xlu0 %v225, 104
    %v5663 = vpop.permute.xlu0 %5662
    %5664 = vrot.lane.b32.xlu0 %v228, 104
    %v5665 = vpop.permute.xlu0 %5664
    %5666 = vrot.lane.b32.xlu0 %v231, 104
    %v5667 = vpop.permute.xlu0 %5666
    %5668 = vrot.lane.b32.xlu0 %v234, 104
    %v5669 = vpop.permute.xlu0 %5668
    %5670 = vrot.lane.b32.xlu0 %v237, 104
    %v5671 = vpop.permute.xlu0 %5670
    %5672 = vrot.lane.b32.xlu0 %v240, 104
    %v5673 = vpop.permute.xlu0 %5672
    %5674 = vrot.lane.b32.xlu0 %v243, 104
    %v5675 = vpop.permute.xlu0 %5674
    %5676 = vrot.lane.b32.xlu0 %v246, 104
    %v5677 = vpop.permute.xlu0 %5676
    %5678 = vrot.lane.b32.xlu0 %v249, 104
    %v5679 = vpop.permute.xlu0 %5678
    %5680 = vrot.lane.b32.xlu0 %v252, 104
    %v5681 = vpop.permute.xlu0 %5680
    %5682 = vrot.lane.b32.xlu0 %v255, 104
    %v5683 = vpop.permute.xlu0 %5682
    %5684 = vrot.lane.b32.xlu0 %v258, 104
    %v5685 = vpop.permute.xlu0 %5684
    %5686 = vrot.lane.b32.xlu0 %v261, 104
    %v5687 = vpop.permute.xlu0 %5686
    %5688 = vrot.lane.b32.xlu0 %v264, 104
    %v5689 = vpop.permute.xlu0 %5688
    %5690 = vrot.lane.b32.xlu0 %v267, 104
    %v5691 = vpop.permute.xlu0 %5690
    %5692 = vrot.lane.b32.xlu0 %v270, 104
    %v5693 = vpop.permute.xlu0 %5692
    %5694 = vrot.lane.b32.xlu0 %v273, 104
    %v5695 = vpop.permute.xlu0 %5694
    %5696 = vrot.lane.b32.xlu0 %v276, 104
    %v5697 = vpop.permute.xlu0 %5696
    %5698 = vrot.lane.b32.xlu0 %v279, 104
    %v5699 = vpop.permute.xlu0 %5698
    %5700 = vrot.lane.b32.xlu0 %v282, 104
    %v5701 = vpop.permute.xlu0 %5700
    %5702 = vrot.lane.b32.xlu0 %v285, 104
    %v5703 = vpop.permute.xlu0 %5702
    %5704 = vrot.lane.b32.xlu0 %v288, 104
    %v5705 = vpop.permute.xlu0 %5704
    %5706 = vrot.lane.b32.xlu0 %v291, 104
    %v5707 = vpop.permute.xlu0 %5706
    %5708 = vrot.lane.b32.xlu0 %v198, 72
    %v5709 = vpop.permute.xlu0 %5708
    %5710 = vrot.lane.b32.xlu0 %v201, 72
    %v5711 = vpop.permute.xlu0 %5710
    %5712 = vrot.lane.b32.xlu0 %v204, 72
    %v5713 = vpop.permute.xlu0 %5712
    %5714 = vrot.lane.b32.xlu0 %v207, 72
    %v5715 = vpop.permute.xlu0 %5714
    %5716 = vrot.lane.b32.xlu0 %v210, 72
    %v5717 = vpop.permute.xlu0 %5716
    %5718 = vrot.lane.b32.xlu0 %v213, 72
    %v5719 = vpop.permute.xlu0 %5718
    %5720 = vrot.lane.b32.xlu0 %v216, 72
    %v5721 = vpop.permute.xlu0 %5720
    %5722 = vrot.lane.b32.xlu0 %v219, 72
    %v5723 = vpop.permute.xlu0 %5722
    %5724 = vrot.lane.b32.xlu0 %v222, 72
    %v5725 = vpop.permute.xlu0 %5724
    %5726 = vrot.lane.b32.xlu0 %v225, 72
    %v5727 = vpop.permute.xlu0 %5726
    %5728 = vrot.lane.b32.xlu0 %v228, 72
    %v5729 = vpop.permute.xlu0 %5728
    %5730 = vrot.lane.b32.xlu0 %v231, 72
    %v5731 = vpop.permute.xlu0 %5730
    %5732 = vrot.lane.b32.xlu0 %v234, 72
    %v5733 = vpop.permute.xlu0 %5732
    %5734 = vrot.lane.b32.xlu0 %v237, 72
    %v5735 = vpop.permute.xlu0 %5734
    %5736 = vrot.lane.b32.xlu0 %v240, 72
    %v5737 = vpop.permute.xlu0 %5736
    %5738 = vrot.lane.b32.xlu0 %v243, 72
    %v5739 = vpop.permute.xlu0 %5738
    %5740 = vrot.lane.b32.xlu0 %v246, 72
    %v5741 = vpop.permute.xlu0 %5740
    %5742 = vrot.lane.b32.xlu0 %v249, 72
    %v5743 = vpop.permute.xlu0 %5742
    %5744 = vrot.lane.b32.xlu0 %v252, 72
    %v5745 = vpop.permute.xlu0 %5744
    %5746 = vrot.lane.b32.xlu0 %v255, 72
    %v5747 = vpop.permute.xlu0 %5746
    %5748 = vrot.lane.b32.xlu0 %v258, 72
    %v5749 = vpop.permute.xlu0 %5748
    %5750 = vrot.lane.b32.xlu0 %v261, 72
    %v5751 = vpop.permute.xlu0 %5750
    %5752 = vrot.lane.b32.xlu0 %v264, 72
    %v5753 = vpop.permute.xlu0 %5752
    %5754 = vrot.lane.b32.xlu0 %v267, 72
    %v5755 = vpop.permute.xlu0 %5754
    %5756 = vrot.lane.b32.xlu0 %v270, 72
    %v5757 = vpop.permute.xlu0 %5756
    %5758 = vrot.lane.b32.xlu0 %v273, 72
    %v5759 = vpop.permute.xlu0 %5758
    %5760 = vrot.lane.b32.xlu0 %v276, 72
    %v5761 = vpop.permute.xlu0 %5760
    %5762 = vrot.lane.b32.xlu0 %v279, 72
    %v5763 = vpop.permute.xlu0 %5762
    %5764 = vrot.lane.b32.xlu0 %v282, 72
    %v5765 = vpop.permute.xlu0 %5764
    %5766 = vrot.lane.b32.xlu0 %v285, 72
    %v5767 = vpop.permute.xlu0 %5766
    %5768 = vrot.lane.b32.xlu0 %v288, 72
    %v5769 = vpop.permute.xlu0 %5768
    %5770 = vrot.lane.b32.xlu0 %v291, 72
    %v5771 = vpop.permute.xlu0 %5770
    %v5772 = vsel %vm461, %v5645, 0
    %v5774 = vsel %vm461, %v5647, 0
    %v5776 = vsel %vm461, %v5649, 0
    %v5778 = vsel %vm461, %v5651, 0
    %v5780 = vsel %vm461, %v5653, 0
    %v5782 = vsel %vm461, %v5655, 0
    %v5784 = vsel %vm461, %v5657, 0
    %v5786 = vsel %vm461, %v5659, 0
    %v5788 = vsel %vm461, %v5661, 0
    %v5790 = vsel %vm461, %v5663, 0
    %v5792 = vsel %vm461, %v5665, 0
    %v5794 = vsel %vm461, %v5667, 0
    %v5796 = vsel %vm461, %v5669, 0
    %v5798 = vsel %vm461, %v5671, 0
    %v5800 = vsel %vm461, %v5673, 0
    %v5802 = vsel %vm461, %v5675, 0
    %v5804 = vsel %vm461, %v5677, 0
    %v5806 = vsel %vm461, %v5679, 0
    %v5808 = vsel %vm461, %v5681, 0
    %v5810 = vsel %vm461, %v5683, 0
    %v5812 = vsel %vm461, %v5685, 0
    %v5814 = vsel %vm461, %v5687, 0
    %v5816 = vsel %vm461, %v5689, 0
    %v5818 = vsel %vm461, %v5691, 0
    %v5820 = vsel %vm461, %v5693, 0
    %v5822 = vsel %vm461, %v5695, 0
    %v5824 = vsel %vm461, %v5697, 0
    %v5826 = vsel %vm461, %v5699, 0
    %v5828 = vsel %vm461, %v5701, 0
    %v5830 = vsel %vm461, %v5703, 0
    %v5832 = vsel %vm461, %v5705, 0
    %v5834 = vsel %vm461, %v5707, 0
    %v5836 = vsel %vm461, %v5709, 0
    %v5838 = vsel %vm461, %v5711, 0
    %v5840 = vsel %vm461, %v5713, 0
    %v5842 = vsel %vm461, %v5715, 0
    %v5844 = vsel %vm461, %v5717, 0
    %v5846 = vsel %vm461, %v5719, 0
    %v5848 = vsel %vm461, %v5721, 0
    %v5850 = vsel %vm461, %v5723, 0
    %v5852 = vsel %vm461, %v5725, 0
    %v5854 = vsel %vm461, %v5727, 0
    %v5856 = vsel %vm461, %v5729, 0
    %v5858 = vsel %vm461, %v5731, 0
    %v5860 = vsel %vm461, %v5733, 0
    %v5862 = vsel %vm461, %v5735, 0
    %v5864 = vsel %vm461, %v5737, 0
    %v5866 = vsel %vm461, %v5739, 0
    %v5868 = vsel %vm461, %v5741, 0
    %v5870 = vsel %vm461, %v5743, 0
    %v5872 = vsel %vm461, %v5745, 0
    %v5874 = vsel %vm461, %v5747, 0
    %v5876 = vsel %vm461, %v5749, 0
    %v5878 = vsel %vm461, %v5751, 0
    %v5880 = vsel %vm461, %v5753, 0
    %v5882 = vsel %vm461, %v5755, 0
    %v5884 = vsel %vm461, %v5757, 0
    %v5886 = vsel %vm461, %v5759, 0
    %v5888 = vsel %vm461, %v5761, 0
    %v5890 = vsel %vm461, %v5763, 0
    %v5892 = vsel %vm461, %v5765, 0
    %v5894 = vsel %vm461, %v5767, 0
    %v5896 = vsel %vm461, %v5769, 0
    %v5898 = vsel %vm461, %v5771, 0
    %5900 = vmatpush.xpose.msra.mxu0 %v5866
    %5901 = vmatpush.xpose.msra.mxu0 %v5864
    %5902 = vmatpush.xpose.msra.mxu0 %v5862
    %5903 = vmatpush.xpose.msra.mxu0 %v5860
    %5904 = vmatpush.xpose.msra.mxu0 %v5858
    %5905 = vmatpush.xpose.msra.mxu0 %v5856
    %5906 = vmatpush.xpose.msra.mxu0 %v5854
    %5907 = vmatpush.xpose.msra.mxu0 %v5852
    %5908 = vmatpush.xpose.msra.mxu0 %v5850
    %5909 = vmatpush.xpose.msra.mxu0 %v5848
    %5910 = vmatpush.xpose.msra.mxu0 %v5846
    %5911 = vmatpush.xpose.msra.mxu0 %v5844
    %5912 = vmatpush.xpose.msra.mxu0 %v5842
    %5913 = vmatpush.xpose.msra.mxu0 %v5840
    %5914 = vmatpush.xpose.msra.mxu0 %v5838
    %5915 = vmatpush.xpose.msra.mxu0 %v5836
    %5916 = vmatmul.f32.gmra.mxu0 %v5772
    %v5917 = vpop.f32.mrf.mxu0
    %v5918 = vadd.f32 %v293, %v5917
    %5919 = vmatmul.f32.gmra.mxu0 %v5774
    %v5920 = vpop.f32.mrf.mxu0
    %v5921 = vadd.f32 %v295, %v5920
    %5922 = vmatmul.f32.gmra.mxu0 %v5776
    %v5923 = vpop.f32.mrf.mxu0
    %v5924 = vadd.f32 %v297, %v5923
    %5925 = vmatmul.f32.gmra.mxu0 %v5778
    %v5926 = vpop.f32.mrf.mxu0
    %v5927 = vadd.f32 %v299, %v5926
    %5928 = vmatmul.f32.gmra.mxu0 %v5780
    %v5929 = vpop.f32.mrf.mxu0
    %v5930 = vadd.f32 %v301, %v5929
    %5931 = vmatmul.f32.gmra.mxu0 %v5782
    %v5932 = vpop.f32.mrf.mxu0
    %v5933 = vadd.f32 %v303, %v5932
    %5934 = vmatmul.f32.gmra.mxu0 %v5784
    %v5935 = vpop.f32.mrf.mxu0
    %v5936 = vadd.f32 %v305, %v5935
    %5937 = vmatmul.f32.gmra.mxu0 %v5786
    %v5938 = vpop.f32.mrf.mxu0
    %v5939 = vadd.f32 %v307, %v5938
    %5940 = vmatmul.f32.gmra.mxu0 %v5788
    %v5941 = vpop.f32.mrf.mxu0
    %v5942 = vadd.f32 %v309, %v5941
    %5943 = vmatmul.f32.gmra.mxu0 %v5790
    %v5944 = vpop.f32.mrf.mxu0
    %v5945 = vadd.f32 %v311, %v5944
    %5946 = vmatmul.f32.gmra.mxu0 %v5792
    %v5947 = vpop.f32.mrf.mxu0
    %v5948 = vadd.f32 %v313, %v5947
    %5949 = vmatmul.f32.gmra.mxu0 %v5794
    %v5950 = vpop.f32.mrf.mxu0
    %v5951 = vadd.f32 %v315, %v5950
    %5952 = vmatmul.f32.gmra.mxu0 %v5796
    %v5953 = vpop.f32.mrf.mxu0
    %v5954 = vadd.f32 %v317, %v5953
    %5955 = vmatmul.f32.gmra.mxu0 %v5798
    %v5956 = vpop.f32.mrf.mxu0
    %v5957 = vadd.f32 %v319, %v5956
    %5958 = vmatmul.f32.gmra.mxu0 %v5800
    %v5959 = vpop.f32.mrf.mxu0
    %v5960 = vadd.f32 %v321, %v5959
    %5961 = vmatmul.f32.gmra.mxu0 %v5802
    %v5962 = vpop.f32.mrf.mxu0
    %v5963 = vadd.f32 %v323, %v5962
    %5964 = vmatmul.f32.gmra.mxu0 %v5804
    %v5965 = vpop.f32.mrf.mxu0
    %v5966 = vadd.f32 %v325, %v5965
    %5967 = vmatmul.f32.gmra.mxu0 %v5806
    %v5968 = vpop.f32.mrf.mxu0
    %v5969 = vadd.f32 %v327, %v5968
    %5970 = vmatmul.f32.gmra.mxu0 %v5808
    %v5971 = vpop.f32.mrf.mxu0
    %v5972 = vadd.f32 %v329, %v5971
    %5973 = vmatmul.f32.gmra.mxu0 %v5810
    %v5974 = vpop.f32.mrf.mxu0
    %v5975 = vadd.f32 %v331, %v5974
    %5976 = vmatmul.f32.gmra.mxu0 %v5812
    %v5977 = vpop.f32.mrf.mxu0
    %v5978 = vadd.f32 %v333, %v5977
    %5979 = vmatmul.f32.gmra.mxu0 %v5814
    %v5980 = vpop.f32.mrf.mxu0
    %v5981 = vadd.f32 %v335, %v5980
    %5982 = vmatmul.f32.gmra.mxu0 %v5816
    %v5983 = vpop.f32.mrf.mxu0
    %v5984 = vadd.f32 %v337, %v5983
    %5985 = vmatmul.f32.gmra.mxu0 %v5818
    %v5986 = vpop.f32.mrf.mxu0
    %v5987 = vadd.f32 %v339, %v5986
    %5988 = vmatmul.f32.gmra.mxu0 %v5820
    %v5989 = vpop.f32.mrf.mxu0
    %v5990 = vadd.f32 %v341, %v5989
    %5991 = vmatmul.f32.gmra.mxu0 %v5822
    %v5992 = vpop.f32.mrf.mxu0
    %v5993 = vadd.f32 %v343, %v5992
    %5994 = vmatmul.f32.gmra.mxu0 %v5824
    %v5995 = vpop.f32.mrf.mxu0
    %v5996 = vadd.f32 %v345, %v5995
    %5997 = vmatmul.f32.gmra.mxu0 %v5826
    %v5998 = vpop.f32.mrf.mxu0
    %v5999 = vadd.f32 %v347, %v5998
    %6000 = vmatmul.f32.gmra.mxu0 %v5828
    %v6001 = vpop.f32.mrf.mxu0
    %v6002 = vadd.f32 %v349, %v6001
    %6003 = vmatmul.f32.gmra.mxu0 %v5830
    %v6004 = vpop.f32.mrf.mxu0
    %v6005 = vadd.f32 %v351, %v6004
    %6006 = vmatmul.f32.gmra.mxu0 %v5832
    %v6007 = vpop.f32.mrf.mxu0
    %v6008 = vadd.f32 %v353, %v6007
    %6009 = vmatmul.f32.gmra.mxu0 %v5834
    %v6010 = vpop.f32.mrf.mxu0
    %v6011 = vadd.f32 %v355, %v6010
    %6012 = vdwg.mxu0
    %6013 = vmatpush.xpose.msra.mxu0 %v5898
    %6014 = vmatpush.xpose.msra.mxu0 %v5896
    %6015 = vmatpush.xpose.msra.mxu0 %v5894
    %6016 = vmatpush.xpose.msra.mxu0 %v5892
    %6017 = vmatpush.xpose.msra.mxu0 %v5890
    %6018 = vmatpush.xpose.msra.mxu0 %v5888
    %6019 = vmatpush.xpose.msra.mxu0 %v5886
    %6020 = vmatpush.xpose.msra.mxu0 %v5884
    %6021 = vmatpush.xpose.msra.mxu0 %v5882
    %6022 = vmatpush.xpose.msra.mxu0 %v5880
    %6023 = vmatpush.xpose.msra.mxu0 %v5878
    %6024 = vmatpush.xpose.msra.mxu0 %v5876
    %6025 = vmatpush.xpose.msra.mxu0 %v5874
    %6026 = vmatpush.xpose.msra.mxu0 %v5872
    %6027 = vmatpush.xpose.msra.mxu0 %v5870
    %6028 = vmatpush.xpose.msra.mxu0 %v5868
    %6029 = vmatmul.f32.gmra.mxu0 %v5772
    %v6030 = vpop.f32.mrf.mxu0
    %v6031 = vadd.f32 %v294, %v6030
    %6032 = vmatmul.f32.gmra.mxu0 %v5774
    %v6033 = vpop.f32.mrf.mxu0
    %v6034 = vadd.f32 %v296, %v6033
    %6035 = vmatmul.f32.gmra.mxu0 %v5776
    %v6036 = vpop.f32.mrf.mxu0
    %v6037 = vadd.f32 %v298, %v6036
    %6038 = vmatmul.f32.gmra.mxu0 %v5778
    %v6039 = vpop.f32.mrf.mxu0
    %v6040 = vadd.f32 %v300, %v6039
    %6041 = vmatmul.f32.gmra.mxu0 %v5780
    %v6042 = vpop.f32.mrf.mxu0
    %v6043 = vadd.f32 %v302, %v6042
    %6044 = vmatmul.f32.gmra.mxu0 %v5782
    %v6045 = vpop.f32.mrf.mxu0
    %v6046 = vadd.f32 %v304, %v6045
    %6047 = vmatmul.f32.gmra.mxu0 %v5784
    %v6048 = vpop.f32.mrf.mxu0
    %v6049 = vadd.f32 %v306, %v6048
    %6050 = vmatmul.f32.gmra.mxu0 %v5786
    %v6051 = vpop.f32.mrf.mxu0
    %v6052 = vadd.f32 %v308, %v6051
    %6053 = vmatmul.f32.gmra.mxu0 %v5788
    %v6054 = vpop.f32.mrf.mxu0
    %v6055 = vadd.f32 %v310, %v6054
    %6056 = vmatmul.f32.gmra.mxu0 %v5790
    %v6057 = vpop.f32.mrf.mxu0
    %v6058 = vadd.f32 %v312, %v6057
    %6059 = vmatmul.f32.gmra.mxu0 %v5792
    %v6060 = vpop.f32.mrf.mxu0
    %v6061 = vadd.f32 %v314, %v6060
    %6062 = vmatmul.f32.gmra.mxu0 %v5794
    %v6063 = vpop.f32.mrf.mxu0
    %v6064 = vadd.f32 %v316, %v6063
    %6065 = vmatmul.f32.gmra.mxu0 %v5796
    %v6066 = vpop.f32.mrf.mxu0
    %v6067 = vadd.f32 %v318, %v6066
    %6068 = vmatmul.f32.gmra.mxu0 %v5798
    %v6069 = vpop.f32.mrf.mxu0
    %v6070 = vadd.f32 %v320, %v6069
    %6071 = vmatmul.f32.gmra.mxu0 %v5800
    %v6072 = vpop.f32.mrf.mxu0
    %v6073 = vadd.f32 %v322, %v6072
    %6074 = vmatmul.f32.gmra.mxu0 %v5802
    %v6075 = vpop.f32.mrf.mxu0
    %v6076 = vadd.f32 %v324, %v6075
    %6077 = vmatmul.f32.gmra.mxu0 %v5804
    %v6078 = vpop.f32.mrf.mxu0
    %v6079 = vadd.f32 %v326, %v6078
    %6080 = vmatmul.f32.gmra.mxu0 %v5806
    %v6081 = vpop.f32.mrf.mxu0
    %v6082 = vadd.f32 %v328, %v6081
    %6083 = vmatmul.f32.gmra.mxu0 %v5808
    %v6084 = vpop.f32.mrf.mxu0
    %v6085 = vadd.f32 %v330, %v6084
    %6086 = vmatmul.f32.gmra.mxu0 %v5810
    %v6087 = vpop.f32.mrf.mxu0
    %v6088 = vadd.f32 %v332, %v6087
    %6089 = vmatmul.f32.gmra.mxu0 %v5812
    %v6090 = vpop.f32.mrf.mxu0
    %v6091 = vadd.f32 %v334, %v6090
    %6092 = vmatmul.f32.gmra.mxu0 %v5814
    %v6093 = vpop.f32.mrf.mxu0
    %v6094 = vadd.f32 %v336, %v6093
    %6095 = vmatmul.f32.gmra.mxu0 %v5816
    %v6096 = vpop.f32.mrf.mxu0
    %v6097 = vadd.f32 %v338, %v6096
    %6098 = vmatmul.f32.gmra.mxu0 %v5818
    %v6099 = vpop.f32.mrf.mxu0
    %v6100 = vadd.f32 %v340, %v6099
    %6101 = vmatmul.f32.gmra.mxu0 %v5820
    %v6102 = vpop.f32.mrf.mxu0
    %v6103 = vadd.f32 %v342, %v6102
    %6104 = vmatmul.f32.gmra.mxu0 %v5822
    %v6105 = vpop.f32.mrf.mxu0
    %v6106 = vadd.f32 %v344, %v6105
    %6107 = vmatmul.f32.gmra.mxu0 %v5824
    %v6108 = vpop.f32.mrf.mxu0
    %v6109 = vadd.f32 %v346, %v6108
    %6110 = vmatmul.f32.gmra.mxu0 %v5826
    %v6111 = vpop.f32.mrf.mxu0
    %v6112 = vadd.f32 %v348, %v6111
    %6113 = vmatmul.f32.gmra.mxu0 %v5828
    %v6114 = vpop.f32.mrf.mxu0
    %v6115 = vadd.f32 %v350, %v6114
    %6116 = vmatmul.f32.gmra.mxu0 %v5830
    %v6117 = vpop.f32.mrf.mxu0
    %v6118 = vadd.f32 %v352, %v6117
    %6119 = vmatmul.f32.gmra.mxu0 %v5832
    %v6120 = vpop.f32.mrf.mxu0
    %v6121 = vadd.f32 %v354, %v6120
    %6122 = vmatmul.f32.gmra.mxu0 %v5834
    %v6123 = vpop.f32.mrf.mxu0
    %v6124 = vadd.f32 %v356, %v6123
    %6125 = vdwg.mxu0
    %v6126 = vmax.f32 %v5918, %v6031
    %6127 = vmax.xlane.f32.xlu0 %v6126
    %v6128 = vpop.xlane.xlu0 %6127
    %v6129 = vmax.f32 %v5921, %v6034
    %6130 = vmax.xlane.f32.xlu0 %v6129
    %v6131 = vpop.xlane.xlu0 %6130
    %v6132 = vmax.f32 %v5924, %v6037
    %6133 = vmax.xlane.f32.xlu0 %v6132
    %v6134 = vpop.xlane.xlu0 %6133
    %v6135 = vmax.f32 %v5927, %v6040
    %6136 = vmax.xlane.f32.xlu0 %v6135
    %v6137 = vpop.xlane.xlu0 %6136
    %v6138 = vmax.f32 %v5930, %v6043
    %6139 = vmax.xlane.f32.xlu0 %v6138
    %v6140 = vpop.xlane.xlu0 %6139
    %v6141 = vmax.f32 %v5933, %v6046
    %6142 = vmax.xlane.f32.xlu0 %v6141
    %v6143 = vpop.xlane.xlu0 %6142
    %v6144 = vmax.f32 %v5936, %v6049
    %6145 = vmax.xlane.f32.xlu0 %v6144
    %v6146 = vpop.xlane.xlu0 %6145
    %v6147 = vmax.f32 %v5939, %v6052
    %6148 = vmax.xlane.f32.xlu0 %v6147
    %v6149 = vpop.xlane.xlu0 %6148
    %v6150 = vmax.f32 %v5942, %v6055
    %6151 = vmax.xlane.f32.xlu0 %v6150
    %v6152 = vpop.xlane.xlu0 %6151
    %v6153 = vmax.f32 %v5945, %v6058
    %6154 = vmax.xlane.f32.xlu0 %v6153
    %v6155 = vpop.xlane.xlu0 %6154
    %v6156 = vmax.f32 %v5948, %v6061
    %6157 = vmax.xlane.f32.xlu0 %v6156
    %v6158 = vpop.xlane.xlu0 %6157
    %v6159 = vmax.f32 %v5951, %v6064
    %6160 = vmax.xlane.f32.xlu0 %v6159
    %v6161 = vpop.xlane.xlu0 %6160
    %v6162 = vmax.f32 %v5954, %v6067
    %6163 = vmax.xlane.f32.xlu0 %v6162
    %v6164 = vpop.xlane.xlu0 %6163
    %v6165 = vmax.f32 %v5957, %v6070
    %6166 = vmax.xlane.f32.xlu0 %v6165
    %v6167 = vpop.xlane.xlu0 %6166
    %v6168 = vmax.f32 %v5960, %v6073
    %6169 = vmax.xlane.f32.xlu0 %v6168
    %v6170 = vpop.xlane.xlu0 %6169
    %v6171 = vmax.f32 %v5963, %v6076
    %6172 = vmax.xlane.f32.xlu0 %v6171
    %v6173 = vpop.xlane.xlu0 %6172
    %v6174 = vmax.f32 %v5966, %v6079
    %6175 = vmax.xlane.f32.xlu0 %v6174
    %v6176 = vpop.xlane.xlu0 %6175
    %v6177 = vmax.f32 %v5969, %v6082
    %6178 = vmax.xlane.f32.xlu0 %v6177
    %v6179 = vpop.xlane.xlu0 %6178
    %v6180 = vmax.f32 %v5972, %v6085
    %6181 = vmax.xlane.f32.xlu0 %v6180
    %v6182 = vpop.xlane.xlu0 %6181
    %v6183 = vmax.f32 %v5975, %v6088
    %6184 = vmax.xlane.f32.xlu0 %v6183
    %v6185 = vpop.xlane.xlu0 %6184
    %v6186 = vmax.f32 %v5978, %v6091
    %6187 = vmax.xlane.f32.xlu0 %v6186
    %v6188 = vpop.xlane.xlu0 %6187
    %v6189 = vmax.f32 %v5981, %v6094
    %6190 = vmax.xlane.f32.xlu0 %v6189
    %v6191 = vpop.xlane.xlu0 %6190
    %v6192 = vmax.f32 %v5984, %v6097
    %6193 = vmax.xlane.f32.xlu0 %v6192
    %v6194 = vpop.xlane.xlu0 %6193
    %v6195 = vmax.f32 %v5987, %v6100
    %6196 = vmax.xlane.f32.xlu0 %v6195
    %v6197 = vpop.xlane.xlu0 %6196
    %v6198 = vmax.f32 %v5990, %v6103
    %6199 = vmax.xlane.f32.xlu0 %v6198
    %v6200 = vpop.xlane.xlu0 %6199
    %v6201 = vmax.f32 %v5993, %v6106
    %6202 = vmax.xlane.f32.xlu0 %v6201
    %v6203 = vpop.xlane.xlu0 %6202
    %v6204 = vmax.f32 %v5996, %v6109
    %6205 = vmax.xlane.f32.xlu0 %v6204
    %v6206 = vpop.xlane.xlu0 %6205
    %v6207 = vmax.f32 %v5999, %v6112
    %6208 = vmax.xlane.f32.xlu0 %v6207
    %v6209 = vpop.xlane.xlu0 %6208
    %v6210 = vmax.f32 %v6002, %v6115
    %6211 = vmax.xlane.f32.xlu0 %v6210
    %v6212 = vpop.xlane.xlu0 %6211
    %v6213 = vmax.f32 %v6005, %v6118
    %6214 = vmax.xlane.f32.xlu0 %v6213
    %v6215 = vpop.xlane.xlu0 %6214
    %v6216 = vmax.f32 %v6008, %v6121
    %6217 = vmax.xlane.f32.xlu0 %v6216
    %v6218 = vpop.xlane.xlu0 %6217
    %v6219 = vmax.f32 %v6011, %v6124
    %6220 = vmax.xlane.f32.xlu0 %v6219
    %v6221 = vpop.xlane.xlu0 %6220
    %v6222 = vsub.f32 %v5918, %v6128
    %v6223 = vsub.f32 %v6031, %v6128
    %v6224 = vsub.f32 %v5921, %v6131
    %v6225 = vsub.f32 %v6034, %v6131
    %v6226 = vsub.f32 %v5924, %v6134
    %v6227 = vsub.f32 %v6037, %v6134
    %v6228 = vsub.f32 %v5927, %v6137
    %v6229 = vsub.f32 %v6040, %v6137
    %v6230 = vsub.f32 %v5930, %v6140
    %v6231 = vsub.f32 %v6043, %v6140
    %v6232 = vsub.f32 %v5933, %v6143
    %v6233 = vsub.f32 %v6046, %v6143
    %v6234 = vsub.f32 %v5936, %v6146
    %v6235 = vsub.f32 %v6049, %v6146
    %v6236 = vsub.f32 %v5939, %v6149
    %v6237 = vsub.f32 %v6052, %v6149
    %v6238 = vsub.f32 %v5942, %v6152
    %v6239 = vsub.f32 %v6055, %v6152
    %v6240 = vsub.f32 %v5945, %v6155
    %v6241 = vsub.f32 %v6058, %v6155
    %v6242 = vsub.f32 %v5948, %v6158
    %v6243 = vsub.f32 %v6061, %v6158
    %v6244 = vsub.f32 %v5951, %v6161
    %v6245 = vsub.f32 %v6064, %v6161
    %v6246 = vsub.f32 %v5954, %v6164
    %v6247 = vsub.f32 %v6067, %v6164
    %v6248 = vsub.f32 %v5957, %v6167
    %v6249 = vsub.f32 %v6070, %v6167
    %v6250 = vsub.f32 %v5960, %v6170
    %v6251 = vsub.f32 %v6073, %v6170
    %v6252 = vsub.f32 %v5963, %v6173
    %v6253 = vsub.f32 %v6076, %v6173
    %v6254 = vsub.f32 %v5966, %v6176
    %v6255 = vsub.f32 %v6079, %v6176
    %v6256 = vsub.f32 %v5969, %v6179
    %v6257 = vsub.f32 %v6082, %v6179
    %v6258 = vsub.f32 %v5972, %v6182
    %v6259 = vsub.f32 %v6085, %v6182
    %v6260 = vsub.f32 %v5975, %v6185
    %v6261 = vsub.f32 %v6088, %v6185
    %v6262 = vsub.f32 %v5978, %v6188
    %v6263 = vsub.f32 %v6091, %v6188
    %v6264 = vsub.f32 %v5981, %v6191
    %v6265 = vsub.f32 %v6094, %v6191
    %v6266 = vsub.f32 %v5984, %v6194
    %v6267 = vsub.f32 %v6097, %v6194
    %v6268 = vsub.f32 %v5987, %v6197
    %v6269 = vsub.f32 %v6100, %v6197
    %v6270 = vsub.f32 %v5990, %v6200
    %v6271 = vsub.f32 %v6103, %v6200
    %v6272 = vsub.f32 %v5993, %v6203
    %v6273 = vsub.f32 %v6106, %v6203
    %v6274 = vsub.f32 %v5996, %v6206
    %v6275 = vsub.f32 %v6109, %v6206
    %v6276 = vsub.f32 %v5999, %v6209
    %v6277 = vsub.f32 %v6112, %v6209
    %v6278 = vsub.f32 %v6002, %v6212
    %v6279 = vsub.f32 %v6115, %v6212
    %v6280 = vsub.f32 %v6005, %v6215
    %v6281 = vsub.f32 %v6118, %v6215
    %v6282 = vsub.f32 %v6008, %v6218
    %v6283 = vsub.f32 %v6121, %v6218
    %v6284 = vsub.f32 %v6011, %v6221
    %v6285 = vsub.f32 %v6124, %v6221
    %v6286 = vmul.f32 %v6222, 1.442695
    %v6287 = vpow.pop %v6286
    %v6288 = vmul.f32 %v6223, 1.442695
    %v6289 = vpow.pop %v6288
    %v6290 = vmul.f32 %v6224, 1.442695
    %v6291 = vpow.pop %v6290
    %v6292 = vmul.f32 %v6225, 1.442695
    %v6293 = vpow.pop %v6292
    %v6294 = vmul.f32 %v6226, 1.442695
    %v6295 = vpow.pop %v6294
    %v6296 = vmul.f32 %v6227, 1.442695
    %v6297 = vpow.pop %v6296
    %v6298 = vmul.f32 %v6228, 1.442695
    %v6299 = vpow.pop %v6298
    %v6300 = vmul.f32 %v6229, 1.442695
    %v6301 = vpow.pop %v6300
    %v6302 = vmul.f32 %v6230, 1.442695
    %v6303 = vpow.pop %v6302
    %v6304 = vmul.f32 %v6231, 1.442695
    %v6305 = vpow.pop %v6304
    %v6306 = vmul.f32 %v6232, 1.442695
    %v6307 = vpow.pop %v6306
    %v6308 = vmul.f32 %v6233, 1.442695
    %v6309 = vpow.pop %v6308
    %v6310 = vmul.f32 %v6234, 1.442695
    %v6311 = vpow.pop %v6310
    %v6312 = vmul.f32 %v6235, 1.442695
    %v6313 = vpow.pop %v6312
    %v6314 = vmul.f32 %v6236, 1.442695
    %v6315 = vpow.pop %v6314
    %v6316 = vmul.f32 %v6237, 1.442695
    %v6317 = vpow.pop %v6316
    %v6318 = vmul.f32 %v6238, 1.442695
    %v6319 = vpow.pop %v6318
    %v6320 = vmul.f32 %v6239, 1.442695
    %v6321 = vpow.pop %v6320
    %v6322 = vmul.f32 %v6240, 1.442695
    %v6323 = vpow.pop %v6322
    %v6324 = vmul.f32 %v6241, 1.442695
    %v6325 = vpow.pop %v6324
    %v6326 = vmul.f32 %v6242, 1.442695
    %v6327 = vpow.pop %v6326
    %v6328 = vmul.f32 %v6243, 1.442695
    %v6329 = vpow.pop %v6328
    %v6330 = vmul.f32 %v6244, 1.442695
    %v6331 = vpow.pop %v6330
    %v6332 = vmul.f32 %v6245, 1.442695
    %v6333 = vpow.pop %v6332
    %v6334 = vmul.f32 %v6246, 1.442695
    %v6335 = vpow.pop %v6334
    %v6336 = vmul.f32 %v6247, 1.442695
    %v6337 = vpow.pop %v6336
    %v6338 = vmul.f32 %v6248, 1.442695
    %v6339 = vpow.pop %v6338
    %v6340 = vmul.f32 %v6249, 1.442695
    %v6341 = vpow.pop %v6340
    %v6342 = vmul.f32 %v6250, 1.442695
    %v6343 = vpow.pop %v6342
    %v6344 = vmul.f32 %v6251, 1.442695
    %v6345 = vpow.pop %v6344
    %v6346 = vmul.f32 %v6252, 1.442695
    %v6347 = vpow.pop %v6346
    %v6348 = vmul.f32 %v6253, 1.442695
    %v6349 = vpow.pop %v6348
    %v6350 = vmul.f32 %v6254, 1.442695
    %v6351 = vpow.pop %v6350
    %v6352 = vmul.f32 %v6255, 1.442695
    %v6353 = vpow.pop %v6352
    %v6354 = vmul.f32 %v6256, 1.442695
    %v6355 = vpow.pop %v6354
    %v6356 = vmul.f32 %v6257, 1.442695
    %v6357 = vpow.pop %v6356
    %v6358 = vmul.f32 %v6258, 1.442695
    %v6359 = vpow.pop %v6358
    %v6360 = vmul.f32 %v6259, 1.442695
    %v6361 = vpow.pop %v6360
    %v6362 = vmul.f32 %v6260, 1.442695
    %v6363 = vpow.pop %v6362
    %v6364 = vmul.f32 %v6261, 1.442695
    %v6365 = vpow.pop %v6364
    %v6366 = vmul.f32 %v6262, 1.442695
    %v6367 = vpow.pop %v6366
    %v6368 = vmul.f32 %v6263, 1.442695
    %v6369 = vpow.pop %v6368
    %v6370 = vmul.f32 %v6264, 1.442695
    %v6371 = vpow.pop %v6370
    %v6372 = vmul.f32 %v6265, 1.442695
    %v6373 = vpow.pop %v6372
    %v6374 = vmul.f32 %v6266, 1.442695
    %v6375 = vpow.pop %v6374
    %v6376 = vmul.f32 %v6267, 1.442695
    %v6377 = vpow.pop %v6376
    %v6378 = vmul.f32 %v6268, 1.442695
    %v6379 = vpow.pop %v6378
    %v6380 = vmul.f32 %v6269, 1.442695
    %v6381 = vpow.pop %v6380
    %v6382 = vmul.f32 %v6270, 1.442695
    %v6383 = vpow.pop %v6382
    %v6384 = vmul.f32 %v6271, 1.442695
    %v6385 = vpow.pop %v6384
    %v6386 = vmul.f32 %v6272, 1.442695
    %v6387 = vpow.pop %v6386
    %v6388 = vmul.f32 %v6273, 1.442695
    %v6389 = vpow.pop %v6388
    %v6390 = vmul.f32 %v6274, 1.442695
    %v6391 = vpow.pop %v6390
    %v6392 = vmul.f32 %v6275, 1.442695
    %v6393 = vpow.pop %v6392
    %v6394 = vmul.f32 %v6276, 1.442695
    %v6395 = vpow.pop %v6394
    %v6396 = vmul.f32 %v6277, 1.442695
    %v6397 = vpow.pop %v6396
    %v6398 = vmul.f32 %v6278, 1.442695
    %v6399 = vpow.pop %v6398
    %v6400 = vmul.f32 %v6279, 1.442695
    %v6401 = vpow.pop %v6400
    %v6402 = vmul.f32 %v6280, 1.442695
    %v6403 = vpow.pop %v6402
    %v6404 = vmul.f32 %v6281, 1.442695
    %v6405 = vpow.pop %v6404
    %v6406 = vmul.f32 %v6282, 1.442695
    %v6407 = vpow.pop %v6406
    %v6408 = vmul.f32 %v6283, 1.442695
    %v6409 = vpow.pop %v6408
    %v6410 = vmul.f32 %v6284, 1.442695
    %v6411 = vpow.pop %v6410
    %v6412 = vmul.f32 %v6285, 1.442695
    %v6413 = vpow.pop %v6412
    %v6414 = vadd.f32 %v6287, %v6289
    %6415 = vadd.xlane.f32.xlu0 %v6414
    %v6416 = vpop.xlane.xlu0 %6415
    %v6417 = vadd.f32 %v6291, %v6293
    %6418 = vadd.xlane.f32.xlu0 %v6417
    %v6419 = vpop.xlane.xlu0 %6418
    %v6420 = vadd.f32 %v6295, %v6297
    %6421 = vadd.xlane.f32.xlu0 %v6420
    %v6422 = vpop.xlane.xlu0 %6421
    %v6423 = vadd.f32 %v6299, %v6301
    %6424 = vadd.xlane.f32.xlu0 %v6423
    %v6425 = vpop.xlane.xlu0 %6424
    %v6426 = vadd.f32 %v6303, %v6305
    %6427 = vadd.xlane.f32.xlu0 %v6426
    %v6428 = vpop.xlane.xlu0 %6427
    %v6429 = vadd.f32 %v6307, %v6309
    %6430 = vadd.xlane.f32.xlu0 %v6429
    %v6431 = vpop.xlane.xlu0 %6430
    %v6432 = vadd.f32 %v6311, %v6313
    %6433 = vadd.xlane.f32.xlu0 %v6432
    %v6434 = vpop.xlane.xlu0 %6433
    %v6435 = vadd.f32 %v6315, %v6317
    %6436 = vadd.xlane.f32.xlu0 %v6435
    %v6437 = vpop.xlane.xlu0 %6436
    %v6438 = vadd.f32 %v6319, %v6321
    %6439 = vadd.xlane.f32.xlu0 %v6438
    %v6440 = vpop.xlane.xlu0 %6439
    %v6441 = vadd.f32 %v6323, %v6325
    %6442 = vadd.xlane.f32.xlu0 %v6441
    %v6443 = vpop.xlane.xlu0 %6442
    %v6444 = vadd.f32 %v6327, %v6329
    %6445 = vadd.xlane.f32.xlu0 %v6444
    %v6446 = vpop.xlane.xlu0 %6445
    %v6447 = vadd.f32 %v6331, %v6333
    %6448 = vadd.xlane.f32.xlu0 %v6447
    %v6449 = vpop.xlane.xlu0 %6448
    %v6450 = vadd.f32 %v6335, %v6337
    %6451 = vadd.xlane.f32.xlu0 %v6450
    %v6452 = vpop.xlane.xlu0 %6451
    %v6453 = vadd.f32 %v6339, %v6341
    %6454 = vadd.xlane.f32.xlu0 %v6453
    %v6455 = vpop.xlane.xlu0 %6454
    %v6456 = vadd.f32 %v6343, %v6345
    %6457 = vadd.xlane.f32.xlu0 %v6456
    %v6458 = vpop.xlane.xlu0 %6457
    %v6459 = vadd.f32 %v6347, %v6349
    %6460 = vadd.xlane.f32.xlu0 %v6459
    %v6461 = vpop.xlane.xlu0 %6460
    %v6462 = vadd.f32 %v6351, %v6353
    %6463 = vadd.xlane.f32.xlu0 %v6462
    %v6464 = vpop.xlane.xlu0 %6463
    %v6465 = vadd.f32 %v6355, %v6357
    %6466 = vadd.xlane.f32.xlu0 %v6465
    %v6467 = vpop.xlane.xlu0 %6466
    %v6468 = vadd.f32 %v6359, %v6361
    %6469 = vadd.xlane.f32.xlu0 %v6468
    %v6470 = vpop.xlane.xlu0 %6469
    %v6471 = vadd.f32 %v6363, %v6365
    %6472 = vadd.xlane.f32.xlu0 %v6471
    %v6473 = vpop.xlane.xlu0 %6472
    %v6474 = vadd.f32 %v6367, %v6369
    %6475 = vadd.xlane.f32.xlu0 %v6474
    %v6476 = vpop.xlane.xlu0 %6475
    %v6477 = vadd.f32 %v6371, %v6373
    %6478 = vadd.xlane.f32.xlu0 %v6477
    %v6479 = vpop.xlane.xlu0 %6478
    %v6480 = vadd.f32 %v6375, %v6377
    %6481 = vadd.xlane.f32.xlu0 %v6480
    %v6482 = vpop.xlane.xlu0 %6481
    %v6483 = vadd.f32 %v6379, %v6381
    %6484 = vadd.xlane.f32.xlu0 %v6483
    %v6485 = vpop.xlane.xlu0 %6484
    %v6486 = vadd.f32 %v6383, %v6385
    %6487 = vadd.xlane.f32.xlu0 %v6486
    %v6488 = vpop.xlane.xlu0 %6487
    %v6489 = vadd.f32 %v6387, %v6389
    %6490 = vadd.xlane.f32.xlu0 %v6489
    %v6491 = vpop.xlane.xlu0 %6490
    %v6492 = vadd.f32 %v6391, %v6393
    %6493 = vadd.xlane.f32.xlu0 %v6492
    %v6494 = vpop.xlane.xlu0 %6493
    %v6495 = vadd.f32 %v6395, %v6397
    %6496 = vadd.xlane.f32.xlu0 %v6495
    %v6497 = vpop.xlane.xlu0 %6496
    %v6498 = vadd.f32 %v6399, %v6401
    %6499 = vadd.xlane.f32.xlu0 %v6498
    %v6500 = vpop.xlane.xlu0 %6499
    %v6501 = vadd.f32 %v6403, %v6405
    %6502 = vadd.xlane.f32.xlu0 %v6501
    %v6503 = vpop.xlane.xlu0 %6502
    %v6504 = vadd.f32 %v6407, %v6409
    %6505 = vadd.xlane.f32.xlu0 %v6504
    %v6506 = vpop.xlane.xlu0 %6505
    %v6507 = vadd.f32 %v6411, %v6413
    %6508 = vadd.xlane.f32.xlu0 %v6507
    %v6509 = vpop.xlane.xlu0 %6508
    %v6510 = vrcp.pop %v6416
    %v6511 = vmul.f32 %v6416, %v6510
    %v6512 = vsub.f32 1.0, %v6511
    %v6513 = vmul.f32 %v6510, %v6512
    %v6514 = vadd.f32 %v6510, %v6513
    %vm6515 = vweird.f32 %v6416
    %vm6516 = vweird.f32 %v6510
    %vm6517 = vmor %vm6515, %vm6516
    %v6518 = vsel %vm6517, %v6510, %v6514
    %v6519 = vand.u32 2147483647, %v6416
    %vm6520 = vcmp.eq.f32.partialorder %v6519, 8.507059e+37
    %v6521 = vand.u32 %v6416, 2147483648
    %v6522 = vor.u32 1.1754944e-38, %v6521
    %v6523 = vsel %vm6520, %v6522, %v6518
    %v6524 = vrcp.pop %v6419
    %v6525 = vmul.f32 %v6419, %v6524
    %v6526 = vsub.f32 1.0, %v6525
    %v6527 = vmul.f32 %v6524, %v6526
    %v6528 = vadd.f32 %v6524, %v6527
    %vm6529 = vweird.f32 %v6419
    %vm6530 = vweird.f32 %v6524
    %vm6531 = vmor %vm6529, %vm6530
    %v6532 = vsel %vm6531, %v6524, %v6528
    %v6533 = vand.u32 2147483647, %v6419
    %vm6534 = vcmp.eq.f32.partialorder %v6533, 8.507059e+37
    %v6535 = vand.u32 %v6419, 2147483648
    %v6536 = vor.u32 1.1754944e-38, %v6535
    %v6537 = vsel %vm6534, %v6536, %v6532
    %v6538 = vrcp.pop %v6422
    %v6539 = vmul.f32 %v6422, %v6538
    %v6540 = vsub.f32 1.0, %v6539
    %v6541 = vmul.f32 %v6538, %v6540
    %v6542 = vadd.f32 %v6538, %v6541
    %vm6543 = vweird.f32 %v6422
    %vm6544 = vweird.f32 %v6538
    %vm6545 = vmor %vm6543, %vm6544
    %v6546 = vsel %vm6545, %v6538, %v6542
    %v6547 = vand.u32 2147483647, %v6422
    %vm6548 = vcmp.eq.f32.partialorder %v6547, 8.507059e+37
    %v6549 = vand.u32 %v6422, 2147483648
    %v6550 = vor.u32 1.1754944e-38, %v6549
    %v6551 = vsel %vm6548, %v6550, %v6546
    %v6552 = vrcp.pop %v6425
    %v6553 = vmul.f32 %v6425, %v6552
    %v6554 = vsub.f32 1.0, %v6553
    %v6555 = vmul.f32 %v6552, %v6554
    %v6556 = vadd.f32 %v6552, %v6555
    %vm6557 = vweird.f32 %v6425
    %vm6558 = vweird.f32 %v6552
    %vm6559 = vmor %vm6557, %vm6558
    %v6560 = vsel %vm6559, %v6552, %v6556
    %v6561 = vand.u32 2147483647, %v6425
    %vm6562 = vcmp.eq.f32.partialorder %v6561, 8.507059e+37
    %v6563 = vand.u32 %v6425, 2147483648
    %v6564 = vor.u32 1.1754944e-38, %v6563
    %v6565 = vsel %vm6562, %v6564, %v6560
    %v6566 = vrcp.pop %v6428
    %v6567 = vmul.f32 %v6428, %v6566
    %v6568 = vsub.f32 1.0, %v6567
    %v6569 = vmul.f32 %v6566, %v6568
    %v6570 = vadd.f32 %v6566, %v6569
    %vm6571 = vweird.f32 %v6428
    %vm6572 = vweird.f32 %v6566
    %vm6573 = vmor %vm6571, %vm6572
    %v6574 = vsel %vm6573, %v6566, %v6570
    %v6575 = vand.u32 2147483647, %v6428
    %vm6576 = vcmp.eq.f32.partialorder %v6575, 8.507059e+37
    %v6577 = vand.u32 %v6428, 2147483648
    %v6578 = vor.u32 1.1754944e-38, %v6577
    %v6579 = vsel %vm6576, %v6578, %v6574
    %v6580 = vrcp.pop %v6431
    %v6581 = vmul.f32 %v6431, %v6580
    %v6582 = vsub.f32 1.0, %v6581
    %v6583 = vmul.f32 %v6580, %v6582
    %v6584 = vadd.f32 %v6580, %v6583
    %vm6585 = vweird.f32 %v6431
    %vm6586 = vweird.f32 %v6580
    %vm6587 = vmor %vm6585, %vm6586
    %v6588 = vsel %vm6587, %v6580, %v6584
    %v6589 = vand.u32 2147483647, %v6431
    %vm6590 = vcmp.eq.f32.partialorder %v6589, 8.507059e+37
    %v6591 = vand.u32 %v6431, 2147483648
    %v6592 = vor.u32 1.1754944e-38, %v6591
    %v6593 = vsel %vm6590, %v6592, %v6588
    %v6594 = vrcp.pop %v6434
    %v6595 = vmul.f32 %v6434, %v6594
    %v6596 = vsub.f32 1.0, %v6595
    %v6597 = vmul.f32 %v6594, %v6596
    %v6598 = vadd.f32 %v6594, %v6597
    %vm6599 = vweird.f32 %v6434
    %vm6600 = vweird.f32 %v6594
    %vm6601 = vmor %vm6599, %vm6600
    %v6602 = vsel %vm6601, %v6594, %v6598
    %v6603 = vand.u32 2147483647, %v6434
    %vm6604 = vcmp.eq.f32.partialorder %v6603, 8.507059e+37
    %v6605 = vand.u32 %v6434, 2147483648
    %v6606 = vor.u32 1.1754944e-38, %v6605
    %v6607 = vsel %vm6604, %v6606, %v6602
    %v6608 = vrcp.pop %v6437
    %v6609 = vmul.f32 %v6437, %v6608
    %v6610 = vsub.f32 1.0, %v6609
    %v6611 = vmul.f32 %v6608, %v6610
    %v6612 = vadd.f32 %v6608, %v6611
    %vm6613 = vweird.f32 %v6437
    %vm6614 = vweird.f32 %v6608
    %vm6615 = vmor %vm6613, %vm6614
    %v6616 = vsel %vm6615, %v6608, %v6612
    %v6617 = vand.u32 2147483647, %v6437
    %vm6618 = vcmp.eq.f32.partialorder %v6617, 8.507059e+37
    %v6619 = vand.u32 %v6437, 2147483648
    %v6620 = vor.u32 1.1754944e-38, %v6619
    %v6621 = vsel %vm6618, %v6620, %v6616
    %v6622 = vrcp.pop %v6440
    %v6623 = vmul.f32 %v6440, %v6622
    %v6624 = vsub.f32 1.0, %v6623
    %v6625 = vmul.f32 %v6622, %v6624
    %v6626 = vadd.f32 %v6622, %v6625
    %vm6627 = vweird.f32 %v6440
    %vm6628 = vweird.f32 %v6622
    %vm6629 = vmor %vm6627, %vm6628
    %v6630 = vsel %vm6629, %v6622, %v6626
    %v6631 = vand.u32 2147483647, %v6440
    %vm6632 = vcmp.eq.f32.partialorder %v6631, 8.507059e+37
    %v6633 = vand.u32 %v6440, 2147483648
    %v6634 = vor.u32 1.1754944e-38, %v6633
    %v6635 = vsel %vm6632, %v6634, %v6630
    %v6636 = vrcp.pop %v6443
    %v6637 = vmul.f32 %v6443, %v6636
    %v6638 = vsub.f32 1.0, %v6637
    %v6639 = vmul.f32 %v6636, %v6638
    %v6640 = vadd.f32 %v6636, %v6639
    %vm6641 = vweird.f32 %v6443
    %vm6642 = vweird.f32 %v6636
    %vm6643 = vmor %vm6641, %vm6642
    %v6644 = vsel %vm6643, %v6636, %v6640
    %v6645 = vand.u32 2147483647, %v6443
    %vm6646 = vcmp.eq.f32.partialorder %v6645, 8.507059e+37
    %v6647 = vand.u32 %v6443, 2147483648
    %v6648 = vor.u32 1.1754944e-38, %v6647
    %v6649 = vsel %vm6646, %v6648, %v6644
    %v6650 = vrcp.pop %v6446
    %v6651 = vmul.f32 %v6446, %v6650
    %v6652 = vsub.f32 1.0, %v6651
    %v6653 = vmul.f32 %v6650, %v6652
    %v6654 = vadd.f32 %v6650, %v6653
    %vm6655 = vweird.f32 %v6446
    %vm6656 = vweird.f32 %v6650
    %vm6657 = vmor %vm6655, %vm6656
    %v6658 = vsel %vm6657, %v6650, %v6654
    %v6659 = vand.u32 2147483647, %v6446
    %vm6660 = vcmp.eq.f32.partialorder %v6659, 8.507059e+37
    %v6661 = vand.u32 %v6446, 2147483648
    %v6662 = vor.u32 1.1754944e-38, %v6661
    %v6663 = vsel %vm6660, %v6662, %v6658
    %v6664 = vrcp.pop %v6449
    %v6665 = vmul.f32 %v6449, %v6664
    %v6666 = vsub.f32 1.0, %v6665
    %v6667 = vmul.f32 %v6664, %v6666
    %v6668 = vadd.f32 %v6664, %v6667
    %vm6669 = vweird.f32 %v6449
    %vm6670 = vweird.f32 %v6664
    %vm6671 = vmor %vm6669, %vm6670
    %v6672 = vsel %vm6671, %v6664, %v6668
    %v6673 = vand.u32 2147483647, %v6449
    %vm6674 = vcmp.eq.f32.partialorder %v6673, 8.507059e+37
    %v6675 = vand.u32 %v6449, 2147483648
    %v6676 = vor.u32 1.1754944e-38, %v6675
    %v6677 = vsel %vm6674, %v6676, %v6672
    %v6678 = vrcp.pop %v6452
    %v6679 = vmul.f32 %v6452, %v6678
    %v6680 = vsub.f32 1.0, %v6679
    %v6681 = vmul.f32 %v6678, %v6680
    %v6682 = vadd.f32 %v6678, %v6681
    %vm6683 = vweird.f32 %v6452
    %vm6684 = vweird.f32 %v6678
    %vm6685 = vmor %vm6683, %vm6684
    %v6686 = vsel %vm6685, %v6678, %v6682
    %v6687 = vand.u32 2147483647, %v6452
    %vm6688 = vcmp.eq.f32.partialorder %v6687, 8.507059e+37
    %v6689 = vand.u32 %v6452, 2147483648
    %v6690 = vor.u32 1.1754944e-38, %v6689
    %v6691 = vsel %vm6688, %v6690, %v6686
    %v6692 = vrcp.pop %v6455
    %v6693 = vmul.f32 %v6455, %v6692
    %v6694 = vsub.f32 1.0, %v6693
    %v6695 = vmul.f32 %v6692, %v6694
    %v6696 = vadd.f32 %v6692, %v6695
    %vm6697 = vweird.f32 %v6455
    %vm6698 = vweird.f32 %v6692
    %vm6699 = vmor %vm6697, %vm6698
    %v6700 = vsel %vm6699, %v6692, %v6696
    %v6701 = vand.u32 2147483647, %v6455
    %vm6702 = vcmp.eq.f32.partialorder %v6701, 8.507059e+37
    %v6703 = vand.u32 %v6455, 2147483648
    %v6704 = vor.u32 1.1754944e-38, %v6703
    %v6705 = vsel %vm6702, %v6704, %v6700
    %v6706 = vrcp.pop %v6458
    %v6707 = vmul.f32 %v6458, %v6706
    %v6708 = vsub.f32 1.0, %v6707
    %v6709 = vmul.f32 %v6706, %v6708
    %v6710 = vadd.f32 %v6706, %v6709
    %vm6711 = vweird.f32 %v6458
    %vm6712 = vweird.f32 %v6706
    %vm6713 = vmor %vm6711, %vm6712
    %v6714 = vsel %vm6713, %v6706, %v6710
    %v6715 = vand.u32 2147483647, %v6458
    %vm6716 = vcmp.eq.f32.partialorder %v6715, 8.507059e+37
    %v6717 = vand.u32 %v6458, 2147483648
    %v6718 = vor.u32 1.1754944e-38, %v6717
    %v6719 = vsel %vm6716, %v6718, %v6714
    %v6720 = vrcp.pop %v6461
    %v6721 = vmul.f32 %v6461, %v6720
    %v6722 = vsub.f32 1.0, %v6721
    %v6723 = vmul.f32 %v6720, %v6722
    %v6724 = vadd.f32 %v6720, %v6723
    %vm6725 = vweird.f32 %v6461
    %vm6726 = vweird.f32 %v6720
    %vm6727 = vmor %vm6725, %vm6726
    %v6728 = vsel %vm6727, %v6720, %v6724
    %v6729 = vand.u32 2147483647, %v6461
    %vm6730 = vcmp.eq.f32.partialorder %v6729, 8.507059e+37
    %v6731 = vand.u32 %v6461, 2147483648
    %v6732 = vor.u32 1.1754944e-38, %v6731
    %v6733 = vsel %vm6730, %v6732, %v6728
    %v6734 = vrcp.pop %v6464
    %v6735 = vmul.f32 %v6464, %v6734
    %v6736 = vsub.f32 1.0, %v6735
    %v6737 = vmul.f32 %v6734, %v6736
    %v6738 = vadd.f32 %v6734, %v6737
    %vm6739 = vweird.f32 %v6464
    %vm6740 = vweird.f32 %v6734
    %vm6741 = vmor %vm6739, %vm6740
    %v6742 = vsel %vm6741, %v6734, %v6738
    %v6743 = vand.u32 2147483647, %v6464
    %vm6744 = vcmp.eq.f32.partialorder %v6743, 8.507059e+37
    %v6745 = vand.u32 %v6464, 2147483648
    %v6746 = vor.u32 1.1754944e-38, %v6745
    %v6747 = vsel %vm6744, %v6746, %v6742
    %v6748 = vrcp.pop %v6467
    %v6749 = vmul.f32 %v6467, %v6748
    %v6750 = vsub.f32 1.0, %v6749
    %v6751 = vmul.f32 %v6748, %v6750
    %v6752 = vadd.f32 %v6748, %v6751
    %vm6753 = vweird.f32 %v6467
    %vm6754 = vweird.f32 %v6748
    %vm6755 = vmor %vm6753, %vm6754
    %v6756 = vsel %vm6755, %v6748, %v6752
    %v6757 = vand.u32 2147483647, %v6467
    %vm6758 = vcmp.eq.f32.partialorder %v6757, 8.507059e+37
    %v6759 = vand.u32 %v6467, 2147483648
    %v6760 = vor.u32 1.1754944e-38, %v6759
    %v6761 = vsel %vm6758, %v6760, %v6756
    %v6762 = vrcp.pop %v6470
    %v6763 = vmul.f32 %v6470, %v6762
    %v6764 = vsub.f32 1.0, %v6763
    %v6765 = vmul.f32 %v6762, %v6764
    %v6766 = vadd.f32 %v6762, %v6765
    %vm6767 = vweird.f32 %v6470
    %vm6768 = vweird.f32 %v6762
    %vm6769 = vmor %vm6767, %vm6768
    %v6770 = vsel %vm6769, %v6762, %v6766
    %v6771 = vand.u32 2147483647, %v6470
    %vm6772 = vcmp.eq.f32.partialorder %v6771, 8.507059e+37
    %v6773 = vand.u32 %v6470, 2147483648
    %v6774 = vor.u32 1.1754944e-38, %v6773
    %v6775 = vsel %vm6772, %v6774, %v6770
    %v6776 = vrcp.pop %v6473
    %v6777 = vmul.f32 %v6473, %v6776
    %v6778 = vsub.f32 1.0, %v6777
    %v6779 = vmul.f32 %v6776, %v6778
    %v6780 = vadd.f32 %v6776, %v6779
    %vm6781 = vweird.f32 %v6473
    %vm6782 = vweird.f32 %v6776
    %vm6783 = vmor %vm6781, %vm6782
    %v6784 = vsel %vm6783, %v6776, %v6780
    %v6785 = vand.u32 2147483647, %v6473
    %vm6786 = vcmp.eq.f32.partialorder %v6785, 8.507059e+37
    %v6787 = vand.u32 %v6473, 2147483648
    %v6788 = vor.u32 1.1754944e-38, %v6787
    %v6789 = vsel %vm6786, %v6788, %v6784
    %v6790 = vrcp.pop %v6476
    %v6791 = vmul.f32 %v6476, %v6790
    %v6792 = vsub.f32 1.0, %v6791
    %v6793 = vmul.f32 %v6790, %v6792
    %v6794 = vadd.f32 %v6790, %v6793
    %vm6795 = vweird.f32 %v6476
    %vm6796 = vweird.f32 %v6790
    %vm6797 = vmor %vm6795, %vm6796
    %v6798 = vsel %vm6797, %v6790, %v6794
    %v6799 = vand.u32 2147483647, %v6476
    %vm6800 = vcmp.eq.f32.partialorder %v6799, 8.507059e+37
    %v6801 = vand.u32 %v6476, 2147483648
    %v6802 = vor.u32 1.1754944e-38, %v6801
    %v6803 = vsel %vm6800, %v6802, %v6798
    %v6804 = vrcp.pop %v6479
    %v6805 = vmul.f32 %v6479, %v6804
    %v6806 = vsub.f32 1.0, %v6805
    %v6807 = vmul.f32 %v6804, %v6806
    %v6808 = vadd.f32 %v6804, %v6807
    %vm6809 = vweird.f32 %v6479
    %vm6810 = vweird.f32 %v6804
    %vm6811 = vmor %vm6809, %vm6810
    %v6812 = vsel %vm6811, %v6804, %v6808
    %v6813 = vand.u32 2147483647, %v6479
    %vm6814 = vcmp.eq.f32.partialorder %v6813, 8.507059e+37
    %v6815 = vand.u32 %v6479, 2147483648
    %v6816 = vor.u32 1.1754944e-38, %v6815
    %v6817 = vsel %vm6814, %v6816, %v6812
    %v6818 = vrcp.pop %v6482
    %v6819 = vmul.f32 %v6482, %v6818
    %v6820 = vsub.f32 1.0, %v6819
    %v6821 = vmul.f32 %v6818, %v6820
    %v6822 = vadd.f32 %v6818, %v6821
    %vm6823 = vweird.f32 %v6482
    %vm6824 = vweird.f32 %v6818
    %vm6825 = vmor %vm6823, %vm6824
    %v6826 = vsel %vm6825, %v6818, %v6822
    %v6827 = vand.u32 2147483647, %v6482
    %vm6828 = vcmp.eq.f32.partialorder %v6827, 8.507059e+37
    %v6829 = vand.u32 %v6482, 2147483648
    %v6830 = vor.u32 1.1754944e-38, %v6829
    %v6831 = vsel %vm6828, %v6830, %v6826
    %v6832 = vrcp.pop %v6485
    %v6833 = vmul.f32 %v6485, %v6832
    %v6834 = vsub.f32 1.0, %v6833
    %v6835 = vmul.f32 %v6832, %v6834
    %v6836 = vadd.f32 %v6832, %v6835
    %vm6837 = vweird.f32 %v6485
    %vm6838 = vweird.f32 %v6832
    %vm6839 = vmor %vm6837, %vm6838
    %v6840 = vsel %vm6839, %v6832, %v6836
    %v6841 = vand.u32 2147483647, %v6485
    %vm6842 = vcmp.eq.f32.partialorder %v6841, 8.507059e+37
    %v6843 = vand.u32 %v6485, 2147483648
    %v6844 = vor.u32 1.1754944e-38, %v6843
    %v6845 = vsel %vm6842, %v6844, %v6840
    %v6846 = vrcp.pop %v6488
    %v6847 = vmul.f32 %v6488, %v6846
    %v6848 = vsub.f32 1.0, %v6847
    %v6849 = vmul.f32 %v6846, %v6848
    %v6850 = vadd.f32 %v6846, %v6849
    %vm6851 = vweird.f32 %v6488
    %vm6852 = vweird.f32 %v6846
    %vm6853 = vmor %vm6851, %vm6852
    %v6854 = vsel %vm6853, %v6846, %v6850
    %v6855 = vand.u32 2147483647, %v6488
    %vm6856 = vcmp.eq.f32.partialorder %v6855, 8.507059e+37
    %v6857 = vand.u32 %v6488, 2147483648
    %v6858 = vor.u32 1.1754944e-38, %v6857
    %v6859 = vsel %vm6856, %v6858, %v6854
    %v6860 = vrcp.pop %v6491
    %v6861 = vmul.f32 %v6491, %v6860
    %v6862 = vsub.f32 1.0, %v6861
    %v6863 = vmul.f32 %v6860, %v6862
    %v6864 = vadd.f32 %v6860, %v6863
    %vm6865 = vweird.f32 %v6491
    %vm6866 = vweird.f32 %v6860
    %vm6867 = vmor %vm6865, %vm6866
    %v6868 = vsel %vm6867, %v6860, %v6864
    %v6869 = vand.u32 2147483647, %v6491
    %vm6870 = vcmp.eq.f32.partialorder %v6869, 8.507059e+37
    %v6871 = vand.u32 %v6491, 2147483648
    %v6872 = vor.u32 1.1754944e-38, %v6871
    %v6873 = vsel %vm6870, %v6872, %v6868
    %v6874 = vrcp.pop %v6494
    %v6875 = vmul.f32 %v6494, %v6874
    %v6876 = vsub.f32 1.0, %v6875
    %v6877 = vmul.f32 %v6874, %v6876
    %v6878 = vadd.f32 %v6874, %v6877
    %vm6879 = vweird.f32 %v6494
    %vm6880 = vweird.f32 %v6874
    %vm6881 = vmor %vm6879, %vm6880
    %v6882 = vsel %vm6881, %v6874, %v6878
    %v6883 = vand.u32 2147483647, %v6494
    %vm6884 = vcmp.eq.f32.partialorder %v6883, 8.507059e+37
    %v6885 = vand.u32 %v6494, 2147483648
    %v6886 = vor.u32 1.1754944e-38, %v6885
    %v6887 = vsel %vm6884, %v6886, %v6882
    %v6888 = vrcp.pop %v6497
    %v6889 = vmul.f32 %v6497, %v6888
    %v6890 = vsub.f32 1.0, %v6889
    %v6891 = vmul.f32 %v6888, %v6890
    %v6892 = vadd.f32 %v6888, %v6891
    %vm6893 = vweird.f32 %v6497
    %vm6894 = vweird.f32 %v6888
    %vm6895 = vmor %vm6893, %vm6894
    %v6896 = vsel %vm6895, %v6888, %v6892
    %v6897 = vand.u32 2147483647, %v6497
    %vm6898 = vcmp.eq.f32.partialorder %v6897, 8.507059e+37
    %v6899 = vand.u32 %v6497, 2147483648
    %v6900 = vor.u32 1.1754944e-38, %v6899
    %v6901 = vsel %vm6898, %v6900, %v6896
    %v6902 = vrcp.pop %v6500
    %v6903 = vmul.f32 %v6500, %v6902
    %v6904 = vsub.f32 1.0, %v6903
    %v6905 = vmul.f32 %v6902, %v6904
    %v6906 = vadd.f32 %v6902, %v6905
    %vm6907 = vweird.f32 %v6500
    %vm6908 = vweird.f32 %v6902
    %vm6909 = vmor %vm6907, %vm6908
    %v6910 = vsel %vm6909, %v6902, %v6906
    %v6911 = vand.u32 2147483647, %v6500
    %vm6912 = vcmp.eq.f32.partialorder %v6911, 8.507059e+37
    %v6913 = vand.u32 %v6500, 2147483648
    %v6914 = vor.u32 1.1754944e-38, %v6913
    %v6915 = vsel %vm6912, %v6914, %v6910
    %v6916 = vrcp.pop %v6503
    %v6917 = vmul.f32 %v6503, %v6916
    %v6918 = vsub.f32 1.0, %v6917
    %v6919 = vmul.f32 %v6916, %v6918
    %v6920 = vadd.f32 %v6916, %v6919
    %vm6921 = vweird.f32 %v6503
    %vm6922 = vweird.f32 %v6916
    %vm6923 = vmor %vm6921, %vm6922
    %v6924 = vsel %vm6923, %v6916, %v6920
    %v6925 = vand.u32 2147483647, %v6503
    %vm6926 = vcmp.eq.f32.partialorder %v6925, 8.507059e+37
    %v6927 = vand.u32 %v6503, 2147483648
    %v6928 = vor.u32 1.1754944e-38, %v6927
    %v6929 = vsel %vm6926, %v6928, %v6924
    %v6930 = vrcp.pop %v6506
    %v6931 = vmul.f32 %v6506, %v6930
    %v6932 = vsub.f32 1.0, %v6931
    %v6933 = vmul.f32 %v6930, %v6932
    %v6934 = vadd.f32 %v6930, %v6933
    %vm6935 = vweird.f32 %v6506
    %vm6936 = vweird.f32 %v6930
    %vm6937 = vmor %vm6935, %vm6936
    %v6938 = vsel %vm6937, %v6930, %v6934
    %v6939 = vand.u32 2147483647, %v6506
    %vm6940 = vcmp.eq.f32.partialorder %v6939, 8.507059e+37
    %v6941 = vand.u32 %v6506, 2147483648
    %v6942 = vor.u32 1.1754944e-38, %v6941
    %v6943 = vsel %vm6940, %v6942, %v6938
    %v6944 = vrcp.pop %v6509
    %v6945 = vmul.f32 %v6509, %v6944
    %v6946 = vsub.f32 1.0, %v6945
    %v6947 = vmul.f32 %v6944, %v6946
    %v6948 = vadd.f32 %v6944, %v6947
    %vm6949 = vweird.f32 %v6509
    %vm6950 = vweird.f32 %v6944
    %vm6951 = vmor %vm6949, %vm6950
    %v6952 = vsel %vm6951, %v6944, %v6948
    %v6953 = vand.u32 2147483647, %v6509
    %vm6954 = vcmp.eq.f32.partialorder %v6953, 8.507059e+37
    %v6955 = vand.u32 %v6509, 2147483648
    %v6956 = vor.u32 1.1754944e-38, %v6955
    %v6957 = vsel %vm6954, %v6956, %v6952
    %6958 = vrot.lane.b32.xlu0 %v198, 40
    %v6959 = vpop.permute.xlu0 %6958
    %6960 = vrot.lane.b32.xlu0 %v201, 40
    %v6961 = vpop.permute.xlu0 %6960
    %6962 = vrot.lane.b32.xlu0 %v204, 40
    %v6963 = vpop.permute.xlu0 %6962
    %6964 = vrot.lane.b32.xlu0 %v207, 40
    %v6965 = vpop.permute.xlu0 %6964
    %6966 = vrot.lane.b32.xlu0 %v210, 40
    %v6967 = vpop.permute.xlu0 %6966
    %6968 = vrot.lane.b32.xlu0 %v213, 40
    %v6969 = vpop.permute.xlu0 %6968
    %6970 = vrot.lane.b32.xlu0 %v216, 40
    %v6971 = vpop.permute.xlu0 %6970
    %6972 = vrot.lane.b32.xlu0 %v219, 40
    %v6973 = vpop.permute.xlu0 %6972
    %6974 = vrot.lane.b32.xlu0 %v222, 40
    %v6975 = vpop.permute.xlu0 %6974
    %6976 = vrot.lane.b32.xlu0 %v225, 40
    %v6977 = vpop.permute.xlu0 %6976
    %6978 = vrot.lane.b32.xlu0 %v228, 40
    %v6979 = vpop.permute.xlu0 %6978
    %6980 = vrot.lane.b32.xlu0 %v231, 40
    %v6981 = vpop.permute.xlu0 %6980
    %6982 = vrot.lane.b32.xlu0 %v234, 40
    %v6983 = vpop.permute.xlu0 %6982
    %6984 = vrot.lane.b32.xlu0 %v237, 40
    %v6985 = vpop.permute.xlu0 %6984
    %6986 = vrot.lane.b32.xlu0 %v240, 40
    %v6987 = vpop.permute.xlu0 %6986
    %6988 = vrot.lane.b32.xlu0 %v243, 40
    %v6989 = vpop.permute.xlu0 %6988
    %6990 = vrot.lane.b32.xlu0 %v246, 40
    %v6991 = vpop.permute.xlu0 %6990
    %6992 = vrot.lane.b32.xlu0 %v249, 40
    %v6993 = vpop.permute.xlu0 %6992
    %6994 = vrot.lane.b32.xlu0 %v252, 40
    %v6995 = vpop.permute.xlu0 %6994
    %6996 = vrot.lane.b32.xlu0 %v255, 40
    %v6997 = vpop.permute.xlu0 %6996
    %6998 = vrot.lane.b32.xlu0 %v258, 40
    %v6999 = vpop.permute.xlu0 %6998
    %7000 = vrot.lane.b32.xlu0 %v261, 40
    %v7001 = vpop.permute.xlu0 %7000
    %7002 = vrot.lane.b32.xlu0 %v264, 40
    %v7003 = vpop.permute.xlu0 %7002
    %7004 = vrot.lane.b32.xlu0 %v267, 40
    %v7005 = vpop.permute.xlu0 %7004
    %7006 = vrot.lane.b32.xlu0 %v270, 40
    %v7007 = vpop.permute.xlu0 %7006
    %7008 = vrot.lane.b32.xlu0 %v273, 40
    %v7009 = vpop.permute.xlu0 %7008
    %7010 = vrot.lane.b32.xlu0 %v276, 40
    %v7011 = vpop.permute.xlu0 %7010
    %7012 = vrot.lane.b32.xlu0 %v279, 40
    %v7013 = vpop.permute.xlu0 %7012
    %7014 = vrot.lane.b32.xlu0 %v282, 40
    %v7015 = vpop.permute.xlu0 %7014
    %7016 = vrot.lane.b32.xlu0 %v285, 40
    %v7017 = vpop.permute.xlu0 %7016
    %7018 = vrot.lane.b32.xlu0 %v288, 40
    %v7019 = vpop.permute.xlu0 %7018
    %7020 = vrot.lane.b32.xlu0 %v291, 40
    %v7021 = vpop.permute.xlu0 %7020
    %7054 = vmatpush.msra.mxu0 %v6989
    %7055 = vmatpush.msra.mxu0 %v6987
    %7056 = vmatpush.msra.mxu0 %v6985
    %7057 = vmatpush.msra.mxu0 %v6983
    %7058 = vmatpush.msra.mxu0 %v6981
    %7059 = vmatpush.msra.mxu0 %v6979
    %7060 = vmatpush.msra.mxu0 %v6977
    %7061 = vmatpush.msra.mxu0 %v6975
    %7062 = vmatpush.msra.mxu0 %v6973
    %7063 = vmatpush.msra.mxu0 %v6971
    %7064 = vmatpush.msra.mxu0 %v6969
    %7065 = vmatpush.msra.mxu0 %v6967
    %7066 = vmatpush.msra.mxu0 %v6965
    %7067 = vmatpush.msra.mxu0 %v6963
    %7068 = vmatpush.msra.mxu0 %v6961
    %7069 = vmatpush.msra.mxu0 %v6959
    %7070 = vmatmul.f32.gmra.mxu0 %v6287
    %v7071 = vpop.f32.mrf.mxu0
    %v7072 = vadd.f32 0.0, %v7071
    %7073 = vmatmul.f32.gmra.mxu0 %v6291
    %v7074 = vpop.f32.mrf.mxu0
    %v7075 = vadd.f32 0.0, %v7074
    %7076 = vmatmul.f32.gmra.mxu0 %v6295
    %v7077 = vpop.f32.mrf.mxu0
    %v7078 = vadd.f32 0.0, %v7077
    %7079 = vmatmul.f32.gmra.mxu0 %v6299
    %v7080 = vpop.f32.mrf.mxu0
    %v7081 = vadd.f32 0.0, %v7080
    %7082 = vmatmul.f32.gmra.mxu0 %v6303
    %v7083 = vpop.f32.mrf.mxu0
    %v7084 = vadd.f32 0.0, %v7083
    %7085 = vmatmul.f32.gmra.mxu0 %v6307
    %v7086 = vpop.f32.mrf.mxu0
    %v7087 = vadd.f32 0.0, %v7086
    %7088 = vmatmul.f32.gmra.mxu0 %v6311
    %v7089 = vpop.f32.mrf.mxu0
    %v7090 = vadd.f32 0.0, %v7089
    %7091 = vmatmul.f32.gmra.mxu0 %v6315
    %v7092 = vpop.f32.mrf.mxu0
    %v7093 = vadd.f32 0.0, %v7092
    %7094 = vmatmul.f32.gmra.mxu0 %v6319
    %v7095 = vpop.f32.mrf.mxu0
    %v7096 = vadd.f32 0.0, %v7095
    %7097 = vmatmul.f32.gmra.mxu0 %v6323
    %v7098 = vpop.f32.mrf.mxu0
    %v7099 = vadd.f32 0.0, %v7098
    %7100 = vmatmul.f32.gmra.mxu0 %v6327
    %v7101 = vpop.f32.mrf.mxu0
    %v7102 = vadd.f32 0.0, %v7101
    %7103 = vmatmul.f32.gmra.mxu0 %v6331
    %v7104 = vpop.f32.mrf.mxu0
    %v7105 = vadd.f32 0.0, %v7104
    %7106 = vmatmul.f32.gmra.mxu0 %v6335
    %v7107 = vpop.f32.mrf.mxu0
    %v7108 = vadd.f32 0.0, %v7107
    %7109 = vmatmul.f32.gmra.mxu0 %v6339
    %v7110 = vpop.f32.mrf.mxu0
    %v7111 = vadd.f32 0.0, %v7110
    %7112 = vmatmul.f32.gmra.mxu0 %v6343
    %v7113 = vpop.f32.mrf.mxu0
    %v7114 = vadd.f32 0.0, %v7113
    %7115 = vmatmul.f32.gmra.mxu0 %v6347
    %v7116 = vpop.f32.mrf.mxu0
    %v7117 = vadd.f32 0.0, %v7116
    %7118 = vmatmul.f32.gmra.mxu0 %v6351
    %v7119 = vpop.f32.mrf.mxu0
    %v7120 = vadd.f32 0.0, %v7119
    %7121 = vmatmul.f32.gmra.mxu0 %v6355
    %v7122 = vpop.f32.mrf.mxu0
    %v7123 = vadd.f32 0.0, %v7122
    %7124 = vmatmul.f32.gmra.mxu0 %v6359
    %v7125 = vpop.f32.mrf.mxu0
    %v7126 = vadd.f32 0.0, %v7125
    %7127 = vmatmul.f32.gmra.mxu0 %v6363
    %v7128 = vpop.f32.mrf.mxu0
    %v7129 = vadd.f32 0.0, %v7128
    %7130 = vmatmul.f32.gmra.mxu0 %v6367
    %v7131 = vpop.f32.mrf.mxu0
    %v7132 = vadd.f32 0.0, %v7131
    %7133 = vmatmul.f32.gmra.mxu0 %v6371
    %v7134 = vpop.f32.mrf.mxu0
    %v7135 = vadd.f32 0.0, %v7134
    %7136 = vmatmul.f32.gmra.mxu0 %v6375
    %v7137 = vpop.f32.mrf.mxu0
    %v7138 = vadd.f32 0.0, %v7137
    %7139 = vmatmul.f32.gmra.mxu0 %v6379
    %v7140 = vpop.f32.mrf.mxu0
    %v7141 = vadd.f32 0.0, %v7140
    %7142 = vmatmul.f32.gmra.mxu0 %v6383
    %v7143 = vpop.f32.mrf.mxu0
    %v7144 = vadd.f32 0.0, %v7143
    %7145 = vmatmul.f32.gmra.mxu0 %v6387
    %v7146 = vpop.f32.mrf.mxu0
    %v7147 = vadd.f32 0.0, %v7146
    %7148 = vmatmul.f32.gmra.mxu0 %v6391
    %v7149 = vpop.f32.mrf.mxu0
    %v7150 = vadd.f32 0.0, %v7149
    %7151 = vmatmul.f32.gmra.mxu0 %v6395
    %v7152 = vpop.f32.mrf.mxu0
    %v7153 = vadd.f32 0.0, %v7152
    %7154 = vmatmul.f32.gmra.mxu0 %v6399
    %v7155 = vpop.f32.mrf.mxu0
    %v7156 = vadd.f32 0.0, %v7155
    %7157 = vmatmul.f32.gmra.mxu0 %v6403
    %v7158 = vpop.f32.mrf.mxu0
    %v7159 = vadd.f32 0.0, %v7158
    %7160 = vmatmul.f32.gmra.mxu0 %v6407
    %v7161 = vpop.f32.mrf.mxu0
    %v7162 = vadd.f32 0.0, %v7161
    %7163 = vmatmul.f32.gmra.mxu0 %v6411
    %v7164 = vpop.f32.mrf.mxu0
    %v7165 = vadd.f32 0.0, %v7164
    %7166 = vdwg.mxu0
    %7167 = vmatpush.msra.mxu0 %v7021
    %7168 = vmatpush.msra.mxu0 %v7019
    %7169 = vmatpush.msra.mxu0 %v7017
    %7170 = vmatpush.msra.mxu0 %v7015
    %7171 = vmatpush.msra.mxu0 %v7013
    %7172 = vmatpush.msra.mxu0 %v7011
    %7173 = vmatpush.msra.mxu0 %v7009
    %7174 = vmatpush.msra.mxu0 %v7007
    %7175 = vmatpush.msra.mxu0 %v7005
    %7176 = vmatpush.msra.mxu0 %v7003
    %7177 = vmatpush.msra.mxu0 %v7001
    %7178 = vmatpush.msra.mxu0 %v6999
    %7179 = vmatpush.msra.mxu0 %v6997
    %7180 = vmatpush.msra.mxu0 %v6995
    %7181 = vmatpush.msra.mxu0 %v6993
    %7182 = vmatpush.msra.mxu0 %v6991
    %7183 = vmatmul.f32.gmra.mxu0 %v6289
    %v7184 = vpop.f32.mrf.mxu0
    %v7185 = vadd.f32 %v7072, %v7184
    %7186 = vmatmul.f32.gmra.mxu0 %v6293
    %v7187 = vpop.f32.mrf.mxu0
    %v7188 = vadd.f32 %v7075, %v7187
    %7189 = vmatmul.f32.gmra.mxu0 %v6297
    %v7190 = vpop.f32.mrf.mxu0
    %v7191 = vadd.f32 %v7078, %v7190
    %7192 = vmatmul.f32.gmra.mxu0 %v6301
    %v7193 = vpop.f32.mrf.mxu0
    %v7194 = vadd.f32 %v7081, %v7193
    %7195 = vmatmul.f32.gmra.mxu0 %v6305
    %v7196 = vpop.f32.mrf.mxu0
    %v7197 = vadd.f32 %v7084, %v7196
    %7198 = vmatmul.f32.gmra.mxu0 %v6309
    %v7199 = vpop.f32.mrf.mxu0
    %v7200 = vadd.f32 %v7087, %v7199
    %7201 = vmatmul.f32.gmra.mxu0 %v6313
    %v7202 = vpop.f32.mrf.mxu0
    %v7203 = vadd.f32 %v7090, %v7202
    %7204 = vmatmul.f32.gmra.mxu0 %v6317
    %v7205 = vpop.f32.mrf.mxu0
    %v7206 = vadd.f32 %v7093, %v7205
    %7207 = vmatmul.f32.gmra.mxu0 %v6321
    %v7208 = vpop.f32.mrf.mxu0
    %v7209 = vadd.f32 %v7096, %v7208
    %7210 = vmatmul.f32.gmra.mxu0 %v6325
    %v7211 = vpop.f32.mrf.mxu0
    %v7212 = vadd.f32 %v7099, %v7211
    %7213 = vmatmul.f32.gmra.mxu0 %v6329
    %v7214 = vpop.f32.mrf.mxu0
    %v7215 = vadd.f32 %v7102, %v7214
    %7216 = vmatmul.f32.gmra.mxu0 %v6333
    %v7217 = vpop.f32.mrf.mxu0
    %v7218 = vadd.f32 %v7105, %v7217
    %7219 = vmatmul.f32.gmra.mxu0 %v6337
    %v7220 = vpop.f32.mrf.mxu0
    %v7221 = vadd.f32 %v7108, %v7220
    %7222 = vmatmul.f32.gmra.mxu0 %v6341
    %v7223 = vpop.f32.mrf.mxu0
    %v7224 = vadd.f32 %v7111, %v7223
    %7225 = vmatmul.f32.gmra.mxu0 %v6345
    %v7226 = vpop.f32.mrf.mxu0
    %v7227 = vadd.f32 %v7114, %v7226
    %7228 = vmatmul.f32.gmra.mxu0 %v6349
    %v7229 = vpop.f32.mrf.mxu0
    %v7230 = vadd.f32 %v7117, %v7229
    %7231 = vmatmul.f32.gmra.mxu0 %v6353
    %v7232 = vpop.f32.mrf.mxu0
    %v7233 = vadd.f32 %v7120, %v7232
    %7234 = vmatmul.f32.gmra.mxu0 %v6357
    %v7235 = vpop.f32.mrf.mxu0
    %v7236 = vadd.f32 %v7123, %v7235
    %7237 = vmatmul.f32.gmra.mxu0 %v6361
    %v7238 = vpop.f32.mrf.mxu0
    %v7239 = vadd.f32 %v7126, %v7238
    %7240 = vmatmul.f32.gmra.mxu0 %v6365
    %v7241 = vpop.f32.mrf.mxu0
    %v7242 = vadd.f32 %v7129, %v7241
    %7243 = vmatmul.f32.gmra.mxu0 %v6369
    %v7244 = vpop.f32.mrf.mxu0
    %v7245 = vadd.f32 %v7132, %v7244
    %7246 = vmatmul.f32.gmra.mxu0 %v6373
    %v7247 = vpop.f32.mrf.mxu0
    %v7248 = vadd.f32 %v7135, %v7247
    %7249 = vmatmul.f32.gmra.mxu0 %v6377
    %v7250 = vpop.f32.mrf.mxu0
    %v7251 = vadd.f32 %v7138, %v7250
    %7252 = vmatmul.f32.gmra.mxu0 %v6381
    %v7253 = vpop.f32.mrf.mxu0
    %v7254 = vadd.f32 %v7141, %v7253
    %7255 = vmatmul.f32.gmra.mxu0 %v6385
    %v7256 = vpop.f32.mrf.mxu0
    %v7257 = vadd.f32 %v7144, %v7256
    %7258 = vmatmul.f32.gmra.mxu0 %v6389
    %v7259 = vpop.f32.mrf.mxu0
    %v7260 = vadd.f32 %v7147, %v7259
    %7261 = vmatmul.f32.gmra.mxu0 %v6393
    %v7262 = vpop.f32.mrf.mxu0
    %v7263 = vadd.f32 %v7150, %v7262
    %7264 = vmatmul.f32.gmra.mxu0 %v6397
    %v7265 = vpop.f32.mrf.mxu0
    %v7266 = vadd.f32 %v7153, %v7265
    %7267 = vmatmul.f32.gmra.mxu0 %v6401
    %v7268 = vpop.f32.mrf.mxu0
    %v7269 = vadd.f32 %v7156, %v7268
    %7270 = vmatmul.f32.gmra.mxu0 %v6405
    %v7271 = vpop.f32.mrf.mxu0
    %v7272 = vadd.f32 %v7159, %v7271
    %7273 = vmatmul.f32.gmra.mxu0 %v6409
    %v7274 = vpop.f32.mrf.mxu0
    %v7275 = vadd.f32 %v7162, %v7274
    %7276 = vmatmul.f32.gmra.mxu0 %v6413
    %v7277 = vpop.f32.mrf.mxu0
    %v7278 = vadd.f32 %v7165, %v7277
    %7279 = vdwg.mxu0
    %v7280 = vmul.f32 %v7185, %v6523
    %v7281 = vmul.f32 %v7188, %v6537
    %v7282 = vmul.f32 %v7191, %v6551
    %v7283 = vmul.f32 %v7194, %v6565
    %v7284 = vmul.f32 %v7197, %v6579
    %v7285 = vmul.f32 %v7200, %v6593
    %v7286 = vmul.f32 %v7203, %v6607
    %v7287 = vmul.f32 %v7206, %v6621
    %v7288 = vmul.f32 %v7209, %v6635
    %v7289 = vmul.f32 %v7212, %v6649
    %v7290 = vmul.f32 %v7215, %v6663
    %v7291 = vmul.f32 %v7218, %v6677
    %v7292 = vmul.f32 %v7221, %v6691
    %v7293 = vmul.f32 %v7224, %v6705
    %v7294 = vmul.f32 %v7227, %v6719
    %v7295 = vmul.f32 %v7230, %v6733
    %v7296 = vmul.f32 %v7233, %v6747
    %v7297 = vmul.f32 %v7236, %v6761
    %v7298 = vmul.f32 %v7239, %v6775
    %v7299 = vmul.f32 %v7242, %v6789
    %v7300 = vmul.f32 %v7245, %v6803
    %v7301 = vmul.f32 %v7248, %v6817
    %v7302 = vmul.f32 %v7251, %v6831
    %v7303 = vmul.f32 %v7254, %v6845
    %v7304 = vmul.f32 %v7257, %v6859
    %v7305 = vmul.f32 %v7260, %v6873
    %v7306 = vmul.f32 %v7263, %v6887
    %v7307 = vmul.f32 %v7266, %v6901
    %v7308 = vmul.f32 %v7269, %v6915
    %v7309 = vmul.f32 %v7272, %v6929
    %v7310 = vmul.f32 %v7275, %v6943
    %v7311 = vmul.f32 %v7278, %v6957
    %7312 = vmatpush.msra.mxu0 %v7295
    %7313 = vmatpush.msra.mxu0 %v7294
    %7314 = vmatpush.msra.mxu0 %v7293
    %7315 = vmatpush.msra.mxu0 %v7292
    %7316 = vmatpush.msra.mxu0 %v7291
    %7317 = vmatpush.msra.mxu0 %v7290
    %7318 = vmatpush.msra.mxu0 %v7289
    %7319 = vmatpush.msra.mxu0 %v7288
    %7320 = vmatpush.msra.mxu0 %v7287
    %7321 = vmatpush.msra.mxu0 %v7286
    %7322 = vmatpush.msra.mxu0 %v7285
    %7323 = vmatpush.msra.mxu0 %v7284
    %7324 = vmatpush.msra.mxu0 %v7283
    %7325 = vmatpush.msra.mxu0 %v7282
    %7326 = vmatpush.msra.mxu0 %v7281
    %7327 = vmatpush.msra.mxu0 %v7280
    %7328 = vmatmul.f32.gmra.mxu0 %v357
    %v7329 = vpop.f32.mrf.mxu0
    %v7330 = vadd.f32 0.0, %v7329
    %7331 = vmatmul.f32.gmra.mxu0 %v359
    %v7332 = vpop.f32.mrf.mxu0
    %v7333 = vadd.f32 0.0, %v7332
    %7334 = vmatmul.f32.gmra.mxu0 %v361
    %v7335 = vpop.f32.mrf.mxu0
    %v7336 = vadd.f32 0.0, %v7335
    %7337 = vmatmul.f32.gmra.mxu0 %v363
    %v7338 = vpop.f32.mrf.mxu0
    %v7339 = vadd.f32 0.0, %v7338
    %7340 = vdwg.mxu0
    %7341 = vmatpush.msra.mxu0 %v7311
    %7342 = vmatpush.msra.mxu0 %v7310
    %7343 = vmatpush.msra.mxu0 %v7309
    %7344 = vmatpush.msra.mxu0 %v7308
    %7345 = vmatpush.msra.mxu0 %v7307
    %7346 = vmatpush.msra.mxu0 %v7306
    %7347 = vmatpush.msra.mxu0 %v7305
    %7348 = vmatpush.msra.mxu0 %v7304
    %7349 = vmatpush.msra.mxu0 %v7303
    %7350 = vmatpush.msra.mxu0 %v7302
    %7351 = vmatpush.msra.mxu0 %v7301
    %7352 = vmatpush.msra.mxu0 %v7300
    %7353 = vmatpush.msra.mxu0 %v7299
    %7354 = vmatpush.msra.mxu0 %v7298
    %7355 = vmatpush.msra.mxu0 %v7297
    %7356 = vmatpush.msra.mxu0 %v7296
    %7357 = vmatmul.f32.gmra.mxu0 %v358
    %v7358 = vpop.f32.mrf.mxu0
    %v7359 = vadd.f32 %v7330, %v7358
    %7360 = vmatmul.f32.gmra.mxu0 %v360
    %v7361 = vpop.f32.mrf.mxu0
    %v7362 = vadd.f32 %v7333, %v7361
    %7363 = vmatmul.f32.gmra.mxu0 %v362
    %v7364 = vpop.f32.mrf.mxu0
    %v7365 = vadd.f32 %v7336, %v7364
    %7366 = vmatmul.f32.gmra.mxu0 %v364
    %v7367 = vpop.f32.mrf.mxu0
    %v7368 = vadd.f32 %v7339, %v7367
    %7369 = vdwg.mxu0
    %s7370 = scalar_lea.vmem %s3, 24
    %v7371 = vld [vmem:[%s7370] sm:$0xff]
    %v7373 = vsel %vm461, %v7359, 0
    %v7376 = vsel %vm461, %v7362, 0
    %v7379 = vsel %vm461, %v7365, 0
    %v7382 = vsel %vm461, %v7368, 0
    %7384 = vmatpush.msra.mxu0 0.0
    %7385 = vmatpush.msra.mxu0 0.0
    %7386 = vmatpush.msra.mxu0 0.0
    %7387 = vmatpush.msra.mxu0 0.0
    %7388 = vmatpush.msra.mxu0 0.0
    %7389 = vmatpush.msra.mxu0 0.0
    %7390 = vmatpush.msra.mxu0 0.0
    %7391 = vmatpush.msra.mxu0 0.0
    %7392 = vmatpush.msra.mxu0 0.0
    %7393 = vmatpush.msra.mxu0 0.0
    %7394 = vmatpush.msra.mxu0 0.0
    %7395 = vmatpush.msra.mxu0 0.0
    %7396 = vmatpush.msra.mxu0 0.0
    %7397 = vmatpush.msra.mxu0 0.0
    %7398 = vmatpush.msra.mxu0 0.0
    %7399 = vmatpush.msra.mxu0 %v7371
    %7400 = vmatmul.f32.gmra.mxu0 %v7373
    %v7401 = vpop.f32.mrf.mxu0
    %v7402 = vadd.f32 0.0, %v7401
    %7403 = vmatmul.f32.gmra.mxu0 %v7376
    %v7404 = vpop.f32.mrf.mxu0
    %v7405 = vadd.f32 0.0, %v7404
    %7406 = vmatmul.f32.gmra.mxu0 %v7379
    %v7407 = vpop.f32.mrf.mxu0
    %v7408 = vadd.f32 0.0, %v7407
    %7409 = vmatmul.f32.gmra.mxu0 %v7382
    %v7410 = vpop.f32.mrf.mxu0
    %v7411 = vadd.f32 0.0, %v7410
    %7412 = vdwg.mxu0
    %v7413 = vadd.f32 %v5640, %v7402
    %v7414 = vadd.f32 %v5641, %v7405
    %v7415 = vadd.f32 %v5642, %v7408
    %v7416 = vadd.f32 %v5643, %v7411
    %v7417 = vld [vmem:[%s4] sm:$0x1]
    %v7419 = vperm.slane %v7417, 0
    %v7421 = vadd.f32 %v7413, %v7419
    %v7422 = vadd.f32 %v7414, %v7419
    %v7423 = vadd.f32 %v7415, %v7419
    %v7424 = vadd.f32 %v7416, %v7419
    %7425 = vst [vmem:[#allocation5] sm:$0xff] %v7421
    %7426 = vst [vmem:[#allocation5 + $0x8] sm:$0xff] %v7422
    %7427 = vst [vmem:[#allocation5 + $0x10] sm:$0xff] %v7423
    %7428 = vst [vmem:[#allocation5 + $0x18] sm:$0xff] %v7424
    // Predicated region
    $region34: #{tpu_custom_call.1} parent=1 // pred_check
      _
    $region35: #{tpu_custom_call.1} parent=1 // pred_check_branch
      %7430 = sbr.rel (0) target = $region37
    $region36: #{tpu_custom_call.1} parent=1 // pred_region
      %7432 = vsyncadd [#allocation4], 0
      %s7433 = sshll.u32 [#allocation5], 4
      %s7434 = int_to_ptr.vmem [resolvable:$true] %s7433
      %s7435 = sshll.u32 %s7, 4
      %s7436 = int_to_ptr.hbm [resolvable:$true] %s7435
      %7441 = dma.vmem_to_hbm [thread:$0]  %s7434, 512, %s7436, [#allocation4], 128, 128, 8
    $region37: #{tpu_custom_call.1} parent=1 // pred_fallthru
      _
    // Predicated region
    $region38: #{tpu_custom_call.1} parent=1 // pred_check
      _
    $region39: #{tpu_custom_call.1} parent=1 // pred_check_branch
      %7443 = sbr.rel (0) target = $region41
    $region40: #{tpu_custom_call.1} parent=1 // pred_region
      %7445 = dma.done [#allocation4], 512
    $region41: #{tpu_custom_call.1} parent=1 // pred_fallthru
      _
    %7446 = vsyncpa [#allocation3], 1
    %7447 = vsyncpa [#allocation4], 1

</llo_original>
